<compile_context>
chip_gen: v7x
topology: tpu7x:2x2x1
jax: 0.10.0
libtpu: 0.0.40
codegen_flags: <defaults>
</compile_context>

<pallas_src>
import math
import functools

import jax
import jax.numpy as jnp
from jax.experimental import pallas as pl
from jax.experimental.pallas import tpu as pltpu


# ---------------------------------------------------------------------------
# in-kernel helpers (pure jnp + pl; only traced inside the Pallas kernel)
# ---------------------------------------------------------------------------
def _layernorm(x, gamma, beta, eps=1e-6):
    # matches the torch module: mean over last dim, *unbiased* std (n-1
    # denominator), division by (std + eps) (not sqrt(var + eps)).
    d = x.shape[-1]
    mean = jnp.mean(x, axis=-1, keepdims=True)
    diff = x - mean
    var = jnp.sum(diff * diff, axis=-1, keepdims=True) * (1.0 / (d - 1))
    # exact reciprocal: same EUP slot cost, no ~1e-3 error on the residual
    inv = pl.reciprocal(jnp.sqrt(var) + eps, approx=False)
    return gamma * diff * inv + beta


def _attention(v_in, k_in, q_in, mask_add, W_ref, b_ref, bB, Lk, Lq, num_heads):
    """MultiHeadAttention.forward(v, k, q, mask) with LoRA already folded in.

    v_in/k_in : (bB*Lk, D) slabs, already cast to the weight dtype
    q_in      : (bB*Lq, D) slab, already cast to the weight dtype
    mask_add  : (bB, 1, Lk) additive key mask (0 keep / -1e9 masked), f32
    W_ref     : Ref (4, D, D) stacked [W_v_eff, W_k, W_q_eff, W_merge], (in, out)
    b_ref     : Ref (4, D) float32
    returns   : (bB*Lq, D) float32
    """
    D = W_ref.shape[-1]
    dk = D // num_heads
    inv_sqrt_dk = 1.0 / math.sqrt(dk)
    w_dtype = W_ref.dtype

    # big projections: lazy Ref slices so only one (D, D) operand is live at
    # a time (M = bB*L rows each, f32 accumulation on the MXU)
    v = jnp.dot(v_in, W_ref[0], preferred_element_type=jnp.float32) + b_ref[0:1]
    k = jnp.dot(k_in, W_ref[1], preferred_element_type=jnp.float32) + b_ref[1:2]
    q = jnp.dot(q_in, W_ref[2], preferred_element_type=jnp.float32) + b_ref[2:3]

    # split the batch back out (leading-dim split; D stays on the lane axis)
    v3 = v.reshape(bB, Lk, D)
    k3 = k.reshape(bB, Lk, D)
    q3 = q.reshape(bB, Lq, D)

    # hoist the mask broadcast out of the head loop (no CSE of broadcasts)
    mask_b = jnp.broadcast_to(mask_add, (bB, Lq, Lk))

    # per-head scores / softmax / context; heads unrolled at trace time
    # TODO(synk): for production shapes with tiny Lk (<128) the softmax path
    # runs at low lane occupancy; packing all heads onto the lane axis with a
    # segmented softmax would improve VPU/EUP utilization.
    ctx_heads = []
    for h in range(num_heads):
        lo = h * dk
        qh = q3[:, :, lo:lo + dk]           # (bB, Lq, dk)
        kh = k3[:, :, lo:lo + dk]           # (bB, Lk, dk)
        vh = v3[:, :, lo:lo + dk]           # (bB, Lk, dk)
        s = jnp.einsum('bqd,bkd->bqk', qh, kh,
                       preferred_element_type=jnp.float32) * inv_sqrt_dk
        s = s + mask_b                       # additive mask
        s = s - jnp.max(s, axis=-1, keepdims=True)
        e = jnp.exp(s)
        p = e * pl.reciprocal(jnp.sum(e, axis=-1, keepdims=True), approx=True)
        ctx_heads.append(jnp.einsum('bqk,bkd->bqd', p, vh,
                                    preferred_element_type=jnp.float32))

    # lane-axis concat of head contexts -> ONE full-K merge matmul
    ctx = jnp.concatenate(ctx_heads, axis=-1).reshape(bB * Lq, D)
    out = jnp.dot(ctx.astype(w_dtype), W_ref[3],
                  preferred_element_type=jnp.float32) + b_ref[3:4]
    return out


# ---------------------------------------------------------------------------
# Pallas kernel: one full decoder layer for a block of batch elements
# ---------------------------------------------------------------------------
def decoder_kernel(tgt_ref, tmask_ref, x_ref, xmask_ref,
                   W1_ref, b1_ref, W2_ref, b2_ref,
                   Wf1_ref, bf1_ref, Wf2_ref, bf2_ref,
                   gamma_ref, beta_ref, out_ref, *, num_heads):
    bB, Lt, D = tgt_ref.shape
    _, Lx, _ = x_ref.shape
    w_dtype = W1_ref.dtype

    # flatten (batch block, seq) -> rows so projections / FFN are big matmuls
    tgt2 = tgt_ref[...].reshape(bB * Lt, D)
    x2 = x_ref[...].reshape(bB * Lx, D)
    tmask = tmask_ref[...]                   # (bB, 1, Lt) additive
    xmask = xmask_ref[...]                   # (bB, 1, Lx) additive

    # cast each activation slab to the weight dtype once (no-op for f32)
    tgt2c = tgt2.astype(w_dtype)
    x2c = x2.astype(w_dtype)

    # 1) self attention (LoRA folded into W1) + residual + norm1
    att1 = _attention(tgt2c, tgt2c, tgt2c, tmask, W1_ref, b1_ref,
                      bB, Lt, Lt, num_heads)
    y = _layernorm(tgt2 + att1, gamma_ref[0:1], beta_ref[0:1])

    # 2) cross attention: Decoder calls mhatt2(x, x, y, x_mask)
    #    => forward(query=x, key=x, value=y) => attention(v=Q(x), k=K(x), q=V(y))
    att2 = _attention(x2c, x2c, y.astype(w_dtype), xmask, W2_ref, b2_ref,
                      bB, Lx, Lt, num_heads)
    y = _layernorm(y + att2, gamma_ref[1:2], beta_ref[1:2])

    # 3) FFN (Linear -> ReLU -> Linear) + residual + norm3; Wf refs are only
    #    materialized inside their own matmul
    h = jnp.maximum(
        jnp.dot(y.astype(w_dtype), Wf1_ref[...],
                preferred_element_type=jnp.float32) + bf1_ref[...], 0.0)
    ff = jnp.dot(h.astype(w_dtype), Wf2_ref[...],
                 preferred_element_type=jnp.float32) + bf2_ref[...]
    y = _layernorm(y + ff, gamma_ref[2:3], beta_ref[2:3])

    out_ref[...] = y.reshape(bB, Lt, D).astype(out_ref.dtype)
    # TODO(synk): dropout layers (dropout1-3 and the attention/FC dropouts)
    # are identity here (eval / inference semantics).


# ---------------------------------------------------------------------------
# one-time preparation (weight-load time, NOT per forward call)
# ---------------------------------------------------------------------------
def fold_decoder_params(params, param_dtype=jnp.float32):
    """Fold LoRA adapters into the base projection weights and cast.

      v = (q_in + q_in A_q B_q) W_v == q_in (W_v + A_q (B_q W_v))
      q = (v_in + v_in A_v B_v) W_q == v_in (W_q + A_v (B_v W_q))

    Call once when the weights are loaded; the forward never re-folds.
    """
    def fold(W, A, Bm):
        W = W.astype(jnp.float32)
        A = A.astype(jnp.float32)
        Bm = Bm.astype(jnp.float32)
        Wv = W[0] + A[0] @ (Bm[0] @ W[0])
        Wq = W[2] + A[1] @ (Bm[1] @ W[2])
        return jnp.stack([Wv, W[1], Wq, W[3]], axis=0)

    return {
        "W1": fold(params["W1"], params["A1"], params["B1"]).astype(param_dtype),
        "b1": params["b1"].astype(jnp.float32),
        "W2": fold(params["W2"], params["A2"], params["B2"]).astype(param_dtype),
        "b2": params["b2"].astype(jnp.float32),
        "Wf1": params["Wf1"].astype(param_dtype),
        "bf1": params["bf1"].astype(jnp.float32),
        "Wf2": params["Wf2"].astype(param_dtype),
        "bf2": params["bf2"].astype(jnp.float32),
        "gamma": params["gamma"].astype(jnp.float32),
        "beta": params["beta"].astype(jnp.float32),
    }


def mask_to_additive(mask):
    """0/1 keep-mask -> additive mask (0 keep / -1e9 masked). Call once per
    mask (cache it), not per forward call."""
    return jnp.where(mask.astype(jnp.float32) > 0.5, 0.0, -1e9).astype(jnp.float32)


def _tensorcores_per_chip():
    try:
        kind = jax.devices()[0].device_kind.lower()
    except Exception:
        return 1
    return 2 if "v7" in kind else 1          # v5e/v6e: 1 TC, v7x: 2 TCs


def _default_batch_block(B):
    cores = _tensorcores_per_chip()
    if cores > 1 and B % cores == 0:
        return B // cores     # >=2 parallel blocks so both TensorCores work
    return B                  # single-TC: one grid step, maximal M = B*L


# ---------------------------------------------------------------------------
# wrapper: BlockSpecs / grid around the folded params
# ---------------------------------------------------------------------------
def decoder_forward(tgt, tmask_add, x, xmask_add, folded, num_heads,
                    batch_block=None):
    tgt = tgt.astype(jnp.float32)
    x = x.astype(jnp.float32)
    B, Lt, D = tgt.shape
    _, Lx, _ = x.shape
    Fdim = folded["Wf1"].shape[-1]
    if batch_block is None:
        batch_block = _default_batch_block(B)
    assert D % num_heads == 0
    assert B % batch_block == 0, "batch_block must divide the batch size"
    nb = B // batch_block

    def rep_spec(shape):                     # whole (grid-invariant) array
        zeros = (0,) * len(shape)
        return pl.BlockSpec(shape, lambda i, _z=zeros: _z)

    in_specs = [
        pl.BlockSpec((batch_block, Lt, D), lambda i: (i, 0, 0)),   # tgt
        pl.BlockSpec((batch_block, 1, Lt), lambda i: (i, 0, 0)),   # tgt mask
        pl.BlockSpec((batch_block, Lx, D), lambda i: (i, 0, 0)),   # x
        pl.BlockSpec((batch_block, 1, Lx), lambda i: (i, 0, 0)),   # x mask
        rep_spec((4, D, D)), rep_spec((4, D)),                     # mhatt1
        rep_spec((4, D, D)), rep_spec((4, D)),                     # mhatt2
        rep_spec((D, Fdim)), rep_spec((1, Fdim)),                  # ffn fc
        rep_spec((Fdim, D)), rep_spec((1, D)),                     # ffn linear
        rep_spec((3, D)), rep_spec((3, D)),                        # layernorms
    ]
    out_specs = pl.BlockSpec((batch_block, Lt, D), lambda i: (i, 0, 0))

    # explicit VMEM budget: double-buffered weights + activation tiles + slack
    wbytes = jnp.dtype(folded["W1"].dtype).itemsize
    weight_bytes = (2 * 4 * D * D + 2 * D * Fdim) * wbytes
    act_bytes = batch_block * ((2 * Lt + Lx) * D + (Lt + Lx)) * 4
    need = 2 * (weight_bytes + act_bytes)                 # double-buffering
    vmem_limit = int(min(64 * 1024 * 1024, max(32 * 1024 * 1024, 4 * need)))
    # TODO(synk): at realistic D/Fdim, single-buffer the grid-invariant weight
    # specs (pipeline_mode=pl.Buffered(1)) or tile the FFN over Fdim to fit
    # v7x's 64 MiB VMEM.

    kernel = functools.partial(decoder_kernel, num_heads=num_heads)

    return pl.pallas_call(
        kernel,
        out_shape=jax.ShapeDtypeStruct((B, Lt, D), jnp.float32),
        grid_spec=pltpu.PrefetchScalarGridSpec(
            num_scalar_prefetch=0,
            grid=(nb,),
            in_specs=in_specs,
            out_specs=out_specs,
        ),
        # batch-block axis is independent work -> megacore-parallel on v7x
        compiler_params=pltpu.CompilerParams(
            dimension_semantics=("parallel",),
            vmem_limit_bytes=vmem_limit),
    )(tgt, tmask_add, x, xmask_add,
      folded["W1"], folded["b1"], folded["W2"], folded["b2"],
      folded["Wf1"], folded["bf1"], folded["Wf2"], folded["bf2"],
      folded["gamma"], folded["beta"])


# ---------------------------------------------------------------------------
# pure-JAX reference: direct port of the original (unfolded) PyTorch math
# ---------------------------------------------------------------------------
def _ref_layernorm(xv, g, b, eps=1e-6):
    mean = xv.mean(-1, keepdims=True)
    diff = xv - mean
    std = jnp.sqrt((diff * diff).sum(-1, keepdims=True) / (xv.shape[-1] - 1))
    return g * diff / (std + eps) + b


def _ref_mha(v, k, q, mask, W, b, H):
    Bn, Lq, D = q.shape
    dk = D // H
    vv = v @ W[0] + b[0]
    kk = k @ W[1] + b[1]
    qq = q @ W[2] + b[2]

    def split(t):
        return t.reshape(Bn, -1, H, dk).transpose(0, 2, 1, 3)

    vv, kk, qq = split(vv), split(kk), split(qq)
    scores = qq @ jnp.swapaxes(kk, -1, -2) / math.sqrt(dk)
    scores = jnp.where(mask[:, None, :, :] == 0.0, -1e9, scores)
    p = jax.nn.softmax(scores, axis=-1)
    ctx = (p @ vv).transpose(0, 2, 1, 3).reshape(Bn, Lq, D)
    return ctx @ W[3] + b[3]


def _ref_lora_mha(query, key, value, mask, W, b, A, Bm, H):
    Q = query + (query @ A[0]) @ Bm[0]
    K = key
    V = value + (value @ A[1]) @ Bm[1]
    return _ref_mha(Q, K, V, mask, W, b, H)   # note v<-Q, k<-K, q<-V binding


def decoder_reference(tgt, tgt_mask, x, x_mask, p, H):
    att1 = _ref_lora_mha(tgt, tgt, tgt, tgt_mask,
                         p["W1"], p["b1"], p["A1"], p["B1"], H)
    y = _ref_layernorm(tgt + att1, p["gamma"][0], p["beta"][0])
    att2 = _ref_lora_mha(x, x, y, x_mask,
                         p["W2"], p["b2"], p["A2"], p["B2"], H)
    y = _ref_layernorm(y + att2, p["gamma"][1], p["beta"][1])
    ff = jnp.maximum(y @ p["Wf1"] + p["bf1"], 0.0) @ p["Wf2"] + p["bf2"]
    y = _ref_layernorm(y + ff, p["gamma"][2], p["beta"][2])
    return y


# ---------------------------------------------------------------------------
if __name__ == "__main__":
    B, Lt, Lx = 4, 8, 16
    D, HEADS, FDIM, RANK = 128, 4, 256, 4     # hidden, multi_head, ff_size, rang

    key = jax.random.PRNGKey(0)
    keys = jax.random.split(key, 16)

    def w(k, shape, scale=0.05):
        return (scale * jax.random.normal(k, shape)).astype(jnp.float32)

    params = {
        # mhatt1: stacked [W_v, W_k, W_q, W_merge] (stored (in, out)), biases
        "W1": w(keys[0], (4, D, D)),
        "b1": w(keys[1], (4, D), 0.01),
        "A1": w(keys[2], (2, D, RANK), 0.02),   # [A_q, A_v]
        "B1": w(keys[3], (2, RANK, D), 0.02),   # [B_q, B_v] (nonzero => LoRA active)
        # mhatt2
        "W2": w(keys[4], (4, D, D)),
        "b2": w(keys[5], (4, D), 0.01),
        "A2": w(keys[6], (2, D, RANK), 0.02),
        "B2": w(keys[7], (2, RANK, D), 0.02),
        # FFN
        "Wf1": w(keys[8], (D, FDIM)),
        "bf1": w(keys[9], (1, FDIM), 0.01),
        "Wf2": w(keys[10], (FDIM, D)),
        "bf2": w(keys[11], (1, D), 0.01),
        # LayerNorms 1..3
        "gamma": jnp.ones((3, D), jnp.float32),
        "beta": jnp.zeros((3, D), jnp.float32),
    }

    tgt = jax.random.normal(keys[12], (B, Lt, D), dtype=jnp.float32)
    x = jax.random.normal(keys[13], (B, Lx, D), dtype=jnp.float32)

    tgt_mask = jnp.ones((B, 1, Lt), jnp.float32)
    tgt_mask = tgt_mask.at[1, 0, -2:].set(0.0).at[3, 0, :3].set(0.0)
    x_mask = jnp.ones((B, 1, Lx), jnp.float32)
    x_mask = x_mask.at[0, 0, -4:].set(0.0).at[2, 0, -6:].set(0.0)

    # --- one-time preparation (weight-load time): LoRA fold + additive masks
    folded_f32 = fold_decoder_params(params, param_dtype=jnp.float32)
    folded_bf16 = fold_decoder_params(params, param_dtype=jnp.bfloat16)
    tmask_add = mask_to_additive(tgt_mask)
    xmask_add = mask_to_additive(x_mask)

    # f32 weights: strict check against the pure-JAX port of the PyTorch module
    out = decoder_forward(tgt, tmask_add, x, xmask_add, folded_f32, HEADS)
    out = jax.block_until_ready(out)
    ref = jax.block_until_ready(
        decoder_reference(tgt, tgt_mask, x, x_mask, params, HEADS))

    assert out.shape == (B, Lt, D)
    assert bool(jnp.all(jnp.isfinite(out)))
    max_diff = float(jnp.max(jnp.abs(out - ref)))
    assert max_diff < 5e-2, f"kernel/reference mismatch: {max_diff}"

    # bf16 weights with f32 accumulation (v6e/v7x path): loose tolerance
    out_bf16 = jax.block_until_ready(
        decoder_forward(tgt, tmask_add, x, xmask_add, folded_bf16, HEADS))
    assert out_bf16.shape == (B, Lt, D)
    assert bool(jnp.all(jnp.isfinite(out_bf16)))
    max_diff_bf16 = float(jnp.max(jnp.abs(out_bf16 - ref)))
    assert max_diff_bf16 < 2.5e-1, f"bf16 kernel mismatch: {max_diff_bf16}"

    print("KERNEL_OK")
</pallas_src>

<mosaic_0001>
module attributes {stable_mosaic.version = 11 : i64} {
  func.func @decoder_kernel(%arg0: i32, %arg1: memref<4x8x128xf32, #tpu.memory_space<vmem>>, %arg2: memref<4x1x8xf32, #tpu.memory_space<vmem>>, %arg3: memref<4x16x128xf32, #tpu.memory_space<vmem>>, %arg4: memref<4x1x16xf32, #tpu.memory_space<vmem>>, %arg5: memref<4x128x128xf32, #tpu.memory_space<vmem>>, %arg6: memref<4x128xf32, #tpu.memory_space<vmem>>, %arg7: memref<4x128x128xf32, #tpu.memory_space<vmem>>, %arg8: memref<4x128xf32, #tpu.memory_space<vmem>>, %arg9: memref<128x256xf32, #tpu.memory_space<vmem>>, %arg10: memref<1x256xf32, #tpu.memory_space<vmem>>, %arg11: memref<256x128xf32, #tpu.memory_space<vmem>>, %arg12: memref<1x128xf32, #tpu.memory_space<vmem>>, %arg13: memref<3x128xf32, #tpu.memory_space<vmem>>, %arg14: memref<3x128xf32, #tpu.memory_space<vmem>>, %arg15: memref<4x8x128xf32, #tpu.memory_space<vmem>>) attributes {dimension_semantics = [#tpu.dimension_semantics<parallel>], iteration_bounds = array<i64: 1>, scalar_prefetch = 0 : i64, scratch_operands = 0 : i64, tpu.core_type = #tpu.core_type<tc>, window_params = [{transform_indices = @transform_0, window_bounds = array<i64: 4, 8, 128>}, {transform_indices = @transform_1, window_bounds = array<i64: 4, 1, 8>}, {transform_indices = @transform_2, window_bounds = array<i64: 4, 16, 128>}, {transform_indices = @transform_3, window_bounds = array<i64: 4, 1, 16>}, {pipeline_mode = #tpu.pipeline_mode<synchronous>, transform_indices = @transform_4, window_bounds = array<i64: 4, 128, 128>}, {pipeline_mode = #tpu.pipeline_mode<synchronous>, transform_indices = @transform_5, window_bounds = array<i64: 4, 128>}, {pipeline_mode = #tpu.pipeline_mode<synchronous>, transform_indices = @transform_6, window_bounds = array<i64: 4, 128, 128>}, {pipeline_mode = #tpu.pipeline_mode<synchronous>, transform_indices = @transform_7, window_bounds = array<i64: 4, 128>}, {pipeline_mode = #tpu.pipeline_mode<synchronous>, transform_indices = @transform_8, window_bounds = array<i64: 128, 256>}, {pipeline_mode = #tpu.pipeline_mode<synchronous>, transform_indices = @transform_9, window_bounds = array<i64: 1, 256>}, {pipeline_mode = #tpu.pipeline_mode<synchronous>, transform_indices = @transform_10, window_bounds = array<i64: 256, 128>}, {pipeline_mode = #tpu.pipeline_mode<synchronous>, transform_indices = @transform_11, window_bounds = array<i64: 1, 128>}, {pipeline_mode = #tpu.pipeline_mode<synchronous>, transform_indices = @transform_12, window_bounds = array<i64: 3, 128>}, {pipeline_mode = #tpu.pipeline_mode<synchronous>, transform_indices = @transform_13, window_bounds = array<i64: 3, 128>}, {transform_indices = @transform_14, window_bounds = array<i64: 4, 8, 128>}]} {
    %c0 = arith.constant 0 : index
    %c0_0 = arith.constant 0 : index
    %c0_1 = arith.constant 0 : index
    %0 = vector.load %arg1[%c0, %c0_0, %c0_1] : memref<4x8x128xf32, #tpu.memory_space<vmem>>, vector<4x8x128xf32>
    %1 = vector.shape_cast %0 : vector<4x8x128xf32> to vector<32x128xf32>
    %c0_2 = arith.constant 0 : index
    %c0_3 = arith.constant 0 : index
    %c0_4 = arith.constant 0 : index
    %2 = vector.load %arg3[%c0_2, %c0_3, %c0_4] : memref<4x16x128xf32, #tpu.memory_space<vmem>>, vector<4x16x128xf32>
    %3 = vector.shape_cast %2 : vector<4x16x128xf32> to vector<64x128xf32>
    %c0_5 = arith.constant 0 : index
    %c0_6 = arith.constant 0 : index
    %c0_7 = arith.constant 0 : index
    %4 = vector.load %arg2[%c0_5, %c0_6, %c0_7] : memref<4x1x8xf32, #tpu.memory_space<vmem>>, vector<4x1x8xf32>
    %c0_8 = arith.constant 0 : index
    %c0_9 = arith.constant 0 : index
    %c0_10 = arith.constant 0 : index
    %5 = vector.load %arg4[%c0_8, %c0_9, %c0_10] : memref<4x1x16xf32, #tpu.memory_space<vmem>>, vector<4x1x16xf32>
    %c0_11 = arith.constant 0 : index
    %c0_12 = arith.constant 0 : index
    %c0_13 = arith.constant 0 : index
    %6 = vector.load %arg5[%c0_11, %c0_12, %c0_13] : memref<4x128x128xf32, #tpu.memory_space<vmem>>, vector<1x128x128xf32>
    %7 = vector.shape_cast %6 : vector<1x128x128xf32> to vector<128x128xf32>
    %cst = arith.constant dense<0.000000e+00> : vector<32x128xf32>
    %8 = tpu.matmul %1, %7, %cst {dimension_numbers = #tpu.dot_dimension_numbers<[1], [0], [0], [1], [0, 0, 1, 1], [], []>} : vector<32x128xf32>, vector<128x128xf32>, vector<32x128xf32> -> vector<32x128xf32>
    %c0_14 = arith.constant 0 : index
    %c0_15 = arith.constant 0 : index
    %9 = vector.load %arg6[%c0_14, %c0_15] : memref<4x128xf32, #tpu.memory_space<vmem>>, vector<1x128xf32>
    %10 = vector.broadcast %9 : vector<1x128xf32> to vector<32x128xf32>
    %11 = arith.addf %8, %10 : vector<32x128xf32>
    %c1 = arith.constant 1 : index
    %c0_16 = arith.constant 0 : index
    %c0_17 = arith.constant 0 : index
    %12 = vector.load %arg5[%c1, %c0_16, %c0_17] : memref<4x128x128xf32, #tpu.memory_space<vmem>>, vector<1x128x128xf32>
    %13 = vector.shape_cast %12 : vector<1x128x128xf32> to vector<128x128xf32>
    %cst_18 = arith.constant dense<0.000000e+00> : vector<32x128xf32>
    %14 = tpu.matmul %1, %13, %cst_18 {dimension_numbers = #tpu.dot_dimension_numbers<[1], [0], [0], [1], [0, 0, 1, 1], [], []>} : vector<32x128xf32>, vector<128x128xf32>, vector<32x128xf32> -> vector<32x128xf32>
    %c1_19 = arith.constant 1 : index
    %c0_20 = arith.constant 0 : index
    %15 = vector.load %arg6[%c1_19, %c0_20] : memref<4x128xf32, #tpu.memory_space<vmem>>, vector<1x128xf32>
    %16 = vector.broadcast %15 : vector<1x128xf32> to vector<32x128xf32>
    %17 = arith.addf %14, %16 : vector<32x128xf32>
    %c2 = arith.constant 2 : index
    %c0_21 = arith.constant 0 : index
    %c0_22 = arith.constant 0 : index
    %18 = vector.load %arg5[%c2, %c0_21, %c0_22] : memref<4x128x128xf32, #tpu.memory_space<vmem>>, vector<1x128x128xf32>
    %19 = vector.shape_cast %18 : vector<1x128x128xf32> to vector<128x128xf32>
    %cst_23 = arith.constant dense<0.000000e+00> : vector<32x128xf32>
    %20 = tpu.matmul %1, %19, %cst_23 {dimension_numbers = #tpu.dot_dimension_numbers<[1], [0], [0], [1], [0, 0, 1, 1], [], []>} : vector<32x128xf32>, vector<128x128xf32>, vector<32x128xf32> -> vector<32x128xf32>
    %c2_24 = arith.constant 2 : index
    %c0_25 = arith.constant 0 : index
    %21 = vector.load %arg6[%c2_24, %c0_25] : memref<4x128xf32, #tpu.memory_space<vmem>>, vector<1x128xf32>
    %22 = vector.broadcast %21 : vector<1x128xf32> to vector<32x128xf32>
    %23 = arith.addf %20, %22 : vector<32x128xf32>
    %24 = vector.shape_cast %11 : vector<32x128xf32> to vector<4x8x128xf32>
    %25 = vector.shape_cast %17 : vector<32x128xf32> to vector<4x8x128xf32>
    %26 = vector.shape_cast %23 : vector<32x128xf32> to vector<4x8x128xf32>
    %27 = vector.shape_cast %4 : vector<4x1x8xf32> to vector<4x1x8xf32>
    %28 = vector.broadcast %27 : vector<4x1x8xf32> to vector<4x8x8xf32>
    %29 = vector.extract_strided_slice %26 {offsets = [0, 0, 0], sizes = [4, 8, 32], strides = [1, 1, 1]} : vector<4x8x128xf32> to vector<4x8x32xf32>
    %30 = vector.extract_strided_slice %25 {offsets = [0, 0, 0], sizes = [4, 8, 32], strides = [1, 1, 1]} : vector<4x8x128xf32> to vector<4x8x32xf32>
    %31 = vector.extract_strided_slice %24 {offsets = [0, 0, 0], sizes = [4, 8, 32], strides = [1, 1, 1]} : vector<4x8x128xf32> to vector<4x8x32xf32>
    "tpu.trace_start"() <{level = 10 : i32, message = "bqd,bkd->bqk"}> : () -> ()
    %cst_26 = arith.constant dense<0.000000e+00> : vector<4x8x8xf32>
    %32 = tpu.matmul %29, %30, %cst_26 {dimension_numbers = #tpu.dot_dimension_numbers<[2], [2], [1], [1], [0, 0, 0, 1, 1, 1], [0], [0]>} : vector<4x8x32xf32>, vector<4x8x32xf32>, vector<4x8x8xf32> -> vector<4x8x8xf32>
    "tpu.trace_stop"() : () -> ()
    %cst_27 = arith.constant 0.176776692 : f32
    %33 = vector.broadcast %cst_27 : f32 to vector<4x8x8xf32>
    %34 = arith.mulf %32, %33 : vector<4x8x8xf32>
    %35 = arith.addf %34, %28 : vector<4x8x8xf32>
    %cst_28 = arith.constant dense<0xFF800000> : vector<4x8xf32>
    %36 = vector.multi_reduction <maximumf>, %35, %cst_28 [2] : vector<4x8x8xf32> to vector<4x8xf32>
    %37 = vector.shape_cast %36 : vector<4x8xf32> to vector<4x8x1xf32>
    %38 = vector.broadcast %37 : vector<4x8x1xf32> to vector<4x8x8xf32>
    %39 = arith.subf %35, %38 : vector<4x8x8xf32>
    %40 = math.exp %39 : vector<4x8x8xf32>
    %cst_29 = arith.constant dense<0.000000e+00> : vector<4x8xf32>
    %41 = vector.multi_reduction <add>, %40, %cst_29 [2] : vector<4x8x8xf32> to vector<4x8xf32>
    %42 = vector.shape_cast %41 : vector<4x8xf32> to vector<4x8x1xf32>
    %43 = tpu.reciprocal %42 {approx = true} : vector<4x8x1xf32> -> vector<4x8x1xf32>
    %44 = vector.broadcast %43 : vector<4x8x1xf32> to vector<4x8x8xf32>
    %45 = arith.mulf %40, %44 : vector<4x8x8xf32>
    "tpu.trace_start"() <{level = 10 : i32, message = "bqk,bkd->bqd"}> : () -> ()
    %cst_30 = arith.constant dense<0.000000e+00> : vector<4x8x32xf32>
    %46 = tpu.matmul %45, %31, %cst_30 {dimension_numbers = #tpu.dot_dimension_numbers<[2], [1], [1], [2], [0, 0, 0, 1, 1, 2], [0], [0]>} : vector<4x8x8xf32>, vector<4x8x32xf32>, vector<4x8x32xf32> -> vector<4x8x32xf32>
    "tpu.trace_stop"() : () -> ()
    %47 = vector.extract_strided_slice %26 {offsets = [0, 0, 32], sizes = [4, 8, 32], strides = [1, 1, 1]} : vector<4x8x128xf32> to vector<4x8x32xf32>
    %48 = vector.extract_strided_slice %25 {offsets = [0, 0, 32], sizes = [4, 8, 32], strides = [1, 1, 1]} : vector<4x8x128xf32> to vector<4x8x32xf32>
    %49 = vector.extract_strided_slice %24 {offsets = [0, 0, 32], sizes = [4, 8, 32], strides = [1, 1, 1]} : vector<4x8x128xf32> to vector<4x8x32xf32>
    "tpu.trace_start"() <{level = 10 : i32, message = "bqd,bkd->bqk"}> : () -> ()
    %cst_31 = arith.constant dense<0.000000e+00> : vector<4x8x8xf32>
    %50 = tpu.matmul %47, %48, %cst_31 {dimension_numbers = #tpu.dot_dimension_numbers<[2], [2], [1], [1], [0, 0, 0, 1, 1, 1], [0], [0]>} : vector<4x8x32xf32>, vector<4x8x32xf32>, vector<4x8x8xf32> -> vector<4x8x8xf32>
    "tpu.trace_stop"() : () -> ()
    %cst_32 = arith.constant 0.176776692 : f32
    %51 = vector.broadcast %cst_32 : f32 to vector<4x8x8xf32>
    %52 = arith.mulf %50, %51 : vector<4x8x8xf32>
    %53 = arith.addf %52, %28 : vector<4x8x8xf32>
    %cst_33 = arith.constant dense<0xFF800000> : vector<4x8xf32>
    %54 = vector.multi_reduction <maximumf>, %53, %cst_33 [2] : vector<4x8x8xf32> to vector<4x8xf32>
    %55 = vector.shape_cast %54 : vector<4x8xf32> to vector<4x8x1xf32>
    %56 = vector.broadcast %55 : vector<4x8x1xf32> to vector<4x8x8xf32>
    %57 = arith.subf %53, %56 : vector<4x8x8xf32>
    %58 = math.exp %57 : vector<4x8x8xf32>
    %cst_34 = arith.constant dense<0.000000e+00> : vector<4x8xf32>
    %59 = vector.multi_reduction <add>, %58, %cst_34 [2] : vector<4x8x8xf32> to vector<4x8xf32>
    %60 = vector.shape_cast %59 : vector<4x8xf32> to vector<4x8x1xf32>
    %61 = tpu.reciprocal %60 {approx = true} : vector<4x8x1xf32> -> vector<4x8x1xf32>
    %62 = vector.broadcast %61 : vector<4x8x1xf32> to vector<4x8x8xf32>
    %63 = arith.mulf %58, %62 : vector<4x8x8xf32>
    "tpu.trace_start"() <{level = 10 : i32, message = "bqk,bkd->bqd"}> : () -> ()
    %cst_35 = arith.constant dense<0.000000e+00> : vector<4x8x32xf32>
    %64 = tpu.matmul %63, %49, %cst_35 {dimension_numbers = #tpu.dot_dimension_numbers<[2], [1], [1], [2], [0, 0, 0, 1, 1, 2], [0], [0]>} : vector<4x8x8xf32>, vector<4x8x32xf32>, vector<4x8x32xf32> -> vector<4x8x32xf32>
    "tpu.trace_stop"() : () -> ()
    %65 = vector.extract_strided_slice %26 {offsets = [0, 0, 64], sizes = [4, 8, 32], strides = [1, 1, 1]} : vector<4x8x128xf32> to vector<4x8x32xf32>
    %66 = vector.extract_strided_slice %25 {offsets = [0, 0, 64], sizes = [4, 8, 32], strides = [1, 1, 1]} : vector<4x8x128xf32> to vector<4x8x32xf32>
    %67 = vector.extract_strided_slice %24 {offsets = [0, 0, 64], sizes = [4, 8, 32], strides = [1, 1, 1]} : vector<4x8x128xf32> to vector<4x8x32xf32>
    "tpu.trace_start"() <{level = 10 : i32, message = "bqd,bkd->bqk"}> : () -> ()
    %cst_36 = arith.constant dense<0.000000e+00> : vector<4x8x8xf32>
    %68 = tpu.matmul %65, %66, %cst_36 {dimension_numbers = #tpu.dot_dimension_numbers<[2], [2], [1], [1], [0, 0, 0, 1, 1, 1], [0], [0]>} : vector<4x8x32xf32>, vector<4x8x32xf32>, vector<4x8x8xf32> -> vector<4x8x8xf32>
    "tpu.trace_stop"() : () -> ()
    %cst_37 = arith.constant 0.176776692 : f32
    %69 = vector.broadcast %cst_37 : f32 to vector<4x8x8xf32>
    %70 = arith.mulf %68, %69 : vector<4x8x8xf32>
    %71 = arith.addf %70, %28 : vector<4x8x8xf32>
    %cst_38 = arith.constant dense<0xFF800000> : vector<4x8xf32>
    %72 = vector.multi_reduction <maximumf>, %71, %cst_38 [2] : vector<4x8x8xf32> to vector<4x8xf32>
    %73 = vector.shape_cast %72 : vector<4x8xf32> to vector<4x8x1xf32>
    %74 = vector.broadcast %73 : vector<4x8x1xf32> to vector<4x8x8xf32>
    %75 = arith.subf %71, %74 : vector<4x8x8xf32>
    %76 = math.exp %75 : vector<4x8x8xf32>
    %cst_39 = arith.constant dense<0.000000e+00> : vector<4x8xf32>
    %77 = vector.multi_reduction <add>, %76, %cst_39 [2] : vector<4x8x8xf32> to vector<4x8xf32>
    %78 = vector.shape_cast %77 : vector<4x8xf32> to vector<4x8x1xf32>
    %79 = tpu.reciprocal %78 {approx = true} : vector<4x8x1xf32> -> vector<4x8x1xf32>
    %80 = vector.broadcast %79 : vector<4x8x1xf32> to vector<4x8x8xf32>
    %81 = arith.mulf %76, %80 : vector<4x8x8xf32>
    "tpu.trace_start"() <{level = 10 : i32, message = "bqk,bkd->bqd"}> : () -> ()
    %cst_40 = arith.constant dense<0.000000e+00> : vector<4x8x32xf32>
    %82 = tpu.matmul %81, %67, %cst_40 {dimension_numbers = #tpu.dot_dimension_numbers<[2], [1], [1], [2], [0, 0, 0, 1, 1, 2], [0], [0]>} : vector<4x8x8xf32>, vector<4x8x32xf32>, vector<4x8x32xf32> -> vector<4x8x32xf32>
    "tpu.trace_stop"() : () -> ()
    %83 = vector.extract_strided_slice %26 {offsets = [0, 0, 96], sizes = [4, 8, 32], strides = [1, 1, 1]} : vector<4x8x128xf32> to vector<4x8x32xf32>
    %84 = vector.extract_strided_slice %25 {offsets = [0, 0, 96], sizes = [4, 8, 32], strides = [1, 1, 1]} : vector<4x8x128xf32> to vector<4x8x32xf32>
    %85 = vector.extract_strided_slice %24 {offsets = [0, 0, 96], sizes = [4, 8, 32], strides = [1, 1, 1]} : vector<4x8x128xf32> to vector<4x8x32xf32>
    "tpu.trace_start"() <{level = 10 : i32, message = "bqd,bkd->bqk"}> : () -> ()
    %cst_41 = arith.constant dense<0.000000e+00> : vector<4x8x8xf32>
    %86 = tpu.matmul %83, %84, %cst_41 {dimension_numbers = #tpu.dot_dimension_numbers<[2], [2], [1], [1], [0, 0, 0, 1, 1, 1], [0], [0]>} : vector<4x8x32xf32>, vector<4x8x32xf32>, vector<4x8x8xf32> -> vector<4x8x8xf32>
    "tpu.trace_stop"() : () -> ()
    %cst_42 = arith.constant 0.176776692 : f32
    %87 = vector.broadcast %cst_42 : f32 to vector<4x8x8xf32>
    %88 = arith.mulf %86, %87 : vector<4x8x8xf32>
    %89 = arith.addf %88, %28 : vector<4x8x8xf32>
    %cst_43 = arith.constant dense<0xFF800000> : vector<4x8xf32>
    %90 = vector.multi_reduction <maximumf>, %89, %cst_43 [2] : vector<4x8x8xf32> to vector<4x8xf32>
    %91 = vector.shape_cast %90 : vector<4x8xf32> to vector<4x8x1xf32>
    %92 = vector.broadcast %91 : vector<4x8x1xf32> to vector<4x8x8xf32>
    %93 = arith.subf %89, %92 : vector<4x8x8xf32>
    %94 = math.exp %93 : vector<4x8x8xf32>
    %cst_44 = arith.constant dense<0.000000e+00> : vector<4x8xf32>
    %95 = vector.multi_reduction <add>, %94, %cst_44 [2] : vector<4x8x8xf32> to vector<4x8xf32>
    %96 = vector.shape_cast %95 : vector<4x8xf32> to vector<4x8x1xf32>
    %97 = tpu.reciprocal %96 {approx = true} : vector<4x8x1xf32> -> vector<4x8x1xf32>
    %98 = vector.broadcast %97 : vector<4x8x1xf32> to vector<4x8x8xf32>
    %99 = arith.mulf %94, %98 : vector<4x8x8xf32>
    "tpu.trace_start"() <{level = 10 : i32, message = "bqk,bkd->bqd"}> : () -> ()
    %cst_45 = arith.constant dense<0.000000e+00> : vector<4x8x32xf32>
    %100 = tpu.matmul %99, %85, %cst_45 {dimension_numbers = #tpu.dot_dimension_numbers<[2], [1], [1], [2], [0, 0, 0, 1, 1, 2], [0], [0]>} : vector<4x8x8xf32>, vector<4x8x32xf32>, vector<4x8x32xf32> -> vector<4x8x32xf32>
    "tpu.trace_stop"() : () -> ()
    %101 = tpu.concatenate %46, %64, %82, %100 in 2 : vector<4x8x32xf32>, vector<4x8x32xf32>, vector<4x8x32xf32>, vector<4x8x32xf32> -> vector<4x8x128xf32>
    %102 = vector.shape_cast %101 : vector<4x8x128xf32> to vector<32x128xf32>
    %c3 = arith.constant 3 : index
    %c0_46 = arith.constant 0 : index
    %c0_47 = arith.constant 0 : index
    %103 = vector.load %arg5[%c3, %c0_46, %c0_47] : memref<4x128x128xf32, #tpu.memory_space<vmem>>, vector<1x128x128xf32>
    %104 = vector.shape_cast %103 : vector<1x128x128xf32> to vector<128x128xf32>
    %cst_48 = arith.constant dense<0.000000e+00> : vector<32x128xf32>
    %105 = tpu.matmul %102, %104, %cst_48 {dimension_numbers = #tpu.dot_dimension_numbers<[1], [0], [0], [1], [0, 0, 1, 1], [], []>} : vector<32x128xf32>, vector<128x128xf32>, vector<32x128xf32> -> vector<32x128xf32>
    %c3_49 = arith.constant 3 : index
    %c0_50 = arith.constant 0 : index
    %106 = vector.load %arg6[%c3_49, %c0_50] : memref<4x128xf32, #tpu.memory_space<vmem>>, vector<1x128xf32>
    %107 = vector.broadcast %106 : vector<1x128xf32> to vector<32x128xf32>
    %108 = arith.addf %105, %107 : vector<32x128xf32>
    %109 = arith.addf %1, %108 : vector<32x128xf32>
    %c0_51 = arith.constant 0 : index
    %c0_52 = arith.constant 0 : index
    %110 = vector.load %arg13[%c0_51, %c0_52] : memref<3x128xf32, #tpu.memory_space<vmem>>, vector<1x128xf32>
    %c0_53 = arith.constant 0 : index
    %c0_54 = arith.constant 0 : index
    %111 = vector.load %arg14[%c0_53, %c0_54] : memref<3x128xf32, #tpu.memory_space<vmem>>, vector<1x128xf32>
    %cst_55 = arith.constant dense<0.000000e+00> : vector<32xf32>
    %112 = vector.multi_reduction <add>, %109, %cst_55 [1] : vector<32x128xf32> to vector<32xf32>
    %113 = vector.shape_cast %112 : vector<32xf32> to vector<32x1xf32>
    %cst_56 = arith.constant 1.280000e+02 : f32
    %114 = vector.broadcast %cst_56 : f32 to vector<32x1xf32>
    %115 = arith.divf %113, %114 : vector<32x1xf32>
    %116 = vector.broadcast %115 : vector<32x1xf32> to vector<32x128xf32>
    %117 = arith.subf %109, %116 : vector<32x128xf32>
    %118 = arith.mulf %117, %117 : vector<32x128xf32>
    %cst_57 = arith.constant dense<0.000000e+00> : vector<32xf32>
    %119 = vector.multi_reduction <add>, %118, %cst_57 [1] : vector<32x128xf32> to vector<32xf32>
    %120 = vector.shape_cast %119 : vector<32xf32> to vector<32x1xf32>
    %cst_58 = arith.constant 0.00787401571 : f32
    %121 = vector.broadcast %cst_58 : f32 to vector<32x1xf32>
    %122 = arith.mulf %120, %121 : vector<32x1xf32>
    %123 = math.sqrt %122 : vector<32x1xf32>
    %cst_59 = arith.constant 9.99999997E-7 : f32
    %124 = vector.broadcast %cst_59 : f32 to vector<32x1xf32>
    %125 = arith.addf %123, %124 : vector<32x1xf32>
    %126 = tpu.reciprocal %125 : vector<32x1xf32> -> vector<32x1xf32>
    %127 = vector.broadcast %110 : vector<1x128xf32> to vector<32x128xf32>
    %128 = arith.mulf %127, %117 : vector<32x128xf32>
    %129 = vector.broadcast %126 : vector<32x1xf32> to vector<32x128xf32>
    %130 = arith.mulf %128, %129 : vector<32x128xf32>
    %131 = vector.broadcast %111 : vector<1x128xf32> to vector<32x128xf32>
    %132 = arith.addf %130, %131 : vector<32x128xf32>
    %c0_60 = arith.constant 0 : index
    %c0_61 = arith.constant 0 : index
    %c0_62 = arith.constant 0 : index
    %133 = vector.load %arg7[%c0_60, %c0_61, %c0_62] : memref<4x128x128xf32, #tpu.memory_space<vmem>>, vector<1x128x128xf32>
    %134 = vector.shape_cast %133 : vector<1x128x128xf32> to vector<128x128xf32>
    %cst_63 = arith.constant dense<0.000000e+00> : vector<64x128xf32>
    %135 = tpu.matmul %3, %134, %cst_63 {dimension_numbers = #tpu.dot_dimension_numbers<[1], [0], [0], [1], [0, 0, 1, 1], [], []>} : vector<64x128xf32>, vector<128x128xf32>, vector<64x128xf32> -> vector<64x128xf32>
    %c0_64 = arith.constant 0 : index
    %c0_65 = arith.constant 0 : index
    %136 = vector.load %arg8[%c0_64, %c0_65] : memref<4x128xf32, #tpu.memory_space<vmem>>, vector<1x128xf32>
    %137 = vector.broadcast %136 : vector<1x128xf32> to vector<64x128xf32>
    %138 = arith.addf %135, %137 : vector<64x128xf32>
    %c1_66 = arith.constant 1 : index
    %c0_67 = arith.constant 0 : index
    %c0_68 = arith.constant 0 : index
    %139 = vector.load %arg7[%c1_66, %c0_67, %c0_68] : memref<4x128x128xf32, #tpu.memory_space<vmem>>, vector<1x128x128xf32>
    %140 = vector.shape_cast %139 : vector<1x128x128xf32> to vector<128x128xf32>
    %cst_69 = arith.constant dense<0.000000e+00> : vector<64x128xf32>
    %141 = tpu.matmul %3, %140, %cst_69 {dimension_numbers = #tpu.dot_dimension_numbers<[1], [0], [0], [1], [0, 0, 1, 1], [], []>} : vector<64x128xf32>, vector<128x128xf32>, vector<64x128xf32> -> vector<64x128xf32>
    %c1_70 = arith.constant 1 : index
    %c0_71 = arith.constant 0 : index
    %142 = vector.load %arg8[%c1_70, %c0_71] : memref<4x128xf32, #tpu.memory_space<vmem>>, vector<1x128xf32>
    %143 = vector.broadcast %142 : vector<1x128xf32> to vector<64x128xf32>
    %144 = arith.addf %141, %143 : vector<64x128xf32>
    %c2_72 = arith.constant 2 : index
    %c0_73 = arith.constant 0 : index
    %c0_74 = arith.constant 0 : index
    %145 = vector.load %arg7[%c2_72, %c0_73, %c0_74] : memref<4x128x128xf32, #tpu.memory_space<vmem>>, vector<1x128x128xf32>
    %146 = vector.shape_cast %145 : vector<1x128x128xf32> to vector<128x128xf32>
    %cst_75 = arith.constant dense<0.000000e+00> : vector<32x128xf32>
    %147 = tpu.matmul %132, %146, %cst_75 {dimension_numbers = #tpu.dot_dimension_numbers<[1], [0], [0], [1], [0, 0, 1, 1], [], []>} : vector<32x128xf32>, vector<128x128xf32>, vector<32x128xf32> -> vector<32x128xf32>
    %c2_76 = arith.constant 2 : index
    %c0_77 = arith.constant 0 : index
    %148 = vector.load %arg8[%c2_76, %c0_77] : memref<4x128xf32, #tpu.memory_space<vmem>>, vector<1x128xf32>
    %149 = vector.broadcast %148 : vector<1x128xf32> to vector<32x128xf32>
    %150 = arith.addf %147, %149 : vector<32x128xf32>
    %151 = vector.shape_cast %138 : vector<64x128xf32> to vector<4x16x128xf32>
    %152 = vector.shape_cast %144 : vector<64x128xf32> to vector<4x16x128xf32>
    %153 = vector.shape_cast %150 : vector<32x128xf32> to vector<4x8x128xf32>
    %154 = vector.shape_cast %5 : vector<4x1x16xf32> to vector<4x1x16xf32>
    %155 = vector.broadcast %154 : vector<4x1x16xf32> to vector<4x8x16xf32>
    %156 = vector.extract_strided_slice %153 {offsets = [0, 0, 0], sizes = [4, 8, 32], strides = [1, 1, 1]} : vector<4x8x128xf32> to vector<4x8x32xf32>
    %157 = vector.extract_strided_slice %152 {offsets = [0, 0, 0], sizes = [4, 16, 32], strides = [1, 1, 1]} : vector<4x16x128xf32> to vector<4x16x32xf32>
    %158 = vector.extract_strided_slice %151 {offsets = [0, 0, 0], sizes = [4, 16, 32], strides = [1, 1, 1]} : vector<4x16x128xf32> to vector<4x16x32xf32>
    "tpu.trace_start"() <{level = 10 : i32, message = "bqd,bkd->bqk"}> : () -> ()
    %cst_78 = arith.constant dense<0.000000e+00> : vector<4x8x16xf32>
    %159 = tpu.matmul %156, %157, %cst_78 {dimension_numbers = #tpu.dot_dimension_numbers<[2], [2], [1], [1], [0, 0, 0, 1, 1, 1], [0], [0]>} : vector<4x8x32xf32>, vector<4x16x32xf32>, vector<4x8x16xf32> -> vector<4x8x16xf32>
    "tpu.trace_stop"() : () -> ()
    %cst_79 = arith.constant 0.176776692 : f32
    %160 = vector.broadcast %cst_79 : f32 to vector<4x8x16xf32>
    %161 = arith.mulf %159, %160 : vector<4x8x16xf32>
    %162 = arith.addf %161, %155 : vector<4x8x16xf32>
    %cst_80 = arith.constant dense<0xFF800000> : vector<4x8xf32>
    %163 = vector.multi_reduction <maximumf>, %162, %cst_80 [2] : vector<4x8x16xf32> to vector<4x8xf32>
    %164 = vector.shape_cast %163 : vector<4x8xf32> to vector<4x8x1xf32>
    %165 = vector.broadcast %164 : vector<4x8x1xf32> to vector<4x8x16xf32>
    %166 = arith.subf %162, %165 : vector<4x8x16xf32>
    %167 = math.exp %166 : vector<4x8x16xf32>
    %cst_81 = arith.constant dense<0.000000e+00> : vector<4x8xf32>
    %168 = vector.multi_reduction <add>, %167, %cst_81 [2] : vector<4x8x16xf32> to vector<4x8xf32>
    %169 = vector.shape_cast %168 : vector<4x8xf32> to vector<4x8x1xf32>
    %170 = tpu.reciprocal %169 {approx = true} : vector<4x8x1xf32> -> vector<4x8x1xf32>
    %171 = vector.broadcast %170 : vector<4x8x1xf32> to vector<4x8x16xf32>
    %172 = arith.mulf %167, %171 : vector<4x8x16xf32>
    "tpu.trace_start"() <{level = 10 : i32, message = "bqk,bkd->bqd"}> : () -> ()
    %cst_82 = arith.constant dense<0.000000e+00> : vector<4x8x32xf32>
    %173 = tpu.matmul %172, %158, %cst_82 {dimension_numbers = #tpu.dot_dimension_numbers<[2], [1], [1], [2], [0, 0, 0, 1, 1, 2], [0], [0]>} : vector<4x8x16xf32>, vector<4x16x32xf32>, vector<4x8x32xf32> -> vector<4x8x32xf32>
    "tpu.trace_stop"() : () -> ()
    %174 = vector.extract_strided_slice %153 {offsets = [0, 0, 32], sizes = [4, 8, 32], strides = [1, 1, 1]} : vector<4x8x128xf32> to vector<4x8x32xf32>
    %175 = vector.extract_strided_slice %152 {offsets = [0, 0, 32], sizes = [4, 16, 32], strides = [1, 1, 1]} : vector<4x16x128xf32> to vector<4x16x32xf32>
    %176 = vector.extract_strided_slice %151 {offsets = [0, 0, 32], sizes = [4, 16, 32], strides = [1, 1, 1]} : vector<4x16x128xf32> to vector<4x16x32xf32>
    "tpu.trace_start"() <{level = 10 : i32, message = "bqd,bkd->bqk"}> : () -> ()
    %cst_83 = arith.constant dense<0.000000e+00> : vector<4x8x16xf32>
    %177 = tpu.matmul %174, %175, %cst_83 {dimension_numbers = #tpu.dot_dimension_numbers<[2], [2], [1], [1], [0, 0, 0, 1, 1, 1], [0], [0]>} : vector<4x8x32xf32>, vector<4x16x32xf32>, vector<4x8x16xf32> -> vector<4x8x16xf32>
    "tpu.trace_stop"() : () -> ()
    %cst_84 = arith.constant 0.176776692 : f32
    %178 = vector.broadcast %cst_84 : f32 to vector<4x8x16xf32>
    %179 = arith.mulf %177, %178 : vector<4x8x16xf32>
    %180 = arith.addf %179, %155 : vector<4x8x16xf32>
    %cst_85 = arith.constant dense<0xFF800000> : vector<4x8xf32>
    %181 = vector.multi_reduction <maximumf>, %180, %cst_85 [2] : vector<4x8x16xf32> to vector<4x8xf32>
    %182 = vector.shape_cast %181 : vector<4x8xf32> to vector<4x8x1xf32>
    %183 = vector.broadcast %182 : vector<4x8x1xf32> to vector<4x8x16xf32>
    %184 = arith.subf %180, %183 : vector<4x8x16xf32>
    %185 = math.exp %184 : vector<4x8x16xf32>
    %cst_86 = arith.constant dense<0.000000e+00> : vector<4x8xf32>
    %186 = vector.multi_reduction <add>, %185, %cst_86 [2] : vector<4x8x16xf32> to vector<4x8xf32>
    %187 = vector.shape_cast %186 : vector<4x8xf32> to vector<4x8x1xf32>
    %188 = tpu.reciprocal %187 {approx = true} : vector<4x8x1xf32> -> vector<4x8x1xf32>
    %189 = vector.broadcast %188 : vector<4x8x1xf32> to vector<4x8x16xf32>
    %190 = arith.mulf %185, %189 : vector<4x8x16xf32>
    "tpu.trace_start"() <{level = 10 : i32, message = "bqk,bkd->bqd"}> : () -> ()
    %cst_87 = arith.constant dense<0.000000e+00> : vector<4x8x32xf32>
    %191 = tpu.matmul %190, %176, %cst_87 {dimension_numbers = #tpu.dot_dimension_numbers<[2], [1], [1], [2], [0, 0, 0, 1, 1, 2], [0], [0]>} : vector<4x8x16xf32>, vector<4x16x32xf32>, vector<4x8x32xf32> -> vector<4x8x32xf32>
    "tpu.trace_stop"() : () -> ()
    %192 = vector.extract_strided_slice %153 {offsets = [0, 0, 64], sizes = [4, 8, 32], strides = [1, 1, 1]} : vector<4x8x128xf32> to vector<4x8x32xf32>
    %193 = vector.extract_strided_slice %152 {offsets = [0, 0, 64], sizes = [4, 16, 32], strides = [1, 1, 1]} : vector<4x16x128xf32> to vector<4x16x32xf32>
    %194 = vector.extract_strided_slice %151 {offsets = [0, 0, 64], sizes = [4, 16, 32], strides = [1, 1, 1]} : vector<4x16x128xf32> to vector<4x16x32xf32>
    "tpu.trace_start"() <{level = 10 : i32, message = "bqd,bkd->bqk"}> : () -> ()
    %cst_88 = arith.constant dense<0.000000e+00> : vector<4x8x16xf32>
    %195 = tpu.matmul %192, %193, %cst_88 {dimension_numbers = #tpu.dot_dimension_numbers<[2], [2], [1], [1], [0, 0, 0, 1, 1, 1], [0], [0]>} : vector<4x8x32xf32>, vector<4x16x32xf32>, vector<4x8x16xf32> -> vector<4x8x16xf32>
    "tpu.trace_stop"() : () -> ()
    %cst_89 = arith.constant 0.176776692 : f32
    %196 = vector.broadcast %cst_89 : f32 to vector<4x8x16xf32>
    %197 = arith.mulf %195, %196 : vector<4x8x16xf32>
    %198 = arith.addf %197, %155 : vector<4x8x16xf32>
    %cst_90 = arith.constant dense<0xFF800000> : vector<4x8xf32>
    %199 = vector.multi_reduction <maximumf>, %198, %cst_90 [2] : vector<4x8x16xf32> to vector<4x8xf32>
    %200 = vector.shape_cast %199 : vector<4x8xf32> to vector<4x8x1xf32>
    %201 = vector.broadcast %200 : vector<4x8x1xf32> to vector<4x8x16xf32>
    %202 = arith.subf %198, %201 : vector<4x8x16xf32>
    %203 = math.exp %202 : vector<4x8x16xf32>
    %cst_91 = arith.constant dense<0.000000e+00> : vector<4x8xf32>
    %204 = vector.multi_reduction <add>, %203, %cst_91 [2] : vector<4x8x16xf32> to vector<4x8xf32>
    %205 = vector.shape_cast %204 : vector<4x8xf32> to vector<4x8x1xf32>
    %206 = tpu.reciprocal %205 {approx = true} : vector<4x8x1xf32> -> vector<4x8x1xf32>
    %207 = vector.broadcast %206 : vector<4x8x1xf32> to vector<4x8x16xf32>
    %208 = arith.mulf %203, %207 : vector<4x8x16xf32>
    "tpu.trace_start"() <{level = 10 : i32, message = "bqk,bkd->bqd"}> : () -> ()
    %cst_92 = arith.constant dense<0.000000e+00> : vector<4x8x32xf32>
    %209 = tpu.matmul %208, %194, %cst_92 {dimension_numbers = #tpu.dot_dimension_numbers<[2], [1], [1], [2], [0, 0, 0, 1, 1, 2], [0], [0]>} : vector<4x8x16xf32>, vector<4x16x32xf32>, vector<4x8x32xf32> -> vector<4x8x32xf32>
    "tpu.trace_stop"() : () -> ()
    %210 = vector.extract_strided_slice %153 {offsets = [0, 0, 96], sizes = [4, 8, 32], strides = [1, 1, 1]} : vector<4x8x128xf32> to vector<4x8x32xf32>
    %211 = vector.extract_strided_slice %152 {offsets = [0, 0, 96], sizes = [4, 16, 32], strides = [1, 1, 1]} : vector<4x16x128xf32> to vector<4x16x32xf32>
    %212 = vector.extract_strided_slice %151 {offsets = [0, 0, 96], sizes = [4, 16, 32], strides = [1, 1, 1]} : vector<4x16x128xf32> to vector<4x16x32xf32>
    "tpu.trace_start"() <{level = 10 : i32, message = "bqd,bkd->bqk"}> : () -> ()
    %cst_93 = arith.constant dense<0.000000e+00> : vector<4x8x16xf32>
    %213 = tpu.matmul %210, %211, %cst_93 {dimension_numbers = #tpu.dot_dimension_numbers<[2], [2], [1], [1], [0, 0, 0, 1, 1, 1], [0], [0]>} : vector<4x8x32xf32>, vector<4x16x32xf32>, vector<4x8x16xf32> -> vector<4x8x16xf32>
    "tpu.trace_stop"() : () -> ()
    %cst_94 = arith.constant 0.176776692 : f32
    %214 = vector.broadcast %cst_94 : f32 to vector<4x8x16xf32>
    %215 = arith.mulf %213, %214 : vector<4x8x16xf32>
    %216 = arith.addf %215, %155 : vector<4x8x16xf32>
    %cst_95 = arith.constant dense<0xFF800000> : vector<4x8xf32>
    %217 = vector.multi_reduction <maximumf>, %216, %cst_95 [2] : vector<4x8x16xf32> to vector<4x8xf32>
    %218 = vector.shape_cast %217 : vector<4x8xf32> to vector<4x8x1xf32>
    %219 = vector.broadcast %218 : vector<4x8x1xf32> to vector<4x8x16xf32>
    %220 = arith.subf %216, %219 : vector<4x8x16xf32>
    %221 = math.exp %220 : vector<4x8x16xf32>
    %cst_96 = arith.constant dense<0.000000e+00> : vector<4x8xf32>
    %222 = vector.multi_reduction <add>, %221, %cst_96 [2] : vector<4x8x16xf32> to vector<4x8xf32>
    %223 = vector.shape_cast %222 : vector<4x8xf32> to vector<4x8x1xf32>
    %224 = tpu.reciprocal %223 {approx = true} : vector<4x8x1xf32> -> vector<4x8x1xf32>
    %225 = vector.broadcast %224 : vector<4x8x1xf32> to vector<4x8x16xf32>
    %226 = arith.mulf %221, %225 : vector<4x8x16xf32>
    "tpu.trace_start"() <{level = 10 : i32, message = "bqk,bkd->bqd"}> : () -> ()
    %cst_97 = arith.constant dense<0.000000e+00> : vector<4x8x32xf32>
    %227 = tpu.matmul %226, %212, %cst_97 {dimension_numbers = #tpu.dot_dimension_numbers<[2], [1], [1], [2], [0, 0, 0, 1, 1, 2], [0], [0]>} : vector<4x8x16xf32>, vector<4x16x32xf32>, vector<4x8x32xf32> -> vector<4x8x32xf32>
    "tpu.trace_stop"() : () -> ()
    %228 = tpu.concatenate %173, %191, %209, %227 in 2 : vector<4x8x32xf32>, vector<4x8x32xf32>, vector<4x8x32xf32>, vector<4x8x32xf32> -> vector<4x8x128xf32>
    %229 = vector.shape_cast %228 : vector<4x8x128xf32> to vector<32x128xf32>
    %c3_98 = arith.constant 3 : index
    %c0_99 = arith.constant 0 : index
    %c0_100 = arith.constant 0 : index
    %230 = vector.load %arg7[%c3_98, %c0_99, %c0_100] : memref<4x128x128xf32, #tpu.memory_space<vmem>>, vector<1x128x128xf32>
    %231 = vector.shape_cast %230 : vector<1x128x128xf32> to vector<128x128xf32>
    %cst_101 = arith.constant dense<0.000000e+00> : vector<32x128xf32>
    %232 = tpu.matmul %229, %231, %cst_101 {dimension_numbers = #tpu.dot_dimension_numbers<[1], [0], [0], [1], [0, 0, 1, 1], [], []>} : vector<32x128xf32>, vector<128x128xf32>, vector<32x128xf32> -> vector<32x128xf32>
    %c3_102 = arith.constant 3 : index
    %c0_103 = arith.constant 0 : index
    %233 = vector.load %arg8[%c3_102, %c0_103] : memref<4x128xf32, #tpu.memory_space<vmem>>, vector<1x128xf32>
    %234 = vector.broadcast %233 : vector<1x128xf32> to vector<32x128xf32>
    %235 = arith.addf %232, %234 : vector<32x128xf32>
    %236 = arith.addf %132, %235 : vector<32x128xf32>
    %c1_104 = arith.constant 1 : index
    %c0_105 = arith.constant 0 : index
    %237 = vector.load %arg13[%c1_104, %c0_105] : memref<3x128xf32, #tpu.memory_space<vmem>>, vector<1x128xf32>
    %c1_106 = arith.constant 1 : index
    %c0_107 = arith.constant 0 : index
    %238 = vector.load %arg14[%c1_106, %c0_107] : memref<3x128xf32, #tpu.memory_space<vmem>>, vector<1x128xf32>
    %cst_108 = arith.constant dense<0.000000e+00> : vector<32xf32>
    %239 = vector.multi_reduction <add>, %236, %cst_108 [1] : vector<32x128xf32> to vector<32xf32>
    %240 = vector.shape_cast %239 : vector<32xf32> to vector<32x1xf32>
    %cst_109 = arith.constant 1.280000e+02 : f32
    %241 = vector.broadcast %cst_109 : f32 to vector<32x1xf32>
    %242 = arith.divf %240, %241 : vector<32x1xf32>
    %243 = vector.broadcast %242 : vector<32x1xf32> to vector<32x128xf32>
    %244 = arith.subf %236, %243 : vector<32x128xf32>
    %245 = arith.mulf %244, %244 : vector<32x128xf32>
    %cst_110 = arith.constant dense<0.000000e+00> : vector<32xf32>
    %246 = vector.multi_reduction <add>, %245, %cst_110 [1] : vector<32x128xf32> to vector<32xf32>
    %247 = vector.shape_cast %246 : vector<32xf32> to vector<32x1xf32>
    %cst_111 = arith.constant 0.00787401571 : f32
    %248 = vector.broadcast %cst_111 : f32 to vector<32x1xf32>
    %249 = arith.mulf %247, %248 : vector<32x1xf32>
    %250 = math.sqrt %249 : vector<32x1xf32>
    %cst_112 = arith.constant 9.99999997E-7 : f32
    %251 = vector.broadcast %cst_112 : f32 to vector<32x1xf32>
    %252 = arith.addf %250, %251 : vector<32x1xf32>
    %253 = tpu.reciprocal %252 : vector<32x1xf32> -> vector<32x1xf32>
    %254 = vector.broadcast %237 : vector<1x128xf32> to vector<32x128xf32>
    %255 = arith.mulf %254, %244 : vector<32x128xf32>
    %256 = vector.broadcast %253 : vector<32x1xf32> to vector<32x128xf32>
    %257 = arith.mulf %255, %256 : vector<32x128xf32>
    %258 = vector.broadcast %238 : vector<1x128xf32> to vector<32x128xf32>
    %259 = arith.addf %257, %258 : vector<32x128xf32>
    %c0_113 = arith.constant 0 : index
    %c0_114 = arith.constant 0 : index
    %260 = vector.load %arg9[%c0_113, %c0_114] : memref<128x256xf32, #tpu.memory_space<vmem>>, vector<128x256xf32>
    %cst_115 = arith.constant dense<0.000000e+00> : vector<32x256xf32>
    %261 = tpu.matmul %259, %260, %cst_115 {dimension_numbers = #tpu.dot_dimension_numbers<[1], [0], [0], [1], [0, 0, 1, 1], [], []>} : vector<32x128xf32>, vector<128x256xf32>, vector<32x256xf32> -> vector<32x256xf32>
    %c0_116 = arith.constant 0 : index
    %c0_117 = arith.constant 0 : index
    %262 = vector.load %arg10[%c0_116, %c0_117] : memref<1x256xf32, #tpu.memory_space<vmem>>, vector<1x256xf32>
    %263 = vector.broadcast %262 : vector<1x256xf32> to vector<32x256xf32>
    %264 = arith.addf %261, %263 : vector<32x256xf32>
    %cst_118 = arith.constant 0.000000e+00 : f32
    %265 = vector.broadcast %cst_118 : f32 to vector<32x256xf32>
    %266 = arith.maximumf %264, %265 : vector<32x256xf32>
    %c0_119 = arith.constant 0 : index
    %c0_120 = arith.constant 0 : index
    %267 = vector.load %arg11[%c0_119, %c0_120] : memref<256x128xf32, #tpu.memory_space<vmem>>, vector<256x128xf32>
    %cst_121 = arith.constant dense<0.000000e+00> : vector<32x128xf32>
    %268 = tpu.matmul %266, %267, %cst_121 {dimension_numbers = #tpu.dot_dimension_numbers<[1], [0], [0], [1], [0, 0, 1, 1], [], []>} : vector<32x256xf32>, vector<256x128xf32>, vector<32x128xf32> -> vector<32x128xf32>
    %c0_122 = arith.constant 0 : index
    %c0_123 = arith.constant 0 : index
    %269 = vector.load %arg12[%c0_122, %c0_123] : memref<1x128xf32, #tpu.memory_space<vmem>>, vector<1x128xf32>
    %270 = vector.broadcast %269 : vector<1x128xf32> to vector<32x128xf32>
    %271 = arith.addf %268, %270 : vector<32x128xf32>
    %272 = arith.addf %259, %271 : vector<32x128xf32>
    %c2_124 = arith.constant 2 : index
    %c0_125 = arith.constant 0 : index
    %273 = vector.load %arg13[%c2_124, %c0_125] : memref<3x128xf32, #tpu.memory_space<vmem>>, vector<1x128xf32>
    %c2_126 = arith.constant 2 : index
    %c0_127 = arith.constant 0 : index
    %274 = vector.load %arg14[%c2_126, %c0_127] : memref<3x128xf32, #tpu.memory_space<vmem>>, vector<1x128xf32>
    %cst_128 = arith.constant dense<0.000000e+00> : vector<32xf32>
    %275 = vector.multi_reduction <add>, %272, %cst_128 [1] : vector<32x128xf32> to vector<32xf32>
    %276 = vector.shape_cast %275 : vector<32xf32> to vector<32x1xf32>
    %cst_129 = arith.constant 1.280000e+02 : f32
    %277 = vector.broadcast %cst_129 : f32 to vector<32x1xf32>
    %278 = arith.divf %276, %277 : vector<32x1xf32>
    %279 = vector.broadcast %278 : vector<32x1xf32> to vector<32x128xf32>
    %280 = arith.subf %272, %279 : vector<32x128xf32>
    %281 = arith.mulf %280, %280 : vector<32x128xf32>
    %cst_130 = arith.constant dense<0.000000e+00> : vector<32xf32>
    %282 = vector.multi_reduction <add>, %281, %cst_130 [1] : vector<32x128xf32> to vector<32xf32>
    %283 = vector.shape_cast %282 : vector<32xf32> to vector<32x1xf32>
    %cst_131 = arith.constant 0.00787401571 : f32
    %284 = vector.broadcast %cst_131 : f32 to vector<32x1xf32>
    %285 = arith.mulf %283, %284 : vector<32x1xf32>
    %286 = math.sqrt %285 : vector<32x1xf32>
    %cst_132 = arith.constant 9.99999997E-7 : f32
    %287 = vector.broadcast %cst_132 : f32 to vector<32x1xf32>
    %288 = arith.addf %286, %287 : vector<32x1xf32>
    %289 = tpu.reciprocal %288 : vector<32x1xf32> -> vector<32x1xf32>
    %290 = vector.broadcast %273 : vector<1x128xf32> to vector<32x128xf32>
    %291 = arith.mulf %290, %280 : vector<32x128xf32>
    %292 = vector.broadcast %289 : vector<32x1xf32> to vector<32x128xf32>
    %293 = arith.mulf %291, %292 : vector<32x128xf32>
    %294 = vector.broadcast %274 : vector<1x128xf32> to vector<32x128xf32>
    %295 = arith.addf %293, %294 : vector<32x128xf32>
    %296 = vector.shape_cast %295 : vector<32x128xf32> to vector<4x8x128xf32>
    %c0_133 = arith.constant 0 : index
    %c0_134 = arith.constant 0 : index
    %c0_135 = arith.constant 0 : index
    %297 = vector.load %arg15[%c0_133, %c0_134, %c0_135] : memref<4x8x128xf32, #tpu.memory_space<vmem>>, vector<4x8x128xf32>
    tpu.vector_store %arg15[%c0_133, %c0_134, %c0_135], %296 {strides = array<i32>} : memref<4x8x128xf32, #tpu.memory_space<vmem>>, vector<4x8x128xf32>,
    return
  }
  func.func @transform_0(%arg0: i32) -> (i32, i32, i32) {
    %c0_i32 = arith.constant 0 : i32
    %c0_i32_0 = arith.constant 0 : i32
    %c0_i32_1 = arith.constant 0 : i32
    return %arg0, %c0_i32, %c0_i32_0 : i32, i32, i32
  }
  func.func @transform_1(%arg0: i32) -> (i32, i32, i32) {
    %c0_i32 = arith.constant 0 : i32
    %c0_i32_0 = arith.constant 0 : i32
    %c0_i32_1 = arith.constant 0 : i32
    return %arg0, %c0_i32, %c0_i32_0 : i32, i32, i32
  }
  func.func @transform_2(%arg0: i32) -> (i32, i32, i32) {
    %c0_i32 = arith.constant 0 : i32
    %c0_i32_0 = arith.constant 0 : i32
    %c0_i32_1 = arith.constant 0 : i32
    return %arg0, %c0_i32, %c0_i32_0 : i32, i32, i32
  }
  func.func @transform_3(%arg0: i32) -> (i32, i32, i32) {
    %c0_i32 = arith.constant 0 : i32
    %c0_i32_0 = arith.constant 0 : i32
    %c0_i32_1 = arith.constant 0 : i32
    return %arg0, %c0_i32, %c0_i32_0 : i32, i32, i32
  }
  func.func @transform_4(%arg0: i32) -> (i32, i32, i32) {
    %c0_i32 = arith.constant 0 : i32
    %c0_i32_0 = arith.constant 0 : i32
    %c0_i32_1 = arith.constant 0 : i32
    %c0_i32_2 = arith.constant 0 : i32
    return %c0_i32, %c0_i32_0, %c0_i32_1 : i32, i32, i32
  }
  func.func @transform_5(%arg0: i32) -> (i32, i32) {
    %c0_i32 = arith.constant 0 : i32
    %c0_i32_0 = arith.constant 0 : i32
    %c0_i32_1 = arith.constant 0 : i32
    return %c0_i32, %c0_i32_0 : i32, i32
  }
  func.func @transform_6(%arg0: i32) -> (i32, i32, i32) {
    %c0_i32 = arith.constant 0 : i32
    %c0_i32_0 = arith.constant 0 : i32
    %c0_i32_1 = arith.constant 0 : i32
    %c0_i32_2 = arith.constant 0 : i32
    return %c0_i32, %c0_i32_0, %c0_i32_1 : i32, i32, i32
  }
  func.func @transform_7(%arg0: i32) -> (i32, i32) {
    %c0_i32 = arith.constant 0 : i32
    %c0_i32_0 = arith.constant 0 : i32
    %c0_i32_1 = arith.constant 0 : i32
    return %c0_i32, %c0_i32_0 : i32, i32
  }
  func.func @transform_8(%arg0: i32) -> (i32, i32) {
    %c0_i32 = arith.constant 0 : i32
    %c0_i32_0 = arith.constant 0 : i32
    %c0_i32_1 = arith.constant 0 : i32
    return %c0_i32, %c0_i32_0 : i32, i32
  }
  func.func @transform_9(%arg0: i32) -> (i32, i32) {
    %c0_i32 = arith.constant 0 : i32
    %c0_i32_0 = arith.constant 0 : i32
    %c0_i32_1 = arith.constant 0 : i32
    return %c0_i32, %c0_i32_0 : i32, i32
  }
  func.func @transform_10(%arg0: i32) -> (i32, i32) {
    %c0_i32 = arith.constant 0 : i32
    %c0_i32_0 = arith.constant 0 : i32
    %c0_i32_1 = arith.constant 0 : i32
    return %c0_i32, %c0_i32_0 : i32, i32
  }
  func.func @transform_11(%arg0: i32) -> (i32, i32) {
    %c0_i32 = arith.constant 0 : i32
    %c0_i32_0 = arith.constant 0 : i32
    %c0_i32_1 = arith.constant 0 : i32
    return %c0_i32, %c0_i32_0 : i32, i32
  }
  func.func @transform_12(%arg0: i32) -> (i32, i32) {
    %c0_i32 = arith.constant 0 : i32
    %c0_i32_0 = arith.constant 0 : i32
    %c0_i32_1 = arith.constant 0 : i32
    return %c0_i32, %c0_i32_0 : i32, i32
  }
  func.func @transform_13(%arg0: i32) -> (i32, i32) {
    %c0_i32 = arith.constant 0 : i32
    %c0_i32_0 = arith.constant 0 : i32
    %c0_i32_1 = arith.constant 0 : i32
    return %c0_i32, %c0_i32_0 : i32, i32
  }
  func.func @transform_14(%arg0: i32) -> (i32, i32, i32) {
    %c0_i32 = arith.constant 0 : i32
    %c0_i32_0 = arith.constant 0 : i32
    %c0_i32_1 = arith.constant 0 : i32
    return %arg0, %c0_i32, %c0_i32_0 : i32, i32, i32
  }
}

</mosaic_0001>

<llo_original>
// kernel: tpu_custom_call.1
$region0: #{tpu_custom_call.1}
  #allocation0 [shape = 'u32[]', space=smem, size = 0x4, offset = 0x4, fixed_abs, tag = 'smem constant byte address 0x4 - core index']
  #allocation1 [shape = 'u32[144,128]{1,0:T(1,128)}', space=vmem, size = 0x12000, scoped, tag = 'internal scratch']
  %s0 = inlined_call_operand.hbm [shape: f32[4,8,128], index: 0, kind: input, shape index: {}]
  %s1 = inlined_call_operand.hbm [shape: f32[4,1,8], index: 1, kind: input, shape index: {}]
  %s2 = inlined_call_operand.hbm [shape: f32[4,16,128], index: 2, kind: input, shape index: {}]
  %s3 = inlined_call_operand.vmem [shape: f32[4,1,16], index: 3, kind: input, shape index: {}]
  %s4 = inlined_call_operand.hbm [shape: f32[4,128,128], index: 4, kind: input, shape index: {}]
  %s5 = inlined_call_operand.vmem [shape: f32[4,128], index: 5, kind: input, shape index: {}]
  %s6 = inlined_call_operand.hbm [shape: f32[4,128,128], index: 6, kind: input, shape index: {}]
  %s7 = inlined_call_operand.vmem [shape: f32[4,128], index: 7, kind: input, shape index: {}]
  %s8 = inlined_call_operand.hbm [shape: f32[128,256], index: 8, kind: input, shape index: {}]
  %s9 = inlined_call_operand.vmem [shape: f32[1,256], index: 9, kind: input, shape index: {}]
  %s10 = inlined_call_operand.hbm [shape: f32[256,128], index: 10, kind: input, shape index: {}]
  %s11 = inlined_call_operand.vmem [shape: f32[1,128], index: 11, kind: input, shape index: {}]
  %s12 = inlined_call_operand.vmem [shape: f32[3,128], index: 12, kind: input, shape index: {}]
  %s13 = inlined_call_operand.vmem [shape: f32[3,128], index: 13, kind: input, shape index: {}]
  %s14 = inlined_call_operand.hbm [shape: f32[4,8,128], index: 14, kind: output, shape index: {}]
  %s15 = sld [smem:[#allocation0]]
  $region94: #{tpu_custom_call.1} parent=0
    _
  %s17 = ssub.s32 1, %s15
  %s18 = scalar_select 0, %s17, %s15
  $region1: #{tpu_custom_call.1} parent=0
    #allocation2 [shape = 'u8[16384]{0}', space=vmem, size = 0x4000, scoped, tag = 'input window, operand 0, single buffered']
    #allocation3 [shape = 's32[1]{0}', space=sflag, size = 0x4, scoped, tag = 'scoped memory for tpu_custom_call.1']
    #allocation4 [shape = 's32[1]{0}', space=sflag, size = 0x4, scoped, tag = 'scoped memory for tpu_custom_call.1']
    #allocation5 [shape = 'u8[2048]{0}', space=vmem, size = 0x800, scoped, tag = 'input window, operand 1, single buffered']
    #allocation6 [shape = 's32[1]{0}', space=sflag, size = 0x4, scoped, tag = 'scoped memory for tpu_custom_call.1']
    #allocation7 [shape = 'u8[32768]{0}', space=vmem, size = 0x8000, scoped, tag = 'input window, operand 2, single buffered']
    #allocation8 [shape = 'u8[262144]{0}', space=vmem, size = 0x40000, scoped, tag = 'input window, operand 4, single buffered']
    #allocation9 [shape = 's32[1]{0}', space=sflag, size = 0x4, scoped, tag = 'scoped memory for tpu_custom_call.1']
    #allocation10 [shape = 'u8[262144]{0}', space=vmem, size = 0x40000, scoped, tag = 'input window, operand 6, single buffered']
    #allocation11 [shape = 'u8[131072]{0}', space=vmem, size = 0x20000, scoped, tag = 'input window, operand 8, single buffered']
    #allocation12 [shape = 's32[1]{0}', space=sflag, size = 0x4, scoped, tag = 'scoped memory for tpu_custom_call.1']
    #allocation13 [shape = 'u8[131072]{0}', space=vmem, size = 0x20000, scoped, tag = 'input window, operand 10, single buffered']
    #allocation14 [shape = 'u8[16384]{0}', space=vmem, size = 0x4000, scoped, tag = 'output window, operand 0, single buffered']
    %19 = vsyncpa [#allocation3], 0
    %20 = vsyncpa [#allocation6], 0
    %21 = vsyncpa [#allocation9], 0
    %22 = vsyncpa [#allocation12], 0
    %23 = vsyncpa [#allocation4], 0
    // Predicated region
    $region2: #{tpu_custom_call.1} parent=1 // pred_check
      _
    $region3: #{tpu_custom_call.1} parent=1 // pred_check_branch
      %25 = sbr.rel (0) target = $region5
    $region4: #{tpu_custom_call.1} parent=1 // pred_region
      %s27 = ssub.s32 512, 512
      %28 = vsyncadd [#allocation3], %s27
      %s29 = sshll.u32 [#allocation2], 4
      %s30 = int_to_ptr.vmem [resolvable:$true] %s29
      %35 = dma.hbm_to_vmem [thread:$0]  %s0, 512, %s30, [#allocation3], 128, 128, 8
    $region5: #{tpu_custom_call.1} parent=1 // pred_fallthru
      _
    // Predicated region
    $region6: #{tpu_custom_call.1} parent=1 // pred_check
      _
    $region7: #{tpu_custom_call.1} parent=1 // pred_check_branch
      %37 = sbr.rel (0) target = $region9
    $region8: #{tpu_custom_call.1} parent=1 // pred_region
      %s39 = ssub.s32 64, 64
      %40 = vsyncadd [#allocation6], %s39
      %s41 = sshll.u32 [#allocation5], 4
      %s42 = int_to_ptr.vmem [resolvable:$true] %s41
      %47 = dma.hbm_to_vmem [thread:$0]  %s1, 64, %s42, [#allocation6], 16, 16, 1
    $region9: #{tpu_custom_call.1} parent=1 // pred_fallthru
      _
    // Predicated region
    $region10: #{tpu_custom_call.1} parent=1 // pred_check
      _
    $region11: #{tpu_custom_call.1} parent=1 // pred_check_branch
      %49 = sbr.rel (0) target = $region13
    $region12: #{tpu_custom_call.1} parent=1 // pred_region
      %s51 = ssub.s32 1024, 1024
      %52 = vsyncadd [#allocation6], %s51
      %s53 = sshll.u32 [#allocation7], 4
      %s54 = int_to_ptr.vmem [resolvable:$true] %s53
      %59 = dma.hbm_to_vmem [thread:$0]  %s2, 1024, %s54, [#allocation6], 128, 128, 8
    $region13: #{tpu_custom_call.1} parent=1 // pred_fallthru
      _
    // Predicated region
    $region14: #{tpu_custom_call.1} parent=1 // pred_check
      _
    $region15: #{tpu_custom_call.1} parent=1 // pred_check_branch
      %61 = sbr.rel (0) target = $region17
    $region16: #{tpu_custom_call.1} parent=1 // pred_region
      _
    $region17: #{tpu_custom_call.1} parent=1 // pred_fallthru
      _
    // Predicated region
    $region18: #{tpu_custom_call.1} parent=1 // pred_check
      _
    $region19: #{tpu_custom_call.1} parent=1 // pred_check_branch
      %63 = sbr.rel (0) target = $region21
    $region20: #{tpu_custom_call.1} parent=1 // pred_region
      %s65 = ssub.s32 8192, 8192
      %66 = vsyncadd [#allocation9], %s65
      %s67 = sshll.u32 [#allocation8], 4
      %s68 = int_to_ptr.vmem [resolvable:$true] %s67
      %73 = dma.hbm_to_vmem [thread:$0]  %s4, 8192, %s68, [#allocation9], 128, 128, 8
    $region21: #{tpu_custom_call.1} parent=1 // pred_fallthru
      _
    // Predicated region
    $region22: #{tpu_custom_call.1} parent=1 // pred_check
      _
    $region23: #{tpu_custom_call.1} parent=1 // pred_check_branch
      %75 = sbr.rel (0) target = $region25
    $region24: #{tpu_custom_call.1} parent=1 // pred_region
      _
    $region25: #{tpu_custom_call.1} parent=1 // pred_fallthru
      _
    // Predicated region
    $region26: #{tpu_custom_call.1} parent=1 // pred_check
      _
    $region27: #{tpu_custom_call.1} parent=1 // pred_check_branch
      %77 = sbr.rel (0) target = $region29
    $region28: #{tpu_custom_call.1} parent=1 // pred_region
      %s79 = ssub.s32 8192, 8192
      %80 = vsyncadd [#allocation9], %s79
      %s81 = sshll.u32 [#allocation10], 4
      %s82 = int_to_ptr.vmem [resolvable:$true] %s81
      %87 = dma.hbm_to_vmem [thread:$0]  %s6, 8192, %s82, [#allocation9], 128, 128, 8
    $region29: #{tpu_custom_call.1} parent=1 // pred_fallthru
      _
    // Predicated region
    $region30: #{tpu_custom_call.1} parent=1 // pred_check
      _
    $region31: #{tpu_custom_call.1} parent=1 // pred_check_branch
      %89 = sbr.rel (0) target = $region33
    $region32: #{tpu_custom_call.1} parent=1 // pred_region
      _
    $region33: #{tpu_custom_call.1} parent=1 // pred_fallthru
      _
    // Predicated region
    $region34: #{tpu_custom_call.1} parent=1 // pred_check
      _
    $region35: #{tpu_custom_call.1} parent=1 // pred_check_branch
      %91 = sbr.rel (0) target = $region37
    $region36: #{tpu_custom_call.1} parent=1 // pred_region
      %s93 = ssub.s32 4096, 4096
      %94 = vsyncadd [#allocation12], %s93
      %s95 = sshll.u32 [#allocation11], 4
      %s96 = int_to_ptr.vmem [resolvable:$true] %s95
      %101 = dma.hbm_to_vmem [thread:$0]  %s8, 4096, %s96, [#allocation12], 256, 256, 16
    $region37: #{tpu_custom_call.1} parent=1 // pred_fallthru
      _
    // Predicated region
    $region38: #{tpu_custom_call.1} parent=1 // pred_check
      _
    $region39: #{tpu_custom_call.1} parent=1 // pred_check_branch
      %103 = sbr.rel (0) target = $region41
    $region40: #{tpu_custom_call.1} parent=1 // pred_region
      _
    $region41: #{tpu_custom_call.1} parent=1 // pred_fallthru
      _
    // Predicated region
    $region42: #{tpu_custom_call.1} parent=1 // pred_check
      _
    $region43: #{tpu_custom_call.1} parent=1 // pred_check_branch
      %105 = sbr.rel (0) target = $region45
    $region44: #{tpu_custom_call.1} parent=1 // pred_region
      %s107 = ssub.s32 4096, 4096
      %108 = vsyncadd [#allocation12], %s107
      %s109 = sshll.u32 [#allocation13], 4
      %s110 = int_to_ptr.vmem [resolvable:$true] %s109
      %115 = dma.hbm_to_vmem [thread:$0]  %s10, 4096, %s110, [#allocation12], 128, 128, 8
    $region45: #{tpu_custom_call.1} parent=1 // pred_fallthru
      _
    // Predicated region
    $region46: #{tpu_custom_call.1} parent=1 // pred_check
      _
    $region47: #{tpu_custom_call.1} parent=1 // pred_check_branch
      %117 = sbr.rel (0) target = $region49
    $region48: #{tpu_custom_call.1} parent=1 // pred_region
      _
    $region49: #{tpu_custom_call.1} parent=1 // pred_fallthru
      _
    // Predicated region
    $region50: #{tpu_custom_call.1} parent=1 // pred_check
      _
    $region51: #{tpu_custom_call.1} parent=1 // pred_check_branch
      %119 = sbr.rel (0) target = $region53
    $region52: #{tpu_custom_call.1} parent=1 // pred_region
      _
    $region53: #{tpu_custom_call.1} parent=1 // pred_fallthru
      _
    // Predicated region
    $region54: #{tpu_custom_call.1} parent=1 // pred_check
      _
    $region55: #{tpu_custom_call.1} parent=1 // pred_check_branch
      %121 = sbr.rel (0) target = $region57
    $region56: #{tpu_custom_call.1} parent=1 // pred_region
      _
    $region57: #{tpu_custom_call.1} parent=1 // pred_fallthru
      _
    // Predicated region
    $region58: #{tpu_custom_call.1} parent=1 // pred_check
      _
    $region59: #{tpu_custom_call.1} parent=1 // pred_check_branch
      %123 = sbr.rel (0) target = $region61
    $region60: #{tpu_custom_call.1} parent=1 // pred_region
      %124 = dma.done [#allocation3], 512
    $region61: #{tpu_custom_call.1} parent=1 // pred_fallthru
      _
    // Predicated region
    $region62: #{tpu_custom_call.1} parent=1 // pred_check
      _
    $region63: #{tpu_custom_call.1} parent=1 // pred_check_branch
      %126 = sbr.rel (0) target = $region65
    $region64: #{tpu_custom_call.1} parent=1 // pred_region
      %127 = dma.done [#allocation6], 64
    $region65: #{tpu_custom_call.1} parent=1 // pred_fallthru
      _
    // Predicated region
    $region66: #{tpu_custom_call.1} parent=1 // pred_check
      _
    $region67: #{tpu_custom_call.1} parent=1 // pred_check_branch
      %129 = sbr.rel (0) target = $region69
    $region68: #{tpu_custom_call.1} parent=1 // pred_region
      %130 = dma.done [#allocation6], 1024
    $region69: #{tpu_custom_call.1} parent=1 // pred_fallthru
      _
    // Predicated region
    $region70: #{tpu_custom_call.1} parent=1 // pred_check
      _
    $region71: #{tpu_custom_call.1} parent=1 // pred_check_branch
      %132 = sbr.rel (0) target = $region73
    $region72: #{tpu_custom_call.1} parent=1 // pred_region
      %133 = dma.done [#allocation9], 8192
    $region73: #{tpu_custom_call.1} parent=1 // pred_fallthru
      _
    // Predicated region
    $region74: #{tpu_custom_call.1} parent=1 // pred_check
      _
    $region75: #{tpu_custom_call.1} parent=1 // pred_check_branch
      %135 = sbr.rel (0) target = $region77
    $region76: #{tpu_custom_call.1} parent=1 // pred_region
      %136 = dma.done [#allocation9], 8192
    $region77: #{tpu_custom_call.1} parent=1 // pred_fallthru
      _
    // Predicated region
    $region78: #{tpu_custom_call.1} parent=1 // pred_check
      _
    $region79: #{tpu_custom_call.1} parent=1 // pred_check_branch
      %138 = sbr.rel (0) target = $region81
    $region80: #{tpu_custom_call.1} parent=1 // pred_region
      %139 = dma.done [#allocation12], 4096
    $region81: #{tpu_custom_call.1} parent=1 // pred_fallthru
      _
    // Predicated region
    $region82: #{tpu_custom_call.1} parent=1 // pred_check
      _
    $region83: #{tpu_custom_call.1} parent=1 // pred_check_branch
      %141 = sbr.rel (0) target = $region85
    $region84: #{tpu_custom_call.1} parent=1 // pred_region
      %142 = dma.done [#allocation12], 4096
    $region85: #{tpu_custom_call.1} parent=1 // pred_fallthru
      _
    %v143 = vld [vmem:[#allocation2] sm:$0xff]
    %v144 = vld [vmem:[#allocation2 + $0x8] sm:$0xff]
    %v145 = vld [vmem:[#allocation2 + $0x10] sm:$0xff]
    %v146 = vld [vmem:[#allocation2 + $0x18] sm:$0xff]
    %v147 = vld [vmem:[#allocation7] sm:$0xff]
    %v148 = vld [vmem:[#allocation7 + $0x8] sm:$0xff]
    %v149 = vld [vmem:[#allocation7 + $0x10] sm:$0xff]
    %v150 = vld [vmem:[#allocation7 + $0x18] sm:$0xff]
    %v151 = vld [vmem:[#allocation7 + $0x20] sm:$0xff]
    %v152 = vld [vmem:[#allocation7 + $0x28] sm:$0xff]
    %v153 = vld [vmem:[#allocation7 + $0x30] sm:$0xff]
    %v154 = vld [vmem:[#allocation7 + $0x38] sm:$0xff]
    %v155 = vld [vmem:[#allocation5] sm:$0x1]
    %v156 = vld [vmem:[#allocation5 + $0x1] sm:$0x1]
    %v157 = vld [vmem:[#allocation5 + $0x2] sm:$0x1]
    %v158 = vld [vmem:[#allocation5 + $0x3] sm:$0x1]
    %v159 = vld [vmem:[%s3] sm:$0x1]
    %v160 = vld [vmem:[%s3 + $0x1] sm:$0x1]
    %v161 = vld [vmem:[%s3 + $0x2] sm:$0x1]
    %v162 = vld [vmem:[%s3 + $0x3] sm:$0x1]
    %v163 = vld [vmem:[#allocation8] sm:$0xff]
    %v164 = vld [vmem:[#allocation8 + $0x8] sm:$0xff]
    %v165 = vld [vmem:[#allocation8 + $0x10] sm:$0xff]
    %v166 = vld [vmem:[#allocation8 + $0x18] sm:$0xff]
    %v167 = vld [vmem:[#allocation8 + $0x20] sm:$0xff]
    %v168 = vld [vmem:[#allocation8 + $0x28] sm:$0xff]
    %v169 = vld [vmem:[#allocation8 + $0x30] sm:$0xff]
    %v170 = vld [vmem:[#allocation8 + $0x38] sm:$0xff]
    %v171 = vld [vmem:[#allocation8 + $0x40] sm:$0xff]
    %v172 = vld [vmem:[#allocation8 + $0x48] sm:$0xff]
    %v173 = vld [vmem:[#allocation8 + $0x50] sm:$0xff]
    %v174 = vld [vmem:[#allocation8 + $0x58] sm:$0xff]
    %v175 = vld [vmem:[#allocation8 + $0x60] sm:$0xff]
    %v176 = vld [vmem:[#allocation8 + $0x68] sm:$0xff]
    %v177 = vld [vmem:[#allocation8 + $0x70] sm:$0xff]
    %v178 = vld [vmem:[#allocation8 + $0x78] sm:$0xff]
    %v179 = vld [vmem:[%s5] sm:$0x1]
    %v180 = vlaneseq
    %v181 = vshrl.u32 %v180, 7
    %v182 = vsub.s32 0, %v181
    %v183 = vrot.slane %v179, %v182
    %184 = vmatprep.subr.mxu0 0.0
    %185 = vmatpush1.msra.mxu0 %v163
    %186 = vmatprep.subr.mxu0 0.0
    %187 = vmatpush1.msra.mxu0 %v164
    %188 = vmatprep.subr.mxu0 0.0
    %189 = vmatpush1.msra.mxu0 %v165
    %190 = vmatprep.subr.mxu0 0.0
    %191 = vmatpush1.msra.mxu0 %v166
    %192 = vmatprep.subr.mxu0 0.0
    %193 = vmatpush1.msra.mxu0 %v167
    %194 = vmatprep.subr.mxu0 0.0
    %195 = vmatpush1.msra.mxu0 %v168
    %196 = vmatprep.subr.mxu0 0.0
    %197 = vmatpush1.msra.mxu0 %v169
    %198 = vmatprep.subr.mxu0 0.0
    %199 = vmatpush1.msra.mxu0 %v170
    %200 = vmatprep.subr.mxu0 0.0
    %201 = vmatpush1.msra.mxu0 %v171
    %202 = vmatprep.subr.mxu0 0.0
    %203 = vmatpush1.msra.mxu0 %v172
    %204 = vmatprep.subr.mxu0 0.0
    %205 = vmatpush1.msra.mxu0 %v173
    %206 = vmatprep.subr.mxu0 0.0
    %207 = vmatpush1.msra.mxu0 %v174
    %208 = vmatprep.subr.mxu0 0.0
    %209 = vmatpush1.msra.mxu0 %v175
    %210 = vmatprep.subr.mxu0 0.0
    %211 = vmatpush1.msra.mxu0 %v176
    %212 = vmatprep.subr.mxu0 0.0
    %213 = vmatpush1.msra.mxu0 %v177
    %214 = vmatprep.subr.mxu0 0.0
    %215 = vmatpush1.msra.mxu0 %v178
    %216 = vmatprep.subr.mxu0 0.0
    %217 = vmatpush1.msra.mxu0 0.0
    %218 = vmatprep.subr.mxu0 0.0
    %219 = vmatpush1.msra.mxu0 0.0
    %220 = vmatprep.subr.mxu0 0.0
    %221 = vmatpush1.msra.mxu0 0.0
    %222 = vmatprep.subr.mxu0 0.0
    %223 = vmatpush1.msra.mxu0 0.0
    %224 = vmatprep.subr.mxu0 0.0
    %225 = vmatpush1.msra.mxu0 0.0
    %226 = vmatprep.subr.mxu0 0.0
    %227 = vmatpush1.msra.mxu0 0.0
    %228 = vmatprep.subr.mxu0 0.0
    %229 = vmatpush1.msra.mxu0 0.0
    %230 = vmatprep.subr.mxu0 0.0
    %231 = vmatpush1.msra.mxu0 0.0
    %232 = vmatprep.subr.mxu0 0.0
    %233 = vmatpush1.msra.mxu0 0.0
    %234 = vmatprep.subr.mxu0 0.0
    %235 = vmatpush1.msra.mxu0 0.0
    %236 = vmatprep.subr.mxu0 0.0
    %237 = vmatpush1.msra.mxu0 0.0
    %238 = vmatprep.subr.mxu0 0.0
    %239 = vmatpush1.msra.mxu0 0.0
    %240 = vmatprep.subr.mxu0 0.0
    %241 = vmatpush1.msra.mxu0 0.0
    %242 = vmatprep.subr.mxu0 0.0
    %243 = vmatpush1.msra.mxu0 0.0
    %244 = vmatprep.subr.mxu0 0.0
    %245 = vmatpush1.msra.mxu0 0.0
    %246 = vmatprep.subr.mxu0 0.0
    %247 = vmatpush1.msra.mxu0 0.0
    %248 = vmatprep.mubr.f32.mxu0 0.0
    %249 = vmatmul.mubr.f32.gmra.mrb[0].mxu0 %v143
    %v250 = vpop.f32.mrb[0].mxu0
    %v251 = vadd.f32 %v183, %v250
    %v252 = vpop.f32.mrb[0].mxu0
    %253 = vmatprep.mubr.f32.mxu0 0.0
    %254 = vmatmul.mubr.f32.gmra.mrb[0].mxu0 %v144
    %v255 = vpop.f32.mrb[0].mxu0
    %v256 = vadd.f32 %v183, %v255
    %v257 = vpop.f32.mrb[0].mxu0
    %258 = vmatprep.mubr.f32.mxu0 0.0
    %259 = vmatmul.mubr.f32.gmra.mrb[0].mxu0 %v145
    %v260 = vpop.f32.mrb[0].mxu0
    %v261 = vadd.f32 %v183, %v260
    %v262 = vpop.f32.mrb[0].mxu0
    %263 = vmatprep.mubr.f32.mxu0 0.0
    %264 = vmatmul.mubr.f32.gmra.mrb[0].mxu0 %v146
    %v265 = vpop.f32.mrb[0].mxu0
    %v266 = vadd.f32 %v183, %v265
    %v267 = vpop.f32.mrb[0].mxu0
    %268 = vdwg.mxu0
    %s269 = scalar_lea.vmem [#allocation8], 128
    %v270 = vld [vmem:[%s269] sm:$0xff]
    %v271 = vld [vmem:[%s269 + $0x8] sm:$0xff]
    %v272 = vld [vmem:[%s269 + $0x10] sm:$0xff]
    %v273 = vld [vmem:[%s269 + $0x18] sm:$0xff]
    %v274 = vld [vmem:[%s269 + $0x20] sm:$0xff]
    %v275 = vld [vmem:[%s269 + $0x28] sm:$0xff]
    %v276 = vld [vmem:[%s269 + $0x30] sm:$0xff]
    %v277 = vld [vmem:[%s269 + $0x38] sm:$0xff]
    %v278 = vld [vmem:[%s269 + $0x40] sm:$0xff]
    %v279 = vld [vmem:[%s269 + $0x48] sm:$0xff]
    %v280 = vld [vmem:[%s269 + $0x50] sm:$0xff]
    %v281 = vld [vmem:[%s269 + $0x58] sm:$0xff]
    %v282 = vld [vmem:[%s269 + $0x60] sm:$0xff]
    %v283 = vld [vmem:[%s269 + $0x68] sm:$0xff]
    %v284 = vld [vmem:[%s269 + $0x70] sm:$0xff]
    %v285 = vld [vmem:[%s269 + $0x78] sm:$0xff]
    %v286 = vld [vmem:[%s5 + $0x1] sm:$0x1]
    %v287 = vlaneseq
    %v288 = vshrl.u32 %v287, 7
    %v289 = vsub.s32 0, %v288
    %v290 = vrot.slane %v286, %v289
    %291 = vmatprep.subr.mxu0 0.0
    %292 = vmatpush1.msra.mxu0 %v270
    %293 = vmatprep.subr.mxu0 0.0
    %294 = vmatpush1.msra.mxu0 %v271
    %295 = vmatprep.subr.mxu0 0.0
    %296 = vmatpush1.msra.mxu0 %v272
    %297 = vmatprep.subr.mxu0 0.0
    %298 = vmatpush1.msra.mxu0 %v273
    %299 = vmatprep.subr.mxu0 0.0
    %300 = vmatpush1.msra.mxu0 %v274
    %301 = vmatprep.subr.mxu0 0.0
    %302 = vmatpush1.msra.mxu0 %v275
    %303 = vmatprep.subr.mxu0 0.0
    %304 = vmatpush1.msra.mxu0 %v276
    %305 = vmatprep.subr.mxu0 0.0
    %306 = vmatpush1.msra.mxu0 %v277
    %307 = vmatprep.subr.mxu0 0.0
    %308 = vmatpush1.msra.mxu0 %v278
    %309 = vmatprep.subr.mxu0 0.0
    %310 = vmatpush1.msra.mxu0 %v279
    %311 = vmatprep.subr.mxu0 0.0
    %312 = vmatpush1.msra.mxu0 %v280
    %313 = vmatprep.subr.mxu0 0.0
    %314 = vmatpush1.msra.mxu0 %v281
    %315 = vmatprep.subr.mxu0 0.0
    %316 = vmatpush1.msra.mxu0 %v282
    %317 = vmatprep.subr.mxu0 0.0
    %318 = vmatpush1.msra.mxu0 %v283
    %319 = vmatprep.subr.mxu0 0.0
    %320 = vmatpush1.msra.mxu0 %v284
    %321 = vmatprep.subr.mxu0 0.0
    %322 = vmatpush1.msra.mxu0 %v285
    %323 = vmatprep.subr.mxu0 0.0
    %324 = vmatpush1.msra.mxu0 0.0
    %325 = vmatprep.subr.mxu0 0.0
    %326 = vmatpush1.msra.mxu0 0.0
    %327 = vmatprep.subr.mxu0 0.0
    %328 = vmatpush1.msra.mxu0 0.0
    %329 = vmatprep.subr.mxu0 0.0
    %330 = vmatpush1.msra.mxu0 0.0
    %331 = vmatprep.subr.mxu0 0.0
    %332 = vmatpush1.msra.mxu0 0.0
    %333 = vmatprep.subr.mxu0 0.0
    %334 = vmatpush1.msra.mxu0 0.0
    %335 = vmatprep.subr.mxu0 0.0
    %336 = vmatpush1.msra.mxu0 0.0
    %337 = vmatprep.subr.mxu0 0.0
    %338 = vmatpush1.msra.mxu0 0.0
    %339 = vmatprep.subr.mxu0 0.0
    %340 = vmatpush1.msra.mxu0 0.0
    %341 = vmatprep.subr.mxu0 0.0
    %342 = vmatpush1.msra.mxu0 0.0
    %343 = vmatprep.subr.mxu0 0.0
    %344 = vmatpush1.msra.mxu0 0.0
    %345 = vmatprep.subr.mxu0 0.0
    %346 = vmatpush1.msra.mxu0 0.0
    %347 = vmatprep.subr.mxu0 0.0
    %348 = vmatpush1.msra.mxu0 0.0
    %349 = vmatprep.subr.mxu0 0.0
    %350 = vmatpush1.msra.mxu0 0.0
    %351 = vmatprep.subr.mxu0 0.0
    %352 = vmatpush1.msra.mxu0 0.0
    %353 = vmatprep.subr.mxu0 0.0
    %354 = vmatpush1.msra.mxu0 0.0
    %355 = vmatprep.mubr.f32.mxu0 0.0
    %356 = vmatmul.mubr.f32.gmra.mrb[0].mxu0 %v143
    %v357 = vpop.f32.mrb[0].mxu0
    %v358 = vadd.f32 %v290, %v357
    %v359 = vpop.f32.mrb[0].mxu0
    %360 = vmatprep.mubr.f32.mxu0 0.0
    %361 = vmatmul.mubr.f32.gmra.mrb[0].mxu0 %v144
    %v362 = vpop.f32.mrb[0].mxu0
    %v363 = vadd.f32 %v290, %v362
    %v364 = vpop.f32.mrb[0].mxu0
    %365 = vmatprep.mubr.f32.mxu0 0.0
    %366 = vmatmul.mubr.f32.gmra.mrb[0].mxu0 %v145
    %v367 = vpop.f32.mrb[0].mxu0
    %v368 = vadd.f32 %v290, %v367
    %v369 = vpop.f32.mrb[0].mxu0
    %370 = vmatprep.mubr.f32.mxu0 0.0
    %371 = vmatmul.mubr.f32.gmra.mrb[0].mxu0 %v146
    %v372 = vpop.f32.mrb[0].mxu0
    %v373 = vadd.f32 %v290, %v372
    %v374 = vpop.f32.mrb[0].mxu0
    %375 = vdwg.mxu0
    %s376 = scalar_lea.vmem [#allocation8], 256
    %v377 = vld [vmem:[%s376] sm:$0xff]
    %v378 = vld [vmem:[%s376 + $0x8] sm:$0xff]
    %v379 = vld [vmem:[%s376 + $0x10] sm:$0xff]
    %v380 = vld [vmem:[%s376 + $0x18] sm:$0xff]
    %v381 = vld [vmem:[%s376 + $0x20] sm:$0xff]
    %v382 = vld [vmem:[%s376 + $0x28] sm:$0xff]
    %v383 = vld [vmem:[%s376 + $0x30] sm:$0xff]
    %v384 = vld [vmem:[%s376 + $0x38] sm:$0xff]
    %v385 = vld [vmem:[%s376 + $0x40] sm:$0xff]
    %v386 = vld [vmem:[%s376 + $0x48] sm:$0xff]
    %v387 = vld [vmem:[%s376 + $0x50] sm:$0xff]
    %v388 = vld [vmem:[%s376 + $0x58] sm:$0xff]
    %v389 = vld [vmem:[%s376 + $0x60] sm:$0xff]
    %v390 = vld [vmem:[%s376 + $0x68] sm:$0xff]
    %v391 = vld [vmem:[%s376 + $0x70] sm:$0xff]
    %v392 = vld [vmem:[%s376 + $0x78] sm:$0xff]
    %v393 = vld [vmem:[%s5 + $0x2] sm:$0x1]
    %v394 = vlaneseq
    %v395 = vshrl.u32 %v394, 7
    %v396 = vsub.s32 0, %v395
    %v397 = vrot.slane %v393, %v396
    %398 = vmatprep.subr.mxu0 0.0
    %399 = vmatpush1.msra.mxu0 %v377
    %400 = vmatprep.subr.mxu0 0.0
    %401 = vmatpush1.msra.mxu0 %v378
    %402 = vmatprep.subr.mxu0 0.0
    %403 = vmatpush1.msra.mxu0 %v379
    %404 = vmatprep.subr.mxu0 0.0
    %405 = vmatpush1.msra.mxu0 %v380
    %406 = vmatprep.subr.mxu0 0.0
    %407 = vmatpush1.msra.mxu0 %v381
    %408 = vmatprep.subr.mxu0 0.0
    %409 = vmatpush1.msra.mxu0 %v382
    %410 = vmatprep.subr.mxu0 0.0
    %411 = vmatpush1.msra.mxu0 %v383
    %412 = vmatprep.subr.mxu0 0.0
    %413 = vmatpush1.msra.mxu0 %v384
    %414 = vmatprep.subr.mxu0 0.0
    %415 = vmatpush1.msra.mxu0 %v385
    %416 = vmatprep.subr.mxu0 0.0
    %417 = vmatpush1.msra.mxu0 %v386
    %418 = vmatprep.subr.mxu0 0.0
    %419 = vmatpush1.msra.mxu0 %v387
    %420 = vmatprep.subr.mxu0 0.0
    %421 = vmatpush1.msra.mxu0 %v388
    %422 = vmatprep.subr.mxu0 0.0
    %423 = vmatpush1.msra.mxu0 %v389
    %424 = vmatprep.subr.mxu0 0.0
    %425 = vmatpush1.msra.mxu0 %v390
    %426 = vmatprep.subr.mxu0 0.0
    %427 = vmatpush1.msra.mxu0 %v391
    %428 = vmatprep.subr.mxu0 0.0
    %429 = vmatpush1.msra.mxu0 %v392
    %430 = vmatprep.subr.mxu0 0.0
    %431 = vmatpush1.msra.mxu0 0.0
    %432 = vmatprep.subr.mxu0 0.0
    %433 = vmatpush1.msra.mxu0 0.0
    %434 = vmatprep.subr.mxu0 0.0
    %435 = vmatpush1.msra.mxu0 0.0
    %436 = vmatprep.subr.mxu0 0.0
    %437 = vmatpush1.msra.mxu0 0.0
    %438 = vmatprep.subr.mxu0 0.0
    %439 = vmatpush1.msra.mxu0 0.0
    %440 = vmatprep.subr.mxu0 0.0
    %441 = vmatpush1.msra.mxu0 0.0
    %442 = vmatprep.subr.mxu0 0.0
    %443 = vmatpush1.msra.mxu0 0.0
    %444 = vmatprep.subr.mxu0 0.0
    %445 = vmatpush1.msra.mxu0 0.0
    %446 = vmatprep.subr.mxu0 0.0
    %447 = vmatpush1.msra.mxu0 0.0
    %448 = vmatprep.subr.mxu0 0.0
    %449 = vmatpush1.msra.mxu0 0.0
    %450 = vmatprep.subr.mxu0 0.0
    %451 = vmatpush1.msra.mxu0 0.0
    %452 = vmatprep.subr.mxu0 0.0
    %453 = vmatpush1.msra.mxu0 0.0
    %454 = vmatprep.subr.mxu0 0.0
    %455 = vmatpush1.msra.mxu0 0.0
    %456 = vmatprep.subr.mxu0 0.0
    %457 = vmatpush1.msra.mxu0 0.0
    %458 = vmatprep.subr.mxu0 0.0
    %459 = vmatpush1.msra.mxu0 0.0
    %460 = vmatprep.subr.mxu0 0.0
    %461 = vmatpush1.msra.mxu0 0.0
    %462 = vmatprep.mubr.f32.mxu0 0.0
    %463 = vmatmul.mubr.f32.gmra.mrb[0].mxu0 %v143
    %v464 = vpop.f32.mrb[0].mxu0
    %v465 = vadd.f32 %v397, %v464
    %v466 = vpop.f32.mrb[0].mxu0
    %467 = vmatprep.mubr.f32.mxu0 0.0
    %468 = vmatmul.mubr.f32.gmra.mrb[0].mxu0 %v144
    %v469 = vpop.f32.mrb[0].mxu0
    %v470 = vadd.f32 %v397, %v469
    %v471 = vpop.f32.mrb[0].mxu0
    %472 = vmatprep.mubr.f32.mxu0 0.0
    %473 = vmatmul.mubr.f32.gmra.mrb[0].mxu0 %v145
    %v474 = vpop.f32.mrb[0].mxu0
    %v475 = vadd.f32 %v397, %v474
    %v476 = vpop.f32.mrb[0].mxu0
    %477 = vmatprep.mubr.f32.mxu0 0.0
    %478 = vmatmul.mubr.f32.gmra.mrb[0].mxu0 %v146
    %v479 = vpop.f32.mrb[0].mxu0
    %v480 = vadd.f32 %v397, %v479
    %v481 = vpop.f32.mrb[0].mxu0
    %482 = vdwg.mxu0
    %v487 = vlaneseq
    %v488 = vshrl.u32 %v487, 7
    %v489 = vsub.s32 0, %v488
    %v490 = vrot.slane %v155, %v489
    %v491 = vlaneseq
    %v492 = vshrl.u32 %v491, 7
    %v493 = vsub.s32 0, %v492
    %v494 = vrot.slane %v156, %v493
    %v495 = vlaneseq
    %v496 = vshrl.u32 %v495, 7
    %v497 = vsub.s32 0, %v496
    %v498 = vrot.slane %v157, %v497
    %v499 = vlaneseq
    %v500 = vshrl.u32 %v499, 7
    %v501 = vsub.s32 0, %v500
    %v502 = vrot.slane %v158, %v501
    %vm507 = vcmask 261120
    %v509 = vsel %vm507, %v465, 0
    %v512 = vsel %vm507, %v358, 0
    %514 = vmatprep.subr.mxu0 0.0
    %515 = vmatpush1.xpose.msra.mxu0 %v512
    %516 = vmatprep.subr.mxu0 0.0
    %517 = vmatpush1.xpose.msra.mxu0 0.0
    %518 = vmatprep.subr.mxu0 0.0
    %519 = vmatpush1.xpose.msra.mxu0 0.0
    %520 = vmatprep.subr.mxu0 0.0
    %521 = vmatpush1.xpose.msra.mxu0 0.0
    %522 = vmatprep.subr.mxu0 0.0
    %523 = vmatpush1.xpose.msra.mxu0 0.0
    %524 = vmatprep.subr.mxu0 0.0
    %525 = vmatpush1.xpose.msra.mxu0 0.0
    %526 = vmatprep.subr.mxu0 0.0
    %527 = vmatpush1.xpose.msra.mxu0 0.0
    %528 = vmatprep.subr.mxu0 0.0
    %529 = vmatpush1.xpose.msra.mxu0 0.0
    %530 = vmatprep.subr.mxu0 0.0
    %531 = vmatpush1.xpose.msra.mxu0 0.0
    %532 = vmatprep.subr.mxu0 0.0
    %533 = vmatpush1.xpose.msra.mxu0 0.0
    %534 = vmatprep.subr.mxu0 0.0
    %535 = vmatpush1.xpose.msra.mxu0 0.0
    %536 = vmatprep.subr.mxu0 0.0
    %537 = vmatpush1.xpose.msra.mxu0 0.0
    %538 = vmatprep.subr.mxu0 0.0
    %539 = vmatpush1.xpose.msra.mxu0 0.0
    %540 = vmatprep.subr.mxu0 0.0
    %541 = vmatpush1.xpose.msra.mxu0 0.0
    %542 = vmatprep.subr.mxu0 0.0
    %543 = vmatpush1.xpose.msra.mxu0 0.0
    %544 = vmatprep.subr.mxu0 0.0
    %545 = vmatpush1.xpose.msra.mxu0 0.0
    %546 = vmatprep.subr.mxu0 0.0
    %547 = vmatpush1.xpose.msra.mxu0 0.0
    %548 = vmatprep.subr.mxu0 0.0
    %549 = vmatpush1.xpose.msra.mxu0 0.0
    %550 = vmatprep.subr.mxu0 0.0
    %551 = vmatpush1.xpose.msra.mxu0 0.0
    %552 = vmatprep.subr.mxu0 0.0
    %553 = vmatpush1.xpose.msra.mxu0 0.0
    %554 = vmatprep.subr.mxu0 0.0
    %555 = vmatpush1.xpose.msra.mxu0 0.0
    %556 = vmatprep.subr.mxu0 0.0
    %557 = vmatpush1.xpose.msra.mxu0 0.0
    %558 = vmatprep.subr.mxu0 0.0
    %559 = vmatpush1.xpose.msra.mxu0 0.0
    %560 = vmatprep.subr.mxu0 0.0
    %561 = vmatpush1.xpose.msra.mxu0 0.0
    %562 = vmatprep.subr.mxu0 0.0
    %563 = vmatpush1.xpose.msra.mxu0 0.0
    %564 = vmatprep.subr.mxu0 0.0
    %565 = vmatpush1.xpose.msra.mxu0 0.0
    %566 = vmatprep.subr.mxu0 0.0
    %567 = vmatpush1.xpose.msra.mxu0 0.0
    %568 = vmatprep.subr.mxu0 0.0
    %569 = vmatpush1.xpose.msra.mxu0 0.0
    %570 = vmatprep.subr.mxu0 0.0
    %571 = vmatpush1.xpose.msra.mxu0 0.0
    %572 = vmatprep.subr.mxu0 0.0
    %573 = vmatpush1.xpose.msra.mxu0 0.0
    %574 = vmatprep.subr.mxu0 0.0
    %575 = vmatpush1.xpose.msra.mxu0 0.0
    %576 = vmatprep.subr.mxu0 0.0
    %577 = vmatpush1.xpose.msra.mxu0 0.0
    %578 = vmatprep.mubr.f32.mxu0 0.0
    %579 = vmatmul.mubr.f32.gmra.mrb[0].mxu0 %v509
    %v580 = vpop.f32.mrb[0].mxu0
    %v581 = vadd.f32 0.0, %v580
    %v582 = vpop.f32.mrb[0].mxu0
    %583 = vdwg.mxu0
    %v585 = vsel %vm507, %v470, 0
    %v588 = vsel %vm507, %v363, 0
    %590 = vmatprep.subr.mxu0 0.0
    %591 = vmatpush1.xpose.msra.mxu0 %v588
    %592 = vmatprep.subr.mxu0 0.0
    %593 = vmatpush1.xpose.msra.mxu0 0.0
    %594 = vmatprep.subr.mxu0 0.0
    %595 = vmatpush1.xpose.msra.mxu0 0.0
    %596 = vmatprep.subr.mxu0 0.0
    %597 = vmatpush1.xpose.msra.mxu0 0.0
    %598 = vmatprep.subr.mxu0 0.0
    %599 = vmatpush1.xpose.msra.mxu0 0.0
    %600 = vmatprep.subr.mxu0 0.0
    %601 = vmatpush1.xpose.msra.mxu0 0.0
    %602 = vmatprep.subr.mxu0 0.0
    %603 = vmatpush1.xpose.msra.mxu0 0.0
    %604 = vmatprep.subr.mxu0 0.0
    %605 = vmatpush1.xpose.msra.mxu0 0.0
    %606 = vmatprep.subr.mxu0 0.0
    %607 = vmatpush1.xpose.msra.mxu0 0.0
    %608 = vmatprep.subr.mxu0 0.0
    %609 = vmatpush1.xpose.msra.mxu0 0.0
    %610 = vmatprep.subr.mxu0 0.0
    %611 = vmatpush1.xpose.msra.mxu0 0.0
    %612 = vmatprep.subr.mxu0 0.0
    %613 = vmatpush1.xpose.msra.mxu0 0.0
    %614 = vmatprep.subr.mxu0 0.0
    %615 = vmatpush1.xpose.msra.mxu0 0.0
    %616 = vmatprep.subr.mxu0 0.0
    %617 = vmatpush1.xpose.msra.mxu0 0.0
    %618 = vmatprep.subr.mxu0 0.0
    %619 = vmatpush1.xpose.msra.mxu0 0.0
    %620 = vmatprep.subr.mxu0 0.0
    %621 = vmatpush1.xpose.msra.mxu0 0.0
    %622 = vmatprep.subr.mxu0 0.0
    %623 = vmatpush1.xpose.msra.mxu0 0.0
    %624 = vmatprep.subr.mxu0 0.0
    %625 = vmatpush1.xpose.msra.mxu0 0.0
    %626 = vmatprep.subr.mxu0 0.0
    %627 = vmatpush1.xpose.msra.mxu0 0.0
    %628 = vmatprep.subr.mxu0 0.0
    %629 = vmatpush1.xpose.msra.mxu0 0.0
    %630 = vmatprep.subr.mxu0 0.0
    %631 = vmatpush1.xpose.msra.mxu0 0.0
    %632 = vmatprep.subr.mxu0 0.0
    %633 = vmatpush1.xpose.msra.mxu0 0.0
    %634 = vmatprep.subr.mxu0 0.0
    %635 = vmatpush1.xpose.msra.mxu0 0.0
    %636 = vmatprep.subr.mxu0 0.0
    %637 = vmatpush1.xpose.msra.mxu0 0.0
    %638 = vmatprep.subr.mxu0 0.0
    %639 = vmatpush1.xpose.msra.mxu0 0.0
    %640 = vmatprep.subr.mxu0 0.0
    %641 = vmatpush1.xpose.msra.mxu0 0.0
    %642 = vmatprep.subr.mxu0 0.0
    %643 = vmatpush1.xpose.msra.mxu0 0.0
    %644 = vmatprep.subr.mxu0 0.0
    %645 = vmatpush1.xpose.msra.mxu0 0.0
    %646 = vmatprep.subr.mxu0 0.0
    %647 = vmatpush1.xpose.msra.mxu0 0.0
    %648 = vmatprep.subr.mxu0 0.0
    %649 = vmatpush1.xpose.msra.mxu0 0.0
    %650 = vmatprep.subr.mxu0 0.0
    %651 = vmatpush1.xpose.msra.mxu0 0.0
    %652 = vmatprep.subr.mxu0 0.0
    %653 = vmatpush1.xpose.msra.mxu0 0.0
    %654 = vmatprep.mubr.f32.mxu0 0.0
    %655 = vmatmul.mubr.f32.gmra.mrb[0].mxu0 %v585
    %v656 = vpop.f32.mrb[0].mxu0
    %v657 = vadd.f32 0.0, %v656
    %v658 = vpop.f32.mrb[0].mxu0
    %659 = vdwg.mxu0
    %v661 = vsel %vm507, %v475, 0
    %v664 = vsel %vm507, %v368, 0
    %666 = vmatprep.subr.mxu0 0.0
    %667 = vmatpush1.xpose.msra.mxu0 %v664
    %668 = vmatprep.subr.mxu0 0.0
    %669 = vmatpush1.xpose.msra.mxu0 0.0
    %670 = vmatprep.subr.mxu0 0.0
    %671 = vmatpush1.xpose.msra.mxu0 0.0
    %672 = vmatprep.subr.mxu0 0.0
    %673 = vmatpush1.xpose.msra.mxu0 0.0
    %674 = vmatprep.subr.mxu0 0.0
    %675 = vmatpush1.xpose.msra.mxu0 0.0
    %676 = vmatprep.subr.mxu0 0.0
    %677 = vmatpush1.xpose.msra.mxu0 0.0
    %678 = vmatprep.subr.mxu0 0.0
    %679 = vmatpush1.xpose.msra.mxu0 0.0
    %680 = vmatprep.subr.mxu0 0.0
    %681 = vmatpush1.xpose.msra.mxu0 0.0
    %682 = vmatprep.subr.mxu0 0.0
    %683 = vmatpush1.xpose.msra.mxu0 0.0
    %684 = vmatprep.subr.mxu0 0.0
    %685 = vmatpush1.xpose.msra.mxu0 0.0
    %686 = vmatprep.subr.mxu0 0.0
    %687 = vmatpush1.xpose.msra.mxu0 0.0
    %688 = vmatprep.subr.mxu0 0.0
    %689 = vmatpush1.xpose.msra.mxu0 0.0
    %690 = vmatprep.subr.mxu0 0.0
    %691 = vmatpush1.xpose.msra.mxu0 0.0
    %692 = vmatprep.subr.mxu0 0.0
    %693 = vmatpush1.xpose.msra.mxu0 0.0
    %694 = vmatprep.subr.mxu0 0.0
    %695 = vmatpush1.xpose.msra.mxu0 0.0
    %696 = vmatprep.subr.mxu0 0.0
    %697 = vmatpush1.xpose.msra.mxu0 0.0
    %698 = vmatprep.subr.mxu0 0.0
    %699 = vmatpush1.xpose.msra.mxu0 0.0
    %700 = vmatprep.subr.mxu0 0.0
    %701 = vmatpush1.xpose.msra.mxu0 0.0
    %702 = vmatprep.subr.mxu0 0.0
    %703 = vmatpush1.xpose.msra.mxu0 0.0
    %704 = vmatprep.subr.mxu0 0.0
    %705 = vmatpush1.xpose.msra.mxu0 0.0
    %706 = vmatprep.subr.mxu0 0.0
    %707 = vmatpush1.xpose.msra.mxu0 0.0
    %708 = vmatprep.subr.mxu0 0.0
    %709 = vmatpush1.xpose.msra.mxu0 0.0
    %710 = vmatprep.subr.mxu0 0.0
    %711 = vmatpush1.xpose.msra.mxu0 0.0
    %712 = vmatprep.subr.mxu0 0.0
    %713 = vmatpush1.xpose.msra.mxu0 0.0
    %714 = vmatprep.subr.mxu0 0.0
    %715 = vmatpush1.xpose.msra.mxu0 0.0
    %716 = vmatprep.subr.mxu0 0.0
    %717 = vmatpush1.xpose.msra.mxu0 0.0
    %718 = vmatprep.subr.mxu0 0.0
    %719 = vmatpush1.xpose.msra.mxu0 0.0
    %720 = vmatprep.subr.mxu0 0.0
    %721 = vmatpush1.xpose.msra.mxu0 0.0
    %722 = vmatprep.subr.mxu0 0.0
    %723 = vmatpush1.xpose.msra.mxu0 0.0
    %724 = vmatprep.subr.mxu0 0.0
    %725 = vmatpush1.xpose.msra.mxu0 0.0
    %726 = vmatprep.subr.mxu0 0.0
    %727 = vmatpush1.xpose.msra.mxu0 0.0
    %728 = vmatprep.subr.mxu0 0.0
    %729 = vmatpush1.xpose.msra.mxu0 0.0
    %730 = vmatprep.mubr.f32.mxu0 0.0
    %731 = vmatmul.mubr.f32.gmra.mrb[0].mxu0 %v661
    %v732 = vpop.f32.mrb[0].mxu0
    %v733 = vadd.f32 0.0, %v732
    %v734 = vpop.f32.mrb[0].mxu0
    %735 = vdwg.mxu0
    %v737 = vsel %vm507, %v480, 0
    %v740 = vsel %vm507, %v373, 0
    %742 = vmatprep.subr.mxu0 0.0
    %743 = vmatpush1.xpose.msra.mxu0 %v740
    %744 = vmatprep.subr.mxu0 0.0
    %745 = vmatpush1.xpose.msra.mxu0 0.0
    %746 = vmatprep.subr.mxu0 0.0
    %747 = vmatpush1.xpose.msra.mxu0 0.0
    %748 = vmatprep.subr.mxu0 0.0
    %749 = vmatpush1.xpose.msra.mxu0 0.0
    %750 = vmatprep.subr.mxu0 0.0
    %751 = vmatpush1.xpose.msra.mxu0 0.0
    %752 = vmatprep.subr.mxu0 0.0
    %753 = vmatpush1.xpose.msra.mxu0 0.0
    %754 = vmatprep.subr.mxu0 0.0
    %755 = vmatpush1.xpose.msra.mxu0 0.0
    %756 = vmatprep.subr.mxu0 0.0
    %757 = vmatpush1.xpose.msra.mxu0 0.0
    %758 = vmatprep.subr.mxu0 0.0
    %759 = vmatpush1.xpose.msra.mxu0 0.0
    %760 = vmatprep.subr.mxu0 0.0
    %761 = vmatpush1.xpose.msra.mxu0 0.0
    %762 = vmatprep.subr.mxu0 0.0
    %763 = vmatpush1.xpose.msra.mxu0 0.0
    %764 = vmatprep.subr.mxu0 0.0
    %765 = vmatpush1.xpose.msra.mxu0 0.0
    %766 = vmatprep.subr.mxu0 0.0
    %767 = vmatpush1.xpose.msra.mxu0 0.0
    %768 = vmatprep.subr.mxu0 0.0
    %769 = vmatpush1.xpose.msra.mxu0 0.0
    %770 = vmatprep.subr.mxu0 0.0
    %771 = vmatpush1.xpose.msra.mxu0 0.0
    %772 = vmatprep.subr.mxu0 0.0
    %773 = vmatpush1.xpose.msra.mxu0 0.0
    %774 = vmatprep.subr.mxu0 0.0
    %775 = vmatpush1.xpose.msra.mxu0 0.0
    %776 = vmatprep.subr.mxu0 0.0
    %777 = vmatpush1.xpose.msra.mxu0 0.0
    %778 = vmatprep.subr.mxu0 0.0
    %779 = vmatpush1.xpose.msra.mxu0 0.0
    %780 = vmatprep.subr.mxu0 0.0
    %781 = vmatpush1.xpose.msra.mxu0 0.0
    %782 = vmatprep.subr.mxu0 0.0
    %783 = vmatpush1.xpose.msra.mxu0 0.0
    %784 = vmatprep.subr.mxu0 0.0
    %785 = vmatpush1.xpose.msra.mxu0 0.0
    %786 = vmatprep.subr.mxu0 0.0
    %787 = vmatpush1.xpose.msra.mxu0 0.0
    %788 = vmatprep.subr.mxu0 0.0
    %789 = vmatpush1.xpose.msra.mxu0 0.0
    %790 = vmatprep.subr.mxu0 0.0
    %791 = vmatpush1.xpose.msra.mxu0 0.0
    %792 = vmatprep.subr.mxu0 0.0
    %793 = vmatpush1.xpose.msra.mxu0 0.0
    %794 = vmatprep.subr.mxu0 0.0
    %795 = vmatpush1.xpose.msra.mxu0 0.0
    %796 = vmatprep.subr.mxu0 0.0
    %797 = vmatpush1.xpose.msra.mxu0 0.0
    %798 = vmatprep.subr.mxu0 0.0
    %799 = vmatpush1.xpose.msra.mxu0 0.0
    %800 = vmatprep.subr.mxu0 0.0
    %801 = vmatpush1.xpose.msra.mxu0 0.0
    %802 = vmatprep.subr.mxu0 0.0
    %803 = vmatpush1.xpose.msra.mxu0 0.0
    %804 = vmatprep.subr.mxu0 0.0
    %805 = vmatpush1.xpose.msra.mxu0 0.0
    %806 = vmatprep.mubr.f32.mxu0 0.0
    %807 = vmatmul.mubr.f32.gmra.mrb[0].mxu0 %v737
    %v808 = vpop.f32.mrb[0].mxu0
    %v809 = vadd.f32 0.0, %v808
    %v810 = vpop.f32.mrb[0].mxu0
    %811 = vdwg.mxu0
    %v812 = vmul.f32 %v581, 0.17677669
    %v813 = vmul.f32 %v657, 0.17677669
    %v814 = vmul.f32 %v733, 0.17677669
    %v815 = vmul.f32 %v809, 0.17677669
    %v816 = vadd.f32 %v812, %v490
    %v817 = vadd.f32 %v813, %v494
    %v818 = vadd.f32 %v814, %v498
    %v819 = vadd.f32 %v815, %v502
    %vm820 = vcmask 64512
    %v821 = vsel %vm820, %v816, -inf
    %822 = vmax.xlane.f32.xlu0 %v821
    %v823 = vpop.xlane.xlu0 %822
    %v824 = vsel %vm820, %v817, -inf
    %825 = vmax.xlane.f32.xlu0 %v824
    %v826 = vpop.xlane.xlu0 %825
    %v827 = vsel %vm820, %v818, -inf
    %828 = vmax.xlane.f32.xlu0 %v827
    %v829 = vpop.xlane.xlu0 %828
    %v830 = vsel %vm820, %v819, -inf
    %831 = vmax.xlane.f32.xlu0 %v830
    %v832 = vpop.xlane.xlu0 %831
    %v833 = vsub.f32 %v816, %v823
    %v834 = vsub.f32 %v817, %v826
    %v835 = vsub.f32 %v818, %v829
    %v836 = vsub.f32 %v819, %v832
    %v837 = vmul.f32 %v833, 1.442695
    %v838 = vpow.pop %v837
    %v839 = vmul.f32 %v834, 1.442695
    %v840 = vpow.pop %v839
    %v841 = vmul.f32 %v835, 1.442695
    %v842 = vpow.pop %v841
    %v843 = vmul.f32 %v836, 1.442695
    %v844 = vpow.pop %v843
    %v845 = vsel %vm820, %v838, 0.0
    %846 = vadd.xlane.f32.xlu0 %v845
    %v847 = vpop.xlane.xlu0 %846
    %v848 = vsel %vm820, %v840, 0.0
    %849 = vadd.xlane.f32.xlu0 %v848
    %v850 = vpop.xlane.xlu0 %849
    %v851 = vsel %vm820, %v842, 0.0
    %852 = vadd.xlane.f32.xlu0 %v851
    %v853 = vpop.xlane.xlu0 %852
    %v854 = vsel %vm820, %v844, 0.0
    %855 = vadd.xlane.f32.xlu0 %v854
    %v856 = vpop.xlane.xlu0 %855
    %v857 = vrcp.pop %v847
    %v858 = vrcp.pop %v850
    %v859 = vrcp.pop %v853
    %v860 = vrcp.pop %v856
    %v861 = vmul.f32 %v838, %v857
    %v862 = vmul.f32 %v840, %v858
    %v863 = vmul.f32 %v842, %v859
    %v864 = vmul.f32 %v844, %v860
    %v866 = vsel %vm820, %v861, 0
    %868 = vmatprep.subr.mxu0 0.0
    %869 = vmatpush1.msra.mxu0 %v251
    %870 = vmatprep.subr.mxu0 0.0
    %871 = vmatpush1.msra.mxu0 0.0
    %872 = vmatprep.subr.mxu0 0.0
    %873 = vmatpush1.msra.mxu0 0.0
    %874 = vmatprep.subr.mxu0 0.0
    %875 = vmatpush1.msra.mxu0 0.0
    %876 = vmatprep.subr.mxu0 0.0
    %877 = vmatpush1.msra.mxu0 0.0
    %878 = vmatprep.subr.mxu0 0.0
    %879 = vmatpush1.msra.mxu0 0.0
    %880 = vmatprep.subr.mxu0 0.0
    %881 = vmatpush1.msra.mxu0 0.0
    %882 = vmatprep.subr.mxu0 0.0
    %883 = vmatpush1.msra.mxu0 0.0
    %884 = vmatprep.subr.mxu0 0.0
    %885 = vmatpush1.msra.mxu0 0.0
    %886 = vmatprep.subr.mxu0 0.0
    %887 = vmatpush1.msra.mxu0 0.0
    %888 = vmatprep.subr.mxu0 0.0
    %889 = vmatpush1.msra.mxu0 0.0
    %890 = vmatprep.subr.mxu0 0.0
    %891 = vmatpush1.msra.mxu0 0.0
    %892 = vmatprep.subr.mxu0 0.0
    %893 = vmatpush1.msra.mxu0 0.0
    %894 = vmatprep.subr.mxu0 0.0
    %895 = vmatpush1.msra.mxu0 0.0
    %896 = vmatprep.subr.mxu0 0.0
    %897 = vmatpush1.msra.mxu0 0.0
    %898 = vmatprep.subr.mxu0 0.0
    %899 = vmatpush1.msra.mxu0 0.0
    %900 = vmatprep.subr.mxu0 0.0
    %901 = vmatpush1.msra.mxu0 0.0
    %902 = vmatprep.subr.mxu0 0.0
    %903 = vmatpush1.msra.mxu0 0.0
    %904 = vmatprep.subr.mxu0 0.0
    %905 = vmatpush1.msra.mxu0 0.0
    %906 = vmatprep.subr.mxu0 0.0
    %907 = vmatpush1.msra.mxu0 0.0
    %908 = vmatprep.subr.mxu0 0.0
    %909 = vmatpush1.msra.mxu0 0.0
    %910 = vmatprep.subr.mxu0 0.0
    %911 = vmatpush1.msra.mxu0 0.0
    %912 = vmatprep.subr.mxu0 0.0
    %913 = vmatpush1.msra.mxu0 0.0
    %914 = vmatprep.subr.mxu0 0.0
    %915 = vmatpush1.msra.mxu0 0.0
    %916 = vmatprep.subr.mxu0 0.0
    %917 = vmatpush1.msra.mxu0 0.0
    %918 = vmatprep.subr.mxu0 0.0
    %919 = vmatpush1.msra.mxu0 0.0
    %920 = vmatprep.subr.mxu0 0.0
    %921 = vmatpush1.msra.mxu0 0.0
    %922 = vmatprep.subr.mxu0 0.0
    %923 = vmatpush1.msra.mxu0 0.0
    %924 = vmatprep.subr.mxu0 0.0
    %925 = vmatpush1.msra.mxu0 0.0
    %926 = vmatprep.subr.mxu0 0.0
    %927 = vmatpush1.msra.mxu0 0.0
    %928 = vmatprep.subr.mxu0 0.0
    %929 = vmatpush1.msra.mxu0 0.0
    %930 = vmatprep.subr.mxu0 0.0
    %931 = vmatpush1.msra.mxu0 0.0
    %932 = vmatprep.mubr.f32.mxu0 0.0
    %933 = vmatmul.mubr.f32.gmra.mrb[0].mxu0 %v866
    %v934 = vpop.f32.mrb[0].mxu0
    %v935 = vadd.f32 0.0, %v934
    %v936 = vpop.f32.mrb[0].mxu0
    %937 = vdwg.mxu0
    %v939 = vsel %vm820, %v862, 0
    %941 = vmatprep.subr.mxu0 0.0
    %942 = vmatpush1.msra.mxu0 %v256
    %943 = vmatprep.subr.mxu0 0.0
    %944 = vmatpush1.msra.mxu0 0.0
    %945 = vmatprep.subr.mxu0 0.0
    %946 = vmatpush1.msra.mxu0 0.0
    %947 = vmatprep.subr.mxu0 0.0
    %948 = vmatpush1.msra.mxu0 0.0
    %949 = vmatprep.subr.mxu0 0.0
    %950 = vmatpush1.msra.mxu0 0.0
    %951 = vmatprep.subr.mxu0 0.0
    %952 = vmatpush1.msra.mxu0 0.0
    %953 = vmatprep.subr.mxu0 0.0
    %954 = vmatpush1.msra.mxu0 0.0
    %955 = vmatprep.subr.mxu0 0.0
    %956 = vmatpush1.msra.mxu0 0.0
    %957 = vmatprep.subr.mxu0 0.0
    %958 = vmatpush1.msra.mxu0 0.0
    %959 = vmatprep.subr.mxu0 0.0
    %960 = vmatpush1.msra.mxu0 0.0
    %961 = vmatprep.subr.mxu0 0.0
    %962 = vmatpush1.msra.mxu0 0.0
    %963 = vmatprep.subr.mxu0 0.0
    %964 = vmatpush1.msra.mxu0 0.0
    %965 = vmatprep.subr.mxu0 0.0
    %966 = vmatpush1.msra.mxu0 0.0
    %967 = vmatprep.subr.mxu0 0.0
    %968 = vmatpush1.msra.mxu0 0.0
    %969 = vmatprep.subr.mxu0 0.0
    %970 = vmatpush1.msra.mxu0 0.0
    %971 = vmatprep.subr.mxu0 0.0
    %972 = vmatpush1.msra.mxu0 0.0
    %973 = vmatprep.subr.mxu0 0.0
    %974 = vmatpush1.msra.mxu0 0.0
    %975 = vmatprep.subr.mxu0 0.0
    %976 = vmatpush1.msra.mxu0 0.0
    %977 = vmatprep.subr.mxu0 0.0
    %978 = vmatpush1.msra.mxu0 0.0
    %979 = vmatprep.subr.mxu0 0.0
    %980 = vmatpush1.msra.mxu0 0.0
    %981 = vmatprep.subr.mxu0 0.0
    %982 = vmatpush1.msra.mxu0 0.0
    %983 = vmatprep.subr.mxu0 0.0
    %984 = vmatpush1.msra.mxu0 0.0
    %985 = vmatprep.subr.mxu0 0.0
    %986 = vmatpush1.msra.mxu0 0.0
    %987 = vmatprep.subr.mxu0 0.0
    %988 = vmatpush1.msra.mxu0 0.0
    %989 = vmatprep.subr.mxu0 0.0
    %990 = vmatpush1.msra.mxu0 0.0
    %991 = vmatprep.subr.mxu0 0.0
    %992 = vmatpush1.msra.mxu0 0.0
    %993 = vmatprep.subr.mxu0 0.0
    %994 = vmatpush1.msra.mxu0 0.0
    %995 = vmatprep.subr.mxu0 0.0
    %996 = vmatpush1.msra.mxu0 0.0
    %997 = vmatprep.subr.mxu0 0.0
    %998 = vmatpush1.msra.mxu0 0.0
    %999 = vmatprep.subr.mxu0 0.0
    %1000 = vmatpush1.msra.mxu0 0.0
    %1001 = vmatprep.subr.mxu0 0.0
    %1002 = vmatpush1.msra.mxu0 0.0
    %1003 = vmatprep.subr.mxu0 0.0
    %1004 = vmatpush1.msra.mxu0 0.0
    %1005 = vmatprep.mubr.f32.mxu0 0.0
    %1006 = vmatmul.mubr.f32.gmra.mrb[0].mxu0 %v939
    %v1007 = vpop.f32.mrb[0].mxu0
    %v1008 = vadd.f32 0.0, %v1007
    %v1009 = vpop.f32.mrb[0].mxu0
    %1010 = vdwg.mxu0
    %v1012 = vsel %vm820, %v863, 0
    %1014 = vmatprep.subr.mxu0 0.0
    %1015 = vmatpush1.msra.mxu0 %v261
    %1016 = vmatprep.subr.mxu0 0.0
    %1017 = vmatpush1.msra.mxu0 0.0
    %1018 = vmatprep.subr.mxu0 0.0
    %1019 = vmatpush1.msra.mxu0 0.0
    %1020 = vmatprep.subr.mxu0 0.0
    %1021 = vmatpush1.msra.mxu0 0.0
    %1022 = vmatprep.subr.mxu0 0.0
    %1023 = vmatpush1.msra.mxu0 0.0
    %1024 = vmatprep.subr.mxu0 0.0
    %1025 = vmatpush1.msra.mxu0 0.0
    %1026 = vmatprep.subr.mxu0 0.0
    %1027 = vmatpush1.msra.mxu0 0.0
    %1028 = vmatprep.subr.mxu0 0.0
    %1029 = vmatpush1.msra.mxu0 0.0
    %1030 = vmatprep.subr.mxu0 0.0
    %1031 = vmatpush1.msra.mxu0 0.0
    %1032 = vmatprep.subr.mxu0 0.0
    %1033 = vmatpush1.msra.mxu0 0.0
    %1034 = vmatprep.subr.mxu0 0.0
    %1035 = vmatpush1.msra.mxu0 0.0
    %1036 = vmatprep.subr.mxu0 0.0
    %1037 = vmatpush1.msra.mxu0 0.0
    %1038 = vmatprep.subr.mxu0 0.0
    %1039 = vmatpush1.msra.mxu0 0.0
    %1040 = vmatprep.subr.mxu0 0.0
    %1041 = vmatpush1.msra.mxu0 0.0
    %1042 = vmatprep.subr.mxu0 0.0
    %1043 = vmatpush1.msra.mxu0 0.0
    %1044 = vmatprep.subr.mxu0 0.0
    %1045 = vmatpush1.msra.mxu0 0.0
    %1046 = vmatprep.subr.mxu0 0.0
    %1047 = vmatpush1.msra.mxu0 0.0
    %1048 = vmatprep.subr.mxu0 0.0
    %1049 = vmatpush1.msra.mxu0 0.0
    %1050 = vmatprep.subr.mxu0 0.0
    %1051 = vmatpush1.msra.mxu0 0.0
    %1052 = vmatprep.subr.mxu0 0.0
    %1053 = vmatpush1.msra.mxu0 0.0
    %1054 = vmatprep.subr.mxu0 0.0
    %1055 = vmatpush1.msra.mxu0 0.0
    %1056 = vmatprep.subr.mxu0 0.0
    %1057 = vmatpush1.msra.mxu0 0.0
    %1058 = vmatprep.subr.mxu0 0.0
    %1059 = vmatpush1.msra.mxu0 0.0
    %1060 = vmatprep.subr.mxu0 0.0
    %1061 = vmatpush1.msra.mxu0 0.0
    %1062 = vmatprep.subr.mxu0 0.0
    %1063 = vmatpush1.msra.mxu0 0.0
    %1064 = vmatprep.subr.mxu0 0.0
    %1065 = vmatpush1.msra.mxu0 0.0
    %1066 = vmatprep.subr.mxu0 0.0
    %1067 = vmatpush1.msra.mxu0 0.0
    %1068 = vmatprep.subr.mxu0 0.0
    %1069 = vmatpush1.msra.mxu0 0.0
    %1070 = vmatprep.subr.mxu0 0.0
    %1071 = vmatpush1.msra.mxu0 0.0
    %1072 = vmatprep.subr.mxu0 0.0
    %1073 = vmatpush1.msra.mxu0 0.0
    %1074 = vmatprep.subr.mxu0 0.0
    %1075 = vmatpush1.msra.mxu0 0.0
    %1076 = vmatprep.subr.mxu0 0.0
    %1077 = vmatpush1.msra.mxu0 0.0
    %1078 = vmatprep.mubr.f32.mxu0 0.0
    %1079 = vmatmul.mubr.f32.gmra.mrb[0].mxu0 %v1012
    %v1080 = vpop.f32.mrb[0].mxu0
    %v1081 = vadd.f32 0.0, %v1080
    %v1082 = vpop.f32.mrb[0].mxu0
    %1083 = vdwg.mxu0
    %v1085 = vsel %vm820, %v864, 0
    %1087 = vmatprep.subr.mxu0 0.0
    %1088 = vmatpush1.msra.mxu0 %v266
    %1089 = vmatprep.subr.mxu0 0.0
    %1090 = vmatpush1.msra.mxu0 0.0
    %1091 = vmatprep.subr.mxu0 0.0
    %1092 = vmatpush1.msra.mxu0 0.0
    %1093 = vmatprep.subr.mxu0 0.0
    %1094 = vmatpush1.msra.mxu0 0.0
    %1095 = vmatprep.subr.mxu0 0.0
    %1096 = vmatpush1.msra.mxu0 0.0
    %1097 = vmatprep.subr.mxu0 0.0
    %1098 = vmatpush1.msra.mxu0 0.0
    %1099 = vmatprep.subr.mxu0 0.0
    %1100 = vmatpush1.msra.mxu0 0.0
    %1101 = vmatprep.subr.mxu0 0.0
    %1102 = vmatpush1.msra.mxu0 0.0
    %1103 = vmatprep.subr.mxu0 0.0
    %1104 = vmatpush1.msra.mxu0 0.0
    %1105 = vmatprep.subr.mxu0 0.0
    %1106 = vmatpush1.msra.mxu0 0.0
    %1107 = vmatprep.subr.mxu0 0.0
    %1108 = vmatpush1.msra.mxu0 0.0
    %1109 = vmatprep.subr.mxu0 0.0
    %1110 = vmatpush1.msra.mxu0 0.0
    %1111 = vmatprep.subr.mxu0 0.0
    %1112 = vmatpush1.msra.mxu0 0.0
    %1113 = vmatprep.subr.mxu0 0.0
    %1114 = vmatpush1.msra.mxu0 0.0
    %1115 = vmatprep.subr.mxu0 0.0
    %1116 = vmatpush1.msra.mxu0 0.0
    %1117 = vmatprep.subr.mxu0 0.0
    %1118 = vmatpush1.msra.mxu0 0.0
    %1119 = vmatprep.subr.mxu0 0.0
    %1120 = vmatpush1.msra.mxu0 0.0
    %1121 = vmatprep.subr.mxu0 0.0
    %1122 = vmatpush1.msra.mxu0 0.0
    %1123 = vmatprep.subr.mxu0 0.0
    %1124 = vmatpush1.msra.mxu0 0.0
    %1125 = vmatprep.subr.mxu0 0.0
    %1126 = vmatpush1.msra.mxu0 0.0
    %1127 = vmatprep.subr.mxu0 0.0
    %1128 = vmatpush1.msra.mxu0 0.0
    %1129 = vmatprep.subr.mxu0 0.0
    %1130 = vmatpush1.msra.mxu0 0.0
    %1131 = vmatprep.subr.mxu0 0.0
    %1132 = vmatpush1.msra.mxu0 0.0
    %1133 = vmatprep.subr.mxu0 0.0
    %1134 = vmatpush1.msra.mxu0 0.0
    %1135 = vmatprep.subr.mxu0 0.0
    %1136 = vmatpush1.msra.mxu0 0.0
    %1137 = vmatprep.subr.mxu0 0.0
    %1138 = vmatpush1.msra.mxu0 0.0
    %1139 = vmatprep.subr.mxu0 0.0
    %1140 = vmatpush1.msra.mxu0 0.0
    %1141 = vmatprep.subr.mxu0 0.0
    %1142 = vmatpush1.msra.mxu0 0.0
    %1143 = vmatprep.subr.mxu0 0.0
    %1144 = vmatpush1.msra.mxu0 0.0
    %1145 = vmatprep.subr.mxu0 0.0
    %1146 = vmatpush1.msra.mxu0 0.0
    %1147 = vmatprep.subr.mxu0 0.0
    %1148 = vmatpush1.msra.mxu0 0.0
    %1149 = vmatprep.subr.mxu0 0.0
    %1150 = vmatpush1.msra.mxu0 0.0
    %1151 = vmatprep.mubr.f32.mxu0 0.0
    %1152 = vmatmul.mubr.f32.gmra.mrb[0].mxu0 %v1085
    %v1153 = vpop.f32.mrb[0].mxu0
    %v1154 = vadd.f32 0.0, %v1153
    %v1155 = vpop.f32.mrb[0].mxu0
    %1156 = vdwg.mxu0
    %1157 = vrot.lane.b32.xlu0 %v465, 96
    %v1158 = vpop.permute.xlu0 %1157
    %1159 = vrot.lane.b32.xlu0 %v358, 96
    %v1160 = vpop.permute.xlu0 %1159
    %v1161 = vsel %vm507, %v1158, 0
    %v1163 = vsel %vm507, %v1160, 0
    %1165 = vmatprep.subr.mxu0 0.0
    %1166 = vmatpush1.xpose.msra.mxu0 %v1163
    %1167 = vmatprep.subr.mxu0 0.0
    %1168 = vmatpush1.xpose.msra.mxu0 0.0
    %1169 = vmatprep.subr.mxu0 0.0
    %1170 = vmatpush1.xpose.msra.mxu0 0.0
    %1171 = vmatprep.subr.mxu0 0.0
    %1172 = vmatpush1.xpose.msra.mxu0 0.0
    %1173 = vmatprep.subr.mxu0 0.0
    %1174 = vmatpush1.xpose.msra.mxu0 0.0
    %1175 = vmatprep.subr.mxu0 0.0
    %1176 = vmatpush1.xpose.msra.mxu0 0.0
    %1177 = vmatprep.subr.mxu0 0.0
    %1178 = vmatpush1.xpose.msra.mxu0 0.0
    %1179 = vmatprep.subr.mxu0 0.0
    %1180 = vmatpush1.xpose.msra.mxu0 0.0
    %1181 = vmatprep.subr.mxu0 0.0
    %1182 = vmatpush1.xpose.msra.mxu0 0.0
    %1183 = vmatprep.subr.mxu0 0.0
    %1184 = vmatpush1.xpose.msra.mxu0 0.0
    %1185 = vmatprep.subr.mxu0 0.0
    %1186 = vmatpush1.xpose.msra.mxu0 0.0
    %1187 = vmatprep.subr.mxu0 0.0
    %1188 = vmatpush1.xpose.msra.mxu0 0.0
    %1189 = vmatprep.subr.mxu0 0.0
    %1190 = vmatpush1.xpose.msra.mxu0 0.0
    %1191 = vmatprep.subr.mxu0 0.0
    %1192 = vmatpush1.xpose.msra.mxu0 0.0
    %1193 = vmatprep.subr.mxu0 0.0
    %1194 = vmatpush1.xpose.msra.mxu0 0.0
    %1195 = vmatprep.subr.mxu0 0.0
    %1196 = vmatpush1.xpose.msra.mxu0 0.0
    %1197 = vmatprep.subr.mxu0 0.0
    %1198 = vmatpush1.xpose.msra.mxu0 0.0
    %1199 = vmatprep.subr.mxu0 0.0
    %1200 = vmatpush1.xpose.msra.mxu0 0.0
    %1201 = vmatprep.subr.mxu0 0.0
    %1202 = vmatpush1.xpose.msra.mxu0 0.0
    %1203 = vmatprep.subr.mxu0 0.0
    %1204 = vmatpush1.xpose.msra.mxu0 0.0
    %1205 = vmatprep.subr.mxu0 0.0
    %1206 = vmatpush1.xpose.msra.mxu0 0.0
    %1207 = vmatprep.subr.mxu0 0.0
    %1208 = vmatpush1.xpose.msra.mxu0 0.0
    %1209 = vmatprep.subr.mxu0 0.0
    %1210 = vmatpush1.xpose.msra.mxu0 0.0
    %1211 = vmatprep.subr.mxu0 0.0
    %1212 = vmatpush1.xpose.msra.mxu0 0.0
    %1213 = vmatprep.subr.mxu0 0.0
    %1214 = vmatpush1.xpose.msra.mxu0 0.0
    %1215 = vmatprep.subr.mxu0 0.0
    %1216 = vmatpush1.xpose.msra.mxu0 0.0
    %1217 = vmatprep.subr.mxu0 0.0
    %1218 = vmatpush1.xpose.msra.mxu0 0.0
    %1219 = vmatprep.subr.mxu0 0.0
    %1220 = vmatpush1.xpose.msra.mxu0 0.0
    %1221 = vmatprep.subr.mxu0 0.0
    %1222 = vmatpush1.xpose.msra.mxu0 0.0
    %1223 = vmatprep.subr.mxu0 0.0
    %1224 = vmatpush1.xpose.msra.mxu0 0.0
    %1225 = vmatprep.subr.mxu0 0.0
    %1226 = vmatpush1.xpose.msra.mxu0 0.0
    %1227 = vmatprep.subr.mxu0 0.0
    %1228 = vmatpush1.xpose.msra.mxu0 0.0
    %1229 = vmatprep.mubr.f32.mxu0 0.0
    %1230 = vmatmul.mubr.f32.gmra.mrb[0].mxu0 %v1161
    %v1231 = vpop.f32.mrb[0].mxu0
    %v1232 = vadd.f32 0.0, %v1231
    %v1233 = vpop.f32.mrb[0].mxu0
    %1234 = vdwg.mxu0
    %1235 = vrot.lane.b32.xlu0 %v470, 96
    %v1236 = vpop.permute.xlu0 %1235
    %1237 = vrot.lane.b32.xlu0 %v363, 96
    %v1238 = vpop.permute.xlu0 %1237
    %v1239 = vsel %vm507, %v1236, 0
    %v1241 = vsel %vm507, %v1238, 0
    %1243 = vmatprep.subr.mxu0 0.0
    %1244 = vmatpush1.xpose.msra.mxu0 %v1241
    %1245 = vmatprep.subr.mxu0 0.0
    %1246 = vmatpush1.xpose.msra.mxu0 0.0
    %1247 = vmatprep.subr.mxu0 0.0
    %1248 = vmatpush1.xpose.msra.mxu0 0.0
    %1249 = vmatprep.subr.mxu0 0.0
    %1250 = vmatpush1.xpose.msra.mxu0 0.0
    %1251 = vmatprep.subr.mxu0 0.0
    %1252 = vmatpush1.xpose.msra.mxu0 0.0
    %1253 = vmatprep.subr.mxu0 0.0
    %1254 = vmatpush1.xpose.msra.mxu0 0.0
    %1255 = vmatprep.subr.mxu0 0.0
    %1256 = vmatpush1.xpose.msra.mxu0 0.0
    %1257 = vmatprep.subr.mxu0 0.0
    %1258 = vmatpush1.xpose.msra.mxu0 0.0
    %1259 = vmatprep.subr.mxu0 0.0
    %1260 = vmatpush1.xpose.msra.mxu0 0.0
    %1261 = vmatprep.subr.mxu0 0.0
    %1262 = vmatpush1.xpose.msra.mxu0 0.0
    %1263 = vmatprep.subr.mxu0 0.0
    %1264 = vmatpush1.xpose.msra.mxu0 0.0
    %1265 = vmatprep.subr.mxu0 0.0
    %1266 = vmatpush1.xpose.msra.mxu0 0.0
    %1267 = vmatprep.subr.mxu0 0.0
    %1268 = vmatpush1.xpose.msra.mxu0 0.0
    %1269 = vmatprep.subr.mxu0 0.0
    %1270 = vmatpush1.xpose.msra.mxu0 0.0
    %1271 = vmatprep.subr.mxu0 0.0
    %1272 = vmatpush1.xpose.msra.mxu0 0.0
    %1273 = vmatprep.subr.mxu0 0.0
    %1274 = vmatpush1.xpose.msra.mxu0 0.0
    %1275 = vmatprep.subr.mxu0 0.0
    %1276 = vmatpush1.xpose.msra.mxu0 0.0
    %1277 = vmatprep.subr.mxu0 0.0
    %1278 = vmatpush1.xpose.msra.mxu0 0.0
    %1279 = vmatprep.subr.mxu0 0.0
    %1280 = vmatpush1.xpose.msra.mxu0 0.0
    %1281 = vmatprep.subr.mxu0 0.0
    %1282 = vmatpush1.xpose.msra.mxu0 0.0
    %1283 = vmatprep.subr.mxu0 0.0
    %1284 = vmatpush1.xpose.msra.mxu0 0.0
    %1285 = vmatprep.subr.mxu0 0.0
    %1286 = vmatpush1.xpose.msra.mxu0 0.0
    %1287 = vmatprep.subr.mxu0 0.0
    %1288 = vmatpush1.xpose.msra.mxu0 0.0
    %1289 = vmatprep.subr.mxu0 0.0
    %1290 = vmatpush1.xpose.msra.mxu0 0.0
    %1291 = vmatprep.subr.mxu0 0.0
    %1292 = vmatpush1.xpose.msra.mxu0 0.0
    %1293 = vmatprep.subr.mxu0 0.0
    %1294 = vmatpush1.xpose.msra.mxu0 0.0
    %1295 = vmatprep.subr.mxu0 0.0
    %1296 = vmatpush1.xpose.msra.mxu0 0.0
    %1297 = vmatprep.subr.mxu0 0.0
    %1298 = vmatpush1.xpose.msra.mxu0 0.0
    %1299 = vmatprep.subr.mxu0 0.0
    %1300 = vmatpush1.xpose.msra.mxu0 0.0
    %1301 = vmatprep.subr.mxu0 0.0
    %1302 = vmatpush1.xpose.msra.mxu0 0.0
    %1303 = vmatprep.subr.mxu0 0.0
    %1304 = vmatpush1.xpose.msra.mxu0 0.0
    %1305 = vmatprep.subr.mxu0 0.0
    %1306 = vmatpush1.xpose.msra.mxu0 0.0
    %1307 = vmatprep.mubr.f32.mxu0 0.0
    %1308 = vmatmul.mubr.f32.gmra.mrb[0].mxu0 %v1239
    %v1309 = vpop.f32.mrb[0].mxu0
    %v1310 = vadd.f32 0.0, %v1309
    %v1311 = vpop.f32.mrb[0].mxu0
    %1312 = vdwg.mxu0
    %1313 = vrot.lane.b32.xlu0 %v475, 96
    %v1314 = vpop.permute.xlu0 %1313
    %1315 = vrot.lane.b32.xlu0 %v368, 96
    %v1316 = vpop.permute.xlu0 %1315
    %v1317 = vsel %vm507, %v1314, 0
    %v1319 = vsel %vm507, %v1316, 0
    %1321 = vmatprep.subr.mxu0 0.0
    %1322 = vmatpush1.xpose.msra.mxu0 %v1319
    %1323 = vmatprep.subr.mxu0 0.0
    %1324 = vmatpush1.xpose.msra.mxu0 0.0
    %1325 = vmatprep.subr.mxu0 0.0
    %1326 = vmatpush1.xpose.msra.mxu0 0.0
    %1327 = vmatprep.subr.mxu0 0.0
    %1328 = vmatpush1.xpose.msra.mxu0 0.0
    %1329 = vmatprep.subr.mxu0 0.0
    %1330 = vmatpush1.xpose.msra.mxu0 0.0
    %1331 = vmatprep.subr.mxu0 0.0
    %1332 = vmatpush1.xpose.msra.mxu0 0.0
    %1333 = vmatprep.subr.mxu0 0.0
    %1334 = vmatpush1.xpose.msra.mxu0 0.0
    %1335 = vmatprep.subr.mxu0 0.0
    %1336 = vmatpush1.xpose.msra.mxu0 0.0
    %1337 = vmatprep.subr.mxu0 0.0
    %1338 = vmatpush1.xpose.msra.mxu0 0.0
    %1339 = vmatprep.subr.mxu0 0.0
    %1340 = vmatpush1.xpose.msra.mxu0 0.0
    %1341 = vmatprep.subr.mxu0 0.0
    %1342 = vmatpush1.xpose.msra.mxu0 0.0
    %1343 = vmatprep.subr.mxu0 0.0
    %1344 = vmatpush1.xpose.msra.mxu0 0.0
    %1345 = vmatprep.subr.mxu0 0.0
    %1346 = vmatpush1.xpose.msra.mxu0 0.0
    %1347 = vmatprep.subr.mxu0 0.0
    %1348 = vmatpush1.xpose.msra.mxu0 0.0
    %1349 = vmatprep.subr.mxu0 0.0
    %1350 = vmatpush1.xpose.msra.mxu0 0.0
    %1351 = vmatprep.subr.mxu0 0.0
    %1352 = vmatpush1.xpose.msra.mxu0 0.0
    %1353 = vmatprep.subr.mxu0 0.0
    %1354 = vmatpush1.xpose.msra.mxu0 0.0
    %1355 = vmatprep.subr.mxu0 0.0
    %1356 = vmatpush1.xpose.msra.mxu0 0.0
    %1357 = vmatprep.subr.mxu0 0.0
    %1358 = vmatpush1.xpose.msra.mxu0 0.0
    %1359 = vmatprep.subr.mxu0 0.0
    %1360 = vmatpush1.xpose.msra.mxu0 0.0
    %1361 = vmatprep.subr.mxu0 0.0
    %1362 = vmatpush1.xpose.msra.mxu0 0.0
    %1363 = vmatprep.subr.mxu0 0.0
    %1364 = vmatpush1.xpose.msra.mxu0 0.0
    %1365 = vmatprep.subr.mxu0 0.0
    %1366 = vmatpush1.xpose.msra.mxu0 0.0
    %1367 = vmatprep.subr.mxu0 0.0
    %1368 = vmatpush1.xpose.msra.mxu0 0.0
    %1369 = vmatprep.subr.mxu0 0.0
    %1370 = vmatpush1.xpose.msra.mxu0 0.0
    %1371 = vmatprep.subr.mxu0 0.0
    %1372 = vmatpush1.xpose.msra.mxu0 0.0
    %1373 = vmatprep.subr.mxu0 0.0
    %1374 = vmatpush1.xpose.msra.mxu0 0.0
    %1375 = vmatprep.subr.mxu0 0.0
    %1376 = vmatpush1.xpose.msra.mxu0 0.0
    %1377 = vmatprep.subr.mxu0 0.0
    %1378 = vmatpush1.xpose.msra.mxu0 0.0
    %1379 = vmatprep.subr.mxu0 0.0
    %1380 = vmatpush1.xpose.msra.mxu0 0.0
    %1381 = vmatprep.subr.mxu0 0.0
    %1382 = vmatpush1.xpose.msra.mxu0 0.0
    %1383 = vmatprep.subr.mxu0 0.0
    %1384 = vmatpush1.xpose.msra.mxu0 0.0
    %1385 = vmatprep.mubr.f32.mxu0 0.0
    %1386 = vmatmul.mubr.f32.gmra.mrb[0].mxu0 %v1317
    %v1387 = vpop.f32.mrb[0].mxu0
    %v1388 = vadd.f32 0.0, %v1387
    %v1389 = vpop.f32.mrb[0].mxu0
    %1390 = vdwg.mxu0
    %1391 = vrot.lane.b32.xlu0 %v480, 96
    %v1392 = vpop.permute.xlu0 %1391
    %1393 = vrot.lane.b32.xlu0 %v373, 96
    %v1394 = vpop.permute.xlu0 %1393
    %v1395 = vsel %vm507, %v1392, 0
    %v1397 = vsel %vm507, %v1394, 0
    %1399 = vmatprep.subr.mxu0 0.0
    %1400 = vmatpush1.xpose.msra.mxu0 %v1397
    %1401 = vmatprep.subr.mxu0 0.0
    %1402 = vmatpush1.xpose.msra.mxu0 0.0
    %1403 = vmatprep.subr.mxu0 0.0
    %1404 = vmatpush1.xpose.msra.mxu0 0.0
    %1405 = vmatprep.subr.mxu0 0.0
    %1406 = vmatpush1.xpose.msra.mxu0 0.0
    %1407 = vmatprep.subr.mxu0 0.0
    %1408 = vmatpush1.xpose.msra.mxu0 0.0
    %1409 = vmatprep.subr.mxu0 0.0
    %1410 = vmatpush1.xpose.msra.mxu0 0.0
    %1411 = vmatprep.subr.mxu0 0.0
    %1412 = vmatpush1.xpose.msra.mxu0 0.0
    %1413 = vmatprep.subr.mxu0 0.0
    %1414 = vmatpush1.xpose.msra.mxu0 0.0
    %1415 = vmatprep.subr.mxu0 0.0
    %1416 = vmatpush1.xpose.msra.mxu0 0.0
    %1417 = vmatprep.subr.mxu0 0.0
    %1418 = vmatpush1.xpose.msra.mxu0 0.0
    %1419 = vmatprep.subr.mxu0 0.0
    %1420 = vmatpush1.xpose.msra.mxu0 0.0
    %1421 = vmatprep.subr.mxu0 0.0
    %1422 = vmatpush1.xpose.msra.mxu0 0.0
    %1423 = vmatprep.subr.mxu0 0.0
    %1424 = vmatpush1.xpose.msra.mxu0 0.0
    %1425 = vmatprep.subr.mxu0 0.0
    %1426 = vmatpush1.xpose.msra.mxu0 0.0
    %1427 = vmatprep.subr.mxu0 0.0
    %1428 = vmatpush1.xpose.msra.mxu0 0.0
    %1429 = vmatprep.subr.mxu0 0.0
    %1430 = vmatpush1.xpose.msra.mxu0 0.0
    %1431 = vmatprep.subr.mxu0 0.0
    %1432 = vmatpush1.xpose.msra.mxu0 0.0
    %1433 = vmatprep.subr.mxu0 0.0
    %1434 = vmatpush1.xpose.msra.mxu0 0.0
    %1435 = vmatprep.subr.mxu0 0.0
    %1436 = vmatpush1.xpose.msra.mxu0 0.0
    %1437 = vmatprep.subr.mxu0 0.0
    %1438 = vmatpush1.xpose.msra.mxu0 0.0
    %1439 = vmatprep.subr.mxu0 0.0
    %1440 = vmatpush1.xpose.msra.mxu0 0.0
    %1441 = vmatprep.subr.mxu0 0.0
    %1442 = vmatpush1.xpose.msra.mxu0 0.0
    %1443 = vmatprep.subr.mxu0 0.0
    %1444 = vmatpush1.xpose.msra.mxu0 0.0
    %1445 = vmatprep.subr.mxu0 0.0
    %1446 = vmatpush1.xpose.msra.mxu0 0.0
    %1447 = vmatprep.subr.mxu0 0.0
    %1448 = vmatpush1.xpose.msra.mxu0 0.0
    %1449 = vmatprep.subr.mxu0 0.0
    %1450 = vmatpush1.xpose.msra.mxu0 0.0
    %1451 = vmatprep.subr.mxu0 0.0
    %1452 = vmatpush1.xpose.msra.mxu0 0.0
    %1453 = vmatprep.subr.mxu0 0.0
    %1454 = vmatpush1.xpose.msra.mxu0 0.0
    %1455 = vmatprep.subr.mxu0 0.0
    %1456 = vmatpush1.xpose.msra.mxu0 0.0
    %1457 = vmatprep.subr.mxu0 0.0
    %1458 = vmatpush1.xpose.msra.mxu0 0.0
    %1459 = vmatprep.subr.mxu0 0.0
    %1460 = vmatpush1.xpose.msra.mxu0 0.0
    %1461 = vmatprep.subr.mxu0 0.0
    %1462 = vmatpush1.xpose.msra.mxu0 0.0
    %1463 = vmatprep.mubr.f32.mxu0 0.0
    %1464 = vmatmul.mubr.f32.gmra.mrb[0].mxu0 %v1395
    %v1465 = vpop.f32.mrb[0].mxu0
    %v1466 = vadd.f32 0.0, %v1465
    %v1467 = vpop.f32.mrb[0].mxu0
    %1468 = vdwg.mxu0
    %v1469 = vmul.f32 %v1232, 0.17677669
    %v1470 = vmul.f32 %v1310, 0.17677669
    %v1471 = vmul.f32 %v1388, 0.17677669
    %v1472 = vmul.f32 %v1466, 0.17677669
    %v1473 = vadd.f32 %v1469, %v490
    %v1474 = vadd.f32 %v1470, %v494
    %v1475 = vadd.f32 %v1471, %v498
    %v1476 = vadd.f32 %v1472, %v502
    %v1477 = vsel %vm820, %v1473, -inf
    %1478 = vmax.xlane.f32.xlu0 %v1477
    %v1479 = vpop.xlane.xlu0 %1478
    %v1480 = vsel %vm820, %v1474, -inf
    %1481 = vmax.xlane.f32.xlu0 %v1480
    %v1482 = vpop.xlane.xlu0 %1481
    %v1483 = vsel %vm820, %v1475, -inf
    %1484 = vmax.xlane.f32.xlu0 %v1483
    %v1485 = vpop.xlane.xlu0 %1484
    %v1486 = vsel %vm820, %v1476, -inf
    %1487 = vmax.xlane.f32.xlu0 %v1486
    %v1488 = vpop.xlane.xlu0 %1487
    %v1489 = vsub.f32 %v1473, %v1479
    %v1490 = vsub.f32 %v1474, %v1482
    %v1491 = vsub.f32 %v1475, %v1485
    %v1492 = vsub.f32 %v1476, %v1488
    %v1493 = vmul.f32 %v1489, 1.442695
    %v1494 = vpow.pop %v1493
    %v1495 = vmul.f32 %v1490, 1.442695
    %v1496 = vpow.pop %v1495
    %v1497 = vmul.f32 %v1491, 1.442695
    %v1498 = vpow.pop %v1497
    %v1499 = vmul.f32 %v1492, 1.442695
    %v1500 = vpow.pop %v1499
    %v1501 = vsel %vm820, %v1494, 0.0
    %1502 = vadd.xlane.f32.xlu0 %v1501
    %v1503 = vpop.xlane.xlu0 %1502
    %v1504 = vsel %vm820, %v1496, 0.0
    %1505 = vadd.xlane.f32.xlu0 %v1504
    %v1506 = vpop.xlane.xlu0 %1505
    %v1507 = vsel %vm820, %v1498, 0.0
    %1508 = vadd.xlane.f32.xlu0 %v1507
    %v1509 = vpop.xlane.xlu0 %1508
    %v1510 = vsel %vm820, %v1500, 0.0
    %1511 = vadd.xlane.f32.xlu0 %v1510
    %v1512 = vpop.xlane.xlu0 %1511
    %v1513 = vrcp.pop %v1503
    %v1514 = vrcp.pop %v1506
    %v1515 = vrcp.pop %v1509
    %v1516 = vrcp.pop %v1512
    %v1517 = vmul.f32 %v1494, %v1513
    %v1518 = vmul.f32 %v1496, %v1514
    %v1519 = vmul.f32 %v1498, %v1515
    %v1520 = vmul.f32 %v1500, %v1516
    %1522 = vrot.lane.b32.xlu0 %v251, 96
    %v1523 = vpop.permute.xlu0 %1522
    %v1526 = vsel %vm820, %v1517, 0
    %1528 = vmatprep.subr.mxu0 0.0
    %1529 = vmatpush1.msra.mxu0 %v1523
    %1530 = vmatprep.subr.mxu0 0.0
    %1531 = vmatpush1.msra.mxu0 0.0
    %1532 = vmatprep.subr.mxu0 0.0
    %1533 = vmatpush1.msra.mxu0 0.0
    %1534 = vmatprep.subr.mxu0 0.0
    %1535 = vmatpush1.msra.mxu0 0.0
    %1536 = vmatprep.subr.mxu0 0.0
    %1537 = vmatpush1.msra.mxu0 0.0
    %1538 = vmatprep.subr.mxu0 0.0
    %1539 = vmatpush1.msra.mxu0 0.0
    %1540 = vmatprep.subr.mxu0 0.0
    %1541 = vmatpush1.msra.mxu0 0.0
    %1542 = vmatprep.subr.mxu0 0.0
    %1543 = vmatpush1.msra.mxu0 0.0
    %1544 = vmatprep.subr.mxu0 0.0
    %1545 = vmatpush1.msra.mxu0 0.0
    %1546 = vmatprep.subr.mxu0 0.0
    %1547 = vmatpush1.msra.mxu0 0.0
    %1548 = vmatprep.subr.mxu0 0.0
    %1549 = vmatpush1.msra.mxu0 0.0
    %1550 = vmatprep.subr.mxu0 0.0
    %1551 = vmatpush1.msra.mxu0 0.0
    %1552 = vmatprep.subr.mxu0 0.0
    %1553 = vmatpush1.msra.mxu0 0.0
    %1554 = vmatprep.subr.mxu0 0.0
    %1555 = vmatpush1.msra.mxu0 0.0
    %1556 = vmatprep.subr.mxu0 0.0
    %1557 = vmatpush1.msra.mxu0 0.0
    %1558 = vmatprep.subr.mxu0 0.0
    %1559 = vmatpush1.msra.mxu0 0.0
    %1560 = vmatprep.subr.mxu0 0.0
    %1561 = vmatpush1.msra.mxu0 0.0
    %1562 = vmatprep.subr.mxu0 0.0
    %1563 = vmatpush1.msra.mxu0 0.0
    %1564 = vmatprep.subr.mxu0 0.0
    %1565 = vmatpush1.msra.mxu0 0.0
    %1566 = vmatprep.subr.mxu0 0.0
    %1567 = vmatpush1.msra.mxu0 0.0
    %1568 = vmatprep.subr.mxu0 0.0
    %1569 = vmatpush1.msra.mxu0 0.0
    %1570 = vmatprep.subr.mxu0 0.0
    %1571 = vmatpush1.msra.mxu0 0.0
    %1572 = vmatprep.subr.mxu0 0.0
    %1573 = vmatpush1.msra.mxu0 0.0
    %1574 = vmatprep.subr.mxu0 0.0
    %1575 = vmatpush1.msra.mxu0 0.0
    %1576 = vmatprep.subr.mxu0 0.0
    %1577 = vmatpush1.msra.mxu0 0.0
    %1578 = vmatprep.subr.mxu0 0.0
    %1579 = vmatpush1.msra.mxu0 0.0
    %1580 = vmatprep.subr.mxu0 0.0
    %1581 = vmatpush1.msra.mxu0 0.0
    %1582 = vmatprep.subr.mxu0 0.0
    %1583 = vmatpush1.msra.mxu0 0.0
    %1584 = vmatprep.subr.mxu0 0.0
    %1585 = vmatpush1.msra.mxu0 0.0
    %1586 = vmatprep.subr.mxu0 0.0
    %1587 = vmatpush1.msra.mxu0 0.0
    %1588 = vmatprep.subr.mxu0 0.0
    %1589 = vmatpush1.msra.mxu0 0.0
    %1590 = vmatprep.subr.mxu0 0.0
    %1591 = vmatpush1.msra.mxu0 0.0
    %1592 = vmatprep.mubr.f32.mxu0 0.0
    %1593 = vmatmul.mubr.f32.gmra.mrb[0].mxu0 %v1526
    %v1594 = vpop.f32.mrb[0].mxu0
    %v1595 = vadd.f32 0.0, %v1594
    %v1596 = vpop.f32.mrb[0].mxu0
    %1597 = vdwg.mxu0
    %1599 = vrot.lane.b32.xlu0 %v256, 96
    %v1600 = vpop.permute.xlu0 %1599
    %v1603 = vsel %vm820, %v1518, 0
    %1605 = vmatprep.subr.mxu0 0.0
    %1606 = vmatpush1.msra.mxu0 %v1600
    %1607 = vmatprep.subr.mxu0 0.0
    %1608 = vmatpush1.msra.mxu0 0.0
    %1609 = vmatprep.subr.mxu0 0.0
    %1610 = vmatpush1.msra.mxu0 0.0
    %1611 = vmatprep.subr.mxu0 0.0
    %1612 = vmatpush1.msra.mxu0 0.0
    %1613 = vmatprep.subr.mxu0 0.0
    %1614 = vmatpush1.msra.mxu0 0.0
    %1615 = vmatprep.subr.mxu0 0.0
    %1616 = vmatpush1.msra.mxu0 0.0
    %1617 = vmatprep.subr.mxu0 0.0
    %1618 = vmatpush1.msra.mxu0 0.0
    %1619 = vmatprep.subr.mxu0 0.0
    %1620 = vmatpush1.msra.mxu0 0.0
    %1621 = vmatprep.subr.mxu0 0.0
    %1622 = vmatpush1.msra.mxu0 0.0
    %1623 = vmatprep.subr.mxu0 0.0
    %1624 = vmatpush1.msra.mxu0 0.0
    %1625 = vmatprep.subr.mxu0 0.0
    %1626 = vmatpush1.msra.mxu0 0.0
    %1627 = vmatprep.subr.mxu0 0.0
    %1628 = vmatpush1.msra.mxu0 0.0
    %1629 = vmatprep.subr.mxu0 0.0
    %1630 = vmatpush1.msra.mxu0 0.0
    %1631 = vmatprep.subr.mxu0 0.0
    %1632 = vmatpush1.msra.mxu0 0.0
    %1633 = vmatprep.subr.mxu0 0.0
    %1634 = vmatpush1.msra.mxu0 0.0
    %1635 = vmatprep.subr.mxu0 0.0
    %1636 = vmatpush1.msra.mxu0 0.0
    %1637 = vmatprep.subr.mxu0 0.0
    %1638 = vmatpush1.msra.mxu0 0.0
    %1639 = vmatprep.subr.mxu0 0.0
    %1640 = vmatpush1.msra.mxu0 0.0
    %1641 = vmatprep.subr.mxu0 0.0
    %1642 = vmatpush1.msra.mxu0 0.0
    %1643 = vmatprep.subr.mxu0 0.0
    %1644 = vmatpush1.msra.mxu0 0.0
    %1645 = vmatprep.subr.mxu0 0.0
    %1646 = vmatpush1.msra.mxu0 0.0
    %1647 = vmatprep.subr.mxu0 0.0
    %1648 = vmatpush1.msra.mxu0 0.0
    %1649 = vmatprep.subr.mxu0 0.0
    %1650 = vmatpush1.msra.mxu0 0.0
    %1651 = vmatprep.subr.mxu0 0.0
    %1652 = vmatpush1.msra.mxu0 0.0
    %1653 = vmatprep.subr.mxu0 0.0
    %1654 = vmatpush1.msra.mxu0 0.0
    %1655 = vmatprep.subr.mxu0 0.0
    %1656 = vmatpush1.msra.mxu0 0.0
    %1657 = vmatprep.subr.mxu0 0.0
    %1658 = vmatpush1.msra.mxu0 0.0
    %1659 = vmatprep.subr.mxu0 0.0
    %1660 = vmatpush1.msra.mxu0 0.0
    %1661 = vmatprep.subr.mxu0 0.0
    %1662 = vmatpush1.msra.mxu0 0.0
    %1663 = vmatprep.subr.mxu0 0.0
    %1664 = vmatpush1.msra.mxu0 0.0
    %1665 = vmatprep.subr.mxu0 0.0
    %1666 = vmatpush1.msra.mxu0 0.0
    %1667 = vmatprep.subr.mxu0 0.0
    %1668 = vmatpush1.msra.mxu0 0.0
    %1669 = vmatprep.mubr.f32.mxu0 0.0
    %1670 = vmatmul.mubr.f32.gmra.mrb[0].mxu0 %v1603
    %v1671 = vpop.f32.mrb[0].mxu0
    %v1672 = vadd.f32 0.0, %v1671
    %v1673 = vpop.f32.mrb[0].mxu0
    %1674 = vdwg.mxu0
    %1676 = vrot.lane.b32.xlu0 %v261, 96
    %v1677 = vpop.permute.xlu0 %1676
    %v1680 = vsel %vm820, %v1519, 0
    %1682 = vmatprep.subr.mxu0 0.0
    %1683 = vmatpush1.msra.mxu0 %v1677
    %1684 = vmatprep.subr.mxu0 0.0
    %1685 = vmatpush1.msra.mxu0 0.0
    %1686 = vmatprep.subr.mxu0 0.0
    %1687 = vmatpush1.msra.mxu0 0.0
    %1688 = vmatprep.subr.mxu0 0.0
    %1689 = vmatpush1.msra.mxu0 0.0
    %1690 = vmatprep.subr.mxu0 0.0
    %1691 = vmatpush1.msra.mxu0 0.0
    %1692 = vmatprep.subr.mxu0 0.0
    %1693 = vmatpush1.msra.mxu0 0.0
    %1694 = vmatprep.subr.mxu0 0.0
    %1695 = vmatpush1.msra.mxu0 0.0
    %1696 = vmatprep.subr.mxu0 0.0
    %1697 = vmatpush1.msra.mxu0 0.0
    %1698 = vmatprep.subr.mxu0 0.0
    %1699 = vmatpush1.msra.mxu0 0.0
    %1700 = vmatprep.subr.mxu0 0.0
    %1701 = vmatpush1.msra.mxu0 0.0
    %1702 = vmatprep.subr.mxu0 0.0
    %1703 = vmatpush1.msra.mxu0 0.0
    %1704 = vmatprep.subr.mxu0 0.0
    %1705 = vmatpush1.msra.mxu0 0.0
    %1706 = vmatprep.subr.mxu0 0.0
    %1707 = vmatpush1.msra.mxu0 0.0
    %1708 = vmatprep.subr.mxu0 0.0
    %1709 = vmatpush1.msra.mxu0 0.0
    %1710 = vmatprep.subr.mxu0 0.0
    %1711 = vmatpush1.msra.mxu0 0.0
    %1712 = vmatprep.subr.mxu0 0.0
    %1713 = vmatpush1.msra.mxu0 0.0
    %1714 = vmatprep.subr.mxu0 0.0
    %1715 = vmatpush1.msra.mxu0 0.0
    %1716 = vmatprep.subr.mxu0 0.0
    %1717 = vmatpush1.msra.mxu0 0.0
    %1718 = vmatprep.subr.mxu0 0.0
    %1719 = vmatpush1.msra.mxu0 0.0
    %1720 = vmatprep.subr.mxu0 0.0
    %1721 = vmatpush1.msra.mxu0 0.0
    %1722 = vmatprep.subr.mxu0 0.0
    %1723 = vmatpush1.msra.mxu0 0.0
    %1724 = vmatprep.subr.mxu0 0.0
    %1725 = vmatpush1.msra.mxu0 0.0
    %1726 = vmatprep.subr.mxu0 0.0
    %1727 = vmatpush1.msra.mxu0 0.0
    %1728 = vmatprep.subr.mxu0 0.0
    %1729 = vmatpush1.msra.mxu0 0.0
    %1730 = vmatprep.subr.mxu0 0.0
    %1731 = vmatpush1.msra.mxu0 0.0
    %1732 = vmatprep.subr.mxu0 0.0
    %1733 = vmatpush1.msra.mxu0 0.0
    %1734 = vmatprep.subr.mxu0 0.0
    %1735 = vmatpush1.msra.mxu0 0.0
    %1736 = vmatprep.subr.mxu0 0.0
    %1737 = vmatpush1.msra.mxu0 0.0
    %1738 = vmatprep.subr.mxu0 0.0
    %1739 = vmatpush1.msra.mxu0 0.0
    %1740 = vmatprep.subr.mxu0 0.0
    %1741 = vmatpush1.msra.mxu0 0.0
    %1742 = vmatprep.subr.mxu0 0.0
    %1743 = vmatpush1.msra.mxu0 0.0
    %1744 = vmatprep.subr.mxu0 0.0
    %1745 = vmatpush1.msra.mxu0 0.0
    %1746 = vmatprep.mubr.f32.mxu0 0.0
    %1747 = vmatmul.mubr.f32.gmra.mrb[0].mxu0 %v1680
    %v1748 = vpop.f32.mrb[0].mxu0
    %v1749 = vadd.f32 0.0, %v1748
    %v1750 = vpop.f32.mrb[0].mxu0
    %1751 = vdwg.mxu0
    %1753 = vrot.lane.b32.xlu0 %v266, 96
    %v1754 = vpop.permute.xlu0 %1753
    %v1757 = vsel %vm820, %v1520, 0
    %1759 = vmatprep.subr.mxu0 0.0
    %1760 = vmatpush1.msra.mxu0 %v1754
    %1761 = vmatprep.subr.mxu0 0.0
    %1762 = vmatpush1.msra.mxu0 0.0
    %1763 = vmatprep.subr.mxu0 0.0
    %1764 = vmatpush1.msra.mxu0 0.0
    %1765 = vmatprep.subr.mxu0 0.0
    %1766 = vmatpush1.msra.mxu0 0.0
    %1767 = vmatprep.subr.mxu0 0.0
    %1768 = vmatpush1.msra.mxu0 0.0
    %1769 = vmatprep.subr.mxu0 0.0
    %1770 = vmatpush1.msra.mxu0 0.0
    %1771 = vmatprep.subr.mxu0 0.0
    %1772 = vmatpush1.msra.mxu0 0.0
    %1773 = vmatprep.subr.mxu0 0.0
    %1774 = vmatpush1.msra.mxu0 0.0
    %1775 = vmatprep.subr.mxu0 0.0
    %1776 = vmatpush1.msra.mxu0 0.0
    %1777 = vmatprep.subr.mxu0 0.0
    %1778 = vmatpush1.msra.mxu0 0.0
    %1779 = vmatprep.subr.mxu0 0.0
    %1780 = vmatpush1.msra.mxu0 0.0
    %1781 = vmatprep.subr.mxu0 0.0
    %1782 = vmatpush1.msra.mxu0 0.0
    %1783 = vmatprep.subr.mxu0 0.0
    %1784 = vmatpush1.msra.mxu0 0.0
    %1785 = vmatprep.subr.mxu0 0.0
    %1786 = vmatpush1.msra.mxu0 0.0
    %1787 = vmatprep.subr.mxu0 0.0
    %1788 = vmatpush1.msra.mxu0 0.0
    %1789 = vmatprep.subr.mxu0 0.0
    %1790 = vmatpush1.msra.mxu0 0.0
    %1791 = vmatprep.subr.mxu0 0.0
    %1792 = vmatpush1.msra.mxu0 0.0
    %1793 = vmatprep.subr.mxu0 0.0
    %1794 = vmatpush1.msra.mxu0 0.0
    %1795 = vmatprep.subr.mxu0 0.0
    %1796 = vmatpush1.msra.mxu0 0.0
    %1797 = vmatprep.subr.mxu0 0.0
    %1798 = vmatpush1.msra.mxu0 0.0
    %1799 = vmatprep.subr.mxu0 0.0
    %1800 = vmatpush1.msra.mxu0 0.0
    %1801 = vmatprep.subr.mxu0 0.0
    %1802 = vmatpush1.msra.mxu0 0.0
    %1803 = vmatprep.subr.mxu0 0.0
    %1804 = vmatpush1.msra.mxu0 0.0
    %1805 = vmatprep.subr.mxu0 0.0
    %1806 = vmatpush1.msra.mxu0 0.0
    %1807 = vmatprep.subr.mxu0 0.0
    %1808 = vmatpush1.msra.mxu0 0.0
    %1809 = vmatprep.subr.mxu0 0.0
    %1810 = vmatpush1.msra.mxu0 0.0
    %1811 = vmatprep.subr.mxu0 0.0
    %1812 = vmatpush1.msra.mxu0 0.0
    %1813 = vmatprep.subr.mxu0 0.0
    %1814 = vmatpush1.msra.mxu0 0.0
    %1815 = vmatprep.subr.mxu0 0.0
    %1816 = vmatpush1.msra.mxu0 0.0
    %1817 = vmatprep.subr.mxu0 0.0
    %1818 = vmatpush1.msra.mxu0 0.0
    %1819 = vmatprep.subr.mxu0 0.0
    %1820 = vmatpush1.msra.mxu0 0.0
    %1821 = vmatprep.subr.mxu0 0.0
    %1822 = vmatpush1.msra.mxu0 0.0
    %1823 = vmatprep.mubr.f32.mxu0 0.0
    %1824 = vmatmul.mubr.f32.gmra.mrb[0].mxu0 %v1757
    %v1825 = vpop.f32.mrb[0].mxu0
    %v1826 = vadd.f32 0.0, %v1825
    %v1827 = vpop.f32.mrb[0].mxu0
    %1828 = vdwg.mxu0
    %1829 = vrot.lane.b32.xlu0 %v465, 64
    %v1830 = vpop.permute.xlu0 %1829
    %1831 = vrot.lane.b32.xlu0 %v358, 64
    %v1832 = vpop.permute.xlu0 %1831
    %v1833 = vsel %vm507, %v1830, 0
    %v1835 = vsel %vm507, %v1832, 0
    %1837 = vmatprep.subr.mxu0 0.0
    %1838 = vmatpush1.xpose.msra.mxu0 %v1835
    %1839 = vmatprep.subr.mxu0 0.0
    %1840 = vmatpush1.xpose.msra.mxu0 0.0
    %1841 = vmatprep.subr.mxu0 0.0
    %1842 = vmatpush1.xpose.msra.mxu0 0.0
    %1843 = vmatprep.subr.mxu0 0.0
    %1844 = vmatpush1.xpose.msra.mxu0 0.0
    %1845 = vmatprep.subr.mxu0 0.0
    %1846 = vmatpush1.xpose.msra.mxu0 0.0
    %1847 = vmatprep.subr.mxu0 0.0
    %1848 = vmatpush1.xpose.msra.mxu0 0.0
    %1849 = vmatprep.subr.mxu0 0.0
    %1850 = vmatpush1.xpose.msra.mxu0 0.0
    %1851 = vmatprep.subr.mxu0 0.0
    %1852 = vmatpush1.xpose.msra.mxu0 0.0
    %1853 = vmatprep.subr.mxu0 0.0
    %1854 = vmatpush1.xpose.msra.mxu0 0.0
    %1855 = vmatprep.subr.mxu0 0.0
    %1856 = vmatpush1.xpose.msra.mxu0 0.0
    %1857 = vmatprep.subr.mxu0 0.0
    %1858 = vmatpush1.xpose.msra.mxu0 0.0
    %1859 = vmatprep.subr.mxu0 0.0
    %1860 = vmatpush1.xpose.msra.mxu0 0.0
    %1861 = vmatprep.subr.mxu0 0.0
    %1862 = vmatpush1.xpose.msra.mxu0 0.0
    %1863 = vmatprep.subr.mxu0 0.0
    %1864 = vmatpush1.xpose.msra.mxu0 0.0
    %1865 = vmatprep.subr.mxu0 0.0
    %1866 = vmatpush1.xpose.msra.mxu0 0.0
    %1867 = vmatprep.subr.mxu0 0.0
    %1868 = vmatpush1.xpose.msra.mxu0 0.0
    %1869 = vmatprep.subr.mxu0 0.0
    %1870 = vmatpush1.xpose.msra.mxu0 0.0
    %1871 = vmatprep.subr.mxu0 0.0
    %1872 = vmatpush1.xpose.msra.mxu0 0.0
    %1873 = vmatprep.subr.mxu0 0.0
    %1874 = vmatpush1.xpose.msra.mxu0 0.0
    %1875 = vmatprep.subr.mxu0 0.0
    %1876 = vmatpush1.xpose.msra.mxu0 0.0
    %1877 = vmatprep.subr.mxu0 0.0
    %1878 = vmatpush1.xpose.msra.mxu0 0.0
    %1879 = vmatprep.subr.mxu0 0.0
    %1880 = vmatpush1.xpose.msra.mxu0 0.0
    %1881 = vmatprep.subr.mxu0 0.0
    %1882 = vmatpush1.xpose.msra.mxu0 0.0
    %1883 = vmatprep.subr.mxu0 0.0
    %1884 = vmatpush1.xpose.msra.mxu0 0.0
    %1885 = vmatprep.subr.mxu0 0.0
    %1886 = vmatpush1.xpose.msra.mxu0 0.0
    %1887 = vmatprep.subr.mxu0 0.0
    %1888 = vmatpush1.xpose.msra.mxu0 0.0
    %1889 = vmatprep.subr.mxu0 0.0
    %1890 = vmatpush1.xpose.msra.mxu0 0.0
    %1891 = vmatprep.subr.mxu0 0.0
    %1892 = vmatpush1.xpose.msra.mxu0 0.0
    %1893 = vmatprep.subr.mxu0 0.0
    %1894 = vmatpush1.xpose.msra.mxu0 0.0
    %1895 = vmatprep.subr.mxu0 0.0
    %1896 = vmatpush1.xpose.msra.mxu0 0.0
    %1897 = vmatprep.subr.mxu0 0.0
    %1898 = vmatpush1.xpose.msra.mxu0 0.0
    %1899 = vmatprep.subr.mxu0 0.0
    %1900 = vmatpush1.xpose.msra.mxu0 0.0
    %1901 = vmatprep.mubr.f32.mxu0 0.0
    %1902 = vmatmul.mubr.f32.gmra.mrb[0].mxu0 %v1833
    %v1903 = vpop.f32.mrb[0].mxu0
    %v1904 = vadd.f32 0.0, %v1903
    %v1905 = vpop.f32.mrb[0].mxu0
    %1906 = vdwg.mxu0
    %1907 = vrot.lane.b32.xlu0 %v470, 64
    %v1908 = vpop.permute.xlu0 %1907
    %1909 = vrot.lane.b32.xlu0 %v363, 64
    %v1910 = vpop.permute.xlu0 %1909
    %v1911 = vsel %vm507, %v1908, 0
    %v1913 = vsel %vm507, %v1910, 0
    %1915 = vmatprep.subr.mxu0 0.0
    %1916 = vmatpush1.xpose.msra.mxu0 %v1913
    %1917 = vmatprep.subr.mxu0 0.0
    %1918 = vmatpush1.xpose.msra.mxu0 0.0
    %1919 = vmatprep.subr.mxu0 0.0
    %1920 = vmatpush1.xpose.msra.mxu0 0.0
    %1921 = vmatprep.subr.mxu0 0.0
    %1922 = vmatpush1.xpose.msra.mxu0 0.0
    %1923 = vmatprep.subr.mxu0 0.0
    %1924 = vmatpush1.xpose.msra.mxu0 0.0
    %1925 = vmatprep.subr.mxu0 0.0
    %1926 = vmatpush1.xpose.msra.mxu0 0.0
    %1927 = vmatprep.subr.mxu0 0.0
    %1928 = vmatpush1.xpose.msra.mxu0 0.0
    %1929 = vmatprep.subr.mxu0 0.0
    %1930 = vmatpush1.xpose.msra.mxu0 0.0
    %1931 = vmatprep.subr.mxu0 0.0
    %1932 = vmatpush1.xpose.msra.mxu0 0.0
    %1933 = vmatprep.subr.mxu0 0.0
    %1934 = vmatpush1.xpose.msra.mxu0 0.0
    %1935 = vmatprep.subr.mxu0 0.0
    %1936 = vmatpush1.xpose.msra.mxu0 0.0
    %1937 = vmatprep.subr.mxu0 0.0
    %1938 = vmatpush1.xpose.msra.mxu0 0.0
    %1939 = vmatprep.subr.mxu0 0.0
    %1940 = vmatpush1.xpose.msra.mxu0 0.0
    %1941 = vmatprep.subr.mxu0 0.0
    %1942 = vmatpush1.xpose.msra.mxu0 0.0
    %1943 = vmatprep.subr.mxu0 0.0
    %1944 = vmatpush1.xpose.msra.mxu0 0.0
    %1945 = vmatprep.subr.mxu0 0.0
    %1946 = vmatpush1.xpose.msra.mxu0 0.0
    %1947 = vmatprep.subr.mxu0 0.0
    %1948 = vmatpush1.xpose.msra.mxu0 0.0
    %1949 = vmatprep.subr.mxu0 0.0
    %1950 = vmatpush1.xpose.msra.mxu0 0.0
    %1951 = vmatprep.subr.mxu0 0.0
    %1952 = vmatpush1.xpose.msra.mxu0 0.0
    %1953 = vmatprep.subr.mxu0 0.0
    %1954 = vmatpush1.xpose.msra.mxu0 0.0
    %1955 = vmatprep.subr.mxu0 0.0
    %1956 = vmatpush1.xpose.msra.mxu0 0.0
    %1957 = vmatprep.subr.mxu0 0.0
    %1958 = vmatpush1.xpose.msra.mxu0 0.0
    %1959 = vmatprep.subr.mxu0 0.0
    %1960 = vmatpush1.xpose.msra.mxu0 0.0
    %1961 = vmatprep.subr.mxu0 0.0
    %1962 = vmatpush1.xpose.msra.mxu0 0.0
    %1963 = vmatprep.subr.mxu0 0.0
    %1964 = vmatpush1.xpose.msra.mxu0 0.0
    %1965 = vmatprep.subr.mxu0 0.0
    %1966 = vmatpush1.xpose.msra.mxu0 0.0
    %1967 = vmatprep.subr.mxu0 0.0
    %1968 = vmatpush1.xpose.msra.mxu0 0.0
    %1969 = vmatprep.subr.mxu0 0.0
    %1970 = vmatpush1.xpose.msra.mxu0 0.0
    %1971 = vmatprep.subr.mxu0 0.0
    %1972 = vmatpush1.xpose.msra.mxu0 0.0
    %1973 = vmatprep.subr.mxu0 0.0
    %1974 = vmatpush1.xpose.msra.mxu0 0.0
    %1975 = vmatprep.subr.mxu0 0.0
    %1976 = vmatpush1.xpose.msra.mxu0 0.0
    %1977 = vmatprep.subr.mxu0 0.0
    %1978 = vmatpush1.xpose.msra.mxu0 0.0
    %1979 = vmatprep.mubr.f32.mxu0 0.0
    %1980 = vmatmul.mubr.f32.gmra.mrb[0].mxu0 %v1911
    %v1981 = vpop.f32.mrb[0].mxu0
    %v1982 = vadd.f32 0.0, %v1981
    %v1983 = vpop.f32.mrb[0].mxu0
    %1984 = vdwg.mxu0
    %1985 = vrot.lane.b32.xlu0 %v475, 64
    %v1986 = vpop.permute.xlu0 %1985
    %1987 = vrot.lane.b32.xlu0 %v368, 64
    %v1988 = vpop.permute.xlu0 %1987
    %v1989 = vsel %vm507, %v1986, 0
    %v1991 = vsel %vm507, %v1988, 0
    %1993 = vmatprep.subr.mxu0 0.0
    %1994 = vmatpush1.xpose.msra.mxu0 %v1991
    %1995 = vmatprep.subr.mxu0 0.0
    %1996 = vmatpush1.xpose.msra.mxu0 0.0
    %1997 = vmatprep.subr.mxu0 0.0
    %1998 = vmatpush1.xpose.msra.mxu0 0.0
    %1999 = vmatprep.subr.mxu0 0.0
    %2000 = vmatpush1.xpose.msra.mxu0 0.0
    %2001 = vmatprep.subr.mxu0 0.0
    %2002 = vmatpush1.xpose.msra.mxu0 0.0
    %2003 = vmatprep.subr.mxu0 0.0
    %2004 = vmatpush1.xpose.msra.mxu0 0.0
    %2005 = vmatprep.subr.mxu0 0.0
    %2006 = vmatpush1.xpose.msra.mxu0 0.0
    %2007 = vmatprep.subr.mxu0 0.0
    %2008 = vmatpush1.xpose.msra.mxu0 0.0
    %2009 = vmatprep.subr.mxu0 0.0
    %2010 = vmatpush1.xpose.msra.mxu0 0.0
    %2011 = vmatprep.subr.mxu0 0.0
    %2012 = vmatpush1.xpose.msra.mxu0 0.0
    %2013 = vmatprep.subr.mxu0 0.0
    %2014 = vmatpush1.xpose.msra.mxu0 0.0
    %2015 = vmatprep.subr.mxu0 0.0
    %2016 = vmatpush1.xpose.msra.mxu0 0.0
    %2017 = vmatprep.subr.mxu0 0.0
    %2018 = vmatpush1.xpose.msra.mxu0 0.0
    %2019 = vmatprep.subr.mxu0 0.0
    %2020 = vmatpush1.xpose.msra.mxu0 0.0
    %2021 = vmatprep.subr.mxu0 0.0
    %2022 = vmatpush1.xpose.msra.mxu0 0.0
    %2023 = vmatprep.subr.mxu0 0.0
    %2024 = vmatpush1.xpose.msra.mxu0 0.0
    %2025 = vmatprep.subr.mxu0 0.0
    %2026 = vmatpush1.xpose.msra.mxu0 0.0
    %2027 = vmatprep.subr.mxu0 0.0
    %2028 = vmatpush1.xpose.msra.mxu0 0.0
    %2029 = vmatprep.subr.mxu0 0.0
    %2030 = vmatpush1.xpose.msra.mxu0 0.0
    %2031 = vmatprep.subr.mxu0 0.0
    %2032 = vmatpush1.xpose.msra.mxu0 0.0
    %2033 = vmatprep.subr.mxu0 0.0
    %2034 = vmatpush1.xpose.msra.mxu0 0.0
    %2035 = vmatprep.subr.mxu0 0.0
    %2036 = vmatpush1.xpose.msra.mxu0 0.0
    %2037 = vmatprep.subr.mxu0 0.0
    %2038 = vmatpush1.xpose.msra.mxu0 0.0
    %2039 = vmatprep.subr.mxu0 0.0
    %2040 = vmatpush1.xpose.msra.mxu0 0.0
    %2041 = vmatprep.subr.mxu0 0.0
    %2042 = vmatpush1.xpose.msra.mxu0 0.0
    %2043 = vmatprep.subr.mxu0 0.0
    %2044 = vmatpush1.xpose.msra.mxu0 0.0
    %2045 = vmatprep.subr.mxu0 0.0
    %2046 = vmatpush1.xpose.msra.mxu0 0.0
    %2047 = vmatprep.subr.mxu0 0.0
    %2048 = vmatpush1.xpose.msra.mxu0 0.0
    %2049 = vmatprep.subr.mxu0 0.0
    %2050 = vmatpush1.xpose.msra.mxu0 0.0
    %2051 = vmatprep.subr.mxu0 0.0
    %2052 = vmatpush1.xpose.msra.mxu0 0.0
    %2053 = vmatprep.subr.mxu0 0.0
    %2054 = vmatpush1.xpose.msra.mxu0 0.0
    %2055 = vmatprep.subr.mxu0 0.0
    %2056 = vmatpush1.xpose.msra.mxu0 0.0
    %2057 = vmatprep.mubr.f32.mxu0 0.0
    %2058 = vmatmul.mubr.f32.gmra.mrb[0].mxu0 %v1989
    %v2059 = vpop.f32.mrb[0].mxu0
    %v2060 = vadd.f32 0.0, %v2059
    %v2061 = vpop.f32.mrb[0].mxu0
    %2062 = vdwg.mxu0
    %2063 = vrot.lane.b32.xlu0 %v480, 64
    %v2064 = vpop.permute.xlu0 %2063
    %2065 = vrot.lane.b32.xlu0 %v373, 64
    %v2066 = vpop.permute.xlu0 %2065
    %v2067 = vsel %vm507, %v2064, 0
    %v2069 = vsel %vm507, %v2066, 0
    %2071 = vmatprep.subr.mxu0 0.0
    %2072 = vmatpush1.xpose.msra.mxu0 %v2069
    %2073 = vmatprep.subr.mxu0 0.0
    %2074 = vmatpush1.xpose.msra.mxu0 0.0
    %2075 = vmatprep.subr.mxu0 0.0
    %2076 = vmatpush1.xpose.msra.mxu0 0.0
    %2077 = vmatprep.subr.mxu0 0.0
    %2078 = vmatpush1.xpose.msra.mxu0 0.0
    %2079 = vmatprep.subr.mxu0 0.0
    %2080 = vmatpush1.xpose.msra.mxu0 0.0
    %2081 = vmatprep.subr.mxu0 0.0
    %2082 = vmatpush1.xpose.msra.mxu0 0.0
    %2083 = vmatprep.subr.mxu0 0.0
    %2084 = vmatpush1.xpose.msra.mxu0 0.0
    %2085 = vmatprep.subr.mxu0 0.0
    %2086 = vmatpush1.xpose.msra.mxu0 0.0
    %2087 = vmatprep.subr.mxu0 0.0
    %2088 = vmatpush1.xpose.msra.mxu0 0.0
    %2089 = vmatprep.subr.mxu0 0.0
    %2090 = vmatpush1.xpose.msra.mxu0 0.0
    %2091 = vmatprep.subr.mxu0 0.0
    %2092 = vmatpush1.xpose.msra.mxu0 0.0
    %2093 = vmatprep.subr.mxu0 0.0
    %2094 = vmatpush1.xpose.msra.mxu0 0.0
    %2095 = vmatprep.subr.mxu0 0.0
    %2096 = vmatpush1.xpose.msra.mxu0 0.0
    %2097 = vmatprep.subr.mxu0 0.0
    %2098 = vmatpush1.xpose.msra.mxu0 0.0
    %2099 = vmatprep.subr.mxu0 0.0
    %2100 = vmatpush1.xpose.msra.mxu0 0.0
    %2101 = vmatprep.subr.mxu0 0.0
    %2102 = vmatpush1.xpose.msra.mxu0 0.0
    %2103 = vmatprep.subr.mxu0 0.0
    %2104 = vmatpush1.xpose.msra.mxu0 0.0
    %2105 = vmatprep.subr.mxu0 0.0
    %2106 = vmatpush1.xpose.msra.mxu0 0.0
    %2107 = vmatprep.subr.mxu0 0.0
    %2108 = vmatpush1.xpose.msra.mxu0 0.0
    %2109 = vmatprep.subr.mxu0 0.0
    %2110 = vmatpush1.xpose.msra.mxu0 0.0
    %2111 = vmatprep.subr.mxu0 0.0
    %2112 = vmatpush1.xpose.msra.mxu0 0.0
    %2113 = vmatprep.subr.mxu0 0.0
    %2114 = vmatpush1.xpose.msra.mxu0 0.0
    %2115 = vmatprep.subr.mxu0 0.0
    %2116 = vmatpush1.xpose.msra.mxu0 0.0
    %2117 = vmatprep.subr.mxu0 0.0
    %2118 = vmatpush1.xpose.msra.mxu0 0.0
    %2119 = vmatprep.subr.mxu0 0.0
    %2120 = vmatpush1.xpose.msra.mxu0 0.0
    %2121 = vmatprep.subr.mxu0 0.0
    %2122 = vmatpush1.xpose.msra.mxu0 0.0
    %2123 = vmatprep.subr.mxu0 0.0
    %2124 = vmatpush1.xpose.msra.mxu0 0.0
    %2125 = vmatprep.subr.mxu0 0.0
    %2126 = vmatpush1.xpose.msra.mxu0 0.0
    %2127 = vmatprep.subr.mxu0 0.0
    %2128 = vmatpush1.xpose.msra.mxu0 0.0
    %2129 = vmatprep.subr.mxu0 0.0
    %2130 = vmatpush1.xpose.msra.mxu0 0.0
    %2131 = vmatprep.subr.mxu0 0.0
    %2132 = vmatpush1.xpose.msra.mxu0 0.0
    %2133 = vmatprep.subr.mxu0 0.0
    %2134 = vmatpush1.xpose.msra.mxu0 0.0
    %2135 = vmatprep.mubr.f32.mxu0 0.0
    %2136 = vmatmul.mubr.f32.gmra.mrb[0].mxu0 %v2067
    %v2137 = vpop.f32.mrb[0].mxu0
    %v2138 = vadd.f32 0.0, %v2137
    %v2139 = vpop.f32.mrb[0].mxu0
    %2140 = vdwg.mxu0
    %v2141 = vmul.f32 %v1904, 0.17677669
    %v2142 = vmul.f32 %v1982, 0.17677669
    %v2143 = vmul.f32 %v2060, 0.17677669
    %v2144 = vmul.f32 %v2138, 0.17677669
    %v2145 = vadd.f32 %v2141, %v490
    %v2146 = vadd.f32 %v2142, %v494
    %v2147 = vadd.f32 %v2143, %v498
    %v2148 = vadd.f32 %v2144, %v502
    %v2149 = vsel %vm820, %v2145, -inf
    %2150 = vmax.xlane.f32.xlu0 %v2149
    %v2151 = vpop.xlane.xlu0 %2150
    %v2152 = vsel %vm820, %v2146, -inf
    %2153 = vmax.xlane.f32.xlu0 %v2152
    %v2154 = vpop.xlane.xlu0 %2153
    %v2155 = vsel %vm820, %v2147, -inf
    %2156 = vmax.xlane.f32.xlu0 %v2155
    %v2157 = vpop.xlane.xlu0 %2156
    %v2158 = vsel %vm820, %v2148, -inf
    %2159 = vmax.xlane.f32.xlu0 %v2158
    %v2160 = vpop.xlane.xlu0 %2159
    %v2161 = vsub.f32 %v2145, %v2151
    %v2162 = vsub.f32 %v2146, %v2154
    %v2163 = vsub.f32 %v2147, %v2157
    %v2164 = vsub.f32 %v2148, %v2160
    %v2165 = vmul.f32 %v2161, 1.442695
    %v2166 = vpow.pop %v2165
    %v2167 = vmul.f32 %v2162, 1.442695
    %v2168 = vpow.pop %v2167
    %v2169 = vmul.f32 %v2163, 1.442695
    %v2170 = vpow.pop %v2169
    %v2171 = vmul.f32 %v2164, 1.442695
    %v2172 = vpow.pop %v2171
    %v2173 = vsel %vm820, %v2166, 0.0
    %2174 = vadd.xlane.f32.xlu0 %v2173
    %v2175 = vpop.xlane.xlu0 %2174
    %v2176 = vsel %vm820, %v2168, 0.0
    %2177 = vadd.xlane.f32.xlu0 %v2176
    %v2178 = vpop.xlane.xlu0 %2177
    %v2179 = vsel %vm820, %v2170, 0.0
    %2180 = vadd.xlane.f32.xlu0 %v2179
    %v2181 = vpop.xlane.xlu0 %2180
    %v2182 = vsel %vm820, %v2172, 0.0
    %2183 = vadd.xlane.f32.xlu0 %v2182
    %v2184 = vpop.xlane.xlu0 %2183
    %v2185 = vrcp.pop %v2175
    %v2186 = vrcp.pop %v2178
    %v2187 = vrcp.pop %v2181
    %v2188 = vrcp.pop %v2184
    %v2189 = vmul.f32 %v2166, %v2185
    %v2190 = vmul.f32 %v2168, %v2186
    %v2191 = vmul.f32 %v2170, %v2187
    %v2192 = vmul.f32 %v2172, %v2188
    %2193 = vrot.lane.b32.xlu0 %v251, 64
    %v2194 = vpop.permute.xlu0 %2193
    %v2197 = vsel %vm820, %v2189, 0
    %2199 = vmatprep.subr.mxu0 0.0
    %2200 = vmatpush1.msra.mxu0 %v2194
    %2201 = vmatprep.subr.mxu0 0.0
    %2202 = vmatpush1.msra.mxu0 0.0
    %2203 = vmatprep.subr.mxu0 0.0
    %2204 = vmatpush1.msra.mxu0 0.0
    %2205 = vmatprep.subr.mxu0 0.0
    %2206 = vmatpush1.msra.mxu0 0.0
    %2207 = vmatprep.subr.mxu0 0.0
    %2208 = vmatpush1.msra.mxu0 0.0
    %2209 = vmatprep.subr.mxu0 0.0
    %2210 = vmatpush1.msra.mxu0 0.0
    %2211 = vmatprep.subr.mxu0 0.0
    %2212 = vmatpush1.msra.mxu0 0.0
    %2213 = vmatprep.subr.mxu0 0.0
    %2214 = vmatpush1.msra.mxu0 0.0
    %2215 = vmatprep.subr.mxu0 0.0
    %2216 = vmatpush1.msra.mxu0 0.0
    %2217 = vmatprep.subr.mxu0 0.0
    %2218 = vmatpush1.msra.mxu0 0.0
    %2219 = vmatprep.subr.mxu0 0.0
    %2220 = vmatpush1.msra.mxu0 0.0
    %2221 = vmatprep.subr.mxu0 0.0
    %2222 = vmatpush1.msra.mxu0 0.0
    %2223 = vmatprep.subr.mxu0 0.0
    %2224 = vmatpush1.msra.mxu0 0.0
    %2225 = vmatprep.subr.mxu0 0.0
    %2226 = vmatpush1.msra.mxu0 0.0
    %2227 = vmatprep.subr.mxu0 0.0
    %2228 = vmatpush1.msra.mxu0 0.0
    %2229 = vmatprep.subr.mxu0 0.0
    %2230 = vmatpush1.msra.mxu0 0.0
    %2231 = vmatprep.subr.mxu0 0.0
    %2232 = vmatpush1.msra.mxu0 0.0
    %2233 = vmatprep.subr.mxu0 0.0
    %2234 = vmatpush1.msra.mxu0 0.0
    %2235 = vmatprep.subr.mxu0 0.0
    %2236 = vmatpush1.msra.mxu0 0.0
    %2237 = vmatprep.subr.mxu0 0.0
    %2238 = vmatpush1.msra.mxu0 0.0
    %2239 = vmatprep.subr.mxu0 0.0
    %2240 = vmatpush1.msra.mxu0 0.0
    %2241 = vmatprep.subr.mxu0 0.0
    %2242 = vmatpush1.msra.mxu0 0.0
    %2243 = vmatprep.subr.mxu0 0.0
    %2244 = vmatpush1.msra.mxu0 0.0
    %2245 = vmatprep.subr.mxu0 0.0
    %2246 = vmatpush1.msra.mxu0 0.0
    %2247 = vmatprep.subr.mxu0 0.0
    %2248 = vmatpush1.msra.mxu0 0.0
    %2249 = vmatprep.subr.mxu0 0.0
    %2250 = vmatpush1.msra.mxu0 0.0
    %2251 = vmatprep.subr.mxu0 0.0
    %2252 = vmatpush1.msra.mxu0 0.0
    %2253 = vmatprep.subr.mxu0 0.0
    %2254 = vmatpush1.msra.mxu0 0.0
    %2255 = vmatprep.subr.mxu0 0.0
    %2256 = vmatpush1.msra.mxu0 0.0
    %2257 = vmatprep.subr.mxu0 0.0
    %2258 = vmatpush1.msra.mxu0 0.0
    %2259 = vmatprep.subr.mxu0 0.0
    %2260 = vmatpush1.msra.mxu0 0.0
    %2261 = vmatprep.subr.mxu0 0.0
    %2262 = vmatpush1.msra.mxu0 0.0
    %2263 = vmatprep.mubr.f32.mxu0 0.0
    %2264 = vmatmul.mubr.f32.gmra.mrb[0].mxu0 %v2197
    %v2265 = vpop.f32.mrb[0].mxu0
    %v2266 = vadd.f32 0.0, %v2265
    %v2267 = vpop.f32.mrb[0].mxu0
    %2268 = vdwg.mxu0
    %2269 = vrot.lane.b32.xlu0 %v256, 64
    %v2270 = vpop.permute.xlu0 %2269
    %v2273 = vsel %vm820, %v2190, 0
    %2275 = vmatprep.subr.mxu0 0.0
    %2276 = vmatpush1.msra.mxu0 %v2270
    %2277 = vmatprep.subr.mxu0 0.0
    %2278 = vmatpush1.msra.mxu0 0.0
    %2279 = vmatprep.subr.mxu0 0.0
    %2280 = vmatpush1.msra.mxu0 0.0
    %2281 = vmatprep.subr.mxu0 0.0
    %2282 = vmatpush1.msra.mxu0 0.0
    %2283 = vmatprep.subr.mxu0 0.0
    %2284 = vmatpush1.msra.mxu0 0.0
    %2285 = vmatprep.subr.mxu0 0.0
    %2286 = vmatpush1.msra.mxu0 0.0
    %2287 = vmatprep.subr.mxu0 0.0
    %2288 = vmatpush1.msra.mxu0 0.0
    %2289 = vmatprep.subr.mxu0 0.0
    %2290 = vmatpush1.msra.mxu0 0.0
    %2291 = vmatprep.subr.mxu0 0.0
    %2292 = vmatpush1.msra.mxu0 0.0
    %2293 = vmatprep.subr.mxu0 0.0
    %2294 = vmatpush1.msra.mxu0 0.0
    %2295 = vmatprep.subr.mxu0 0.0
    %2296 = vmatpush1.msra.mxu0 0.0
    %2297 = vmatprep.subr.mxu0 0.0
    %2298 = vmatpush1.msra.mxu0 0.0
    %2299 = vmatprep.subr.mxu0 0.0
    %2300 = vmatpush1.msra.mxu0 0.0
    %2301 = vmatprep.subr.mxu0 0.0
    %2302 = vmatpush1.msra.mxu0 0.0
    %2303 = vmatprep.subr.mxu0 0.0
    %2304 = vmatpush1.msra.mxu0 0.0
    %2305 = vmatprep.subr.mxu0 0.0
    %2306 = vmatpush1.msra.mxu0 0.0
    %2307 = vmatprep.subr.mxu0 0.0
    %2308 = vmatpush1.msra.mxu0 0.0
    %2309 = vmatprep.subr.mxu0 0.0
    %2310 = vmatpush1.msra.mxu0 0.0
    %2311 = vmatprep.subr.mxu0 0.0
    %2312 = vmatpush1.msra.mxu0 0.0
    %2313 = vmatprep.subr.mxu0 0.0
    %2314 = vmatpush1.msra.mxu0 0.0
    %2315 = vmatprep.subr.mxu0 0.0
    %2316 = vmatpush1.msra.mxu0 0.0
    %2317 = vmatprep.subr.mxu0 0.0
    %2318 = vmatpush1.msra.mxu0 0.0
    %2319 = vmatprep.subr.mxu0 0.0
    %2320 = vmatpush1.msra.mxu0 0.0
    %2321 = vmatprep.subr.mxu0 0.0
    %2322 = vmatpush1.msra.mxu0 0.0
    %2323 = vmatprep.subr.mxu0 0.0
    %2324 = vmatpush1.msra.mxu0 0.0
    %2325 = vmatprep.subr.mxu0 0.0
    %2326 = vmatpush1.msra.mxu0 0.0
    %2327 = vmatprep.subr.mxu0 0.0
    %2328 = vmatpush1.msra.mxu0 0.0
    %2329 = vmatprep.subr.mxu0 0.0
    %2330 = vmatpush1.msra.mxu0 0.0
    %2331 = vmatprep.subr.mxu0 0.0
    %2332 = vmatpush1.msra.mxu0 0.0
    %2333 = vmatprep.subr.mxu0 0.0
    %2334 = vmatpush1.msra.mxu0 0.0
    %2335 = vmatprep.subr.mxu0 0.0
    %2336 = vmatpush1.msra.mxu0 0.0
    %2337 = vmatprep.subr.mxu0 0.0
    %2338 = vmatpush1.msra.mxu0 0.0
    %2339 = vmatprep.mubr.f32.mxu0 0.0
    %2340 = vmatmul.mubr.f32.gmra.mrb[0].mxu0 %v2273
    %v2341 = vpop.f32.mrb[0].mxu0
    %v2342 = vadd.f32 0.0, %v2341
    %v2343 = vpop.f32.mrb[0].mxu0
    %2344 = vdwg.mxu0
    %2345 = vrot.lane.b32.xlu0 %v261, 64
    %v2346 = vpop.permute.xlu0 %2345
    %v2349 = vsel %vm820, %v2191, 0
    %2351 = vmatprep.subr.mxu0 0.0
    %2352 = vmatpush1.msra.mxu0 %v2346
    %2353 = vmatprep.subr.mxu0 0.0
    %2354 = vmatpush1.msra.mxu0 0.0
    %2355 = vmatprep.subr.mxu0 0.0
    %2356 = vmatpush1.msra.mxu0 0.0
    %2357 = vmatprep.subr.mxu0 0.0
    %2358 = vmatpush1.msra.mxu0 0.0
    %2359 = vmatprep.subr.mxu0 0.0
    %2360 = vmatpush1.msra.mxu0 0.0
    %2361 = vmatprep.subr.mxu0 0.0
    %2362 = vmatpush1.msra.mxu0 0.0
    %2363 = vmatprep.subr.mxu0 0.0
    %2364 = vmatpush1.msra.mxu0 0.0
    %2365 = vmatprep.subr.mxu0 0.0
    %2366 = vmatpush1.msra.mxu0 0.0
    %2367 = vmatprep.subr.mxu0 0.0
    %2368 = vmatpush1.msra.mxu0 0.0
    %2369 = vmatprep.subr.mxu0 0.0
    %2370 = vmatpush1.msra.mxu0 0.0
    %2371 = vmatprep.subr.mxu0 0.0
    %2372 = vmatpush1.msra.mxu0 0.0
    %2373 = vmatprep.subr.mxu0 0.0
    %2374 = vmatpush1.msra.mxu0 0.0
    %2375 = vmatprep.subr.mxu0 0.0
    %2376 = vmatpush1.msra.mxu0 0.0
    %2377 = vmatprep.subr.mxu0 0.0
    %2378 = vmatpush1.msra.mxu0 0.0
    %2379 = vmatprep.subr.mxu0 0.0
    %2380 = vmatpush1.msra.mxu0 0.0
    %2381 = vmatprep.subr.mxu0 0.0
    %2382 = vmatpush1.msra.mxu0 0.0
    %2383 = vmatprep.subr.mxu0 0.0
    %2384 = vmatpush1.msra.mxu0 0.0
    %2385 = vmatprep.subr.mxu0 0.0
    %2386 = vmatpush1.msra.mxu0 0.0
    %2387 = vmatprep.subr.mxu0 0.0
    %2388 = vmatpush1.msra.mxu0 0.0
    %2389 = vmatprep.subr.mxu0 0.0
    %2390 = vmatpush1.msra.mxu0 0.0
    %2391 = vmatprep.subr.mxu0 0.0
    %2392 = vmatpush1.msra.mxu0 0.0
    %2393 = vmatprep.subr.mxu0 0.0
    %2394 = vmatpush1.msra.mxu0 0.0
    %2395 = vmatprep.subr.mxu0 0.0
    %2396 = vmatpush1.msra.mxu0 0.0
    %2397 = vmatprep.subr.mxu0 0.0
    %2398 = vmatpush1.msra.mxu0 0.0
    %2399 = vmatprep.subr.mxu0 0.0
    %2400 = vmatpush1.msra.mxu0 0.0
    %2401 = vmatprep.subr.mxu0 0.0
    %2402 = vmatpush1.msra.mxu0 0.0
    %2403 = vmatprep.subr.mxu0 0.0
    %2404 = vmatpush1.msra.mxu0 0.0
    %2405 = vmatprep.subr.mxu0 0.0
    %2406 = vmatpush1.msra.mxu0 0.0
    %2407 = vmatprep.subr.mxu0 0.0
    %2408 = vmatpush1.msra.mxu0 0.0
    %2409 = vmatprep.subr.mxu0 0.0
    %2410 = vmatpush1.msra.mxu0 0.0
    %2411 = vmatprep.subr.mxu0 0.0
    %2412 = vmatpush1.msra.mxu0 0.0
    %2413 = vmatprep.subr.mxu0 0.0
    %2414 = vmatpush1.msra.mxu0 0.0
    %2415 = vmatprep.mubr.f32.mxu0 0.0
    %2416 = vmatmul.mubr.f32.gmra.mrb[0].mxu0 %v2349
    %v2417 = vpop.f32.mrb[0].mxu0
    %v2418 = vadd.f32 0.0, %v2417
    %v2419 = vpop.f32.mrb[0].mxu0
    %2420 = vdwg.mxu0
    %2421 = vrot.lane.b32.xlu0 %v266, 64
    %v2422 = vpop.permute.xlu0 %2421
    %v2425 = vsel %vm820, %v2192, 0
    %2427 = vmatprep.subr.mxu0 0.0
    %2428 = vmatpush1.msra.mxu0 %v2422
    %2429 = vmatprep.subr.mxu0 0.0
    %2430 = vmatpush1.msra.mxu0 0.0
    %2431 = vmatprep.subr.mxu0 0.0
    %2432 = vmatpush1.msra.mxu0 0.0
    %2433 = vmatprep.subr.mxu0 0.0
    %2434 = vmatpush1.msra.mxu0 0.0
    %2435 = vmatprep.subr.mxu0 0.0
    %2436 = vmatpush1.msra.mxu0 0.0
    %2437 = vmatprep.subr.mxu0 0.0
    %2438 = vmatpush1.msra.mxu0 0.0
    %2439 = vmatprep.subr.mxu0 0.0
    %2440 = vmatpush1.msra.mxu0 0.0
    %2441 = vmatprep.subr.mxu0 0.0
    %2442 = vmatpush1.msra.mxu0 0.0
    %2443 = vmatprep.subr.mxu0 0.0
    %2444 = vmatpush1.msra.mxu0 0.0
    %2445 = vmatprep.subr.mxu0 0.0
    %2446 = vmatpush1.msra.mxu0 0.0
    %2447 = vmatprep.subr.mxu0 0.0
    %2448 = vmatpush1.msra.mxu0 0.0
    %2449 = vmatprep.subr.mxu0 0.0
    %2450 = vmatpush1.msra.mxu0 0.0
    %2451 = vmatprep.subr.mxu0 0.0
    %2452 = vmatpush1.msra.mxu0 0.0
    %2453 = vmatprep.subr.mxu0 0.0
    %2454 = vmatpush1.msra.mxu0 0.0
    %2455 = vmatprep.subr.mxu0 0.0
    %2456 = vmatpush1.msra.mxu0 0.0
    %2457 = vmatprep.subr.mxu0 0.0
    %2458 = vmatpush1.msra.mxu0 0.0
    %2459 = vmatprep.subr.mxu0 0.0
    %2460 = vmatpush1.msra.mxu0 0.0
    %2461 = vmatprep.subr.mxu0 0.0
    %2462 = vmatpush1.msra.mxu0 0.0
    %2463 = vmatprep.subr.mxu0 0.0
    %2464 = vmatpush1.msra.mxu0 0.0
    %2465 = vmatprep.subr.mxu0 0.0
    %2466 = vmatpush1.msra.mxu0 0.0
    %2467 = vmatprep.subr.mxu0 0.0
    %2468 = vmatpush1.msra.mxu0 0.0
    %2469 = vmatprep.subr.mxu0 0.0
    %2470 = vmatpush1.msra.mxu0 0.0
    %2471 = vmatprep.subr.mxu0 0.0
    %2472 = vmatpush1.msra.mxu0 0.0
    %2473 = vmatprep.subr.mxu0 0.0
    %2474 = vmatpush1.msra.mxu0 0.0
    %2475 = vmatprep.subr.mxu0 0.0
    %2476 = vmatpush1.msra.mxu0 0.0
    %2477 = vmatprep.subr.mxu0 0.0
    %2478 = vmatpush1.msra.mxu0 0.0
    %2479 = vmatprep.subr.mxu0 0.0
    %2480 = vmatpush1.msra.mxu0 0.0
    %2481 = vmatprep.subr.mxu0 0.0
    %2482 = vmatpush1.msra.mxu0 0.0
    %2483 = vmatprep.subr.mxu0 0.0
    %2484 = vmatpush1.msra.mxu0 0.0
    %2485 = vmatprep.subr.mxu0 0.0
    %2486 = vmatpush1.msra.mxu0 0.0
    %2487 = vmatprep.subr.mxu0 0.0
    %2488 = vmatpush1.msra.mxu0 0.0
    %2489 = vmatprep.subr.mxu0 0.0
    %2490 = vmatpush1.msra.mxu0 0.0
    %2491 = vmatprep.mubr.f32.mxu0 0.0
    %2492 = vmatmul.mubr.f32.gmra.mrb[0].mxu0 %v2425
    %v2493 = vpop.f32.mrb[0].mxu0
    %v2494 = vadd.f32 0.0, %v2493
    %v2495 = vpop.f32.mrb[0].mxu0
    %2496 = vdwg.mxu0
    %2497 = vrot.lane.b32.xlu0 %v465, 32
    %v2498 = vpop.permute.xlu0 %2497
    %2499 = vrot.lane.b32.xlu0 %v358, 32
    %v2500 = vpop.permute.xlu0 %2499
    %v2501 = vsel %vm507, %v2498, 0
    %v2503 = vsel %vm507, %v2500, 0
    %2505 = vmatprep.subr.mxu0 0.0
    %2506 = vmatpush1.xpose.msra.mxu0 %v2503
    %2507 = vmatprep.subr.mxu0 0.0
    %2508 = vmatpush1.xpose.msra.mxu0 0.0
    %2509 = vmatprep.subr.mxu0 0.0
    %2510 = vmatpush1.xpose.msra.mxu0 0.0
    %2511 = vmatprep.subr.mxu0 0.0
    %2512 = vmatpush1.xpose.msra.mxu0 0.0
    %2513 = vmatprep.subr.mxu0 0.0
    %2514 = vmatpush1.xpose.msra.mxu0 0.0
    %2515 = vmatprep.subr.mxu0 0.0
    %2516 = vmatpush1.xpose.msra.mxu0 0.0
    %2517 = vmatprep.subr.mxu0 0.0
    %2518 = vmatpush1.xpose.msra.mxu0 0.0
    %2519 = vmatprep.subr.mxu0 0.0
    %2520 = vmatpush1.xpose.msra.mxu0 0.0
    %2521 = vmatprep.subr.mxu0 0.0
    %2522 = vmatpush1.xpose.msra.mxu0 0.0
    %2523 = vmatprep.subr.mxu0 0.0
    %2524 = vmatpush1.xpose.msra.mxu0 0.0
    %2525 = vmatprep.subr.mxu0 0.0
    %2526 = vmatpush1.xpose.msra.mxu0 0.0
    %2527 = vmatprep.subr.mxu0 0.0
    %2528 = vmatpush1.xpose.msra.mxu0 0.0
    %2529 = vmatprep.subr.mxu0 0.0
    %2530 = vmatpush1.xpose.msra.mxu0 0.0
    %2531 = vmatprep.subr.mxu0 0.0
    %2532 = vmatpush1.xpose.msra.mxu0 0.0
    %2533 = vmatprep.subr.mxu0 0.0
    %2534 = vmatpush1.xpose.msra.mxu0 0.0
    %2535 = vmatprep.subr.mxu0 0.0
    %2536 = vmatpush1.xpose.msra.mxu0 0.0
    %2537 = vmatprep.subr.mxu0 0.0
    %2538 = vmatpush1.xpose.msra.mxu0 0.0
    %2539 = vmatprep.subr.mxu0 0.0
    %2540 = vmatpush1.xpose.msra.mxu0 0.0
    %2541 = vmatprep.subr.mxu0 0.0
    %2542 = vmatpush1.xpose.msra.mxu0 0.0
    %2543 = vmatprep.subr.mxu0 0.0
    %2544 = vmatpush1.xpose.msra.mxu0 0.0
    %2545 = vmatprep.subr.mxu0 0.0
    %2546 = vmatpush1.xpose.msra.mxu0 0.0
    %2547 = vmatprep.subr.mxu0 0.0
    %2548 = vmatpush1.xpose.msra.mxu0 0.0
    %2549 = vmatprep.subr.mxu0 0.0
    %2550 = vmatpush1.xpose.msra.mxu0 0.0
    %2551 = vmatprep.subr.mxu0 0.0
    %2552 = vmatpush1.xpose.msra.mxu0 0.0
    %2553 = vmatprep.subr.mxu0 0.0
    %2554 = vmatpush1.xpose.msra.mxu0 0.0
    %2555 = vmatprep.subr.mxu0 0.0
    %2556 = vmatpush1.xpose.msra.mxu0 0.0
    %2557 = vmatprep.subr.mxu0 0.0
    %2558 = vmatpush1.xpose.msra.mxu0 0.0
    %2559 = vmatprep.subr.mxu0 0.0
    %2560 = vmatpush1.xpose.msra.mxu0 0.0
    %2561 = vmatprep.subr.mxu0 0.0
    %2562 = vmatpush1.xpose.msra.mxu0 0.0
    %2563 = vmatprep.subr.mxu0 0.0
    %2564 = vmatpush1.xpose.msra.mxu0 0.0
    %2565 = vmatprep.subr.mxu0 0.0
    %2566 = vmatpush1.xpose.msra.mxu0 0.0
    %2567 = vmatprep.subr.mxu0 0.0
    %2568 = vmatpush1.xpose.msra.mxu0 0.0
    %2569 = vmatprep.mubr.f32.mxu0 0.0
    %2570 = vmatmul.mubr.f32.gmra.mrb[0].mxu0 %v2501
    %v2571 = vpop.f32.mrb[0].mxu0
    %v2572 = vadd.f32 0.0, %v2571
    %v2573 = vpop.f32.mrb[0].mxu0
    %2574 = vdwg.mxu0
    %2575 = vrot.lane.b32.xlu0 %v470, 32
    %v2576 = vpop.permute.xlu0 %2575
    %2577 = vrot.lane.b32.xlu0 %v363, 32
    %v2578 = vpop.permute.xlu0 %2577
    %v2579 = vsel %vm507, %v2576, 0
    %v2581 = vsel %vm507, %v2578, 0
    %2583 = vmatprep.subr.mxu0 0.0
    %2584 = vmatpush1.xpose.msra.mxu0 %v2581
    %2585 = vmatprep.subr.mxu0 0.0
    %2586 = vmatpush1.xpose.msra.mxu0 0.0
    %2587 = vmatprep.subr.mxu0 0.0
    %2588 = vmatpush1.xpose.msra.mxu0 0.0
    %2589 = vmatprep.subr.mxu0 0.0
    %2590 = vmatpush1.xpose.msra.mxu0 0.0
    %2591 = vmatprep.subr.mxu0 0.0
    %2592 = vmatpush1.xpose.msra.mxu0 0.0
    %2593 = vmatprep.subr.mxu0 0.0
    %2594 = vmatpush1.xpose.msra.mxu0 0.0
    %2595 = vmatprep.subr.mxu0 0.0
    %2596 = vmatpush1.xpose.msra.mxu0 0.0
    %2597 = vmatprep.subr.mxu0 0.0
    %2598 = vmatpush1.xpose.msra.mxu0 0.0
    %2599 = vmatprep.subr.mxu0 0.0
    %2600 = vmatpush1.xpose.msra.mxu0 0.0
    %2601 = vmatprep.subr.mxu0 0.0
    %2602 = vmatpush1.xpose.msra.mxu0 0.0
    %2603 = vmatprep.subr.mxu0 0.0
    %2604 = vmatpush1.xpose.msra.mxu0 0.0
    %2605 = vmatprep.subr.mxu0 0.0
    %2606 = vmatpush1.xpose.msra.mxu0 0.0
    %2607 = vmatprep.subr.mxu0 0.0
    %2608 = vmatpush1.xpose.msra.mxu0 0.0
    %2609 = vmatprep.subr.mxu0 0.0
    %2610 = vmatpush1.xpose.msra.mxu0 0.0
    %2611 = vmatprep.subr.mxu0 0.0
    %2612 = vmatpush1.xpose.msra.mxu0 0.0
    %2613 = vmatprep.subr.mxu0 0.0
    %2614 = vmatpush1.xpose.msra.mxu0 0.0
    %2615 = vmatprep.subr.mxu0 0.0
    %2616 = vmatpush1.xpose.msra.mxu0 0.0
    %2617 = vmatprep.subr.mxu0 0.0
    %2618 = vmatpush1.xpose.msra.mxu0 0.0
    %2619 = vmatprep.subr.mxu0 0.0
    %2620 = vmatpush1.xpose.msra.mxu0 0.0
    %2621 = vmatprep.subr.mxu0 0.0
    %2622 = vmatpush1.xpose.msra.mxu0 0.0
    %2623 = vmatprep.subr.mxu0 0.0
    %2624 = vmatpush1.xpose.msra.mxu0 0.0
    %2625 = vmatprep.subr.mxu0 0.0
    %2626 = vmatpush1.xpose.msra.mxu0 0.0
    %2627 = vmatprep.subr.mxu0 0.0
    %2628 = vmatpush1.xpose.msra.mxu0 0.0
    %2629 = vmatprep.subr.mxu0 0.0
    %2630 = vmatpush1.xpose.msra.mxu0 0.0
    %2631 = vmatprep.subr.mxu0 0.0
    %2632 = vmatpush1.xpose.msra.mxu0 0.0
    %2633 = vmatprep.subr.mxu0 0.0
    %2634 = vmatpush1.xpose.msra.mxu0 0.0
    %2635 = vmatprep.subr.mxu0 0.0
    %2636 = vmatpush1.xpose.msra.mxu0 0.0
    %2637 = vmatprep.subr.mxu0 0.0
    %2638 = vmatpush1.xpose.msra.mxu0 0.0
    %2639 = vmatprep.subr.mxu0 0.0
    %2640 = vmatpush1.xpose.msra.mxu0 0.0
    %2641 = vmatprep.subr.mxu0 0.0
    %2642 = vmatpush1.xpose.msra.mxu0 0.0
    %2643 = vmatprep.subr.mxu0 0.0
    %2644 = vmatpush1.xpose.msra.mxu0 0.0
    %2645 = vmatprep.subr.mxu0 0.0
    %2646 = vmatpush1.xpose.msra.mxu0 0.0
    %2647 = vmatprep.mubr.f32.mxu0 0.0
    %2648 = vmatmul.mubr.f32.gmra.mrb[0].mxu0 %v2579
    %v2649 = vpop.f32.mrb[0].mxu0
    %v2650 = vadd.f32 0.0, %v2649
    %v2651 = vpop.f32.mrb[0].mxu0
    %2652 = vdwg.mxu0
    %2653 = vrot.lane.b32.xlu0 %v475, 32
    %v2654 = vpop.permute.xlu0 %2653
    %2655 = vrot.lane.b32.xlu0 %v368, 32
    %v2656 = vpop.permute.xlu0 %2655
    %v2657 = vsel %vm507, %v2654, 0
    %v2659 = vsel %vm507, %v2656, 0
    %2661 = vmatprep.subr.mxu0 0.0
    %2662 = vmatpush1.xpose.msra.mxu0 %v2659
    %2663 = vmatprep.subr.mxu0 0.0
    %2664 = vmatpush1.xpose.msra.mxu0 0.0
    %2665 = vmatprep.subr.mxu0 0.0
    %2666 = vmatpush1.xpose.msra.mxu0 0.0
    %2667 = vmatprep.subr.mxu0 0.0
    %2668 = vmatpush1.xpose.msra.mxu0 0.0
    %2669 = vmatprep.subr.mxu0 0.0
    %2670 = vmatpush1.xpose.msra.mxu0 0.0
    %2671 = vmatprep.subr.mxu0 0.0
    %2672 = vmatpush1.xpose.msra.mxu0 0.0
    %2673 = vmatprep.subr.mxu0 0.0
    %2674 = vmatpush1.xpose.msra.mxu0 0.0
    %2675 = vmatprep.subr.mxu0 0.0
    %2676 = vmatpush1.xpose.msra.mxu0 0.0
    %2677 = vmatprep.subr.mxu0 0.0
    %2678 = vmatpush1.xpose.msra.mxu0 0.0
    %2679 = vmatprep.subr.mxu0 0.0
    %2680 = vmatpush1.xpose.msra.mxu0 0.0
    %2681 = vmatprep.subr.mxu0 0.0
    %2682 = vmatpush1.xpose.msra.mxu0 0.0
    %2683 = vmatprep.subr.mxu0 0.0
    %2684 = vmatpush1.xpose.msra.mxu0 0.0
    %2685 = vmatprep.subr.mxu0 0.0
    %2686 = vmatpush1.xpose.msra.mxu0 0.0
    %2687 = vmatprep.subr.mxu0 0.0
    %2688 = vmatpush1.xpose.msra.mxu0 0.0
    %2689 = vmatprep.subr.mxu0 0.0
    %2690 = vmatpush1.xpose.msra.mxu0 0.0
    %2691 = vmatprep.subr.mxu0 0.0
    %2692 = vmatpush1.xpose.msra.mxu0 0.0
    %2693 = vmatprep.subr.mxu0 0.0
    %2694 = vmatpush1.xpose.msra.mxu0 0.0
    %2695 = vmatprep.subr.mxu0 0.0
    %2696 = vmatpush1.xpose.msra.mxu0 0.0
    %2697 = vmatprep.subr.mxu0 0.0
    %2698 = vmatpush1.xpose.msra.mxu0 0.0
    %2699 = vmatprep.subr.mxu0 0.0
    %2700 = vmatpush1.xpose.msra.mxu0 0.0
    %2701 = vmatprep.subr.mxu0 0.0
    %2702 = vmatpush1.xpose.msra.mxu0 0.0
    %2703 = vmatprep.subr.mxu0 0.0
    %2704 = vmatpush1.xpose.msra.mxu0 0.0
    %2705 = vmatprep.subr.mxu0 0.0
    %2706 = vmatpush1.xpose.msra.mxu0 0.0
    %2707 = vmatprep.subr.mxu0 0.0
    %2708 = vmatpush1.xpose.msra.mxu0 0.0
    %2709 = vmatprep.subr.mxu0 0.0
    %2710 = vmatpush1.xpose.msra.mxu0 0.0
    %2711 = vmatprep.subr.mxu0 0.0
    %2712 = vmatpush1.xpose.msra.mxu0 0.0
    %2713 = vmatprep.subr.mxu0 0.0
    %2714 = vmatpush1.xpose.msra.mxu0 0.0
    %2715 = vmatprep.subr.mxu0 0.0
    %2716 = vmatpush1.xpose.msra.mxu0 0.0
    %2717 = vmatprep.subr.mxu0 0.0
    %2718 = vmatpush1.xpose.msra.mxu0 0.0
    %2719 = vmatprep.subr.mxu0 0.0
    %2720 = vmatpush1.xpose.msra.mxu0 0.0
    %2721 = vmatprep.subr.mxu0 0.0
    %2722 = vmatpush1.xpose.msra.mxu0 0.0
    %2723 = vmatprep.subr.mxu0 0.0
    %2724 = vmatpush1.xpose.msra.mxu0 0.0
    %2725 = vmatprep.mubr.f32.mxu0 0.0
    %2726 = vmatmul.mubr.f32.gmra.mrb[0].mxu0 %v2657
    %v2727 = vpop.f32.mrb[0].mxu0
    %v2728 = vadd.f32 0.0, %v2727
    %v2729 = vpop.f32.mrb[0].mxu0
    %2730 = vdwg.mxu0
    %2731 = vrot.lane.b32.xlu0 %v480, 32
    %v2732 = vpop.permute.xlu0 %2731
    %2733 = vrot.lane.b32.xlu0 %v373, 32
    %v2734 = vpop.permute.xlu0 %2733
    %v2735 = vsel %vm507, %v2732, 0
    %v2737 = vsel %vm507, %v2734, 0
    %2739 = vmatprep.subr.mxu0 0.0
    %2740 = vmatpush1.xpose.msra.mxu0 %v2737
    %2741 = vmatprep.subr.mxu0 0.0
    %2742 = vmatpush1.xpose.msra.mxu0 0.0
    %2743 = vmatprep.subr.mxu0 0.0
    %2744 = vmatpush1.xpose.msra.mxu0 0.0
    %2745 = vmatprep.subr.mxu0 0.0
    %2746 = vmatpush1.xpose.msra.mxu0 0.0
    %2747 = vmatprep.subr.mxu0 0.0
    %2748 = vmatpush1.xpose.msra.mxu0 0.0
    %2749 = vmatprep.subr.mxu0 0.0
    %2750 = vmatpush1.xpose.msra.mxu0 0.0
    %2751 = vmatprep.subr.mxu0 0.0
    %2752 = vmatpush1.xpose.msra.mxu0 0.0
    %2753 = vmatprep.subr.mxu0 0.0
    %2754 = vmatpush1.xpose.msra.mxu0 0.0
    %2755 = vmatprep.subr.mxu0 0.0
    %2756 = vmatpush1.xpose.msra.mxu0 0.0
    %2757 = vmatprep.subr.mxu0 0.0
    %2758 = vmatpush1.xpose.msra.mxu0 0.0
    %2759 = vmatprep.subr.mxu0 0.0
    %2760 = vmatpush1.xpose.msra.mxu0 0.0
    %2761 = vmatprep.subr.mxu0 0.0
    %2762 = vmatpush1.xpose.msra.mxu0 0.0
    %2763 = vmatprep.subr.mxu0 0.0
    %2764 = vmatpush1.xpose.msra.mxu0 0.0
    %2765 = vmatprep.subr.mxu0 0.0
    %2766 = vmatpush1.xpose.msra.mxu0 0.0
    %2767 = vmatprep.subr.mxu0 0.0
    %2768 = vmatpush1.xpose.msra.mxu0 0.0
    %2769 = vmatprep.subr.mxu0 0.0
    %2770 = vmatpush1.xpose.msra.mxu0 0.0
    %2771 = vmatprep.subr.mxu0 0.0
    %2772 = vmatpush1.xpose.msra.mxu0 0.0
    %2773 = vmatprep.subr.mxu0 0.0
    %2774 = vmatpush1.xpose.msra.mxu0 0.0
    %2775 = vmatprep.subr.mxu0 0.0
    %2776 = vmatpush1.xpose.msra.mxu0 0.0
    %2777 = vmatprep.subr.mxu0 0.0
    %2778 = vmatpush1.xpose.msra.mxu0 0.0
    %2779 = vmatprep.subr.mxu0 0.0
    %2780 = vmatpush1.xpose.msra.mxu0 0.0
    %2781 = vmatprep.subr.mxu0 0.0
    %2782 = vmatpush1.xpose.msra.mxu0 0.0
    %2783 = vmatprep.subr.mxu0 0.0
    %2784 = vmatpush1.xpose.msra.mxu0 0.0
    %2785 = vmatprep.subr.mxu0 0.0
    %2786 = vmatpush1.xpose.msra.mxu0 0.0
    %2787 = vmatprep.subr.mxu0 0.0
    %2788 = vmatpush1.xpose.msra.mxu0 0.0
    %2789 = vmatprep.subr.mxu0 0.0
    %2790 = vmatpush1.xpose.msra.mxu0 0.0
    %2791 = vmatprep.subr.mxu0 0.0
    %2792 = vmatpush1.xpose.msra.mxu0 0.0
    %2793 = vmatprep.subr.mxu0 0.0
    %2794 = vmatpush1.xpose.msra.mxu0 0.0
    %2795 = vmatprep.subr.mxu0 0.0
    %2796 = vmatpush1.xpose.msra.mxu0 0.0
    %2797 = vmatprep.subr.mxu0 0.0
    %2798 = vmatpush1.xpose.msra.mxu0 0.0
    %2799 = vmatprep.subr.mxu0 0.0
    %2800 = vmatpush1.xpose.msra.mxu0 0.0
    %2801 = vmatprep.subr.mxu0 0.0
    %2802 = vmatpush1.xpose.msra.mxu0 0.0
    %2803 = vmatprep.mubr.f32.mxu0 0.0
    %2804 = vmatmul.mubr.f32.gmra.mrb[0].mxu0 %v2735
    %v2805 = vpop.f32.mrb[0].mxu0
    %v2806 = vadd.f32 0.0, %v2805
    %v2807 = vpop.f32.mrb[0].mxu0
    %2808 = vdwg.mxu0
    %v2809 = vmul.f32 %v2572, 0.17677669
    %v2810 = vmul.f32 %v2650, 0.17677669
    %v2811 = vmul.f32 %v2728, 0.17677669
    %v2812 = vmul.f32 %v2806, 0.17677669
    %v2813 = vadd.f32 %v2809, %v490
    %v2814 = vadd.f32 %v2810, %v494
    %v2815 = vadd.f32 %v2811, %v498
    %v2816 = vadd.f32 %v2812, %v502
    %v2817 = vsel %vm820, %v2813, -inf
    %2818 = vmax.xlane.f32.xlu0 %v2817
    %v2819 = vpop.xlane.xlu0 %2818
    %v2820 = vsel %vm820, %v2814, -inf
    %2821 = vmax.xlane.f32.xlu0 %v2820
    %v2822 = vpop.xlane.xlu0 %2821
    %v2823 = vsel %vm820, %v2815, -inf
    %2824 = vmax.xlane.f32.xlu0 %v2823
    %v2825 = vpop.xlane.xlu0 %2824
    %v2826 = vsel %vm820, %v2816, -inf
    %2827 = vmax.xlane.f32.xlu0 %v2826
    %v2828 = vpop.xlane.xlu0 %2827
    %v2829 = vsub.f32 %v2813, %v2819
    %v2830 = vsub.f32 %v2814, %v2822
    %v2831 = vsub.f32 %v2815, %v2825
    %v2832 = vsub.f32 %v2816, %v2828
    %v2833 = vmul.f32 %v2829, 1.442695
    %v2834 = vpow.pop %v2833
    %v2835 = vmul.f32 %v2830, 1.442695
    %v2836 = vpow.pop %v2835
    %v2837 = vmul.f32 %v2831, 1.442695
    %v2838 = vpow.pop %v2837
    %v2839 = vmul.f32 %v2832, 1.442695
    %v2840 = vpow.pop %v2839
    %v2841 = vsel %vm820, %v2834, 0.0
    %2842 = vadd.xlane.f32.xlu0 %v2841
    %v2843 = vpop.xlane.xlu0 %2842
    %v2844 = vsel %vm820, %v2836, 0.0
    %2845 = vadd.xlane.f32.xlu0 %v2844
    %v2846 = vpop.xlane.xlu0 %2845
    %v2847 = vsel %vm820, %v2838, 0.0
    %2848 = vadd.xlane.f32.xlu0 %v2847
    %v2849 = vpop.xlane.xlu0 %2848
    %v2850 = vsel %vm820, %v2840, 0.0
    %2851 = vadd.xlane.f32.xlu0 %v2850
    %v2852 = vpop.xlane.xlu0 %2851
    %v2853 = vrcp.pop %v2843
    %v2854 = vrcp.pop %v2846
    %v2855 = vrcp.pop %v2849
    %v2856 = vrcp.pop %v2852
    %v2857 = vmul.f32 %v2834, %v2853
    %v2858 = vmul.f32 %v2836, %v2854
    %v2859 = vmul.f32 %v2838, %v2855
    %v2860 = vmul.f32 %v2840, %v2856
    %2861 = vrot.lane.b32.xlu0 %v251, 32
    %v2862 = vpop.permute.xlu0 %2861
    %v2865 = vsel %vm820, %v2857, 0
    %2867 = vmatprep.subr.mxu0 0.0
    %2868 = vmatpush1.msra.mxu0 %v2862
    %2869 = vmatprep.subr.mxu0 0.0
    %2870 = vmatpush1.msra.mxu0 0.0
    %2871 = vmatprep.subr.mxu0 0.0
    %2872 = vmatpush1.msra.mxu0 0.0
    %2873 = vmatprep.subr.mxu0 0.0
    %2874 = vmatpush1.msra.mxu0 0.0
    %2875 = vmatprep.subr.mxu0 0.0
    %2876 = vmatpush1.msra.mxu0 0.0
    %2877 = vmatprep.subr.mxu0 0.0
    %2878 = vmatpush1.msra.mxu0 0.0
    %2879 = vmatprep.subr.mxu0 0.0
    %2880 = vmatpush1.msra.mxu0 0.0
    %2881 = vmatprep.subr.mxu0 0.0
    %2882 = vmatpush1.msra.mxu0 0.0
    %2883 = vmatprep.subr.mxu0 0.0
    %2884 = vmatpush1.msra.mxu0 0.0
    %2885 = vmatprep.subr.mxu0 0.0
    %2886 = vmatpush1.msra.mxu0 0.0
    %2887 = vmatprep.subr.mxu0 0.0
    %2888 = vmatpush1.msra.mxu0 0.0
    %2889 = vmatprep.subr.mxu0 0.0
    %2890 = vmatpush1.msra.mxu0 0.0
    %2891 = vmatprep.subr.mxu0 0.0
    %2892 = vmatpush1.msra.mxu0 0.0
    %2893 = vmatprep.subr.mxu0 0.0
    %2894 = vmatpush1.msra.mxu0 0.0
    %2895 = vmatprep.subr.mxu0 0.0
    %2896 = vmatpush1.msra.mxu0 0.0
    %2897 = vmatprep.subr.mxu0 0.0
    %2898 = vmatpush1.msra.mxu0 0.0
    %2899 = vmatprep.subr.mxu0 0.0
    %2900 = vmatpush1.msra.mxu0 0.0
    %2901 = vmatprep.subr.mxu0 0.0
    %2902 = vmatpush1.msra.mxu0 0.0
    %2903 = vmatprep.subr.mxu0 0.0
    %2904 = vmatpush1.msra.mxu0 0.0
    %2905 = vmatprep.subr.mxu0 0.0
    %2906 = vmatpush1.msra.mxu0 0.0
    %2907 = vmatprep.subr.mxu0 0.0
    %2908 = vmatpush1.msra.mxu0 0.0
    %2909 = vmatprep.subr.mxu0 0.0
    %2910 = vmatpush1.msra.mxu0 0.0
    %2911 = vmatprep.subr.mxu0 0.0
    %2912 = vmatpush1.msra.mxu0 0.0
    %2913 = vmatprep.subr.mxu0 0.0
    %2914 = vmatpush1.msra.mxu0 0.0
    %2915 = vmatprep.subr.mxu0 0.0
    %2916 = vmatpush1.msra.mxu0 0.0
    %2917 = vmatprep.subr.mxu0 0.0
    %2918 = vmatpush1.msra.mxu0 0.0
    %2919 = vmatprep.subr.mxu0 0.0
    %2920 = vmatpush1.msra.mxu0 0.0
    %2921 = vmatprep.subr.mxu0 0.0
    %2922 = vmatpush1.msra.mxu0 0.0
    %2923 = vmatprep.subr.mxu0 0.0
    %2924 = vmatpush1.msra.mxu0 0.0
    %2925 = vmatprep.subr.mxu0 0.0
    %2926 = vmatpush1.msra.mxu0 0.0
    %2927 = vmatprep.subr.mxu0 0.0
    %2928 = vmatpush1.msra.mxu0 0.0
    %2929 = vmatprep.subr.mxu0 0.0
    %2930 = vmatpush1.msra.mxu0 0.0
    %2931 = vmatprep.mubr.f32.mxu0 0.0
    %2932 = vmatmul.mubr.f32.gmra.mrb[0].mxu0 %v2865
    %v2933 = vpop.f32.mrb[0].mxu0
    %v2934 = vadd.f32 0.0, %v2933
    %v2935 = vpop.f32.mrb[0].mxu0
    %2936 = vdwg.mxu0
    %2937 = vrot.lane.b32.xlu0 %v256, 32
    %v2938 = vpop.permute.xlu0 %2937
    %v2941 = vsel %vm820, %v2858, 0
    %2943 = vmatprep.subr.mxu0 0.0
    %2944 = vmatpush1.msra.mxu0 %v2938
    %2945 = vmatprep.subr.mxu0 0.0
    %2946 = vmatpush1.msra.mxu0 0.0
    %2947 = vmatprep.subr.mxu0 0.0
    %2948 = vmatpush1.msra.mxu0 0.0
    %2949 = vmatprep.subr.mxu0 0.0
    %2950 = vmatpush1.msra.mxu0 0.0
    %2951 = vmatprep.subr.mxu0 0.0
    %2952 = vmatpush1.msra.mxu0 0.0
    %2953 = vmatprep.subr.mxu0 0.0
    %2954 = vmatpush1.msra.mxu0 0.0
    %2955 = vmatprep.subr.mxu0 0.0
    %2956 = vmatpush1.msra.mxu0 0.0
    %2957 = vmatprep.subr.mxu0 0.0
    %2958 = vmatpush1.msra.mxu0 0.0
    %2959 = vmatprep.subr.mxu0 0.0
    %2960 = vmatpush1.msra.mxu0 0.0
    %2961 = vmatprep.subr.mxu0 0.0
    %2962 = vmatpush1.msra.mxu0 0.0
    %2963 = vmatprep.subr.mxu0 0.0
    %2964 = vmatpush1.msra.mxu0 0.0
    %2965 = vmatprep.subr.mxu0 0.0
    %2966 = vmatpush1.msra.mxu0 0.0
    %2967 = vmatprep.subr.mxu0 0.0
    %2968 = vmatpush1.msra.mxu0 0.0
    %2969 = vmatprep.subr.mxu0 0.0
    %2970 = vmatpush1.msra.mxu0 0.0
    %2971 = vmatprep.subr.mxu0 0.0
    %2972 = vmatpush1.msra.mxu0 0.0
    %2973 = vmatprep.subr.mxu0 0.0
    %2974 = vmatpush1.msra.mxu0 0.0
    %2975 = vmatprep.subr.mxu0 0.0
    %2976 = vmatpush1.msra.mxu0 0.0
    %2977 = vmatprep.subr.mxu0 0.0
    %2978 = vmatpush1.msra.mxu0 0.0
    %2979 = vmatprep.subr.mxu0 0.0
    %2980 = vmatpush1.msra.mxu0 0.0
    %2981 = vmatprep.subr.mxu0 0.0
    %2982 = vmatpush1.msra.mxu0 0.0
    %2983 = vmatprep.subr.mxu0 0.0
    %2984 = vmatpush1.msra.mxu0 0.0
    %2985 = vmatprep.subr.mxu0 0.0
    %2986 = vmatpush1.msra.mxu0 0.0
    %2987 = vmatprep.subr.mxu0 0.0
    %2988 = vmatpush1.msra.mxu0 0.0
    %2989 = vmatprep.subr.mxu0 0.0
    %2990 = vmatpush1.msra.mxu0 0.0
    %2991 = vmatprep.subr.mxu0 0.0
    %2992 = vmatpush1.msra.mxu0 0.0
    %2993 = vmatprep.subr.mxu0 0.0
    %2994 = vmatpush1.msra.mxu0 0.0
    %2995 = vmatprep.subr.mxu0 0.0
    %2996 = vmatpush1.msra.mxu0 0.0
    %2997 = vmatprep.subr.mxu0 0.0
    %2998 = vmatpush1.msra.mxu0 0.0
    %2999 = vmatprep.subr.mxu0 0.0
    %3000 = vmatpush1.msra.mxu0 0.0
    %3001 = vmatprep.subr.mxu0 0.0
    %3002 = vmatpush1.msra.mxu0 0.0
    %3003 = vmatprep.subr.mxu0 0.0
    %3004 = vmatpush1.msra.mxu0 0.0
    %3005 = vmatprep.subr.mxu0 0.0
    %3006 = vmatpush1.msra.mxu0 0.0
    %3007 = vmatprep.mubr.f32.mxu0 0.0
    %3008 = vmatmul.mubr.f32.gmra.mrb[0].mxu0 %v2941
    %v3009 = vpop.f32.mrb[0].mxu0
    %v3010 = vadd.f32 0.0, %v3009
    %v3011 = vpop.f32.mrb[0].mxu0
    %3012 = vdwg.mxu0
    %3013 = vrot.lane.b32.xlu0 %v261, 32
    %v3014 = vpop.permute.xlu0 %3013
    %v3017 = vsel %vm820, %v2859, 0
    %3019 = vmatprep.subr.mxu0 0.0
    %3020 = vmatpush1.msra.mxu0 %v3014
    %3021 = vmatprep.subr.mxu0 0.0
    %3022 = vmatpush1.msra.mxu0 0.0
    %3023 = vmatprep.subr.mxu0 0.0
    %3024 = vmatpush1.msra.mxu0 0.0
    %3025 = vmatprep.subr.mxu0 0.0
    %3026 = vmatpush1.msra.mxu0 0.0
    %3027 = vmatprep.subr.mxu0 0.0
    %3028 = vmatpush1.msra.mxu0 0.0
    %3029 = vmatprep.subr.mxu0 0.0
    %3030 = vmatpush1.msra.mxu0 0.0
    %3031 = vmatprep.subr.mxu0 0.0
    %3032 = vmatpush1.msra.mxu0 0.0
    %3033 = vmatprep.subr.mxu0 0.0
    %3034 = vmatpush1.msra.mxu0 0.0
    %3035 = vmatprep.subr.mxu0 0.0
    %3036 = vmatpush1.msra.mxu0 0.0
    %3037 = vmatprep.subr.mxu0 0.0
    %3038 = vmatpush1.msra.mxu0 0.0
    %3039 = vmatprep.subr.mxu0 0.0
    %3040 = vmatpush1.msra.mxu0 0.0
    %3041 = vmatprep.subr.mxu0 0.0
    %3042 = vmatpush1.msra.mxu0 0.0
    %3043 = vmatprep.subr.mxu0 0.0
    %3044 = vmatpush1.msra.mxu0 0.0
    %3045 = vmatprep.subr.mxu0 0.0
    %3046 = vmatpush1.msra.mxu0 0.0
    %3047 = vmatprep.subr.mxu0 0.0
    %3048 = vmatpush1.msra.mxu0 0.0
    %3049 = vmatprep.subr.mxu0 0.0
    %3050 = vmatpush1.msra.mxu0 0.0
    %3051 = vmatprep.subr.mxu0 0.0
    %3052 = vmatpush1.msra.mxu0 0.0
    %3053 = vmatprep.subr.mxu0 0.0
    %3054 = vmatpush1.msra.mxu0 0.0
    %3055 = vmatprep.subr.mxu0 0.0
    %3056 = vmatpush1.msra.mxu0 0.0
    %3057 = vmatprep.subr.mxu0 0.0
    %3058 = vmatpush1.msra.mxu0 0.0
    %3059 = vmatprep.subr.mxu0 0.0
    %3060 = vmatpush1.msra.mxu0 0.0
    %3061 = vmatprep.subr.mxu0 0.0
    %3062 = vmatpush1.msra.mxu0 0.0
    %3063 = vmatprep.subr.mxu0 0.0
    %3064 = vmatpush1.msra.mxu0 0.0
    %3065 = vmatprep.subr.mxu0 0.0
    %3066 = vmatpush1.msra.mxu0 0.0
    %3067 = vmatprep.subr.mxu0 0.0
    %3068 = vmatpush1.msra.mxu0 0.0
    %3069 = vmatprep.subr.mxu0 0.0
    %3070 = vmatpush1.msra.mxu0 0.0
    %3071 = vmatprep.subr.mxu0 0.0
    %3072 = vmatpush1.msra.mxu0 0.0
    %3073 = vmatprep.subr.mxu0 0.0
    %3074 = vmatpush1.msra.mxu0 0.0
    %3075 = vmatprep.subr.mxu0 0.0
    %3076 = vmatpush1.msra.mxu0 0.0
    %3077 = vmatprep.subr.mxu0 0.0
    %3078 = vmatpush1.msra.mxu0 0.0
    %3079 = vmatprep.subr.mxu0 0.0
    %3080 = vmatpush1.msra.mxu0 0.0
    %3081 = vmatprep.subr.mxu0 0.0
    %3082 = vmatpush1.msra.mxu0 0.0
    %3083 = vmatprep.mubr.f32.mxu0 0.0
    %3084 = vmatmul.mubr.f32.gmra.mrb[0].mxu0 %v3017
    %v3085 = vpop.f32.mrb[0].mxu0
    %v3086 = vadd.f32 0.0, %v3085
    %v3087 = vpop.f32.mrb[0].mxu0
    %3088 = vdwg.mxu0
    %3089 = vrot.lane.b32.xlu0 %v266, 32
    %v3090 = vpop.permute.xlu0 %3089
    %v3093 = vsel %vm820, %v2860, 0
    %3095 = vmatprep.subr.mxu0 0.0
    %3096 = vmatpush1.msra.mxu0 %v3090
    %3097 = vmatprep.subr.mxu0 0.0
    %3098 = vmatpush1.msra.mxu0 0.0
    %3099 = vmatprep.subr.mxu0 0.0
    %3100 = vmatpush1.msra.mxu0 0.0
    %3101 = vmatprep.subr.mxu0 0.0
    %3102 = vmatpush1.msra.mxu0 0.0
    %3103 = vmatprep.subr.mxu0 0.0
    %3104 = vmatpush1.msra.mxu0 0.0
    %3105 = vmatprep.subr.mxu0 0.0
    %3106 = vmatpush1.msra.mxu0 0.0
    %3107 = vmatprep.subr.mxu0 0.0
    %3108 = vmatpush1.msra.mxu0 0.0
    %3109 = vmatprep.subr.mxu0 0.0
    %3110 = vmatpush1.msra.mxu0 0.0
    %3111 = vmatprep.subr.mxu0 0.0
    %3112 = vmatpush1.msra.mxu0 0.0
    %3113 = vmatprep.subr.mxu0 0.0
    %3114 = vmatpush1.msra.mxu0 0.0
    %3115 = vmatprep.subr.mxu0 0.0
    %3116 = vmatpush1.msra.mxu0 0.0
    %3117 = vmatprep.subr.mxu0 0.0
    %3118 = vmatpush1.msra.mxu0 0.0
    %3119 = vmatprep.subr.mxu0 0.0
    %3120 = vmatpush1.msra.mxu0 0.0
    %3121 = vmatprep.subr.mxu0 0.0
    %3122 = vmatpush1.msra.mxu0 0.0
    %3123 = vmatprep.subr.mxu0 0.0
    %3124 = vmatpush1.msra.mxu0 0.0
    %3125 = vmatprep.subr.mxu0 0.0
    %3126 = vmatpush1.msra.mxu0 0.0
    %3127 = vmatprep.subr.mxu0 0.0
    %3128 = vmatpush1.msra.mxu0 0.0
    %3129 = vmatprep.subr.mxu0 0.0
    %3130 = vmatpush1.msra.mxu0 0.0
    %3131 = vmatprep.subr.mxu0 0.0
    %3132 = vmatpush1.msra.mxu0 0.0
    %3133 = vmatprep.subr.mxu0 0.0
    %3134 = vmatpush1.msra.mxu0 0.0
    %3135 = vmatprep.subr.mxu0 0.0
    %3136 = vmatpush1.msra.mxu0 0.0
    %3137 = vmatprep.subr.mxu0 0.0
    %3138 = vmatpush1.msra.mxu0 0.0
    %3139 = vmatprep.subr.mxu0 0.0
    %3140 = vmatpush1.msra.mxu0 0.0
    %3141 = vmatprep.subr.mxu0 0.0
    %3142 = vmatpush1.msra.mxu0 0.0
    %3143 = vmatprep.subr.mxu0 0.0
    %3144 = vmatpush1.msra.mxu0 0.0
    %3145 = vmatprep.subr.mxu0 0.0
    %3146 = vmatpush1.msra.mxu0 0.0
    %3147 = vmatprep.subr.mxu0 0.0
    %3148 = vmatpush1.msra.mxu0 0.0
    %3149 = vmatprep.subr.mxu0 0.0
    %3150 = vmatpush1.msra.mxu0 0.0
    %3151 = vmatprep.subr.mxu0 0.0
    %3152 = vmatpush1.msra.mxu0 0.0
    %3153 = vmatprep.subr.mxu0 0.0
    %3154 = vmatpush1.msra.mxu0 0.0
    %3155 = vmatprep.subr.mxu0 0.0
    %3156 = vmatpush1.msra.mxu0 0.0
    %3157 = vmatprep.subr.mxu0 0.0
    %3158 = vmatpush1.msra.mxu0 0.0
    %3159 = vmatprep.mubr.f32.mxu0 0.0
    %3160 = vmatmul.mubr.f32.gmra.mrb[0].mxu0 %v3093
    %v3161 = vpop.f32.mrb[0].mxu0
    %v3162 = vadd.f32 0.0, %v3161
    %v3163 = vpop.f32.mrb[0].mxu0
    %3164 = vdwg.mxu0
    %3169 = vrot.lane.b32.xlu0 %v1595, 32
    %v3170 = vpop.permute.xlu0 %3169
    %3171 = vrot.lane.b32.xlu0 %v1672, 32
    %v3172 = vpop.permute.xlu0 %3171
    %3173 = vrot.lane.b32.xlu0 %v1749, 32
    %v3174 = vpop.permute.xlu0 %3173
    %3175 = vrot.lane.b32.xlu0 %v1826, 32
    %v3176 = vpop.permute.xlu0 %3175
    %3185 = vrot.lane.b32.xlu0 %v2266, 64
    %v3186 = vpop.permute.xlu0 %3185
    %3187 = vrot.lane.b32.xlu0 %v2342, 64
    %v3188 = vpop.permute.xlu0 %3187
    %3189 = vrot.lane.b32.xlu0 %v2418, 64
    %v3190 = vpop.permute.xlu0 %3189
    %3191 = vrot.lane.b32.xlu0 %v2494, 64
    %v3192 = vpop.permute.xlu0 %3191
    %3201 = vrot.lane.b32.xlu0 %v2934, 96
    %v3202 = vpop.permute.xlu0 %3201
    %3203 = vrot.lane.b32.xlu0 %v3010, 96
    %v3204 = vpop.permute.xlu0 %3203
    %3205 = vrot.lane.b32.xlu0 %v3086, 96
    %v3206 = vpop.permute.xlu0 %3205
    %3207 = vrot.lane.b32.xlu0 %v3162, 96
    %v3208 = vpop.permute.xlu0 %3207
    %v3213 = vsel %vm507, %v935, %v3170
    %v3214 = vsel %vm507, %v1008, %v3172
    %v3215 = vsel %vm507, %v1081, %v3174
    %v3216 = vsel %vm507, %v1154, %v3176
    %vm3217 = vcmask 523264
    %v3218 = vsel %vm3217, %v3213, %v3186
    %v3219 = vsel %vm3217, %v3214, %v3188
    %v3220 = vsel %vm3217, %v3215, %v3190
    %v3221 = vsel %vm3217, %v3216, %v3192
    %vm3222 = vcmask 785408
    %v3223 = vsel %vm3222, %v3218, %v3202
    %v3224 = vsel %vm3222, %v3219, %v3204
    %v3225 = vsel %vm3222, %v3220, %v3206
    %v3226 = vsel %vm3222, %v3221, %v3208
    %s3227 = scalar_lea.vmem [#allocation8], 384
    %v3228 = vld [vmem:[%s3227] sm:$0xff]
    %v3229 = vld [vmem:[%s3227 + $0x8] sm:$0xff]
    %v3230 = vld [vmem:[%s3227 + $0x10] sm:$0xff]
    %v3231 = vld [vmem:[%s3227 + $0x18] sm:$0xff]
    %v3232 = vld [vmem:[%s3227 + $0x20] sm:$0xff]
    %v3233 = vld [vmem:[%s3227 + $0x28] sm:$0xff]
    %v3234 = vld [vmem:[%s3227 + $0x30] sm:$0xff]
    %v3235 = vld [vmem:[%s3227 + $0x38] sm:$0xff]
    %v3236 = vld [vmem:[%s3227 + $0x40] sm:$0xff]
    %v3237 = vld [vmem:[%s3227 + $0x48] sm:$0xff]
    %v3238 = vld [vmem:[%s3227 + $0x50] sm:$0xff]
    %v3239 = vld [vmem:[%s3227 + $0x58] sm:$0xff]
    %v3240 = vld [vmem:[%s3227 + $0x60] sm:$0xff]
    %v3241 = vld [vmem:[%s3227 + $0x68] sm:$0xff]
    %v3242 = vld [vmem:[%s3227 + $0x70] sm:$0xff]
    %v3243 = vld [vmem:[%s3227 + $0x78] sm:$0xff]
    %v3244 = vld [vmem:[%s5 + $0x3] sm:$0x1]
    %v3245 = vlaneseq
    %v3246 = vshrl.u32 %v3245, 7
    %v3247 = vsub.s32 0, %v3246
    %v3248 = vrot.slane %v3244, %v3247
    %3249 = vmatprep.subr.mxu0 0.0
    %3250 = vmatpush1.msra.mxu0 %v3228
    %3251 = vmatprep.subr.mxu0 0.0
    %3252 = vmatpush1.msra.mxu0 %v3229
    %3253 = vmatprep.subr.mxu0 0.0
    %3254 = vmatpush1.msra.mxu0 %v3230
    %3255 = vmatprep.subr.mxu0 0.0
    %3256 = vmatpush1.msra.mxu0 %v3231
    %3257 = vmatprep.subr.mxu0 0.0
    %3258 = vmatpush1.msra.mxu0 %v3232
    %3259 = vmatprep.subr.mxu0 0.0
    %3260 = vmatpush1.msra.mxu0 %v3233
    %3261 = vmatprep.subr.mxu0 0.0
    %3262 = vmatpush1.msra.mxu0 %v3234
    %3263 = vmatprep.subr.mxu0 0.0
    %3264 = vmatpush1.msra.mxu0 %v3235
    %3265 = vmatprep.subr.mxu0 0.0
    %3266 = vmatpush1.msra.mxu0 %v3236
    %3267 = vmatprep.subr.mxu0 0.0
    %3268 = vmatpush1.msra.mxu0 %v3237
    %3269 = vmatprep.subr.mxu0 0.0
    %3270 = vmatpush1.msra.mxu0 %v3238
    %3271 = vmatprep.subr.mxu0 0.0
    %3272 = vmatpush1.msra.mxu0 %v3239
    %3273 = vmatprep.subr.mxu0 0.0
    %3274 = vmatpush1.msra.mxu0 %v3240
    %3275 = vmatprep.subr.mxu0 0.0
    %3276 = vmatpush1.msra.mxu0 %v3241
    %3277 = vmatprep.subr.mxu0 0.0
    %3278 = vmatpush1.msra.mxu0 %v3242
    %3279 = vmatprep.subr.mxu0 0.0
    %3280 = vmatpush1.msra.mxu0 %v3243
    %3281 = vmatprep.subr.mxu0 0.0
    %3282 = vmatpush1.msra.mxu0 0.0
    %3283 = vmatprep.subr.mxu0 0.0
    %3284 = vmatpush1.msra.mxu0 0.0
    %3285 = vmatprep.subr.mxu0 0.0
    %3286 = vmatpush1.msra.mxu0 0.0
    %3287 = vmatprep.subr.mxu0 0.0
    %3288 = vmatpush1.msra.mxu0 0.0
    %3289 = vmatprep.subr.mxu0 0.0
    %3290 = vmatpush1.msra.mxu0 0.0
    %3291 = vmatprep.subr.mxu0 0.0
    %3292 = vmatpush1.msra.mxu0 0.0
    %3293 = vmatprep.subr.mxu0 0.0
    %3294 = vmatpush1.msra.mxu0 0.0
    %3295 = vmatprep.subr.mxu0 0.0
    %3296 = vmatpush1.msra.mxu0 0.0
    %3297 = vmatprep.subr.mxu0 0.0
    %3298 = vmatpush1.msra.mxu0 0.0
    %3299 = vmatprep.subr.mxu0 0.0
    %3300 = vmatpush1.msra.mxu0 0.0
    %3301 = vmatprep.subr.mxu0 0.0
    %3302 = vmatpush1.msra.mxu0 0.0
    %3303 = vmatprep.subr.mxu0 0.0
    %3304 = vmatpush1.msra.mxu0 0.0
    %3305 = vmatprep.subr.mxu0 0.0
    %3306 = vmatpush1.msra.mxu0 0.0
    %3307 = vmatprep.subr.mxu0 0.0
    %3308 = vmatpush1.msra.mxu0 0.0
    %3309 = vmatprep.subr.mxu0 0.0
    %3310 = vmatpush1.msra.mxu0 0.0
    %3311 = vmatprep.subr.mxu0 0.0
    %3312 = vmatpush1.msra.mxu0 0.0
    %3313 = vmatprep.mubr.f32.mxu0 0.0
    %3314 = vmatmul.mubr.f32.gmra.mrb[0].mxu0 %v3223
    %v3315 = vpop.f32.mrb[0].mxu0
    %v3316 = vadd.f32 %v3248, %v3315
    %v3317 = vpop.f32.mrb[0].mxu0
    %3318 = vmatprep.mubr.f32.mxu0 0.0
    %3319 = vmatmul.mubr.f32.gmra.mrb[0].mxu0 %v3224
    %v3320 = vpop.f32.mrb[0].mxu0
    %v3321 = vadd.f32 %v3248, %v3320
    %v3322 = vpop.f32.mrb[0].mxu0
    %3323 = vmatprep.mubr.f32.mxu0 0.0
    %3324 = vmatmul.mubr.f32.gmra.mrb[0].mxu0 %v3225
    %v3325 = vpop.f32.mrb[0].mxu0
    %v3326 = vadd.f32 %v3248, %v3325
    %v3327 = vpop.f32.mrb[0].mxu0
    %3328 = vmatprep.mubr.f32.mxu0 0.0
    %3329 = vmatmul.mubr.f32.gmra.mrb[0].mxu0 %v3226
    %v3330 = vpop.f32.mrb[0].mxu0
    %v3331 = vadd.f32 %v3248, %v3330
    %v3332 = vpop.f32.mrb[0].mxu0
    %3333 = vdwg.mxu0
    %v3334 = vadd.f32 %v143, %v3316
    %v3335 = vadd.f32 %v144, %v3321
    %v3336 = vadd.f32 %v145, %v3326
    %v3337 = vadd.f32 %v146, %v3331
    %v3338 = vld [vmem:[%s12] sm:$0x1]
    %v3339 = vld [vmem:[%s13] sm:$0x1]
    %3340 = vadd.xlane.f32.xlu0 %v3334
    %v3341 = vpop.xlane.xlu0 %3340
    %3342 = vadd.xlane.f32.xlu0 %v3335
    %v3343 = vpop.xlane.xlu0 %3342
    %3344 = vadd.xlane.f32.xlu0 %v3336
    %v3345 = vpop.xlane.xlu0 %3344
    %3346 = vadd.xlane.f32.xlu0 %v3337
    %v3347 = vpop.xlane.xlu0 %3346
    %v3348 = vrcp.pop 128.0
    %v3349 = vmul.f32 %v3341, %v3348
    %v3350 = vmul.f32 %v3343, %v3348
    %v3351 = vmul.f32 %v3345, %v3348
    %v3352 = vmul.f32 %v3347, %v3348
    %v3353 = vsub.f32 %v3334, %v3349
    %v3354 = vsub.f32 %v3335, %v3350
    %v3355 = vsub.f32 %v3336, %v3351
    %v3356 = vsub.f32 %v3337, %v3352
    %v3357 = vmul.f32 %v3353, %v3353
    %v3358 = vmul.f32 %v3354, %v3354
    %v3359 = vmul.f32 %v3355, %v3355
    %v3360 = vmul.f32 %v3356, %v3356
    %3361 = vadd.xlane.f32.xlu0 %v3357
    %v3362 = vpop.xlane.xlu0 %3361
    %3363 = vadd.xlane.f32.xlu0 %v3358
    %v3364 = vpop.xlane.xlu0 %3363
    %3365 = vadd.xlane.f32.xlu0 %v3359
    %v3366 = vpop.xlane.xlu0 %3365
    %3367 = vadd.xlane.f32.xlu0 %v3360
    %v3368 = vpop.xlane.xlu0 %3367
    %v3369 = vmul.f32 %v3362, 0.007874016
    %v3370 = vmul.f32 %v3364, 0.007874016
    %v3371 = vmul.f32 %v3366, 0.007874016
    %v3372 = vmul.f32 %v3368, 0.007874016
    %v3373 = vrsqrt.pop %v3369
    %v3374 = vmul.f32 %v3369, %v3373
    %vm3375 = vcmp.eq.f32.partialorder %v3369, inf
    %v3376 = vsel %vm3375, %v3369, %v3374
    %vm3377 = vcmp.eq.f32.partialorder %v3369, 0.0
    %v3378 = vand.u32 %v3369, 2147483648
    %v3379 = vsel %vm3377, %v3378, %v3376
    %v3380 = vrsqrt.pop %v3370
    %v3381 = vmul.f32 %v3370, %v3380
    %vm3382 = vcmp.eq.f32.partialorder %v3370, inf
    %v3383 = vsel %vm3382, %v3370, %v3381
    %vm3384 = vcmp.eq.f32.partialorder %v3370, 0.0
    %v3385 = vand.u32 %v3370, 2147483648
    %v3386 = vsel %vm3384, %v3385, %v3383
    %v3387 = vrsqrt.pop %v3371
    %v3388 = vmul.f32 %v3371, %v3387
    %vm3389 = vcmp.eq.f32.partialorder %v3371, inf
    %v3390 = vsel %vm3389, %v3371, %v3388
    %vm3391 = vcmp.eq.f32.partialorder %v3371, 0.0
    %v3392 = vand.u32 %v3371, 2147483648
    %v3393 = vsel %vm3391, %v3392, %v3390
    %v3394 = vrsqrt.pop %v3372
    %v3395 = vmul.f32 %v3372, %v3394
    %vm3396 = vcmp.eq.f32.partialorder %v3372, inf
    %v3397 = vsel %vm3396, %v3372, %v3395
    %vm3398 = vcmp.eq.f32.partialorder %v3372, 0.0
    %v3399 = vand.u32 %v3372, 2147483648
    %v3400 = vsel %vm3398, %v3399, %v3397
    %v3401 = vadd.f32 %v3379, 1e-06
    %v3402 = vadd.f32 %v3386, 1e-06
    %v3403 = vadd.f32 %v3393, 1e-06
    %v3404 = vadd.f32 %v3400, 1e-06
    %v3405 = vrcp.pop %v3401
    %v3406 = vrcp.pop %v3402
    %v3407 = vrcp.pop %v3403
    %v3408 = vrcp.pop %v3404
    %v3409 = vlaneseq
    %v3410 = vshrl.u32 %v3409, 7
    %v3411 = vsub.s32 0, %v3410
    %v3412 = vrot.slane %v3338, %v3411
    %v3413 = vmul.f32 %v3412, %v3353
    %v3414 = vmul.f32 %v3412, %v3354
    %v3415 = vmul.f32 %v3412, %v3355
    %v3416 = vmul.f32 %v3412, %v3356
    %v3417 = vmul.f32 %v3413, %v3405
    %v3418 = vmul.f32 %v3414, %v3406
    %v3419 = vmul.f32 %v3415, %v3407
    %v3420 = vmul.f32 %v3416, %v3408
    %v3421 = vlaneseq
    %v3422 = vshrl.u32 %v3421, 7
    %v3423 = vsub.s32 0, %v3422
    %v3424 = vrot.slane %v3339, %v3423
    %v3425 = vadd.f32 %v3417, %v3424
    %v3426 = vadd.f32 %v3418, %v3424
    %v3427 = vadd.f32 %v3419, %v3424
    %v3428 = vadd.f32 %v3420, %v3424
    %v3429 = vld [vmem:[#allocation10] sm:$0xff]
    %v3430 = vld [vmem:[#allocation10 + $0x8] sm:$0xff]
    %v3431 = vld [vmem:[#allocation10 + $0x10] sm:$0xff]
    %v3432 = vld [vmem:[#allocation10 + $0x18] sm:$0xff]
    %v3433 = vld [vmem:[#allocation10 + $0x20] sm:$0xff]
    %v3434 = vld [vmem:[#allocation10 + $0x28] sm:$0xff]
    %v3435 = vld [vmem:[#allocation10 + $0x30] sm:$0xff]
    %v3436 = vld [vmem:[#allocation10 + $0x38] sm:$0xff]
    %v3437 = vld [vmem:[#allocation10 + $0x40] sm:$0xff]
    %v3438 = vld [vmem:[#allocation10 + $0x48] sm:$0xff]
    %v3439 = vld [vmem:[#allocation10 + $0x50] sm:$0xff]
    %v3440 = vld [vmem:[#allocation10 + $0x58] sm:$0xff]
    %v3441 = vld [vmem:[#allocation10 + $0x60] sm:$0xff]
    %v3442 = vld [vmem:[#allocation10 + $0x68] sm:$0xff]
    %v3443 = vld [vmem:[#allocation10 + $0x70] sm:$0xff]
    %v3444 = vld [vmem:[#allocation10 + $0x78] sm:$0xff]
    %v3445 = vld [vmem:[%s7] sm:$0x1]
    %v3446 = vlaneseq
    %v3447 = vshrl.u32 %v3446, 7
    %v3448 = vsub.s32 0, %v3447
    %v3449 = vrot.slane %v3445, %v3448
    %3450 = vmatprep.subr.mxu0 0.0
    %3451 = vmatpush1.msra.mxu0 %v3429
    %3452 = vmatprep.subr.mxu0 0.0
    %3453 = vmatpush1.msra.mxu0 %v3430
    %3454 = vmatprep.subr.mxu0 0.0
    %3455 = vmatpush1.msra.mxu0 %v3431
    %3456 = vmatprep.subr.mxu0 0.0
    %3457 = vmatpush1.msra.mxu0 %v3432
    %3458 = vmatprep.subr.mxu0 0.0
    %3459 = vmatpush1.msra.mxu0 %v3433
    %3460 = vmatprep.subr.mxu0 0.0
    %3461 = vmatpush1.msra.mxu0 %v3434
    %3462 = vmatprep.subr.mxu0 0.0
    %3463 = vmatpush1.msra.mxu0 %v3435
    %3464 = vmatprep.subr.mxu0 0.0
    %3465 = vmatpush1.msra.mxu0 %v3436
    %3466 = vmatprep.subr.mxu0 0.0
    %3467 = vmatpush1.msra.mxu0 %v3437
    %3468 = vmatprep.subr.mxu0 0.0
    %3469 = vmatpush1.msra.mxu0 %v3438
    %3470 = vmatprep.subr.mxu0 0.0
    %3471 = vmatpush1.msra.mxu0 %v3439
    %3472 = vmatprep.subr.mxu0 0.0
    %3473 = vmatpush1.msra.mxu0 %v3440
    %3474 = vmatprep.subr.mxu0 0.0
    %3475 = vmatpush1.msra.mxu0 %v3441
    %3476 = vmatprep.subr.mxu0 0.0
    %3477 = vmatpush1.msra.mxu0 %v3442
    %3478 = vmatprep.subr.mxu0 0.0
    %3479 = vmatpush1.msra.mxu0 %v3443
    %3480 = vmatprep.subr.mxu0 0.0
    %3481 = vmatpush1.msra.mxu0 %v3444
    %3482 = vmatprep.subr.mxu0 0.0
    %3483 = vmatpush1.msra.mxu0 0.0
    %3484 = vmatprep.subr.mxu0 0.0
    %3485 = vmatpush1.msra.mxu0 0.0
    %3486 = vmatprep.subr.mxu0 0.0
    %3487 = vmatpush1.msra.mxu0 0.0
    %3488 = vmatprep.subr.mxu0 0.0
    %3489 = vmatpush1.msra.mxu0 0.0
    %3490 = vmatprep.subr.mxu0 0.0
    %3491 = vmatpush1.msra.mxu0 0.0
    %3492 = vmatprep.subr.mxu0 0.0
    %3493 = vmatpush1.msra.mxu0 0.0
    %3494 = vmatprep.subr.mxu0 0.0
    %3495 = vmatpush1.msra.mxu0 0.0
    %3496 = vmatprep.subr.mxu0 0.0
    %3497 = vmatpush1.msra.mxu0 0.0
    %3498 = vmatprep.subr.mxu0 0.0
    %3499 = vmatpush1.msra.mxu0 0.0
    %3500 = vmatprep.subr.mxu0 0.0
    %3501 = vmatpush1.msra.mxu0 0.0
    %3502 = vmatprep.subr.mxu0 0.0
    %3503 = vmatpush1.msra.mxu0 0.0
    %3504 = vmatprep.subr.mxu0 0.0
    %3505 = vmatpush1.msra.mxu0 0.0
    %3506 = vmatprep.subr.mxu0 0.0
    %3507 = vmatpush1.msra.mxu0 0.0
    %3508 = vmatprep.subr.mxu0 0.0
    %3509 = vmatpush1.msra.mxu0 0.0
    %3510 = vmatprep.subr.mxu0 0.0
    %3511 = vmatpush1.msra.mxu0 0.0
    %3512 = vmatprep.subr.mxu0 0.0
    %3513 = vmatpush1.msra.mxu0 0.0
    %3514 = vmatprep.mubr.f32.mxu0 0.0
    %3515 = vmatmul.mubr.f32.gmra.mrb[0].mxu0 %v147
    %v3516 = vpop.f32.mrb[0].mxu0
    %v3517 = vadd.f32 %v3449, %v3516
    %v3518 = vpop.f32.mrb[0].mxu0
    %3519 = vmatprep.mubr.f32.mxu0 0.0
    %3520 = vmatmul.mubr.f32.gmra.mrb[0].mxu0 %v148
    %v3521 = vpop.f32.mrb[0].mxu0
    %v3522 = vadd.f32 %v3449, %v3521
    %v3523 = vpop.f32.mrb[0].mxu0
    %3524 = vmatprep.mubr.f32.mxu0 0.0
    %3525 = vmatmul.mubr.f32.gmra.mrb[0].mxu0 %v149
    %v3526 = vpop.f32.mrb[0].mxu0
    %v3527 = vadd.f32 %v3449, %v3526
    %v3528 = vpop.f32.mrb[0].mxu0
    %3529 = vmatprep.mubr.f32.mxu0 0.0
    %3530 = vmatmul.mubr.f32.gmra.mrb[0].mxu0 %v150
    %v3531 = vpop.f32.mrb[0].mxu0
    %v3532 = vadd.f32 %v3449, %v3531
    %v3533 = vpop.f32.mrb[0].mxu0
    %3534 = vmatprep.mubr.f32.mxu0 0.0
    %3535 = vmatmul.mubr.f32.gmra.mrb[0].mxu0 %v151
    %v3536 = vpop.f32.mrb[0].mxu0
    %v3537 = vadd.f32 %v3449, %v3536
    %v3538 = vpop.f32.mrb[0].mxu0
    %3539 = vmatprep.mubr.f32.mxu0 0.0
    %3540 = vmatmul.mubr.f32.gmra.mrb[0].mxu0 %v152
    %v3541 = vpop.f32.mrb[0].mxu0
    %v3542 = vadd.f32 %v3449, %v3541
    %v3543 = vpop.f32.mrb[0].mxu0
    %3544 = vmatprep.mubr.f32.mxu0 0.0
    %3545 = vmatmul.mubr.f32.gmra.mrb[0].mxu0 %v153
    %v3546 = vpop.f32.mrb[0].mxu0
    %v3547 = vadd.f32 %v3449, %v3546
    %v3548 = vpop.f32.mrb[0].mxu0
    %3549 = vmatprep.mubr.f32.mxu0 0.0
    %3550 = vmatmul.mubr.f32.gmra.mrb[0].mxu0 %v154
    %v3551 = vpop.f32.mrb[0].mxu0
    %v3552 = vadd.f32 %v3449, %v3551
    %v3553 = vpop.f32.mrb[0].mxu0
    %3554 = vdwg.mxu0
    %s3555 = scalar_lea.vmem [#allocation10], 128
    %v3556 = vld [vmem:[%s3555] sm:$0xff]
    %v3557 = vld [vmem:[%s3555 + $0x8] sm:$0xff]
    %v3558 = vld [vmem:[%s3555 + $0x10] sm:$0xff]
    %v3559 = vld [vmem:[%s3555 + $0x18] sm:$0xff]
    %v3560 = vld [vmem:[%s3555 + $0x20] sm:$0xff]
    %v3561 = vld [vmem:[%s3555 + $0x28] sm:$0xff]
    %v3562 = vld [vmem:[%s3555 + $0x30] sm:$0xff]
    %v3563 = vld [vmem:[%s3555 + $0x38] sm:$0xff]
    %v3564 = vld [vmem:[%s3555 + $0x40] sm:$0xff]
    %v3565 = vld [vmem:[%s3555 + $0x48] sm:$0xff]
    %v3566 = vld [vmem:[%s3555 + $0x50] sm:$0xff]
    %v3567 = vld [vmem:[%s3555 + $0x58] sm:$0xff]
    %v3568 = vld [vmem:[%s3555 + $0x60] sm:$0xff]
    %v3569 = vld [vmem:[%s3555 + $0x68] sm:$0xff]
    %v3570 = vld [vmem:[%s3555 + $0x70] sm:$0xff]
    %v3571 = vld [vmem:[%s3555 + $0x78] sm:$0xff]
    %v3572 = vld [vmem:[%s7 + $0x1] sm:$0x1]
    %v3573 = vlaneseq
    %v3574 = vshrl.u32 %v3573, 7
    %v3575 = vsub.s32 0, %v3574
    %v3576 = vrot.slane %v3572, %v3575
    %3577 = vmatprep.subr.mxu0 0.0
    %3578 = vmatpush1.msra.mxu0 %v3556
    %3579 = vmatprep.subr.mxu0 0.0
    %3580 = vmatpush1.msra.mxu0 %v3557
    %3581 = vmatprep.subr.mxu0 0.0
    %3582 = vmatpush1.msra.mxu0 %v3558
    %3583 = vmatprep.subr.mxu0 0.0
    %3584 = vmatpush1.msra.mxu0 %v3559
    %3585 = vmatprep.subr.mxu0 0.0
    %3586 = vmatpush1.msra.mxu0 %v3560
    %3587 = vmatprep.subr.mxu0 0.0
    %3588 = vmatpush1.msra.mxu0 %v3561
    %3589 = vmatprep.subr.mxu0 0.0
    %3590 = vmatpush1.msra.mxu0 %v3562
    %3591 = vmatprep.subr.mxu0 0.0
    %3592 = vmatpush1.msra.mxu0 %v3563
    %3593 = vmatprep.subr.mxu0 0.0
    %3594 = vmatpush1.msra.mxu0 %v3564
    %3595 = vmatprep.subr.mxu0 0.0
    %3596 = vmatpush1.msra.mxu0 %v3565
    %3597 = vmatprep.subr.mxu0 0.0
    %3598 = vmatpush1.msra.mxu0 %v3566
    %3599 = vmatprep.subr.mxu0 0.0
    %3600 = vmatpush1.msra.mxu0 %v3567
    %3601 = vmatprep.subr.mxu0 0.0
    %3602 = vmatpush1.msra.mxu0 %v3568
    %3603 = vmatprep.subr.mxu0 0.0
    %3604 = vmatpush1.msra.mxu0 %v3569
    %3605 = vmatprep.subr.mxu0 0.0
    %3606 = vmatpush1.msra.mxu0 %v3570
    %3607 = vmatprep.subr.mxu0 0.0
    %3608 = vmatpush1.msra.mxu0 %v3571
    %3609 = vmatprep.subr.mxu0 0.0
    %3610 = vmatpush1.msra.mxu0 0.0
    %3611 = vmatprep.subr.mxu0 0.0
    %3612 = vmatpush1.msra.mxu0 0.0
    %3613 = vmatprep.subr.mxu0 0.0
    %3614 = vmatpush1.msra.mxu0 0.0
    %3615 = vmatprep.subr.mxu0 0.0
    %3616 = vmatpush1.msra.mxu0 0.0
    %3617 = vmatprep.subr.mxu0 0.0
    %3618 = vmatpush1.msra.mxu0 0.0
    %3619 = vmatprep.subr.mxu0 0.0
    %3620 = vmatpush1.msra.mxu0 0.0
    %3621 = vmatprep.subr.mxu0 0.0
    %3622 = vmatpush1.msra.mxu0 0.0
    %3623 = vmatprep.subr.mxu0 0.0
    %3624 = vmatpush1.msra.mxu0 0.0
    %3625 = vmatprep.subr.mxu0 0.0
    %3626 = vmatpush1.msra.mxu0 0.0
    %3627 = vmatprep.subr.mxu0 0.0
    %3628 = vmatpush1.msra.mxu0 0.0
    %3629 = vmatprep.subr.mxu0 0.0
    %3630 = vmatpush1.msra.mxu0 0.0
    %3631 = vmatprep.subr.mxu0 0.0
    %3632 = vmatpush1.msra.mxu0 0.0
    %3633 = vmatprep.subr.mxu0 0.0
    %3634 = vmatpush1.msra.mxu0 0.0
    %3635 = vmatprep.subr.mxu0 0.0
    %3636 = vmatpush1.msra.mxu0 0.0
    %3637 = vmatprep.subr.mxu0 0.0
    %3638 = vmatpush1.msra.mxu0 0.0
    %3639 = vmatprep.subr.mxu0 0.0
    %3640 = vmatpush1.msra.mxu0 0.0
    %3641 = vmatprep.mubr.f32.mxu0 0.0
    %3642 = vmatmul.mubr.f32.gmra.mrb[0].mxu0 %v147
    %v3643 = vpop.f32.mrb[0].mxu0
    %v3644 = vadd.f32 %v3576, %v3643
    %v3645 = vpop.f32.mrb[0].mxu0
    %3646 = vmatprep.mubr.f32.mxu0 0.0
    %3647 = vmatmul.mubr.f32.gmra.mrb[0].mxu0 %v148
    %v3648 = vpop.f32.mrb[0].mxu0
    %v3649 = vadd.f32 %v3576, %v3648
    %v3650 = vpop.f32.mrb[0].mxu0
    %3651 = vmatprep.mubr.f32.mxu0 0.0
    %3652 = vmatmul.mubr.f32.gmra.mrb[0].mxu0 %v149
    %v3653 = vpop.f32.mrb[0].mxu0
    %v3654 = vadd.f32 %v3576, %v3653
    %v3655 = vpop.f32.mrb[0].mxu0
    %3656 = vmatprep.mubr.f32.mxu0 0.0
    %3657 = vmatmul.mubr.f32.gmra.mrb[0].mxu0 %v150
    %v3658 = vpop.f32.mrb[0].mxu0
    %v3659 = vadd.f32 %v3576, %v3658
    %v3660 = vpop.f32.mrb[0].mxu0
    %3661 = vmatprep.mubr.f32.mxu0 0.0
    %3662 = vmatmul.mubr.f32.gmra.mrb[0].mxu0 %v151
    %v3663 = vpop.f32.mrb[0].mxu0
    %v3664 = vadd.f32 %v3576, %v3663
    %v3665 = vpop.f32.mrb[0].mxu0
    %3666 = vmatprep.mubr.f32.mxu0 0.0
    %3667 = vmatmul.mubr.f32.gmra.mrb[0].mxu0 %v152
    %v3668 = vpop.f32.mrb[0].mxu0
    %v3669 = vadd.f32 %v3576, %v3668
    %v3670 = vpop.f32.mrb[0].mxu0
    %3671 = vmatprep.mubr.f32.mxu0 0.0
    %3672 = vmatmul.mubr.f32.gmra.mrb[0].mxu0 %v153
    %v3673 = vpop.f32.mrb[0].mxu0
    %v3674 = vadd.f32 %v3576, %v3673
    %v3675 = vpop.f32.mrb[0].mxu0
    %3676 = vmatprep.mubr.f32.mxu0 0.0
    %3677 = vmatmul.mubr.f32.gmra.mrb[0].mxu0 %v154
    %v3678 = vpop.f32.mrb[0].mxu0
    %v3679 = vadd.f32 %v3576, %v3678
    %v3680 = vpop.f32.mrb[0].mxu0
    %3681 = vdwg.mxu0
    %s3682 = scalar_lea.vmem [#allocation10], 256
    %v3683 = vld [vmem:[%s3682] sm:$0xff]
    %v3684 = vld [vmem:[%s3682 + $0x8] sm:$0xff]
    %v3685 = vld [vmem:[%s3682 + $0x10] sm:$0xff]
    %v3686 = vld [vmem:[%s3682 + $0x18] sm:$0xff]
    %v3687 = vld [vmem:[%s3682 + $0x20] sm:$0xff]
    %v3688 = vld [vmem:[%s3682 + $0x28] sm:$0xff]
    %v3689 = vld [vmem:[%s3682 + $0x30] sm:$0xff]
    %v3690 = vld [vmem:[%s3682 + $0x38] sm:$0xff]
    %v3691 = vld [vmem:[%s3682 + $0x40] sm:$0xff]
    %v3692 = vld [vmem:[%s3682 + $0x48] sm:$0xff]
    %v3693 = vld [vmem:[%s3682 + $0x50] sm:$0xff]
    %v3694 = vld [vmem:[%s3682 + $0x58] sm:$0xff]
    %v3695 = vld [vmem:[%s3682 + $0x60] sm:$0xff]
    %v3696 = vld [vmem:[%s3682 + $0x68] sm:$0xff]
    %v3697 = vld [vmem:[%s3682 + $0x70] sm:$0xff]
    %v3698 = vld [vmem:[%s3682 + $0x78] sm:$0xff]
    %v3699 = vld [vmem:[%s7 + $0x2] sm:$0x1]
    %v3700 = vlaneseq
    %v3701 = vshrl.u32 %v3700, 7
    %v3702 = vsub.s32 0, %v3701
    %v3703 = vrot.slane %v3699, %v3702
    %3704 = vmatprep.subr.mxu0 0.0
    %3705 = vmatpush1.msra.mxu0 %v3683
    %3706 = vmatprep.subr.mxu0 0.0
    %3707 = vmatpush1.msra.mxu0 %v3684
    %3708 = vmatprep.subr.mxu0 0.0
    %3709 = vmatpush1.msra.mxu0 %v3685
    %3710 = vmatprep.subr.mxu0 0.0
    %3711 = vmatpush1.msra.mxu0 %v3686
    %3712 = vmatprep.subr.mxu0 0.0
    %3713 = vmatpush1.msra.mxu0 %v3687
    %3714 = vmatprep.subr.mxu0 0.0
    %3715 = vmatpush1.msra.mxu0 %v3688
    %3716 = vmatprep.subr.mxu0 0.0
    %3717 = vmatpush1.msra.mxu0 %v3689
    %3718 = vmatprep.subr.mxu0 0.0
    %3719 = vmatpush1.msra.mxu0 %v3690
    %3720 = vmatprep.subr.mxu0 0.0
    %3721 = vmatpush1.msra.mxu0 %v3691
    %3722 = vmatprep.subr.mxu0 0.0
    %3723 = vmatpush1.msra.mxu0 %v3692
    %3724 = vmatprep.subr.mxu0 0.0
    %3725 = vmatpush1.msra.mxu0 %v3693
    %3726 = vmatprep.subr.mxu0 0.0
    %3727 = vmatpush1.msra.mxu0 %v3694
    %3728 = vmatprep.subr.mxu0 0.0
    %3729 = vmatpush1.msra.mxu0 %v3695
    %3730 = vmatprep.subr.mxu0 0.0
    %3731 = vmatpush1.msra.mxu0 %v3696
    %3732 = vmatprep.subr.mxu0 0.0
    %3733 = vmatpush1.msra.mxu0 %v3697
    %3734 = vmatprep.subr.mxu0 0.0
    %3735 = vmatpush1.msra.mxu0 %v3698
    %3736 = vmatprep.subr.mxu0 0.0
    %3737 = vmatpush1.msra.mxu0 0.0
    %3738 = vmatprep.subr.mxu0 0.0
    %3739 = vmatpush1.msra.mxu0 0.0
    %3740 = vmatprep.subr.mxu0 0.0
    %3741 = vmatpush1.msra.mxu0 0.0
    %3742 = vmatprep.subr.mxu0 0.0
    %3743 = vmatpush1.msra.mxu0 0.0
    %3744 = vmatprep.subr.mxu0 0.0
    %3745 = vmatpush1.msra.mxu0 0.0
    %3746 = vmatprep.subr.mxu0 0.0
    %3747 = vmatpush1.msra.mxu0 0.0
    %3748 = vmatprep.subr.mxu0 0.0
    %3749 = vmatpush1.msra.mxu0 0.0
    %3750 = vmatprep.subr.mxu0 0.0
    %3751 = vmatpush1.msra.mxu0 0.0
    %3752 = vmatprep.subr.mxu0 0.0
    %3753 = vmatpush1.msra.mxu0 0.0
    %3754 = vmatprep.subr.mxu0 0.0
    %3755 = vmatpush1.msra.mxu0 0.0
    %3756 = vmatprep.subr.mxu0 0.0
    %3757 = vmatpush1.msra.mxu0 0.0
    %3758 = vmatprep.subr.mxu0 0.0
    %3759 = vmatpush1.msra.mxu0 0.0
    %3760 = vmatprep.subr.mxu0 0.0
    %3761 = vmatpush1.msra.mxu0 0.0
    %3762 = vmatprep.subr.mxu0 0.0
    %3763 = vmatpush1.msra.mxu0 0.0
    %3764 = vmatprep.subr.mxu0 0.0
    %3765 = vmatpush1.msra.mxu0 0.0
    %3766 = vmatprep.subr.mxu0 0.0
    %3767 = vmatpush1.msra.mxu0 0.0
    %3768 = vmatprep.mubr.f32.mxu0 0.0
    %3769 = vmatmul.mubr.f32.gmra.mrb[0].mxu0 %v3425
    %v3770 = vpop.f32.mrb[0].mxu0
    %v3771 = vadd.f32 %v3703, %v3770
    %v3772 = vpop.f32.mrb[0].mxu0
    %3773 = vmatprep.mubr.f32.mxu0 0.0
    %3774 = vmatmul.mubr.f32.gmra.mrb[0].mxu0 %v3426
    %v3775 = vpop.f32.mrb[0].mxu0
    %v3776 = vadd.f32 %v3703, %v3775
    %v3777 = vpop.f32.mrb[0].mxu0
    %3778 = vmatprep.mubr.f32.mxu0 0.0
    %3779 = vmatmul.mubr.f32.gmra.mrb[0].mxu0 %v3427
    %v3780 = vpop.f32.mrb[0].mxu0
    %v3781 = vadd.f32 %v3703, %v3780
    %v3782 = vpop.f32.mrb[0].mxu0
    %3783 = vmatprep.mubr.f32.mxu0 0.0
    %3784 = vmatmul.mubr.f32.gmra.mrb[0].mxu0 %v3428
    %v3785 = vpop.f32.mrb[0].mxu0
    %v3786 = vadd.f32 %v3703, %v3785
    %v3787 = vpop.f32.mrb[0].mxu0
    %3788 = vdwg.mxu0
    %v3793 = vlaneseq
    %v3794 = vshrl.u32 %v3793, 7
    %v3795 = vsub.s32 0, %v3794
    %v3796 = vrot.slane %v159, %v3795
    %v3797 = vlaneseq
    %v3798 = vshrl.u32 %v3797, 7
    %v3799 = vsub.s32 0, %v3798
    %v3800 = vrot.slane %v160, %v3799
    %v3801 = vlaneseq
    %v3802 = vshrl.u32 %v3801, 7
    %v3803 = vsub.s32 0, %v3802
    %v3804 = vrot.slane %v161, %v3803
    %v3805 = vlaneseq
    %v3806 = vshrl.u32 %v3805, 7
    %v3807 = vsub.s32 0, %v3806
    %v3808 = vrot.slane %v162, %v3807
    %v3814 = vsel %vm507, %v3771, 0
    %v3817 = vsel %vm507, %v3644, 0
    %v3820 = vsel %vm507, %v3649, 0
    %3822 = vmatprep.subr.mxu0 0.0
    %3823 = vmatpush1.xpose.msra.mxu0 %v3817
    %3824 = vmatprep.subr.mxu0 0.0
    %3825 = vmatpush1.xpose.msra.mxu0 %v3820
    %3826 = vmatprep.subr.mxu0 0.0
    %3827 = vmatpush1.xpose.msra.mxu0 0.0
    %3828 = vmatprep.subr.mxu0 0.0
    %3829 = vmatpush1.xpose.msra.mxu0 0.0
    %3830 = vmatprep.subr.mxu0 0.0
    %3831 = vmatpush1.xpose.msra.mxu0 0.0
    %3832 = vmatprep.subr.mxu0 0.0
    %3833 = vmatpush1.xpose.msra.mxu0 0.0
    %3834 = vmatprep.subr.mxu0 0.0
    %3835 = vmatpush1.xpose.msra.mxu0 0.0
    %3836 = vmatprep.subr.mxu0 0.0
    %3837 = vmatpush1.xpose.msra.mxu0 0.0
    %3838 = vmatprep.subr.mxu0 0.0
    %3839 = vmatpush1.xpose.msra.mxu0 0.0
    %3840 = vmatprep.subr.mxu0 0.0
    %3841 = vmatpush1.xpose.msra.mxu0 0.0
    %3842 = vmatprep.subr.mxu0 0.0
    %3843 = vmatpush1.xpose.msra.mxu0 0.0
    %3844 = vmatprep.subr.mxu0 0.0
    %3845 = vmatpush1.xpose.msra.mxu0 0.0
    %3846 = vmatprep.subr.mxu0 0.0
    %3847 = vmatpush1.xpose.msra.mxu0 0.0
    %3848 = vmatprep.subr.mxu0 0.0
    %3849 = vmatpush1.xpose.msra.mxu0 0.0
    %3850 = vmatprep.subr.mxu0 0.0
    %3851 = vmatpush1.xpose.msra.mxu0 0.0
    %3852 = vmatprep.subr.mxu0 0.0
    %3853 = vmatpush1.xpose.msra.mxu0 0.0
    %3854 = vmatprep.subr.mxu0 0.0
    %3855 = vmatpush1.xpose.msra.mxu0 0.0
    %3856 = vmatprep.subr.mxu0 0.0
    %3857 = vmatpush1.xpose.msra.mxu0 0.0
    %3858 = vmatprep.subr.mxu0 0.0
    %3859 = vmatpush1.xpose.msra.mxu0 0.0
    %3860 = vmatprep.subr.mxu0 0.0
    %3861 = vmatpush1.xpose.msra.mxu0 0.0
    %3862 = vmatprep.subr.mxu0 0.0
    %3863 = vmatpush1.xpose.msra.mxu0 0.0
    %3864 = vmatprep.subr.mxu0 0.0
    %3865 = vmatpush1.xpose.msra.mxu0 0.0
    %3866 = vmatprep.subr.mxu0 0.0
    %3867 = vmatpush1.xpose.msra.mxu0 0.0
    %3868 = vmatprep.subr.mxu0 0.0
    %3869 = vmatpush1.xpose.msra.mxu0 0.0
    %3870 = vmatprep.subr.mxu0 0.0
    %3871 = vmatpush1.xpose.msra.mxu0 0.0
    %3872 = vmatprep.subr.mxu0 0.0
    %3873 = vmatpush1.xpose.msra.mxu0 0.0
    %3874 = vmatprep.subr.mxu0 0.0
    %3875 = vmatpush1.xpose.msra.mxu0 0.0
    %3876 = vmatprep.subr.mxu0 0.0
    %3877 = vmatpush1.xpose.msra.mxu0 0.0
    %3878 = vmatprep.subr.mxu0 0.0
    %3879 = vmatpush1.xpose.msra.mxu0 0.0
    %3880 = vmatprep.subr.mxu0 0.0
    %3881 = vmatpush1.xpose.msra.mxu0 0.0
    %3882 = vmatprep.subr.mxu0 0.0
    %3883 = vmatpush1.xpose.msra.mxu0 0.0
    %3884 = vmatprep.subr.mxu0 0.0
    %3885 = vmatpush1.xpose.msra.mxu0 0.0
    %3886 = vmatprep.mubr.f32.mxu0 0.0
    %3887 = vmatmul.mubr.f32.gmra.mrb[0].mxu0 %v3814
    %v3888 = vpop.f32.mrb[0].mxu0
    %v3889 = vadd.f32 0.0, %v3888
    %v3890 = vpop.f32.mrb[0].mxu0
    %3891 = vdwg.mxu0
    %v3893 = vsel %vm507, %v3776, 0
    %v3896 = vsel %vm507, %v3654, 0
    %v3899 = vsel %vm507, %v3659, 0
    %3901 = vmatprep.subr.mxu0 0.0
    %3902 = vmatpush1.xpose.msra.mxu0 %v3896
    %3903 = vmatprep.subr.mxu0 0.0
    %3904 = vmatpush1.xpose.msra.mxu0 %v3899
    %3905 = vmatprep.subr.mxu0 0.0
    %3906 = vmatpush1.xpose.msra.mxu0 0.0
    %3907 = vmatprep.subr.mxu0 0.0
    %3908 = vmatpush1.xpose.msra.mxu0 0.0
    %3909 = vmatprep.subr.mxu0 0.0
    %3910 = vmatpush1.xpose.msra.mxu0 0.0
    %3911 = vmatprep.subr.mxu0 0.0
    %3912 = vmatpush1.xpose.msra.mxu0 0.0
    %3913 = vmatprep.subr.mxu0 0.0
    %3914 = vmatpush1.xpose.msra.mxu0 0.0
    %3915 = vmatprep.subr.mxu0 0.0
    %3916 = vmatpush1.xpose.msra.mxu0 0.0
    %3917 = vmatprep.subr.mxu0 0.0
    %3918 = vmatpush1.xpose.msra.mxu0 0.0
    %3919 = vmatprep.subr.mxu0 0.0
    %3920 = vmatpush1.xpose.msra.mxu0 0.0
    %3921 = vmatprep.subr.mxu0 0.0
    %3922 = vmatpush1.xpose.msra.mxu0 0.0
    %3923 = vmatprep.subr.mxu0 0.0
    %3924 = vmatpush1.xpose.msra.mxu0 0.0
    %3925 = vmatprep.subr.mxu0 0.0
    %3926 = vmatpush1.xpose.msra.mxu0 0.0
    %3927 = vmatprep.subr.mxu0 0.0
    %3928 = vmatpush1.xpose.msra.mxu0 0.0
    %3929 = vmatprep.subr.mxu0 0.0
    %3930 = vmatpush1.xpose.msra.mxu0 0.0
    %3931 = vmatprep.subr.mxu0 0.0
    %3932 = vmatpush1.xpose.msra.mxu0 0.0
    %3933 = vmatprep.subr.mxu0 0.0
    %3934 = vmatpush1.xpose.msra.mxu0 0.0
    %3935 = vmatprep.subr.mxu0 0.0
    %3936 = vmatpush1.xpose.msra.mxu0 0.0
    %3937 = vmatprep.subr.mxu0 0.0
    %3938 = vmatpush1.xpose.msra.mxu0 0.0
    %3939 = vmatprep.subr.mxu0 0.0
    %3940 = vmatpush1.xpose.msra.mxu0 0.0
    %3941 = vmatprep.subr.mxu0 0.0
    %3942 = vmatpush1.xpose.msra.mxu0 0.0
    %3943 = vmatprep.subr.mxu0 0.0
    %3944 = vmatpush1.xpose.msra.mxu0 0.0
    %3945 = vmatprep.subr.mxu0 0.0
    %3946 = vmatpush1.xpose.msra.mxu0 0.0
    %3947 = vmatprep.subr.mxu0 0.0
    %3948 = vmatpush1.xpose.msra.mxu0 0.0
    %3949 = vmatprep.subr.mxu0 0.0
    %3950 = vmatpush1.xpose.msra.mxu0 0.0
    %3951 = vmatprep.subr.mxu0 0.0
    %3952 = vmatpush1.xpose.msra.mxu0 0.0
    %3953 = vmatprep.subr.mxu0 0.0
    %3954 = vmatpush1.xpose.msra.mxu0 0.0
    %3955 = vmatprep.subr.mxu0 0.0
    %3956 = vmatpush1.xpose.msra.mxu0 0.0
    %3957 = vmatprep.subr.mxu0 0.0
    %3958 = vmatpush1.xpose.msra.mxu0 0.0
    %3959 = vmatprep.subr.mxu0 0.0
    %3960 = vmatpush1.xpose.msra.mxu0 0.0
    %3961 = vmatprep.subr.mxu0 0.0
    %3962 = vmatpush1.xpose.msra.mxu0 0.0
    %3963 = vmatprep.subr.mxu0 0.0
    %3964 = vmatpush1.xpose.msra.mxu0 0.0
    %3965 = vmatprep.mubr.f32.mxu0 0.0
    %3966 = vmatmul.mubr.f32.gmra.mrb[0].mxu0 %v3893
    %v3967 = vpop.f32.mrb[0].mxu0
    %v3968 = vadd.f32 0.0, %v3967
    %v3969 = vpop.f32.mrb[0].mxu0
    %3970 = vdwg.mxu0
    %v3972 = vsel %vm507, %v3781, 0
    %v3975 = vsel %vm507, %v3664, 0
    %v3978 = vsel %vm507, %v3669, 0
    %3980 = vmatprep.subr.mxu0 0.0
    %3981 = vmatpush1.xpose.msra.mxu0 %v3975
    %3982 = vmatprep.subr.mxu0 0.0
    %3983 = vmatpush1.xpose.msra.mxu0 %v3978
    %3984 = vmatprep.subr.mxu0 0.0
    %3985 = vmatpush1.xpose.msra.mxu0 0.0
    %3986 = vmatprep.subr.mxu0 0.0
    %3987 = vmatpush1.xpose.msra.mxu0 0.0
    %3988 = vmatprep.subr.mxu0 0.0
    %3989 = vmatpush1.xpose.msra.mxu0 0.0
    %3990 = vmatprep.subr.mxu0 0.0
    %3991 = vmatpush1.xpose.msra.mxu0 0.0
    %3992 = vmatprep.subr.mxu0 0.0
    %3993 = vmatpush1.xpose.msra.mxu0 0.0
    %3994 = vmatprep.subr.mxu0 0.0
    %3995 = vmatpush1.xpose.msra.mxu0 0.0
    %3996 = vmatprep.subr.mxu0 0.0
    %3997 = vmatpush1.xpose.msra.mxu0 0.0
    %3998 = vmatprep.subr.mxu0 0.0
    %3999 = vmatpush1.xpose.msra.mxu0 0.0
    %4000 = vmatprep.subr.mxu0 0.0
    %4001 = vmatpush1.xpose.msra.mxu0 0.0
    %4002 = vmatprep.subr.mxu0 0.0
    %4003 = vmatpush1.xpose.msra.mxu0 0.0
    %4004 = vmatprep.subr.mxu0 0.0
    %4005 = vmatpush1.xpose.msra.mxu0 0.0
    %4006 = vmatprep.subr.mxu0 0.0
    %4007 = vmatpush1.xpose.msra.mxu0 0.0
    %4008 = vmatprep.subr.mxu0 0.0
    %4009 = vmatpush1.xpose.msra.mxu0 0.0
    %4010 = vmatprep.subr.mxu0 0.0
    %4011 = vmatpush1.xpose.msra.mxu0 0.0
    %4012 = vmatprep.subr.mxu0 0.0
    %4013 = vmatpush1.xpose.msra.mxu0 0.0
    %4014 = vmatprep.subr.mxu0 0.0
    %4015 = vmatpush1.xpose.msra.mxu0 0.0
    %4016 = vmatprep.subr.mxu0 0.0
    %4017 = vmatpush1.xpose.msra.mxu0 0.0
    %4018 = vmatprep.subr.mxu0 0.0
    %4019 = vmatpush1.xpose.msra.mxu0 0.0
    %4020 = vmatprep.subr.mxu0 0.0
    %4021 = vmatpush1.xpose.msra.mxu0 0.0
    %4022 = vmatprep.subr.mxu0 0.0
    %4023 = vmatpush1.xpose.msra.mxu0 0.0
    %4024 = vmatprep.subr.mxu0 0.0
    %4025 = vmatpush1.xpose.msra.mxu0 0.0
    %4026 = vmatprep.subr.mxu0 0.0
    %4027 = vmatpush1.xpose.msra.mxu0 0.0
    %4028 = vmatprep.subr.mxu0 0.0
    %4029 = vmatpush1.xpose.msra.mxu0 0.0
    %4030 = vmatprep.subr.mxu0 0.0
    %4031 = vmatpush1.xpose.msra.mxu0 0.0
    %4032 = vmatprep.subr.mxu0 0.0
    %4033 = vmatpush1.xpose.msra.mxu0 0.0
    %4034 = vmatprep.subr.mxu0 0.0
    %4035 = vmatpush1.xpose.msra.mxu0 0.0
    %4036 = vmatprep.subr.mxu0 0.0
    %4037 = vmatpush1.xpose.msra.mxu0 0.0
    %4038 = vmatprep.subr.mxu0 0.0
    %4039 = vmatpush1.xpose.msra.mxu0 0.0
    %4040 = vmatprep.subr.mxu0 0.0
    %4041 = vmatpush1.xpose.msra.mxu0 0.0
    %4042 = vmatprep.subr.mxu0 0.0
    %4043 = vmatpush1.xpose.msra.mxu0 0.0
    %4044 = vmatprep.mubr.f32.mxu0 0.0
    %4045 = vmatmul.mubr.f32.gmra.mrb[0].mxu0 %v3972
    %v4046 = vpop.f32.mrb[0].mxu0
    %v4047 = vadd.f32 0.0, %v4046
    %v4048 = vpop.f32.mrb[0].mxu0
    %4049 = vdwg.mxu0
    %v4051 = vsel %vm507, %v3786, 0
    %v4054 = vsel %vm507, %v3674, 0
    %v4057 = vsel %vm507, %v3679, 0
    %4059 = vmatprep.subr.mxu0 0.0
    %4060 = vmatpush1.xpose.msra.mxu0 %v4054
    %4061 = vmatprep.subr.mxu0 0.0
    %4062 = vmatpush1.xpose.msra.mxu0 %v4057
    %4063 = vmatprep.subr.mxu0 0.0
    %4064 = vmatpush1.xpose.msra.mxu0 0.0
    %4065 = vmatprep.subr.mxu0 0.0
    %4066 = vmatpush1.xpose.msra.mxu0 0.0
    %4067 = vmatprep.subr.mxu0 0.0
    %4068 = vmatpush1.xpose.msra.mxu0 0.0
    %4069 = vmatprep.subr.mxu0 0.0
    %4070 = vmatpush1.xpose.msra.mxu0 0.0
    %4071 = vmatprep.subr.mxu0 0.0
    %4072 = vmatpush1.xpose.msra.mxu0 0.0
    %4073 = vmatprep.subr.mxu0 0.0
    %4074 = vmatpush1.xpose.msra.mxu0 0.0
    %4075 = vmatprep.subr.mxu0 0.0
    %4076 = vmatpush1.xpose.msra.mxu0 0.0
    %4077 = vmatprep.subr.mxu0 0.0
    %4078 = vmatpush1.xpose.msra.mxu0 0.0
    %4079 = vmatprep.subr.mxu0 0.0
    %4080 = vmatpush1.xpose.msra.mxu0 0.0
    %4081 = vmatprep.subr.mxu0 0.0
    %4082 = vmatpush1.xpose.msra.mxu0 0.0
    %4083 = vmatprep.subr.mxu0 0.0
    %4084 = vmatpush1.xpose.msra.mxu0 0.0
    %4085 = vmatprep.subr.mxu0 0.0
    %4086 = vmatpush1.xpose.msra.mxu0 0.0
    %4087 = vmatprep.subr.mxu0 0.0
    %4088 = vmatpush1.xpose.msra.mxu0 0.0
    %4089 = vmatprep.subr.mxu0 0.0
    %4090 = vmatpush1.xpose.msra.mxu0 0.0
    %4091 = vmatprep.subr.mxu0 0.0
    %4092 = vmatpush1.xpose.msra.mxu0 0.0
    %4093 = vmatprep.subr.mxu0 0.0
    %4094 = vmatpush1.xpose.msra.mxu0 0.0
    %4095 = vmatprep.subr.mxu0 0.0
    %4096 = vmatpush1.xpose.msra.mxu0 0.0
    %4097 = vmatprep.subr.mxu0 0.0
    %4098 = vmatpush1.xpose.msra.mxu0 0.0
    %4099 = vmatprep.subr.mxu0 0.0
    %4100 = vmatpush1.xpose.msra.mxu0 0.0
    %4101 = vmatprep.subr.mxu0 0.0
    %4102 = vmatpush1.xpose.msra.mxu0 0.0
    %4103 = vmatprep.subr.mxu0 0.0
    %4104 = vmatpush1.xpose.msra.mxu0 0.0
    %4105 = vmatprep.subr.mxu0 0.0
    %4106 = vmatpush1.xpose.msra.mxu0 0.0
    %4107 = vmatprep.subr.mxu0 0.0
    %4108 = vmatpush1.xpose.msra.mxu0 0.0
    %4109 = vmatprep.subr.mxu0 0.0
    %4110 = vmatpush1.xpose.msra.mxu0 0.0
    %4111 = vmatprep.subr.mxu0 0.0
    %4112 = vmatpush1.xpose.msra.mxu0 0.0
    %4113 = vmatprep.subr.mxu0 0.0
    %4114 = vmatpush1.xpose.msra.mxu0 0.0
    %4115 = vmatprep.subr.mxu0 0.0
    %4116 = vmatpush1.xpose.msra.mxu0 0.0
    %4117 = vmatprep.subr.mxu0 0.0
    %4118 = vmatpush1.xpose.msra.mxu0 0.0
    %4119 = vmatprep.subr.mxu0 0.0
    %4120 = vmatpush1.xpose.msra.mxu0 0.0
    %4121 = vmatprep.subr.mxu0 0.0
    %4122 = vmatpush1.xpose.msra.mxu0 0.0
    %4123 = vmatprep.mubr.f32.mxu0 0.0
    %4124 = vmatmul.mubr.f32.gmra.mrb[0].mxu0 %v4051
    %v4125 = vpop.f32.mrb[0].mxu0
    %v4126 = vadd.f32 0.0, %v4125
    %v4127 = vpop.f32.mrb[0].mxu0
    %4128 = vdwg.mxu0
    %v4129 = vmul.f32 %v3889, 0.17677669
    %v4130 = vmul.f32 %v3968, 0.17677669
    %v4131 = vmul.f32 %v4047, 0.17677669
    %v4132 = vmul.f32 %v4126, 0.17677669
    %v4133 = vadd.f32 %v4129, %v3796
    %v4134 = vadd.f32 %v4130, %v3800
    %v4135 = vadd.f32 %v4131, %v3804
    %v4136 = vadd.f32 %v4132, %v3808
    %vm4137 = vcmask 130048
    %v4138 = vsel %vm4137, %v4133, -inf
    %4139 = vmax.xlane.f32.xlu0 %v4138
    %v4140 = vpop.xlane.xlu0 %4139
    %v4141 = vsel %vm4137, %v4134, -inf
    %4142 = vmax.xlane.f32.xlu0 %v4141
    %v4143 = vpop.xlane.xlu0 %4142
    %v4144 = vsel %vm4137, %v4135, -inf
    %4145 = vmax.xlane.f32.xlu0 %v4144
    %v4146 = vpop.xlane.xlu0 %4145
    %v4147 = vsel %vm4137, %v4136, -inf
    %4148 = vmax.xlane.f32.xlu0 %v4147
    %v4149 = vpop.xlane.xlu0 %4148
    %v4150 = vsub.f32 %v4133, %v4140
    %v4151 = vsub.f32 %v4134, %v4143
    %v4152 = vsub.f32 %v4135, %v4146
    %v4153 = vsub.f32 %v4136, %v4149
    %v4154 = vmul.f32 %v4150, 1.442695
    %v4155 = vpow.pop %v4154
    %v4156 = vmul.f32 %v4151, 1.442695
    %v4157 = vpow.pop %v4156
    %v4158 = vmul.f32 %v4152, 1.442695
    %v4159 = vpow.pop %v4158
    %v4160 = vmul.f32 %v4153, 1.442695
    %v4161 = vpow.pop %v4160
    %v4162 = vsel %vm4137, %v4155, 0.0
    %4163 = vadd.xlane.f32.xlu0 %v4162
    %v4164 = vpop.xlane.xlu0 %4163
    %v4165 = vsel %vm4137, %v4157, 0.0
    %4166 = vadd.xlane.f32.xlu0 %v4165
    %v4167 = vpop.xlane.xlu0 %4166
    %v4168 = vsel %vm4137, %v4159, 0.0
    %4169 = vadd.xlane.f32.xlu0 %v4168
    %v4170 = vpop.xlane.xlu0 %4169
    %v4171 = vsel %vm4137, %v4161, 0.0
    %4172 = vadd.xlane.f32.xlu0 %v4171
    %v4173 = vpop.xlane.xlu0 %4172
    %v4174 = vrcp.pop %v4164
    %v4175 = vrcp.pop %v4167
    %v4176 = vrcp.pop %v4170
    %v4177 = vrcp.pop %v4173
    %v4178 = vmul.f32 %v4155, %v4174
    %v4179 = vmul.f32 %v4157, %v4175
    %v4180 = vmul.f32 %v4159, %v4176
    %v4181 = vmul.f32 %v4161, %v4177
    %v4183 = vsel %vm4137, %v4178, 0
    %4185 = vmatprep.subr.mxu0 0.0
    %4186 = vmatpush1.msra.mxu0 %v3517
    %4187 = vmatprep.subr.mxu0 0.0
    %4188 = vmatpush1.msra.mxu0 %v3522
    %4189 = vmatprep.subr.mxu0 0.0
    %4190 = vmatpush1.msra.mxu0 0.0
    %4191 = vmatprep.subr.mxu0 0.0
    %4192 = vmatpush1.msra.mxu0 0.0
    %4193 = vmatprep.subr.mxu0 0.0
    %4194 = vmatpush1.msra.mxu0 0.0
    %4195 = vmatprep.subr.mxu0 0.0
    %4196 = vmatpush1.msra.mxu0 0.0
    %4197 = vmatprep.subr.mxu0 0.0
    %4198 = vmatpush1.msra.mxu0 0.0
    %4199 = vmatprep.subr.mxu0 0.0
    %4200 = vmatpush1.msra.mxu0 0.0
    %4201 = vmatprep.subr.mxu0 0.0
    %4202 = vmatpush1.msra.mxu0 0.0
    %4203 = vmatprep.subr.mxu0 0.0
    %4204 = vmatpush1.msra.mxu0 0.0
    %4205 = vmatprep.subr.mxu0 0.0
    %4206 = vmatpush1.msra.mxu0 0.0
    %4207 = vmatprep.subr.mxu0 0.0
    %4208 = vmatpush1.msra.mxu0 0.0
    %4209 = vmatprep.subr.mxu0 0.0
    %4210 = vmatpush1.msra.mxu0 0.0
    %4211 = vmatprep.subr.mxu0 0.0
    %4212 = vmatpush1.msra.mxu0 0.0
    %4213 = vmatprep.subr.mxu0 0.0
    %4214 = vmatpush1.msra.mxu0 0.0
    %4215 = vmatprep.subr.mxu0 0.0
    %4216 = vmatpush1.msra.mxu0 0.0
    %4217 = vmatprep.subr.mxu0 0.0
    %4218 = vmatpush1.msra.mxu0 0.0
    %4219 = vmatprep.subr.mxu0 0.0
    %4220 = vmatpush1.msra.mxu0 0.0
    %4221 = vmatprep.subr.mxu0 0.0
    %4222 = vmatpush1.msra.mxu0 0.0
    %4223 = vmatprep.subr.mxu0 0.0
    %4224 = vmatpush1.msra.mxu0 0.0
    %4225 = vmatprep.subr.mxu0 0.0
    %4226 = vmatpush1.msra.mxu0 0.0
    %4227 = vmatprep.subr.mxu0 0.0
    %4228 = vmatpush1.msra.mxu0 0.0
    %4229 = vmatprep.subr.mxu0 0.0
    %4230 = vmatpush1.msra.mxu0 0.0
    %4231 = vmatprep.subr.mxu0 0.0
    %4232 = vmatpush1.msra.mxu0 0.0
    %4233 = vmatprep.subr.mxu0 0.0
    %4234 = vmatpush1.msra.mxu0 0.0
    %4235 = vmatprep.subr.mxu0 0.0
    %4236 = vmatpush1.msra.mxu0 0.0
    %4237 = vmatprep.subr.mxu0 0.0
    %4238 = vmatpush1.msra.mxu0 0.0
    %4239 = vmatprep.subr.mxu0 0.0
    %4240 = vmatpush1.msra.mxu0 0.0
    %4241 = vmatprep.subr.mxu0 0.0
    %4242 = vmatpush1.msra.mxu0 0.0
    %4243 = vmatprep.subr.mxu0 0.0
    %4244 = vmatpush1.msra.mxu0 0.0
    %4245 = vmatprep.subr.mxu0 0.0
    %4246 = vmatpush1.msra.mxu0 0.0
    %4247 = vmatprep.subr.mxu0 0.0
    %4248 = vmatpush1.msra.mxu0 0.0
    %4249 = vmatprep.mubr.f32.mxu0 0.0
    %4250 = vmatmul.mubr.f32.gmra.mrb[0].mxu0 %v4183
    %v4251 = vpop.f32.mrb[0].mxu0
    %v4252 = vadd.f32 0.0, %v4251
    %v4253 = vpop.f32.mrb[0].mxu0
    %4254 = vdwg.mxu0
    %v4256 = vsel %vm4137, %v4179, 0
    %4258 = vmatprep.subr.mxu0 0.0
    %4259 = vmatpush1.msra.mxu0 %v3527
    %4260 = vmatprep.subr.mxu0 0.0
    %4261 = vmatpush1.msra.mxu0 %v3532
    %4262 = vmatprep.subr.mxu0 0.0
    %4263 = vmatpush1.msra.mxu0 0.0
    %4264 = vmatprep.subr.mxu0 0.0
    %4265 = vmatpush1.msra.mxu0 0.0
    %4266 = vmatprep.subr.mxu0 0.0
    %4267 = vmatpush1.msra.mxu0 0.0
    %4268 = vmatprep.subr.mxu0 0.0
    %4269 = vmatpush1.msra.mxu0 0.0
    %4270 = vmatprep.subr.mxu0 0.0
    %4271 = vmatpush1.msra.mxu0 0.0
    %4272 = vmatprep.subr.mxu0 0.0
    %4273 = vmatpush1.msra.mxu0 0.0
    %4274 = vmatprep.subr.mxu0 0.0
    %4275 = vmatpush1.msra.mxu0 0.0
    %4276 = vmatprep.subr.mxu0 0.0
    %4277 = vmatpush1.msra.mxu0 0.0
    %4278 = vmatprep.subr.mxu0 0.0
    %4279 = vmatpush1.msra.mxu0 0.0
    %4280 = vmatprep.subr.mxu0 0.0
    %4281 = vmatpush1.msra.mxu0 0.0
    %4282 = vmatprep.subr.mxu0 0.0
    %4283 = vmatpush1.msra.mxu0 0.0
    %4284 = vmatprep.subr.mxu0 0.0
    %4285 = vmatpush1.msra.mxu0 0.0
    %4286 = vmatprep.subr.mxu0 0.0
    %4287 = vmatpush1.msra.mxu0 0.0
    %4288 = vmatprep.subr.mxu0 0.0
    %4289 = vmatpush1.msra.mxu0 0.0
    %4290 = vmatprep.subr.mxu0 0.0
    %4291 = vmatpush1.msra.mxu0 0.0
    %4292 = vmatprep.subr.mxu0 0.0
    %4293 = vmatpush1.msra.mxu0 0.0
    %4294 = vmatprep.subr.mxu0 0.0
    %4295 = vmatpush1.msra.mxu0 0.0
    %4296 = vmatprep.subr.mxu0 0.0
    %4297 = vmatpush1.msra.mxu0 0.0
    %4298 = vmatprep.subr.mxu0 0.0
    %4299 = vmatpush1.msra.mxu0 0.0
    %4300 = vmatprep.subr.mxu0 0.0
    %4301 = vmatpush1.msra.mxu0 0.0
    %4302 = vmatprep.subr.mxu0 0.0
    %4303 = vmatpush1.msra.mxu0 0.0
    %4304 = vmatprep.subr.mxu0 0.0
    %4305 = vmatpush1.msra.mxu0 0.0
    %4306 = vmatprep.subr.mxu0 0.0
    %4307 = vmatpush1.msra.mxu0 0.0
    %4308 = vmatprep.subr.mxu0 0.0
    %4309 = vmatpush1.msra.mxu0 0.0
    %4310 = vmatprep.subr.mxu0 0.0
    %4311 = vmatpush1.msra.mxu0 0.0
    %4312 = vmatprep.subr.mxu0 0.0
    %4313 = vmatpush1.msra.mxu0 0.0
    %4314 = vmatprep.subr.mxu0 0.0
    %4315 = vmatpush1.msra.mxu0 0.0
    %4316 = vmatprep.subr.mxu0 0.0
    %4317 = vmatpush1.msra.mxu0 0.0
    %4318 = vmatprep.subr.mxu0 0.0
    %4319 = vmatpush1.msra.mxu0 0.0
    %4320 = vmatprep.subr.mxu0 0.0
    %4321 = vmatpush1.msra.mxu0 0.0
    %4322 = vmatprep.mubr.f32.mxu0 0.0
    %4323 = vmatmul.mubr.f32.gmra.mrb[0].mxu0 %v4256
    %v4324 = vpop.f32.mrb[0].mxu0
    %v4325 = vadd.f32 0.0, %v4324
    %v4326 = vpop.f32.mrb[0].mxu0
    %4327 = vdwg.mxu0
    %v4329 = vsel %vm4137, %v4180, 0
    %4331 = vmatprep.subr.mxu0 0.0
    %4332 = vmatpush1.msra.mxu0 %v3537
    %4333 = vmatprep.subr.mxu0 0.0
    %4334 = vmatpush1.msra.mxu0 %v3542
    %4335 = vmatprep.subr.mxu0 0.0
    %4336 = vmatpush1.msra.mxu0 0.0
    %4337 = vmatprep.subr.mxu0 0.0
    %4338 = vmatpush1.msra.mxu0 0.0
    %4339 = vmatprep.subr.mxu0 0.0
    %4340 = vmatpush1.msra.mxu0 0.0
    %4341 = vmatprep.subr.mxu0 0.0
    %4342 = vmatpush1.msra.mxu0 0.0
    %4343 = vmatprep.subr.mxu0 0.0
    %4344 = vmatpush1.msra.mxu0 0.0
    %4345 = vmatprep.subr.mxu0 0.0
    %4346 = vmatpush1.msra.mxu0 0.0
    %4347 = vmatprep.subr.mxu0 0.0
    %4348 = vmatpush1.msra.mxu0 0.0
    %4349 = vmatprep.subr.mxu0 0.0
    %4350 = vmatpush1.msra.mxu0 0.0
    %4351 = vmatprep.subr.mxu0 0.0
    %4352 = vmatpush1.msra.mxu0 0.0
    %4353 = vmatprep.subr.mxu0 0.0
    %4354 = vmatpush1.msra.mxu0 0.0
    %4355 = vmatprep.subr.mxu0 0.0
    %4356 = vmatpush1.msra.mxu0 0.0
    %4357 = vmatprep.subr.mxu0 0.0
    %4358 = vmatpush1.msra.mxu0 0.0
    %4359 = vmatprep.subr.mxu0 0.0
    %4360 = vmatpush1.msra.mxu0 0.0
    %4361 = vmatprep.subr.mxu0 0.0
    %4362 = vmatpush1.msra.mxu0 0.0
    %4363 = vmatprep.subr.mxu0 0.0
    %4364 = vmatpush1.msra.mxu0 0.0
    %4365 = vmatprep.subr.mxu0 0.0
    %4366 = vmatpush1.msra.mxu0 0.0
    %4367 = vmatprep.subr.mxu0 0.0
    %4368 = vmatpush1.msra.mxu0 0.0
    %4369 = vmatprep.subr.mxu0 0.0
    %4370 = vmatpush1.msra.mxu0 0.0
    %4371 = vmatprep.subr.mxu0 0.0
    %4372 = vmatpush1.msra.mxu0 0.0
    %4373 = vmatprep.subr.mxu0 0.0
    %4374 = vmatpush1.msra.mxu0 0.0
    %4375 = vmatprep.subr.mxu0 0.0
    %4376 = vmatpush1.msra.mxu0 0.0
    %4377 = vmatprep.subr.mxu0 0.0
    %4378 = vmatpush1.msra.mxu0 0.0
    %4379 = vmatprep.subr.mxu0 0.0
    %4380 = vmatpush1.msra.mxu0 0.0
    %4381 = vmatprep.subr.mxu0 0.0
    %4382 = vmatpush1.msra.mxu0 0.0
    %4383 = vmatprep.subr.mxu0 0.0
    %4384 = vmatpush1.msra.mxu0 0.0
    %4385 = vmatprep.subr.mxu0 0.0
    %4386 = vmatpush1.msra.mxu0 0.0
    %4387 = vmatprep.subr.mxu0 0.0
    %4388 = vmatpush1.msra.mxu0 0.0
    %4389 = vmatprep.subr.mxu0 0.0
    %4390 = vmatpush1.msra.mxu0 0.0
    %4391 = vmatprep.subr.mxu0 0.0
    %4392 = vmatpush1.msra.mxu0 0.0
    %4393 = vmatprep.subr.mxu0 0.0
    %4394 = vmatpush1.msra.mxu0 0.0
    %4395 = vmatprep.mubr.f32.mxu0 0.0
    %4396 = vmatmul.mubr.f32.gmra.mrb[0].mxu0 %v4329
    %v4397 = vpop.f32.mrb[0].mxu0
    %v4398 = vadd.f32 0.0, %v4397
    %v4399 = vpop.f32.mrb[0].mxu0
    %4400 = vdwg.mxu0
    %v4402 = vsel %vm4137, %v4181, 0
    %4404 = vmatprep.subr.mxu0 0.0
    %4405 = vmatpush1.msra.mxu0 %v3547
    %4406 = vmatprep.subr.mxu0 0.0
    %4407 = vmatpush1.msra.mxu0 %v3552
    %4408 = vmatprep.subr.mxu0 0.0
    %4409 = vmatpush1.msra.mxu0 0.0
    %4410 = vmatprep.subr.mxu0 0.0
    %4411 = vmatpush1.msra.mxu0 0.0
    %4412 = vmatprep.subr.mxu0 0.0
    %4413 = vmatpush1.msra.mxu0 0.0
    %4414 = vmatprep.subr.mxu0 0.0
    %4415 = vmatpush1.msra.mxu0 0.0
    %4416 = vmatprep.subr.mxu0 0.0
    %4417 = vmatpush1.msra.mxu0 0.0
    %4418 = vmatprep.subr.mxu0 0.0
    %4419 = vmatpush1.msra.mxu0 0.0
    %4420 = vmatprep.subr.mxu0 0.0
    %4421 = vmatpush1.msra.mxu0 0.0
    %4422 = vmatprep.subr.mxu0 0.0
    %4423 = vmatpush1.msra.mxu0 0.0
    %4424 = vmatprep.subr.mxu0 0.0
    %4425 = vmatpush1.msra.mxu0 0.0
    %4426 = vmatprep.subr.mxu0 0.0
    %4427 = vmatpush1.msra.mxu0 0.0
    %4428 = vmatprep.subr.mxu0 0.0
    %4429 = vmatpush1.msra.mxu0 0.0
    %4430 = vmatprep.subr.mxu0 0.0
    %4431 = vmatpush1.msra.mxu0 0.0
    %4432 = vmatprep.subr.mxu0 0.0
    %4433 = vmatpush1.msra.mxu0 0.0
    %4434 = vmatprep.subr.mxu0 0.0
    %4435 = vmatpush1.msra.mxu0 0.0
    %4436 = vmatprep.subr.mxu0 0.0
    %4437 = vmatpush1.msra.mxu0 0.0
    %4438 = vmatprep.subr.mxu0 0.0
    %4439 = vmatpush1.msra.mxu0 0.0
    %4440 = vmatprep.subr.mxu0 0.0
    %4441 = vmatpush1.msra.mxu0 0.0
    %4442 = vmatprep.subr.mxu0 0.0
    %4443 = vmatpush1.msra.mxu0 0.0
    %4444 = vmatprep.subr.mxu0 0.0
    %4445 = vmatpush1.msra.mxu0 0.0
    %4446 = vmatprep.subr.mxu0 0.0
    %4447 = vmatpush1.msra.mxu0 0.0
    %4448 = vmatprep.subr.mxu0 0.0
    %4449 = vmatpush1.msra.mxu0 0.0
    %4450 = vmatprep.subr.mxu0 0.0
    %4451 = vmatpush1.msra.mxu0 0.0
    %4452 = vmatprep.subr.mxu0 0.0
    %4453 = vmatpush1.msra.mxu0 0.0
    %4454 = vmatprep.subr.mxu0 0.0
    %4455 = vmatpush1.msra.mxu0 0.0
    %4456 = vmatprep.subr.mxu0 0.0
    %4457 = vmatpush1.msra.mxu0 0.0
    %4458 = vmatprep.subr.mxu0 0.0
    %4459 = vmatpush1.msra.mxu0 0.0
    %4460 = vmatprep.subr.mxu0 0.0
    %4461 = vmatpush1.msra.mxu0 0.0
    %4462 = vmatprep.subr.mxu0 0.0
    %4463 = vmatpush1.msra.mxu0 0.0
    %4464 = vmatprep.subr.mxu0 0.0
    %4465 = vmatpush1.msra.mxu0 0.0
    %4466 = vmatprep.subr.mxu0 0.0
    %4467 = vmatpush1.msra.mxu0 0.0
    %4468 = vmatprep.mubr.f32.mxu0 0.0
    %4469 = vmatmul.mubr.f32.gmra.mrb[0].mxu0 %v4402
    %v4470 = vpop.f32.mrb[0].mxu0
    %v4471 = vadd.f32 0.0, %v4470
    %v4472 = vpop.f32.mrb[0].mxu0
    %4473 = vdwg.mxu0
    %4474 = vrot.lane.b32.xlu0 %v3771, 96
    %v4475 = vpop.permute.xlu0 %4474
    %4476 = vrot.lane.b32.xlu0 %v3644, 96
    %v4477 = vpop.permute.xlu0 %4476
    %4478 = vrot.lane.b32.xlu0 %v3649, 96
    %v4479 = vpop.permute.xlu0 %4478
    %v4480 = vsel %vm507, %v4475, 0
    %v4482 = vsel %vm507, %v4477, 0
    %v4484 = vsel %vm507, %v4479, 0
    %4486 = vmatprep.subr.mxu0 0.0
    %4487 = vmatpush1.xpose.msra.mxu0 %v4482
    %4488 = vmatprep.subr.mxu0 0.0
    %4489 = vmatpush1.xpose.msra.mxu0 %v4484
    %4490 = vmatprep.subr.mxu0 0.0
    %4491 = vmatpush1.xpose.msra.mxu0 0.0
    %4492 = vmatprep.subr.mxu0 0.0
    %4493 = vmatpush1.xpose.msra.mxu0 0.0
    %4494 = vmatprep.subr.mxu0 0.0
    %4495 = vmatpush1.xpose.msra.mxu0 0.0
    %4496 = vmatprep.subr.mxu0 0.0
    %4497 = vmatpush1.xpose.msra.mxu0 0.0
    %4498 = vmatprep.subr.mxu0 0.0
    %4499 = vmatpush1.xpose.msra.mxu0 0.0
    %4500 = vmatprep.subr.mxu0 0.0
    %4501 = vmatpush1.xpose.msra.mxu0 0.0
    %4502 = vmatprep.subr.mxu0 0.0
    %4503 = vmatpush1.xpose.msra.mxu0 0.0
    %4504 = vmatprep.subr.mxu0 0.0
    %4505 = vmatpush1.xpose.msra.mxu0 0.0
    %4506 = vmatprep.subr.mxu0 0.0
    %4507 = vmatpush1.xpose.msra.mxu0 0.0
    %4508 = vmatprep.subr.mxu0 0.0
    %4509 = vmatpush1.xpose.msra.mxu0 0.0
    %4510 = vmatprep.subr.mxu0 0.0
    %4511 = vmatpush1.xpose.msra.mxu0 0.0
    %4512 = vmatprep.subr.mxu0 0.0
    %4513 = vmatpush1.xpose.msra.mxu0 0.0
    %4514 = vmatprep.subr.mxu0 0.0
    %4515 = vmatpush1.xpose.msra.mxu0 0.0
    %4516 = vmatprep.subr.mxu0 0.0
    %4517 = vmatpush1.xpose.msra.mxu0 0.0
    %4518 = vmatprep.subr.mxu0 0.0
    %4519 = vmatpush1.xpose.msra.mxu0 0.0
    %4520 = vmatprep.subr.mxu0 0.0
    %4521 = vmatpush1.xpose.msra.mxu0 0.0
    %4522 = vmatprep.subr.mxu0 0.0
    %4523 = vmatpush1.xpose.msra.mxu0 0.0
    %4524 = vmatprep.subr.mxu0 0.0
    %4525 = vmatpush1.xpose.msra.mxu0 0.0
    %4526 = vmatprep.subr.mxu0 0.0
    %4527 = vmatpush1.xpose.msra.mxu0 0.0
    %4528 = vmatprep.subr.mxu0 0.0
    %4529 = vmatpush1.xpose.msra.mxu0 0.0
    %4530 = vmatprep.subr.mxu0 0.0
    %4531 = vmatpush1.xpose.msra.mxu0 0.0
    %4532 = vmatprep.subr.mxu0 0.0
    %4533 = vmatpush1.xpose.msra.mxu0 0.0
    %4534 = vmatprep.subr.mxu0 0.0
    %4535 = vmatpush1.xpose.msra.mxu0 0.0
    %4536 = vmatprep.subr.mxu0 0.0
    %4537 = vmatpush1.xpose.msra.mxu0 0.0
    %4538 = vmatprep.subr.mxu0 0.0
    %4539 = vmatpush1.xpose.msra.mxu0 0.0
    %4540 = vmatprep.subr.mxu0 0.0
    %4541 = vmatpush1.xpose.msra.mxu0 0.0
    %4542 = vmatprep.subr.mxu0 0.0
    %4543 = vmatpush1.xpose.msra.mxu0 0.0
    %4544 = vmatprep.subr.mxu0 0.0
    %4545 = vmatpush1.xpose.msra.mxu0 0.0
    %4546 = vmatprep.subr.mxu0 0.0
    %4547 = vmatpush1.xpose.msra.mxu0 0.0
    %4548 = vmatprep.subr.mxu0 0.0
    %4549 = vmatpush1.xpose.msra.mxu0 0.0
    %4550 = vmatprep.mubr.f32.mxu0 0.0
    %4551 = vmatmul.mubr.f32.gmra.mrb[0].mxu0 %v4480
    %v4552 = vpop.f32.mrb[0].mxu0
    %v4553 = vadd.f32 0.0, %v4552
    %v4554 = vpop.f32.mrb[0].mxu0
    %4555 = vdwg.mxu0
    %4556 = vrot.lane.b32.xlu0 %v3776, 96
    %v4557 = vpop.permute.xlu0 %4556
    %4558 = vrot.lane.b32.xlu0 %v3654, 96
    %v4559 = vpop.permute.xlu0 %4558
    %4560 = vrot.lane.b32.xlu0 %v3659, 96
    %v4561 = vpop.permute.xlu0 %4560
    %v4562 = vsel %vm507, %v4557, 0
    %v4564 = vsel %vm507, %v4559, 0
    %v4566 = vsel %vm507, %v4561, 0
    %4568 = vmatprep.subr.mxu0 0.0
    %4569 = vmatpush1.xpose.msra.mxu0 %v4564
    %4570 = vmatprep.subr.mxu0 0.0
    %4571 = vmatpush1.xpose.msra.mxu0 %v4566
    %4572 = vmatprep.subr.mxu0 0.0
    %4573 = vmatpush1.xpose.msra.mxu0 0.0
    %4574 = vmatprep.subr.mxu0 0.0
    %4575 = vmatpush1.xpose.msra.mxu0 0.0
    %4576 = vmatprep.subr.mxu0 0.0
    %4577 = vmatpush1.xpose.msra.mxu0 0.0
    %4578 = vmatprep.subr.mxu0 0.0
    %4579 = vmatpush1.xpose.msra.mxu0 0.0
    %4580 = vmatprep.subr.mxu0 0.0
    %4581 = vmatpush1.xpose.msra.mxu0 0.0
    %4582 = vmatprep.subr.mxu0 0.0
    %4583 = vmatpush1.xpose.msra.mxu0 0.0
    %4584 = vmatprep.subr.mxu0 0.0
    %4585 = vmatpush1.xpose.msra.mxu0 0.0
    %4586 = vmatprep.subr.mxu0 0.0
    %4587 = vmatpush1.xpose.msra.mxu0 0.0
    %4588 = vmatprep.subr.mxu0 0.0
    %4589 = vmatpush1.xpose.msra.mxu0 0.0
    %4590 = vmatprep.subr.mxu0 0.0
    %4591 = vmatpush1.xpose.msra.mxu0 0.0
    %4592 = vmatprep.subr.mxu0 0.0
    %4593 = vmatpush1.xpose.msra.mxu0 0.0
    %4594 = vmatprep.subr.mxu0 0.0
    %4595 = vmatpush1.xpose.msra.mxu0 0.0
    %4596 = vmatprep.subr.mxu0 0.0
    %4597 = vmatpush1.xpose.msra.mxu0 0.0
    %4598 = vmatprep.subr.mxu0 0.0
    %4599 = vmatpush1.xpose.msra.mxu0 0.0
    %4600 = vmatprep.subr.mxu0 0.0
    %4601 = vmatpush1.xpose.msra.mxu0 0.0
    %4602 = vmatprep.subr.mxu0 0.0
    %4603 = vmatpush1.xpose.msra.mxu0 0.0
    %4604 = vmatprep.subr.mxu0 0.0
    %4605 = vmatpush1.xpose.msra.mxu0 0.0
    %4606 = vmatprep.subr.mxu0 0.0
    %4607 = vmatpush1.xpose.msra.mxu0 0.0
    %4608 = vmatprep.subr.mxu0 0.0
    %4609 = vmatpush1.xpose.msra.mxu0 0.0
    %4610 = vmatprep.subr.mxu0 0.0
    %4611 = vmatpush1.xpose.msra.mxu0 0.0
    %4612 = vmatprep.subr.mxu0 0.0
    %4613 = vmatpush1.xpose.msra.mxu0 0.0
    %4614 = vmatprep.subr.mxu0 0.0
    %4615 = vmatpush1.xpose.msra.mxu0 0.0
    %4616 = vmatprep.subr.mxu0 0.0
    %4617 = vmatpush1.xpose.msra.mxu0 0.0
    %4618 = vmatprep.subr.mxu0 0.0
    %4619 = vmatpush1.xpose.msra.mxu0 0.0
    %4620 = vmatprep.subr.mxu0 0.0
    %4621 = vmatpush1.xpose.msra.mxu0 0.0
    %4622 = vmatprep.subr.mxu0 0.0
    %4623 = vmatpush1.xpose.msra.mxu0 0.0
    %4624 = vmatprep.subr.mxu0 0.0
    %4625 = vmatpush1.xpose.msra.mxu0 0.0
    %4626 = vmatprep.subr.mxu0 0.0
    %4627 = vmatpush1.xpose.msra.mxu0 0.0
    %4628 = vmatprep.subr.mxu0 0.0
    %4629 = vmatpush1.xpose.msra.mxu0 0.0
    %4630 = vmatprep.subr.mxu0 0.0
    %4631 = vmatpush1.xpose.msra.mxu0 0.0
    %4632 = vmatprep.mubr.f32.mxu0 0.0
    %4633 = vmatmul.mubr.f32.gmra.mrb[0].mxu0 %v4562
    %v4634 = vpop.f32.mrb[0].mxu0
    %v4635 = vadd.f32 0.0, %v4634
    %v4636 = vpop.f32.mrb[0].mxu0
    %4637 = vdwg.mxu0
    %4638 = vrot.lane.b32.xlu0 %v3781, 96
    %v4639 = vpop.permute.xlu0 %4638
    %4640 = vrot.lane.b32.xlu0 %v3664, 96
    %v4641 = vpop.permute.xlu0 %4640
    %4642 = vrot.lane.b32.xlu0 %v3669, 96
    %v4643 = vpop.permute.xlu0 %4642
    %v4644 = vsel %vm507, %v4639, 0
    %v4646 = vsel %vm507, %v4641, 0
    %v4648 = vsel %vm507, %v4643, 0
    %4650 = vmatprep.subr.mxu0 0.0
    %4651 = vmatpush1.xpose.msra.mxu0 %v4646
    %4652 = vmatprep.subr.mxu0 0.0
    %4653 = vmatpush1.xpose.msra.mxu0 %v4648
    %4654 = vmatprep.subr.mxu0 0.0
    %4655 = vmatpush1.xpose.msra.mxu0 0.0
    %4656 = vmatprep.subr.mxu0 0.0
    %4657 = vmatpush1.xpose.msra.mxu0 0.0
    %4658 = vmatprep.subr.mxu0 0.0
    %4659 = vmatpush1.xpose.msra.mxu0 0.0
    %4660 = vmatprep.subr.mxu0 0.0
    %4661 = vmatpush1.xpose.msra.mxu0 0.0
    %4662 = vmatprep.subr.mxu0 0.0
    %4663 = vmatpush1.xpose.msra.mxu0 0.0
    %4664 = vmatprep.subr.mxu0 0.0
    %4665 = vmatpush1.xpose.msra.mxu0 0.0
    %4666 = vmatprep.subr.mxu0 0.0
    %4667 = vmatpush1.xpose.msra.mxu0 0.0
    %4668 = vmatprep.subr.mxu0 0.0
    %4669 = vmatpush1.xpose.msra.mxu0 0.0
    %4670 = vmatprep.subr.mxu0 0.0
    %4671 = vmatpush1.xpose.msra.mxu0 0.0
    %4672 = vmatprep.subr.mxu0 0.0
    %4673 = vmatpush1.xpose.msra.mxu0 0.0
    %4674 = vmatprep.subr.mxu0 0.0
    %4675 = vmatpush1.xpose.msra.mxu0 0.0
    %4676 = vmatprep.subr.mxu0 0.0
    %4677 = vmatpush1.xpose.msra.mxu0 0.0
    %4678 = vmatprep.subr.mxu0 0.0
    %4679 = vmatpush1.xpose.msra.mxu0 0.0
    %4680 = vmatprep.subr.mxu0 0.0
    %4681 = vmatpush1.xpose.msra.mxu0 0.0
    %4682 = vmatprep.subr.mxu0 0.0
    %4683 = vmatpush1.xpose.msra.mxu0 0.0
    %4684 = vmatprep.subr.mxu0 0.0
    %4685 = vmatpush1.xpose.msra.mxu0 0.0
    %4686 = vmatprep.subr.mxu0 0.0
    %4687 = vmatpush1.xpose.msra.mxu0 0.0
    %4688 = vmatprep.subr.mxu0 0.0
    %4689 = vmatpush1.xpose.msra.mxu0 0.0
    %4690 = vmatprep.subr.mxu0 0.0
    %4691 = vmatpush1.xpose.msra.mxu0 0.0
    %4692 = vmatprep.subr.mxu0 0.0
    %4693 = vmatpush1.xpose.msra.mxu0 0.0
    %4694 = vmatprep.subr.mxu0 0.0
    %4695 = vmatpush1.xpose.msra.mxu0 0.0
    %4696 = vmatprep.subr.mxu0 0.0
    %4697 = vmatpush1.xpose.msra.mxu0 0.0
    %4698 = vmatprep.subr.mxu0 0.0
    %4699 = vmatpush1.xpose.msra.mxu0 0.0
    %4700 = vmatprep.subr.mxu0 0.0
    %4701 = vmatpush1.xpose.msra.mxu0 0.0
    %4702 = vmatprep.subr.mxu0 0.0
    %4703 = vmatpush1.xpose.msra.mxu0 0.0
    %4704 = vmatprep.subr.mxu0 0.0
    %4705 = vmatpush1.xpose.msra.mxu0 0.0
    %4706 = vmatprep.subr.mxu0 0.0
    %4707 = vmatpush1.xpose.msra.mxu0 0.0
    %4708 = vmatprep.subr.mxu0 0.0
    %4709 = vmatpush1.xpose.msra.mxu0 0.0
    %4710 = vmatprep.subr.mxu0 0.0
    %4711 = vmatpush1.xpose.msra.mxu0 0.0
    %4712 = vmatprep.subr.mxu0 0.0
    %4713 = vmatpush1.xpose.msra.mxu0 0.0
    %4714 = vmatprep.mubr.f32.mxu0 0.0
    %4715 = vmatmul.mubr.f32.gmra.mrb[0].mxu0 %v4644
    %v4716 = vpop.f32.mrb[0].mxu0
    %v4717 = vadd.f32 0.0, %v4716
    %v4718 = vpop.f32.mrb[0].mxu0
    %4719 = vdwg.mxu0
    %4720 = vrot.lane.b32.xlu0 %v3786, 96
    %v4721 = vpop.permute.xlu0 %4720
    %4722 = vrot.lane.b32.xlu0 %v3674, 96
    %v4723 = vpop.permute.xlu0 %4722
    %4724 = vrot.lane.b32.xlu0 %v3679, 96
    %v4725 = vpop.permute.xlu0 %4724
    %v4726 = vsel %vm507, %v4721, 0
    %v4728 = vsel %vm507, %v4723, 0
    %v4730 = vsel %vm507, %v4725, 0
    %4732 = vmatprep.subr.mxu0 0.0
    %4733 = vmatpush1.xpose.msra.mxu0 %v4728
    %4734 = vmatprep.subr.mxu0 0.0
    %4735 = vmatpush1.xpose.msra.mxu0 %v4730
    %4736 = vmatprep.subr.mxu0 0.0
    %4737 = vmatpush1.xpose.msra.mxu0 0.0
    %4738 = vmatprep.subr.mxu0 0.0
    %4739 = vmatpush1.xpose.msra.mxu0 0.0
    %4740 = vmatprep.subr.mxu0 0.0
    %4741 = vmatpush1.xpose.msra.mxu0 0.0
    %4742 = vmatprep.subr.mxu0 0.0
    %4743 = vmatpush1.xpose.msra.mxu0 0.0
    %4744 = vmatprep.subr.mxu0 0.0
    %4745 = vmatpush1.xpose.msra.mxu0 0.0
    %4746 = vmatprep.subr.mxu0 0.0
    %4747 = vmatpush1.xpose.msra.mxu0 0.0
    %4748 = vmatprep.subr.mxu0 0.0
    %4749 = vmatpush1.xpose.msra.mxu0 0.0
    %4750 = vmatprep.subr.mxu0 0.0
    %4751 = vmatpush1.xpose.msra.mxu0 0.0
    %4752 = vmatprep.subr.mxu0 0.0
    %4753 = vmatpush1.xpose.msra.mxu0 0.0
    %4754 = vmatprep.subr.mxu0 0.0
    %4755 = vmatpush1.xpose.msra.mxu0 0.0
    %4756 = vmatprep.subr.mxu0 0.0
    %4757 = vmatpush1.xpose.msra.mxu0 0.0
    %4758 = vmatprep.subr.mxu0 0.0
    %4759 = vmatpush1.xpose.msra.mxu0 0.0
    %4760 = vmatprep.subr.mxu0 0.0
    %4761 = vmatpush1.xpose.msra.mxu0 0.0
    %4762 = vmatprep.subr.mxu0 0.0
    %4763 = vmatpush1.xpose.msra.mxu0 0.0
    %4764 = vmatprep.subr.mxu0 0.0
    %4765 = vmatpush1.xpose.msra.mxu0 0.0
    %4766 = vmatprep.subr.mxu0 0.0
    %4767 = vmatpush1.xpose.msra.mxu0 0.0
    %4768 = vmatprep.subr.mxu0 0.0
    %4769 = vmatpush1.xpose.msra.mxu0 0.0
    %4770 = vmatprep.subr.mxu0 0.0
    %4771 = vmatpush1.xpose.msra.mxu0 0.0
    %4772 = vmatprep.subr.mxu0 0.0
    %4773 = vmatpush1.xpose.msra.mxu0 0.0
    %4774 = vmatprep.subr.mxu0 0.0
    %4775 = vmatpush1.xpose.msra.mxu0 0.0
    %4776 = vmatprep.subr.mxu0 0.0
    %4777 = vmatpush1.xpose.msra.mxu0 0.0
    %4778 = vmatprep.subr.mxu0 0.0
    %4779 = vmatpush1.xpose.msra.mxu0 0.0
    %4780 = vmatprep.subr.mxu0 0.0
    %4781 = vmatpush1.xpose.msra.mxu0 0.0
    %4782 = vmatprep.subr.mxu0 0.0
    %4783 = vmatpush1.xpose.msra.mxu0 0.0
    %4784 = vmatprep.subr.mxu0 0.0
    %4785 = vmatpush1.xpose.msra.mxu0 0.0
    %4786 = vmatprep.subr.mxu0 0.0
    %4787 = vmatpush1.xpose.msra.mxu0 0.0
    %4788 = vmatprep.subr.mxu0 0.0
    %4789 = vmatpush1.xpose.msra.mxu0 0.0
    %4790 = vmatprep.subr.mxu0 0.0
    %4791 = vmatpush1.xpose.msra.mxu0 0.0
    %4792 = vmatprep.subr.mxu0 0.0
    %4793 = vmatpush1.xpose.msra.mxu0 0.0
    %4794 = vmatprep.subr.mxu0 0.0
    %4795 = vmatpush1.xpose.msra.mxu0 0.0
    %4796 = vmatprep.mubr.f32.mxu0 0.0
    %4797 = vmatmul.mubr.f32.gmra.mrb[0].mxu0 %v4726
    %v4798 = vpop.f32.mrb[0].mxu0
    %v4799 = vadd.f32 0.0, %v4798
    %v4800 = vpop.f32.mrb[0].mxu0
    %4801 = vdwg.mxu0
    %v4802 = vmul.f32 %v4553, 0.17677669
    %v4803 = vmul.f32 %v4635, 0.17677669
    %v4804 = vmul.f32 %v4717, 0.17677669
    %v4805 = vmul.f32 %v4799, 0.17677669
    %v4806 = vadd.f32 %v4802, %v3796
    %v4807 = vadd.f32 %v4803, %v3800
    %v4808 = vadd.f32 %v4804, %v3804
    %v4809 = vadd.f32 %v4805, %v3808
    %v4810 = vsel %vm4137, %v4806, -inf
    %4811 = vmax.xlane.f32.xlu0 %v4810
    %v4812 = vpop.xlane.xlu0 %4811
    %v4813 = vsel %vm4137, %v4807, -inf
    %4814 = vmax.xlane.f32.xlu0 %v4813
    %v4815 = vpop.xlane.xlu0 %4814
    %v4816 = vsel %vm4137, %v4808, -inf
    %4817 = vmax.xlane.f32.xlu0 %v4816
    %v4818 = vpop.xlane.xlu0 %4817
    %v4819 = vsel %vm4137, %v4809, -inf
    %4820 = vmax.xlane.f32.xlu0 %v4819
    %v4821 = vpop.xlane.xlu0 %4820
    %v4822 = vsub.f32 %v4806, %v4812
    %v4823 = vsub.f32 %v4807, %v4815
    %v4824 = vsub.f32 %v4808, %v4818
    %v4825 = vsub.f32 %v4809, %v4821
    %v4826 = vmul.f32 %v4822, 1.442695
    %v4827 = vpow.pop %v4826
    %v4828 = vmul.f32 %v4823, 1.442695
    %v4829 = vpow.pop %v4828
    %v4830 = vmul.f32 %v4824, 1.442695
    %v4831 = vpow.pop %v4830
    %v4832 = vmul.f32 %v4825, 1.442695
    %v4833 = vpow.pop %v4832
    %v4834 = vsel %vm4137, %v4827, 0.0
    %4835 = vadd.xlane.f32.xlu0 %v4834
    %v4836 = vpop.xlane.xlu0 %4835
    %v4837 = vsel %vm4137, %v4829, 0.0
    %4838 = vadd.xlane.f32.xlu0 %v4837
    %v4839 = vpop.xlane.xlu0 %4838
    %v4840 = vsel %vm4137, %v4831, 0.0
    %4841 = vadd.xlane.f32.xlu0 %v4840
    %v4842 = vpop.xlane.xlu0 %4841
    %v4843 = vsel %vm4137, %v4833, 0.0
    %4844 = vadd.xlane.f32.xlu0 %v4843
    %v4845 = vpop.xlane.xlu0 %4844
    %v4846 = vrcp.pop %v4836
    %v4847 = vrcp.pop %v4839
    %v4848 = vrcp.pop %v4842
    %v4849 = vrcp.pop %v4845
    %v4850 = vmul.f32 %v4827, %v4846
    %v4851 = vmul.f32 %v4829, %v4847
    %v4852 = vmul.f32 %v4831, %v4848
    %v4853 = vmul.f32 %v4833, %v4849
    %4856 = vrot.lane.b32.xlu0 %v3517, 96
    %v4857 = vpop.permute.xlu0 %4856
    %4858 = vrot.lane.b32.xlu0 %v3522, 96
    %v4859 = vpop.permute.xlu0 %4858
    %v4863 = vsel %vm4137, %v4850, 0
    %4865 = vmatprep.subr.mxu0 0.0
    %4866 = vmatpush1.msra.mxu0 %v4857
    %4867 = vmatprep.subr.mxu0 0.0
    %4868 = vmatpush1.msra.mxu0 %v4859
    %4869 = vmatprep.subr.mxu0 0.0
    %4870 = vmatpush1.msra.mxu0 0.0
    %4871 = vmatprep.subr.mxu0 0.0
    %4872 = vmatpush1.msra.mxu0 0.0
    %4873 = vmatprep.subr.mxu0 0.0
    %4874 = vmatpush1.msra.mxu0 0.0
    %4875 = vmatprep.subr.mxu0 0.0
    %4876 = vmatpush1.msra.mxu0 0.0
    %4877 = vmatprep.subr.mxu0 0.0
    %4878 = vmatpush1.msra.mxu0 0.0
    %4879 = vmatprep.subr.mxu0 0.0
    %4880 = vmatpush1.msra.mxu0 0.0
    %4881 = vmatprep.subr.mxu0 0.0
    %4882 = vmatpush1.msra.mxu0 0.0
    %4883 = vmatprep.subr.mxu0 0.0
    %4884 = vmatpush1.msra.mxu0 0.0
    %4885 = vmatprep.subr.mxu0 0.0
    %4886 = vmatpush1.msra.mxu0 0.0
    %4887 = vmatprep.subr.mxu0 0.0
    %4888 = vmatpush1.msra.mxu0 0.0
    %4889 = vmatprep.subr.mxu0 0.0
    %4890 = vmatpush1.msra.mxu0 0.0
    %4891 = vmatprep.subr.mxu0 0.0
    %4892 = vmatpush1.msra.mxu0 0.0
    %4893 = vmatprep.subr.mxu0 0.0
    %4894 = vmatpush1.msra.mxu0 0.0
    %4895 = vmatprep.subr.mxu0 0.0
    %4896 = vmatpush1.msra.mxu0 0.0
    %4897 = vmatprep.subr.mxu0 0.0
    %4898 = vmatpush1.msra.mxu0 0.0
    %4899 = vmatprep.subr.mxu0 0.0
    %4900 = vmatpush1.msra.mxu0 0.0
    %4901 = vmatprep.subr.mxu0 0.0
    %4902 = vmatpush1.msra.mxu0 0.0
    %4903 = vmatprep.subr.mxu0 0.0
    %4904 = vmatpush1.msra.mxu0 0.0
    %4905 = vmatprep.subr.mxu0 0.0
    %4906 = vmatpush1.msra.mxu0 0.0
    %4907 = vmatprep.subr.mxu0 0.0
    %4908 = vmatpush1.msra.mxu0 0.0
    %4909 = vmatprep.subr.mxu0 0.0
    %4910 = vmatpush1.msra.mxu0 0.0
    %4911 = vmatprep.subr.mxu0 0.0
    %4912 = vmatpush1.msra.mxu0 0.0
    %4913 = vmatprep.subr.mxu0 0.0
    %4914 = vmatpush1.msra.mxu0 0.0
    %4915 = vmatprep.subr.mxu0 0.0
    %4916 = vmatpush1.msra.mxu0 0.0
    %4917 = vmatprep.subr.mxu0 0.0
    %4918 = vmatpush1.msra.mxu0 0.0
    %4919 = vmatprep.subr.mxu0 0.0
    %4920 = vmatpush1.msra.mxu0 0.0
    %4921 = vmatprep.subr.mxu0 0.0
    %4922 = vmatpush1.msra.mxu0 0.0
    %4923 = vmatprep.subr.mxu0 0.0
    %4924 = vmatpush1.msra.mxu0 0.0
    %4925 = vmatprep.subr.mxu0 0.0
    %4926 = vmatpush1.msra.mxu0 0.0
    %4927 = vmatprep.subr.mxu0 0.0
    %4928 = vmatpush1.msra.mxu0 0.0
    %4929 = vmatprep.mubr.f32.mxu0 0.0
    %4930 = vmatmul.mubr.f32.gmra.mrb[0].mxu0 %v4863
    %v4931 = vpop.f32.mrb[0].mxu0
    %v4932 = vadd.f32 0.0, %v4931
    %v4933 = vpop.f32.mrb[0].mxu0
    %4934 = vdwg.mxu0
    %4937 = vrot.lane.b32.xlu0 %v3527, 96
    %v4938 = vpop.permute.xlu0 %4937
    %4939 = vrot.lane.b32.xlu0 %v3532, 96
    %v4940 = vpop.permute.xlu0 %4939
    %v4944 = vsel %vm4137, %v4851, 0
    %4946 = vmatprep.subr.mxu0 0.0
    %4947 = vmatpush1.msra.mxu0 %v4938
    %4948 = vmatprep.subr.mxu0 0.0
    %4949 = vmatpush1.msra.mxu0 %v4940
    %4950 = vmatprep.subr.mxu0 0.0
    %4951 = vmatpush1.msra.mxu0 0.0
    %4952 = vmatprep.subr.mxu0 0.0
    %4953 = vmatpush1.msra.mxu0 0.0
    %4954 = vmatprep.subr.mxu0 0.0
    %4955 = vmatpush1.msra.mxu0 0.0
    %4956 = vmatprep.subr.mxu0 0.0
    %4957 = vmatpush1.msra.mxu0 0.0
    %4958 = vmatprep.subr.mxu0 0.0
    %4959 = vmatpush1.msra.mxu0 0.0
    %4960 = vmatprep.subr.mxu0 0.0
    %4961 = vmatpush1.msra.mxu0 0.0
    %4962 = vmatprep.subr.mxu0 0.0
    %4963 = vmatpush1.msra.mxu0 0.0
    %4964 = vmatprep.subr.mxu0 0.0
    %4965 = vmatpush1.msra.mxu0 0.0
    %4966 = vmatprep.subr.mxu0 0.0
    %4967 = vmatpush1.msra.mxu0 0.0
    %4968 = vmatprep.subr.mxu0 0.0
    %4969 = vmatpush1.msra.mxu0 0.0
    %4970 = vmatprep.subr.mxu0 0.0
    %4971 = vmatpush1.msra.mxu0 0.0
    %4972 = vmatprep.subr.mxu0 0.0
    %4973 = vmatpush1.msra.mxu0 0.0
    %4974 = vmatprep.subr.mxu0 0.0
    %4975 = vmatpush1.msra.mxu0 0.0
    %4976 = vmatprep.subr.mxu0 0.0
    %4977 = vmatpush1.msra.mxu0 0.0
    %4978 = vmatprep.subr.mxu0 0.0
    %4979 = vmatpush1.msra.mxu0 0.0
    %4980 = vmatprep.subr.mxu0 0.0
    %4981 = vmatpush1.msra.mxu0 0.0
    %4982 = vmatprep.subr.mxu0 0.0
    %4983 = vmatpush1.msra.mxu0 0.0
    %4984 = vmatprep.subr.mxu0 0.0
    %4985 = vmatpush1.msra.mxu0 0.0
    %4986 = vmatprep.subr.mxu0 0.0
    %4987 = vmatpush1.msra.mxu0 0.0
    %4988 = vmatprep.subr.mxu0 0.0
    %4989 = vmatpush1.msra.mxu0 0.0
    %4990 = vmatprep.subr.mxu0 0.0
    %4991 = vmatpush1.msra.mxu0 0.0
    %4992 = vmatprep.subr.mxu0 0.0
    %4993 = vmatpush1.msra.mxu0 0.0
    %4994 = vmatprep.subr.mxu0 0.0
    %4995 = vmatpush1.msra.mxu0 0.0
    %4996 = vmatprep.subr.mxu0 0.0
    %4997 = vmatpush1.msra.mxu0 0.0
    %4998 = vmatprep.subr.mxu0 0.0
    %4999 = vmatpush1.msra.mxu0 0.0
    %5000 = vmatprep.subr.mxu0 0.0
    %5001 = vmatpush1.msra.mxu0 0.0
    %5002 = vmatprep.subr.mxu0 0.0
    %5003 = vmatpush1.msra.mxu0 0.0
    %5004 = vmatprep.subr.mxu0 0.0
    %5005 = vmatpush1.msra.mxu0 0.0
    %5006 = vmatprep.subr.mxu0 0.0
    %5007 = vmatpush1.msra.mxu0 0.0
    %5008 = vmatprep.subr.mxu0 0.0
    %5009 = vmatpush1.msra.mxu0 0.0
    %5010 = vmatprep.mubr.f32.mxu0 0.0
    %5011 = vmatmul.mubr.f32.gmra.mrb[0].mxu0 %v4944
    %v5012 = vpop.f32.mrb[0].mxu0
    %v5013 = vadd.f32 0.0, %v5012
    %v5014 = vpop.f32.mrb[0].mxu0
    %5015 = vdwg.mxu0
    %5018 = vrot.lane.b32.xlu0 %v3537, 96
    %v5019 = vpop.permute.xlu0 %5018
    %5020 = vrot.lane.b32.xlu0 %v3542, 96
    %v5021 = vpop.permute.xlu0 %5020
    %v5025 = vsel %vm4137, %v4852, 0
    %5027 = vmatprep.subr.mxu0 0.0
    %5028 = vmatpush1.msra.mxu0 %v5019
    %5029 = vmatprep.subr.mxu0 0.0
    %5030 = vmatpush1.msra.mxu0 %v5021
    %5031 = vmatprep.subr.mxu0 0.0
    %5032 = vmatpush1.msra.mxu0 0.0
    %5033 = vmatprep.subr.mxu0 0.0
    %5034 = vmatpush1.msra.mxu0 0.0
    %5035 = vmatprep.subr.mxu0 0.0
    %5036 = vmatpush1.msra.mxu0 0.0
    %5037 = vmatprep.subr.mxu0 0.0
    %5038 = vmatpush1.msra.mxu0 0.0
    %5039 = vmatprep.subr.mxu0 0.0
    %5040 = vmatpush1.msra.mxu0 0.0
    %5041 = vmatprep.subr.mxu0 0.0
    %5042 = vmatpush1.msra.mxu0 0.0
    %5043 = vmatprep.subr.mxu0 0.0
    %5044 = vmatpush1.msra.mxu0 0.0
    %5045 = vmatprep.subr.mxu0 0.0
    %5046 = vmatpush1.msra.mxu0 0.0
    %5047 = vmatprep.subr.mxu0 0.0
    %5048 = vmatpush1.msra.mxu0 0.0
    %5049 = vmatprep.subr.mxu0 0.0
    %5050 = vmatpush1.msra.mxu0 0.0
    %5051 = vmatprep.subr.mxu0 0.0
    %5052 = vmatpush1.msra.mxu0 0.0
    %5053 = vmatprep.subr.mxu0 0.0
    %5054 = vmatpush1.msra.mxu0 0.0
    %5055 = vmatprep.subr.mxu0 0.0
    %5056 = vmatpush1.msra.mxu0 0.0
    %5057 = vmatprep.subr.mxu0 0.0
    %5058 = vmatpush1.msra.mxu0 0.0
    %5059 = vmatprep.subr.mxu0 0.0
    %5060 = vmatpush1.msra.mxu0 0.0
    %5061 = vmatprep.subr.mxu0 0.0
    %5062 = vmatpush1.msra.mxu0 0.0
    %5063 = vmatprep.subr.mxu0 0.0
    %5064 = vmatpush1.msra.mxu0 0.0
    %5065 = vmatprep.subr.mxu0 0.0
    %5066 = vmatpush1.msra.mxu0 0.0
    %5067 = vmatprep.subr.mxu0 0.0
    %5068 = vmatpush1.msra.mxu0 0.0
    %5069 = vmatprep.subr.mxu0 0.0
    %5070 = vmatpush1.msra.mxu0 0.0
    %5071 = vmatprep.subr.mxu0 0.0
    %5072 = vmatpush1.msra.mxu0 0.0
    %5073 = vmatprep.subr.mxu0 0.0
    %5074 = vmatpush1.msra.mxu0 0.0
    %5075 = vmatprep.subr.mxu0 0.0
    %5076 = vmatpush1.msra.mxu0 0.0
    %5077 = vmatprep.subr.mxu0 0.0
    %5078 = vmatpush1.msra.mxu0 0.0
    %5079 = vmatprep.subr.mxu0 0.0
    %5080 = vmatpush1.msra.mxu0 0.0
    %5081 = vmatprep.subr.mxu0 0.0
    %5082 = vmatpush1.msra.mxu0 0.0
    %5083 = vmatprep.subr.mxu0 0.0
    %5084 = vmatpush1.msra.mxu0 0.0
    %5085 = vmatprep.subr.mxu0 0.0
    %5086 = vmatpush1.msra.mxu0 0.0
    %5087 = vmatprep.subr.mxu0 0.0
    %5088 = vmatpush1.msra.mxu0 0.0
    %5089 = vmatprep.subr.mxu0 0.0
    %5090 = vmatpush1.msra.mxu0 0.0
    %5091 = vmatprep.mubr.f32.mxu0 0.0
    %5092 = vmatmul.mubr.f32.gmra.mrb[0].mxu0 %v5025
    %v5093 = vpop.f32.mrb[0].mxu0
    %v5094 = vadd.f32 0.0, %v5093
    %v5095 = vpop.f32.mrb[0].mxu0
    %5096 = vdwg.mxu0
    %5099 = vrot.lane.b32.xlu0 %v3547, 96
    %v5100 = vpop.permute.xlu0 %5099
    %5101 = vrot.lane.b32.xlu0 %v3552, 96
    %v5102 = vpop.permute.xlu0 %5101
    %v5106 = vsel %vm4137, %v4853, 0
    %5108 = vmatprep.subr.mxu0 0.0
    %5109 = vmatpush1.msra.mxu0 %v5100
    %5110 = vmatprep.subr.mxu0 0.0
    %5111 = vmatpush1.msra.mxu0 %v5102
    %5112 = vmatprep.subr.mxu0 0.0
    %5113 = vmatpush1.msra.mxu0 0.0
    %5114 = vmatprep.subr.mxu0 0.0
    %5115 = vmatpush1.msra.mxu0 0.0
    %5116 = vmatprep.subr.mxu0 0.0
    %5117 = vmatpush1.msra.mxu0 0.0
    %5118 = vmatprep.subr.mxu0 0.0
    %5119 = vmatpush1.msra.mxu0 0.0
    %5120 = vmatprep.subr.mxu0 0.0
    %5121 = vmatpush1.msra.mxu0 0.0
    %5122 = vmatprep.subr.mxu0 0.0
    %5123 = vmatpush1.msra.mxu0 0.0
    %5124 = vmatprep.subr.mxu0 0.0
    %5125 = vmatpush1.msra.mxu0 0.0
    %5126 = vmatprep.subr.mxu0 0.0
    %5127 = vmatpush1.msra.mxu0 0.0
    %5128 = vmatprep.subr.mxu0 0.0
    %5129 = vmatpush1.msra.mxu0 0.0
    %5130 = vmatprep.subr.mxu0 0.0
    %5131 = vmatpush1.msra.mxu0 0.0
    %5132 = vmatprep.subr.mxu0 0.0
    %5133 = vmatpush1.msra.mxu0 0.0
    %5134 = vmatprep.subr.mxu0 0.0
    %5135 = vmatpush1.msra.mxu0 0.0
    %5136 = vmatprep.subr.mxu0 0.0
    %5137 = vmatpush1.msra.mxu0 0.0
    %5138 = vmatprep.subr.mxu0 0.0
    %5139 = vmatpush1.msra.mxu0 0.0
    %5140 = vmatprep.subr.mxu0 0.0
    %5141 = vmatpush1.msra.mxu0 0.0
    %5142 = vmatprep.subr.mxu0 0.0
    %5143 = vmatpush1.msra.mxu0 0.0
    %5144 = vmatprep.subr.mxu0 0.0
    %5145 = vmatpush1.msra.mxu0 0.0
    %5146 = vmatprep.subr.mxu0 0.0
    %5147 = vmatpush1.msra.mxu0 0.0
    %5148 = vmatprep.subr.mxu0 0.0
    %5149 = vmatpush1.msra.mxu0 0.0
    %5150 = vmatprep.subr.mxu0 0.0
    %5151 = vmatpush1.msra.mxu0 0.0
    %5152 = vmatprep.subr.mxu0 0.0
    %5153 = vmatpush1.msra.mxu0 0.0
    %5154 = vmatprep.subr.mxu0 0.0
    %5155 = vmatpush1.msra.mxu0 0.0
    %5156 = vmatprep.subr.mxu0 0.0
    %5157 = vmatpush1.msra.mxu0 0.0
    %5158 = vmatprep.subr.mxu0 0.0
    %5159 = vmatpush1.msra.mxu0 0.0
    %5160 = vmatprep.subr.mxu0 0.0
    %5161 = vmatpush1.msra.mxu0 0.0
    %5162 = vmatprep.subr.mxu0 0.0
    %5163 = vmatpush1.msra.mxu0 0.0
    %5164 = vmatprep.subr.mxu0 0.0
    %5165 = vmatpush1.msra.mxu0 0.0
    %5166 = vmatprep.subr.mxu0 0.0
    %5167 = vmatpush1.msra.mxu0 0.0
    %5168 = vmatprep.subr.mxu0 0.0
    %5169 = vmatpush1.msra.mxu0 0.0
    %5170 = vmatprep.subr.mxu0 0.0
    %5171 = vmatpush1.msra.mxu0 0.0
    %5172 = vmatprep.mubr.f32.mxu0 0.0
    %5173 = vmatmul.mubr.f32.gmra.mrb[0].mxu0 %v5106
    %v5174 = vpop.f32.mrb[0].mxu0
    %v5175 = vadd.f32 0.0, %v5174
    %v5176 = vpop.f32.mrb[0].mxu0
    %5177 = vdwg.mxu0
    %5178 = vrot.lane.b32.xlu0 %v3771, 64
    %v5179 = vpop.permute.xlu0 %5178
    %5180 = vrot.lane.b32.xlu0 %v3644, 64
    %v5181 = vpop.permute.xlu0 %5180
    %5182 = vrot.lane.b32.xlu0 %v3649, 64
    %v5183 = vpop.permute.xlu0 %5182
    %v5184 = vsel %vm507, %v5179, 0
    %v5186 = vsel %vm507, %v5181, 0
    %v5188 = vsel %vm507, %v5183, 0
    %5190 = vmatprep.subr.mxu0 0.0
    %5191 = vmatpush1.xpose.msra.mxu0 %v5186
    %5192 = vmatprep.subr.mxu0 0.0
    %5193 = vmatpush1.xpose.msra.mxu0 %v5188
    %5194 = vmatprep.subr.mxu0 0.0
    %5195 = vmatpush1.xpose.msra.mxu0 0.0
    %5196 = vmatprep.subr.mxu0 0.0
    %5197 = vmatpush1.xpose.msra.mxu0 0.0
    %5198 = vmatprep.subr.mxu0 0.0
    %5199 = vmatpush1.xpose.msra.mxu0 0.0
    %5200 = vmatprep.subr.mxu0 0.0
    %5201 = vmatpush1.xpose.msra.mxu0 0.0
    %5202 = vmatprep.subr.mxu0 0.0
    %5203 = vmatpush1.xpose.msra.mxu0 0.0
    %5204 = vmatprep.subr.mxu0 0.0
    %5205 = vmatpush1.xpose.msra.mxu0 0.0
    %5206 = vmatprep.subr.mxu0 0.0
    %5207 = vmatpush1.xpose.msra.mxu0 0.0
    %5208 = vmatprep.subr.mxu0 0.0
    %5209 = vmatpush1.xpose.msra.mxu0 0.0
    %5210 = vmatprep.subr.mxu0 0.0
    %5211 = vmatpush1.xpose.msra.mxu0 0.0
    %5212 = vmatprep.subr.mxu0 0.0
    %5213 = vmatpush1.xpose.msra.mxu0 0.0
    %5214 = vmatprep.subr.mxu0 0.0
    %5215 = vmatpush1.xpose.msra.mxu0 0.0
    %5216 = vmatprep.subr.mxu0 0.0
    %5217 = vmatpush1.xpose.msra.mxu0 0.0
    %5218 = vmatprep.subr.mxu0 0.0
    %5219 = vmatpush1.xpose.msra.mxu0 0.0
    %5220 = vmatprep.subr.mxu0 0.0
    %5221 = vmatpush1.xpose.msra.mxu0 0.0
    %5222 = vmatprep.subr.mxu0 0.0
    %5223 = vmatpush1.xpose.msra.mxu0 0.0
    %5224 = vmatprep.subr.mxu0 0.0
    %5225 = vmatpush1.xpose.msra.mxu0 0.0
    %5226 = vmatprep.subr.mxu0 0.0
    %5227 = vmatpush1.xpose.msra.mxu0 0.0
    %5228 = vmatprep.subr.mxu0 0.0
    %5229 = vmatpush1.xpose.msra.mxu0 0.0
    %5230 = vmatprep.subr.mxu0 0.0
    %5231 = vmatpush1.xpose.msra.mxu0 0.0
    %5232 = vmatprep.subr.mxu0 0.0
    %5233 = vmatpush1.xpose.msra.mxu0 0.0
    %5234 = vmatprep.subr.mxu0 0.0
    %5235 = vmatpush1.xpose.msra.mxu0 0.0
    %5236 = vmatprep.subr.mxu0 0.0
    %5237 = vmatpush1.xpose.msra.mxu0 0.0
    %5238 = vmatprep.subr.mxu0 0.0
    %5239 = vmatpush1.xpose.msra.mxu0 0.0
    %5240 = vmatprep.subr.mxu0 0.0
    %5241 = vmatpush1.xpose.msra.mxu0 0.0
    %5242 = vmatprep.subr.mxu0 0.0
    %5243 = vmatpush1.xpose.msra.mxu0 0.0
    %5244 = vmatprep.subr.mxu0 0.0
    %5245 = vmatpush1.xpose.msra.mxu0 0.0
    %5246 = vmatprep.subr.mxu0 0.0
    %5247 = vmatpush1.xpose.msra.mxu0 0.0
    %5248 = vmatprep.subr.mxu0 0.0
    %5249 = vmatpush1.xpose.msra.mxu0 0.0
    %5250 = vmatprep.subr.mxu0 0.0
    %5251 = vmatpush1.xpose.msra.mxu0 0.0
    %5252 = vmatprep.subr.mxu0 0.0
    %5253 = vmatpush1.xpose.msra.mxu0 0.0
    %5254 = vmatprep.mubr.f32.mxu0 0.0
    %5255 = vmatmul.mubr.f32.gmra.mrb[0].mxu0 %v5184
    %v5256 = vpop.f32.mrb[0].mxu0
    %v5257 = vadd.f32 0.0, %v5256
    %v5258 = vpop.f32.mrb[0].mxu0
    %5259 = vdwg.mxu0
    %5260 = vrot.lane.b32.xlu0 %v3776, 64
    %v5261 = vpop.permute.xlu0 %5260
    %5262 = vrot.lane.b32.xlu0 %v3654, 64
    %v5263 = vpop.permute.xlu0 %5262
    %5264 = vrot.lane.b32.xlu0 %v3659, 64
    %v5265 = vpop.permute.xlu0 %5264
    %v5266 = vsel %vm507, %v5261, 0
    %v5268 = vsel %vm507, %v5263, 0
    %v5270 = vsel %vm507, %v5265, 0
    %5272 = vmatprep.subr.mxu0 0.0
    %5273 = vmatpush1.xpose.msra.mxu0 %v5268
    %5274 = vmatprep.subr.mxu0 0.0
    %5275 = vmatpush1.xpose.msra.mxu0 %v5270
    %5276 = vmatprep.subr.mxu0 0.0
    %5277 = vmatpush1.xpose.msra.mxu0 0.0
    %5278 = vmatprep.subr.mxu0 0.0
    %5279 = vmatpush1.xpose.msra.mxu0 0.0
    %5280 = vmatprep.subr.mxu0 0.0
    %5281 = vmatpush1.xpose.msra.mxu0 0.0
    %5282 = vmatprep.subr.mxu0 0.0
    %5283 = vmatpush1.xpose.msra.mxu0 0.0
    %5284 = vmatprep.subr.mxu0 0.0
    %5285 = vmatpush1.xpose.msra.mxu0 0.0
    %5286 = vmatprep.subr.mxu0 0.0
    %5287 = vmatpush1.xpose.msra.mxu0 0.0
    %5288 = vmatprep.subr.mxu0 0.0
    %5289 = vmatpush1.xpose.msra.mxu0 0.0
    %5290 = vmatprep.subr.mxu0 0.0
    %5291 = vmatpush1.xpose.msra.mxu0 0.0
    %5292 = vmatprep.subr.mxu0 0.0
    %5293 = vmatpush1.xpose.msra.mxu0 0.0
    %5294 = vmatprep.subr.mxu0 0.0
    %5295 = vmatpush1.xpose.msra.mxu0 0.0
    %5296 = vmatprep.subr.mxu0 0.0
    %5297 = vmatpush1.xpose.msra.mxu0 0.0
    %5298 = vmatprep.subr.mxu0 0.0
    %5299 = vmatpush1.xpose.msra.mxu0 0.0
    %5300 = vmatprep.subr.mxu0 0.0
    %5301 = vmatpush1.xpose.msra.mxu0 0.0
    %5302 = vmatprep.subr.mxu0 0.0
    %5303 = vmatpush1.xpose.msra.mxu0 0.0
    %5304 = vmatprep.subr.mxu0 0.0
    %5305 = vmatpush1.xpose.msra.mxu0 0.0
    %5306 = vmatprep.subr.mxu0 0.0
    %5307 = vmatpush1.xpose.msra.mxu0 0.0
    %5308 = vmatprep.subr.mxu0 0.0
    %5309 = vmatpush1.xpose.msra.mxu0 0.0
    %5310 = vmatprep.subr.mxu0 0.0
    %5311 = vmatpush1.xpose.msra.mxu0 0.0
    %5312 = vmatprep.subr.mxu0 0.0
    %5313 = vmatpush1.xpose.msra.mxu0 0.0
    %5314 = vmatprep.subr.mxu0 0.0
    %5315 = vmatpush1.xpose.msra.mxu0 0.0
    %5316 = vmatprep.subr.mxu0 0.0
    %5317 = vmatpush1.xpose.msra.mxu0 0.0
    %5318 = vmatprep.subr.mxu0 0.0
    %5319 = vmatpush1.xpose.msra.mxu0 0.0
    %5320 = vmatprep.subr.mxu0 0.0
    %5321 = vmatpush1.xpose.msra.mxu0 0.0
    %5322 = vmatprep.subr.mxu0 0.0
    %5323 = vmatpush1.xpose.msra.mxu0 0.0
    %5324 = vmatprep.subr.mxu0 0.0
    %5325 = vmatpush1.xpose.msra.mxu0 0.0
    %5326 = vmatprep.subr.mxu0 0.0
    %5327 = vmatpush1.xpose.msra.mxu0 0.0
    %5328 = vmatprep.subr.mxu0 0.0
    %5329 = vmatpush1.xpose.msra.mxu0 0.0
    %5330 = vmatprep.subr.mxu0 0.0
    %5331 = vmatpush1.xpose.msra.mxu0 0.0
    %5332 = vmatprep.subr.mxu0 0.0
    %5333 = vmatpush1.xpose.msra.mxu0 0.0
    %5334 = vmatprep.subr.mxu0 0.0
    %5335 = vmatpush1.xpose.msra.mxu0 0.0
    %5336 = vmatprep.mubr.f32.mxu0 0.0
    %5337 = vmatmul.mubr.f32.gmra.mrb[0].mxu0 %v5266
    %v5338 = vpop.f32.mrb[0].mxu0
    %v5339 = vadd.f32 0.0, %v5338
    %v5340 = vpop.f32.mrb[0].mxu0
    %5341 = vdwg.mxu0
    %5342 = vrot.lane.b32.xlu0 %v3781, 64
    %v5343 = vpop.permute.xlu0 %5342
    %5344 = vrot.lane.b32.xlu0 %v3664, 64
    %v5345 = vpop.permute.xlu0 %5344
    %5346 = vrot.lane.b32.xlu0 %v3669, 64
    %v5347 = vpop.permute.xlu0 %5346
    %v5348 = vsel %vm507, %v5343, 0
    %v5350 = vsel %vm507, %v5345, 0
    %v5352 = vsel %vm507, %v5347, 0
    %5354 = vmatprep.subr.mxu0 0.0
    %5355 = vmatpush1.xpose.msra.mxu0 %v5350
    %5356 = vmatprep.subr.mxu0 0.0
    %5357 = vmatpush1.xpose.msra.mxu0 %v5352
    %5358 = vmatprep.subr.mxu0 0.0
    %5359 = vmatpush1.xpose.msra.mxu0 0.0
    %5360 = vmatprep.subr.mxu0 0.0
    %5361 = vmatpush1.xpose.msra.mxu0 0.0
    %5362 = vmatprep.subr.mxu0 0.0
    %5363 = vmatpush1.xpose.msra.mxu0 0.0
    %5364 = vmatprep.subr.mxu0 0.0
    %5365 = vmatpush1.xpose.msra.mxu0 0.0
    %5366 = vmatprep.subr.mxu0 0.0
    %5367 = vmatpush1.xpose.msra.mxu0 0.0
    %5368 = vmatprep.subr.mxu0 0.0
    %5369 = vmatpush1.xpose.msra.mxu0 0.0
    %5370 = vmatprep.subr.mxu0 0.0
    %5371 = vmatpush1.xpose.msra.mxu0 0.0
    %5372 = vmatprep.subr.mxu0 0.0
    %5373 = vmatpush1.xpose.msra.mxu0 0.0
    %5374 = vmatprep.subr.mxu0 0.0
    %5375 = vmatpush1.xpose.msra.mxu0 0.0
    %5376 = vmatprep.subr.mxu0 0.0
    %5377 = vmatpush1.xpose.msra.mxu0 0.0
    %5378 = vmatprep.subr.mxu0 0.0
    %5379 = vmatpush1.xpose.msra.mxu0 0.0
    %5380 = vmatprep.subr.mxu0 0.0
    %5381 = vmatpush1.xpose.msra.mxu0 0.0
    %5382 = vmatprep.subr.mxu0 0.0
    %5383 = vmatpush1.xpose.msra.mxu0 0.0
    %5384 = vmatprep.subr.mxu0 0.0
    %5385 = vmatpush1.xpose.msra.mxu0 0.0
    %5386 = vmatprep.subr.mxu0 0.0
    %5387 = vmatpush1.xpose.msra.mxu0 0.0
    %5388 = vmatprep.subr.mxu0 0.0
    %5389 = vmatpush1.xpose.msra.mxu0 0.0
    %5390 = vmatprep.subr.mxu0 0.0
    %5391 = vmatpush1.xpose.msra.mxu0 0.0
    %5392 = vmatprep.subr.mxu0 0.0
    %5393 = vmatpush1.xpose.msra.mxu0 0.0
    %5394 = vmatprep.subr.mxu0 0.0
    %5395 = vmatpush1.xpose.msra.mxu0 0.0
    %5396 = vmatprep.subr.mxu0 0.0
    %5397 = vmatpush1.xpose.msra.mxu0 0.0
    %5398 = vmatprep.subr.mxu0 0.0
    %5399 = vmatpush1.xpose.msra.mxu0 0.0
    %5400 = vmatprep.subr.mxu0 0.0
    %5401 = vmatpush1.xpose.msra.mxu0 0.0
    %5402 = vmatprep.subr.mxu0 0.0
    %5403 = vmatpush1.xpose.msra.mxu0 0.0
    %5404 = vmatprep.subr.mxu0 0.0
    %5405 = vmatpush1.xpose.msra.mxu0 0.0
    %5406 = vmatprep.subr.mxu0 0.0
    %5407 = vmatpush1.xpose.msra.mxu0 0.0
    %5408 = vmatprep.subr.mxu0 0.0
    %5409 = vmatpush1.xpose.msra.mxu0 0.0
    %5410 = vmatprep.subr.mxu0 0.0
    %5411 = vmatpush1.xpose.msra.mxu0 0.0
    %5412 = vmatprep.subr.mxu0 0.0
    %5413 = vmatpush1.xpose.msra.mxu0 0.0
    %5414 = vmatprep.subr.mxu0 0.0
    %5415 = vmatpush1.xpose.msra.mxu0 0.0
    %5416 = vmatprep.subr.mxu0 0.0
    %5417 = vmatpush1.xpose.msra.mxu0 0.0
    %5418 = vmatprep.mubr.f32.mxu0 0.0
    %5419 = vmatmul.mubr.f32.gmra.mrb[0].mxu0 %v5348
    %v5420 = vpop.f32.mrb[0].mxu0
    %v5421 = vadd.f32 0.0, %v5420
    %v5422 = vpop.f32.mrb[0].mxu0
    %5423 = vdwg.mxu0
    %5424 = vrot.lane.b32.xlu0 %v3786, 64
    %v5425 = vpop.permute.xlu0 %5424
    %5426 = vrot.lane.b32.xlu0 %v3674, 64
    %v5427 = vpop.permute.xlu0 %5426
    %5428 = vrot.lane.b32.xlu0 %v3679, 64
    %v5429 = vpop.permute.xlu0 %5428
    %v5430 = vsel %vm507, %v5425, 0
    %v5432 = vsel %vm507, %v5427, 0
    %v5434 = vsel %vm507, %v5429, 0
    %5436 = vmatprep.subr.mxu0 0.0
    %5437 = vmatpush1.xpose.msra.mxu0 %v5432
    %5438 = vmatprep.subr.mxu0 0.0
    %5439 = vmatpush1.xpose.msra.mxu0 %v5434
    %5440 = vmatprep.subr.mxu0 0.0
    %5441 = vmatpush1.xpose.msra.mxu0 0.0
    %5442 = vmatprep.subr.mxu0 0.0
    %5443 = vmatpush1.xpose.msra.mxu0 0.0
    %5444 = vmatprep.subr.mxu0 0.0
    %5445 = vmatpush1.xpose.msra.mxu0 0.0
    %5446 = vmatprep.subr.mxu0 0.0
    %5447 = vmatpush1.xpose.msra.mxu0 0.0
    %5448 = vmatprep.subr.mxu0 0.0
    %5449 = vmatpush1.xpose.msra.mxu0 0.0
    %5450 = vmatprep.subr.mxu0 0.0
    %5451 = vmatpush1.xpose.msra.mxu0 0.0
    %5452 = vmatprep.subr.mxu0 0.0
    %5453 = vmatpush1.xpose.msra.mxu0 0.0
    %5454 = vmatprep.subr.mxu0 0.0
    %5455 = vmatpush1.xpose.msra.mxu0 0.0
    %5456 = vmatprep.subr.mxu0 0.0
    %5457 = vmatpush1.xpose.msra.mxu0 0.0
    %5458 = vmatprep.subr.mxu0 0.0
    %5459 = vmatpush1.xpose.msra.mxu0 0.0
    %5460 = vmatprep.subr.mxu0 0.0
    %5461 = vmatpush1.xpose.msra.mxu0 0.0
    %5462 = vmatprep.subr.mxu0 0.0
    %5463 = vmatpush1.xpose.msra.mxu0 0.0
    %5464 = vmatprep.subr.mxu0 0.0
    %5465 = vmatpush1.xpose.msra.mxu0 0.0
    %5466 = vmatprep.subr.mxu0 0.0
    %5467 = vmatpush1.xpose.msra.mxu0 0.0
    %5468 = vmatprep.subr.mxu0 0.0
    %5469 = vmatpush1.xpose.msra.mxu0 0.0
    %5470 = vmatprep.subr.mxu0 0.0
    %5471 = vmatpush1.xpose.msra.mxu0 0.0
    %5472 = vmatprep.subr.mxu0 0.0
    %5473 = vmatpush1.xpose.msra.mxu0 0.0
    %5474 = vmatprep.subr.mxu0 0.0
    %5475 = vmatpush1.xpose.msra.mxu0 0.0
    %5476 = vmatprep.subr.mxu0 0.0
    %5477 = vmatpush1.xpose.msra.mxu0 0.0
    %5478 = vmatprep.subr.mxu0 0.0
    %5479 = vmatpush1.xpose.msra.mxu0 0.0
    %5480 = vmatprep.subr.mxu0 0.0
    %5481 = vmatpush1.xpose.msra.mxu0 0.0
    %5482 = vmatprep.subr.mxu0 0.0
    %5483 = vmatpush1.xpose.msra.mxu0 0.0
    %5484 = vmatprep.subr.mxu0 0.0
    %5485 = vmatpush1.xpose.msra.mxu0 0.0
    %5486 = vmatprep.subr.mxu0 0.0
    %5487 = vmatpush1.xpose.msra.mxu0 0.0
    %5488 = vmatprep.subr.mxu0 0.0
    %5489 = vmatpush1.xpose.msra.mxu0 0.0
    %5490 = vmatprep.subr.mxu0 0.0
    %5491 = vmatpush1.xpose.msra.mxu0 0.0
    %5492 = vmatprep.subr.mxu0 0.0
    %5493 = vmatpush1.xpose.msra.mxu0 0.0
    %5494 = vmatprep.subr.mxu0 0.0
    %5495 = vmatpush1.xpose.msra.mxu0 0.0
    %5496 = vmatprep.subr.mxu0 0.0
    %5497 = vmatpush1.xpose.msra.mxu0 0.0
    %5498 = vmatprep.subr.mxu0 0.0
    %5499 = vmatpush1.xpose.msra.mxu0 0.0
    %5500 = vmatprep.mubr.f32.mxu0 0.0
    %5501 = vmatmul.mubr.f32.gmra.mrb[0].mxu0 %v5430
    %v5502 = vpop.f32.mrb[0].mxu0
    %v5503 = vadd.f32 0.0, %v5502
    %v5504 = vpop.f32.mrb[0].mxu0
    %5505 = vdwg.mxu0
    %v5506 = vmul.f32 %v5257, 0.17677669
    %v5507 = vmul.f32 %v5339, 0.17677669
    %v5508 = vmul.f32 %v5421, 0.17677669
    %v5509 = vmul.f32 %v5503, 0.17677669
    %v5510 = vadd.f32 %v5506, %v3796
    %v5511 = vadd.f32 %v5507, %v3800
    %v5512 = vadd.f32 %v5508, %v3804
    %v5513 = vadd.f32 %v5509, %v3808
    %v5514 = vsel %vm4137, %v5510, -inf
    %5515 = vmax.xlane.f32.xlu0 %v5514
    %v5516 = vpop.xlane.xlu0 %5515
    %v5517 = vsel %vm4137, %v5511, -inf
    %5518 = vmax.xlane.f32.xlu0 %v5517
    %v5519 = vpop.xlane.xlu0 %5518
    %v5520 = vsel %vm4137, %v5512, -inf
    %5521 = vmax.xlane.f32.xlu0 %v5520
    %v5522 = vpop.xlane.xlu0 %5521
    %v5523 = vsel %vm4137, %v5513, -inf
    %5524 = vmax.xlane.f32.xlu0 %v5523
    %v5525 = vpop.xlane.xlu0 %5524
    %v5526 = vsub.f32 %v5510, %v5516
    %v5527 = vsub.f32 %v5511, %v5519
    %v5528 = vsub.f32 %v5512, %v5522
    %v5529 = vsub.f32 %v5513, %v5525
    %v5530 = vmul.f32 %v5526, 1.442695
    %v5531 = vpow.pop %v5530
    %v5532 = vmul.f32 %v5527, 1.442695
    %v5533 = vpow.pop %v5532
    %v5534 = vmul.f32 %v5528, 1.442695
    %v5535 = vpow.pop %v5534
    %v5536 = vmul.f32 %v5529, 1.442695
    %v5537 = vpow.pop %v5536
    %v5538 = vsel %vm4137, %v5531, 0.0
    %5539 = vadd.xlane.f32.xlu0 %v5538
    %v5540 = vpop.xlane.xlu0 %5539
    %v5541 = vsel %vm4137, %v5533, 0.0
    %5542 = vadd.xlane.f32.xlu0 %v5541
    %v5543 = vpop.xlane.xlu0 %5542
    %v5544 = vsel %vm4137, %v5535, 0.0
    %5545 = vadd.xlane.f32.xlu0 %v5544
    %v5546 = vpop.xlane.xlu0 %5545
    %v5547 = vsel %vm4137, %v5537, 0.0
    %5548 = vadd.xlane.f32.xlu0 %v5547
    %v5549 = vpop.xlane.xlu0 %5548
    %v5550 = vrcp.pop %v5540
    %v5551 = vrcp.pop %v5543
    %v5552 = vrcp.pop %v5546
    %v5553 = vrcp.pop %v5549
    %v5554 = vmul.f32 %v5531, %v5550
    %v5555 = vmul.f32 %v5533, %v5551
    %v5556 = vmul.f32 %v5535, %v5552
    %v5557 = vmul.f32 %v5537, %v5553
    %5558 = vrot.lane.b32.xlu0 %v3517, 64
    %v5559 = vpop.permute.xlu0 %5558
    %5560 = vrot.lane.b32.xlu0 %v3522, 64
    %v5561 = vpop.permute.xlu0 %5560
    %v5565 = vsel %vm4137, %v5554, 0
    %5567 = vmatprep.subr.mxu0 0.0
    %5568 = vmatpush1.msra.mxu0 %v5559
    %5569 = vmatprep.subr.mxu0 0.0
    %5570 = vmatpush1.msra.mxu0 %v5561
    %5571 = vmatprep.subr.mxu0 0.0
    %5572 = vmatpush1.msra.mxu0 0.0
    %5573 = vmatprep.subr.mxu0 0.0
    %5574 = vmatpush1.msra.mxu0 0.0
    %5575 = vmatprep.subr.mxu0 0.0
    %5576 = vmatpush1.msra.mxu0 0.0
    %5577 = vmatprep.subr.mxu0 0.0
    %5578 = vmatpush1.msra.mxu0 0.0
    %5579 = vmatprep.subr.mxu0 0.0
    %5580 = vmatpush1.msra.mxu0 0.0
    %5581 = vmatprep.subr.mxu0 0.0
    %5582 = vmatpush1.msra.mxu0 0.0
    %5583 = vmatprep.subr.mxu0 0.0
    %5584 = vmatpush1.msra.mxu0 0.0
    %5585 = vmatprep.subr.mxu0 0.0
    %5586 = vmatpush1.msra.mxu0 0.0
    %5587 = vmatprep.subr.mxu0 0.0
    %5588 = vmatpush1.msra.mxu0 0.0
    %5589 = vmatprep.subr.mxu0 0.0
    %5590 = vmatpush1.msra.mxu0 0.0
    %5591 = vmatprep.subr.mxu0 0.0
    %5592 = vmatpush1.msra.mxu0 0.0
    %5593 = vmatprep.subr.mxu0 0.0
    %5594 = vmatpush1.msra.mxu0 0.0
    %5595 = vmatprep.subr.mxu0 0.0
    %5596 = vmatpush1.msra.mxu0 0.0
    %5597 = vmatprep.subr.mxu0 0.0
    %5598 = vmatpush1.msra.mxu0 0.0
    %5599 = vmatprep.subr.mxu0 0.0
    %5600 = vmatpush1.msra.mxu0 0.0
    %5601 = vmatprep.subr.mxu0 0.0
    %5602 = vmatpush1.msra.mxu0 0.0
    %5603 = vmatprep.subr.mxu0 0.0
    %5604 = vmatpush1.msra.mxu0 0.0
    %5605 = vmatprep.subr.mxu0 0.0
    %5606 = vmatpush1.msra.mxu0 0.0
    %5607 = vmatprep.subr.mxu0 0.0
    %5608 = vmatpush1.msra.mxu0 0.0
    %5609 = vmatprep.subr.mxu0 0.0
    %5610 = vmatpush1.msra.mxu0 0.0
    %5611 = vmatprep.subr.mxu0 0.0
    %5612 = vmatpush1.msra.mxu0 0.0
    %5613 = vmatprep.subr.mxu0 0.0
    %5614 = vmatpush1.msra.mxu0 0.0
    %5615 = vmatprep.subr.mxu0 0.0
    %5616 = vmatpush1.msra.mxu0 0.0
    %5617 = vmatprep.subr.mxu0 0.0
    %5618 = vmatpush1.msra.mxu0 0.0
    %5619 = vmatprep.subr.mxu0 0.0
    %5620 = vmatpush1.msra.mxu0 0.0
    %5621 = vmatprep.subr.mxu0 0.0
    %5622 = vmatpush1.msra.mxu0 0.0
    %5623 = vmatprep.subr.mxu0 0.0
    %5624 = vmatpush1.msra.mxu0 0.0
    %5625 = vmatprep.subr.mxu0 0.0
    %5626 = vmatpush1.msra.mxu0 0.0
    %5627 = vmatprep.subr.mxu0 0.0
    %5628 = vmatpush1.msra.mxu0 0.0
    %5629 = vmatprep.subr.mxu0 0.0
    %5630 = vmatpush1.msra.mxu0 0.0
    %5631 = vmatprep.mubr.f32.mxu0 0.0
    %5632 = vmatmul.mubr.f32.gmra.mrb[0].mxu0 %v5565
    %v5633 = vpop.f32.mrb[0].mxu0
    %v5634 = vadd.f32 0.0, %v5633
    %v5635 = vpop.f32.mrb[0].mxu0
    %5636 = vdwg.mxu0
    %5637 = vrot.lane.b32.xlu0 %v3527, 64
    %v5638 = vpop.permute.xlu0 %5637
    %5639 = vrot.lane.b32.xlu0 %v3532, 64
    %v5640 = vpop.permute.xlu0 %5639
    %v5644 = vsel %vm4137, %v5555, 0
    %5646 = vmatprep.subr.mxu0 0.0
    %5647 = vmatpush1.msra.mxu0 %v5638
    %5648 = vmatprep.subr.mxu0 0.0
    %5649 = vmatpush1.msra.mxu0 %v5640
    %5650 = vmatprep.subr.mxu0 0.0
    %5651 = vmatpush1.msra.mxu0 0.0
    %5652 = vmatprep.subr.mxu0 0.0
    %5653 = vmatpush1.msra.mxu0 0.0
    %5654 = vmatprep.subr.mxu0 0.0
    %5655 = vmatpush1.msra.mxu0 0.0
    %5656 = vmatprep.subr.mxu0 0.0
    %5657 = vmatpush1.msra.mxu0 0.0
    %5658 = vmatprep.subr.mxu0 0.0
    %5659 = vmatpush1.msra.mxu0 0.0
    %5660 = vmatprep.subr.mxu0 0.0
    %5661 = vmatpush1.msra.mxu0 0.0
    %5662 = vmatprep.subr.mxu0 0.0
    %5663 = vmatpush1.msra.mxu0 0.0
    %5664 = vmatprep.subr.mxu0 0.0
    %5665 = vmatpush1.msra.mxu0 0.0
    %5666 = vmatprep.subr.mxu0 0.0
    %5667 = vmatpush1.msra.mxu0 0.0
    %5668 = vmatprep.subr.mxu0 0.0
    %5669 = vmatpush1.msra.mxu0 0.0
    %5670 = vmatprep.subr.mxu0 0.0
    %5671 = vmatpush1.msra.mxu0 0.0
    %5672 = vmatprep.subr.mxu0 0.0
    %5673 = vmatpush1.msra.mxu0 0.0
    %5674 = vmatprep.subr.mxu0 0.0
    %5675 = vmatpush1.msra.mxu0 0.0
    %5676 = vmatprep.subr.mxu0 0.0
    %5677 = vmatpush1.msra.mxu0 0.0
    %5678 = vmatprep.subr.mxu0 0.0
    %5679 = vmatpush1.msra.mxu0 0.0
    %5680 = vmatprep.subr.mxu0 0.0
    %5681 = vmatpush1.msra.mxu0 0.0
    %5682 = vmatprep.subr.mxu0 0.0
    %5683 = vmatpush1.msra.mxu0 0.0
    %5684 = vmatprep.subr.mxu0 0.0
    %5685 = vmatpush1.msra.mxu0 0.0
    %5686 = vmatprep.subr.mxu0 0.0
    %5687 = vmatpush1.msra.mxu0 0.0
    %5688 = vmatprep.subr.mxu0 0.0
    %5689 = vmatpush1.msra.mxu0 0.0
    %5690 = vmatprep.subr.mxu0 0.0
    %5691 = vmatpush1.msra.mxu0 0.0
    %5692 = vmatprep.subr.mxu0 0.0
    %5693 = vmatpush1.msra.mxu0 0.0
    %5694 = vmatprep.subr.mxu0 0.0
    %5695 = vmatpush1.msra.mxu0 0.0
    %5696 = vmatprep.subr.mxu0 0.0
    %5697 = vmatpush1.msra.mxu0 0.0
    %5698 = vmatprep.subr.mxu0 0.0
    %5699 = vmatpush1.msra.mxu0 0.0
    %5700 = vmatprep.subr.mxu0 0.0
    %5701 = vmatpush1.msra.mxu0 0.0
    %5702 = vmatprep.subr.mxu0 0.0
    %5703 = vmatpush1.msra.mxu0 0.0
    %5704 = vmatprep.subr.mxu0 0.0
    %5705 = vmatpush1.msra.mxu0 0.0
    %5706 = vmatprep.subr.mxu0 0.0
    %5707 = vmatpush1.msra.mxu0 0.0
    %5708 = vmatprep.subr.mxu0 0.0
    %5709 = vmatpush1.msra.mxu0 0.0
    %5710 = vmatprep.mubr.f32.mxu0 0.0
    %5711 = vmatmul.mubr.f32.gmra.mrb[0].mxu0 %v5644
    %v5712 = vpop.f32.mrb[0].mxu0
    %v5713 = vadd.f32 0.0, %v5712
    %v5714 = vpop.f32.mrb[0].mxu0
    %5715 = vdwg.mxu0
    %5716 = vrot.lane.b32.xlu0 %v3537, 64
    %v5717 = vpop.permute.xlu0 %5716
    %5718 = vrot.lane.b32.xlu0 %v3542, 64
    %v5719 = vpop.permute.xlu0 %5718
    %v5723 = vsel %vm4137, %v5556, 0
    %5725 = vmatprep.subr.mxu0 0.0
    %5726 = vmatpush1.msra.mxu0 %v5717
    %5727 = vmatprep.subr.mxu0 0.0
    %5728 = vmatpush1.msra.mxu0 %v5719
    %5729 = vmatprep.subr.mxu0 0.0
    %5730 = vmatpush1.msra.mxu0 0.0
    %5731 = vmatprep.subr.mxu0 0.0
    %5732 = vmatpush1.msra.mxu0 0.0
    %5733 = vmatprep.subr.mxu0 0.0
    %5734 = vmatpush1.msra.mxu0 0.0
    %5735 = vmatprep.subr.mxu0 0.0
    %5736 = vmatpush1.msra.mxu0 0.0
    %5737 = vmatprep.subr.mxu0 0.0
    %5738 = vmatpush1.msra.mxu0 0.0
    %5739 = vmatprep.subr.mxu0 0.0
    %5740 = vmatpush1.msra.mxu0 0.0
    %5741 = vmatprep.subr.mxu0 0.0
    %5742 = vmatpush1.msra.mxu0 0.0
    %5743 = vmatprep.subr.mxu0 0.0
    %5744 = vmatpush1.msra.mxu0 0.0
    %5745 = vmatprep.subr.mxu0 0.0
    %5746 = vmatpush1.msra.mxu0 0.0
    %5747 = vmatprep.subr.mxu0 0.0
    %5748 = vmatpush1.msra.mxu0 0.0
    %5749 = vmatprep.subr.mxu0 0.0
    %5750 = vmatpush1.msra.mxu0 0.0
    %5751 = vmatprep.subr.mxu0 0.0
    %5752 = vmatpush1.msra.mxu0 0.0
    %5753 = vmatprep.subr.mxu0 0.0
    %5754 = vmatpush1.msra.mxu0 0.0
    %5755 = vmatprep.subr.mxu0 0.0
    %5756 = vmatpush1.msra.mxu0 0.0
    %5757 = vmatprep.subr.mxu0 0.0
    %5758 = vmatpush1.msra.mxu0 0.0
    %5759 = vmatprep.subr.mxu0 0.0
    %5760 = vmatpush1.msra.mxu0 0.0
    %5761 = vmatprep.subr.mxu0 0.0
    %5762 = vmatpush1.msra.mxu0 0.0
    %5763 = vmatprep.subr.mxu0 0.0
    %5764 = vmatpush1.msra.mxu0 0.0
    %5765 = vmatprep.subr.mxu0 0.0
    %5766 = vmatpush1.msra.mxu0 0.0
    %5767 = vmatprep.subr.mxu0 0.0
    %5768 = vmatpush1.msra.mxu0 0.0
    %5769 = vmatprep.subr.mxu0 0.0
    %5770 = vmatpush1.msra.mxu0 0.0
    %5771 = vmatprep.subr.mxu0 0.0
    %5772 = vmatpush1.msra.mxu0 0.0
    %5773 = vmatprep.subr.mxu0 0.0
    %5774 = vmatpush1.msra.mxu0 0.0
    %5775 = vmatprep.subr.mxu0 0.0
    %5776 = vmatpush1.msra.mxu0 0.0
    %5777 = vmatprep.subr.mxu0 0.0
    %5778 = vmatpush1.msra.mxu0 0.0
    %5779 = vmatprep.subr.mxu0 0.0
    %5780 = vmatpush1.msra.mxu0 0.0
    %5781 = vmatprep.subr.mxu0 0.0
    %5782 = vmatpush1.msra.mxu0 0.0
    %5783 = vmatprep.subr.mxu0 0.0
    %5784 = vmatpush1.msra.mxu0 0.0
    %5785 = vmatprep.subr.mxu0 0.0
    %5786 = vmatpush1.msra.mxu0 0.0
    %5787 = vmatprep.subr.mxu0 0.0
    %5788 = vmatpush1.msra.mxu0 0.0
    %5789 = vmatprep.mubr.f32.mxu0 0.0
    %5790 = vmatmul.mubr.f32.gmra.mrb[0].mxu0 %v5723
    %v5791 = vpop.f32.mrb[0].mxu0
    %v5792 = vadd.f32 0.0, %v5791
    %v5793 = vpop.f32.mrb[0].mxu0
    %5794 = vdwg.mxu0
    %5795 = vrot.lane.b32.xlu0 %v3547, 64
    %v5796 = vpop.permute.xlu0 %5795
    %5797 = vrot.lane.b32.xlu0 %v3552, 64
    %v5798 = vpop.permute.xlu0 %5797
    %v5802 = vsel %vm4137, %v5557, 0
    %5804 = vmatprep.subr.mxu0 0.0
    %5805 = vmatpush1.msra.mxu0 %v5796
    %5806 = vmatprep.subr.mxu0 0.0
    %5807 = vmatpush1.msra.mxu0 %v5798
    %5808 = vmatprep.subr.mxu0 0.0
    %5809 = vmatpush1.msra.mxu0 0.0
    %5810 = vmatprep.subr.mxu0 0.0
    %5811 = vmatpush1.msra.mxu0 0.0
    %5812 = vmatprep.subr.mxu0 0.0
    %5813 = vmatpush1.msra.mxu0 0.0
    %5814 = vmatprep.subr.mxu0 0.0
    %5815 = vmatpush1.msra.mxu0 0.0
    %5816 = vmatprep.subr.mxu0 0.0
    %5817 = vmatpush1.msra.mxu0 0.0
    %5818 = vmatprep.subr.mxu0 0.0
    %5819 = vmatpush1.msra.mxu0 0.0
    %5820 = vmatprep.subr.mxu0 0.0
    %5821 = vmatpush1.msra.mxu0 0.0
    %5822 = vmatprep.subr.mxu0 0.0
    %5823 = vmatpush1.msra.mxu0 0.0
    %5824 = vmatprep.subr.mxu0 0.0
    %5825 = vmatpush1.msra.mxu0 0.0
    %5826 = vmatprep.subr.mxu0 0.0
    %5827 = vmatpush1.msra.mxu0 0.0
    %5828 = vmatprep.subr.mxu0 0.0
    %5829 = vmatpush1.msra.mxu0 0.0
    %5830 = vmatprep.subr.mxu0 0.0
    %5831 = vmatpush1.msra.mxu0 0.0
    %5832 = vmatprep.subr.mxu0 0.0
    %5833 = vmatpush1.msra.mxu0 0.0
    %5834 = vmatprep.subr.mxu0 0.0
    %5835 = vmatpush1.msra.mxu0 0.0
    %5836 = vmatprep.subr.mxu0 0.0
    %5837 = vmatpush1.msra.mxu0 0.0
    %5838 = vmatprep.subr.mxu0 0.0
    %5839 = vmatpush1.msra.mxu0 0.0
    %5840 = vmatprep.subr.mxu0 0.0
    %5841 = vmatpush1.msra.mxu0 0.0
    %5842 = vmatprep.subr.mxu0 0.0
    %5843 = vmatpush1.msra.mxu0 0.0
    %5844 = vmatprep.subr.mxu0 0.0
    %5845 = vmatpush1.msra.mxu0 0.0
    %5846 = vmatprep.subr.mxu0 0.0
    %5847 = vmatpush1.msra.mxu0 0.0
    %5848 = vmatprep.subr.mxu0 0.0
    %5849 = vmatpush1.msra.mxu0 0.0
    %5850 = vmatprep.subr.mxu0 0.0
    %5851 = vmatpush1.msra.mxu0 0.0
    %5852 = vmatprep.subr.mxu0 0.0
    %5853 = vmatpush1.msra.mxu0 0.0
    %5854 = vmatprep.subr.mxu0 0.0
    %5855 = vmatpush1.msra.mxu0 0.0
    %5856 = vmatprep.subr.mxu0 0.0
    %5857 = vmatpush1.msra.mxu0 0.0
    %5858 = vmatprep.subr.mxu0 0.0
    %5859 = vmatpush1.msra.mxu0 0.0
    %5860 = vmatprep.subr.mxu0 0.0
    %5861 = vmatpush1.msra.mxu0 0.0
    %5862 = vmatprep.subr.mxu0 0.0
    %5863 = vmatpush1.msra.mxu0 0.0
    %5864 = vmatprep.subr.mxu0 0.0
    %5865 = vmatpush1.msra.mxu0 0.0
    %5866 = vmatprep.subr.mxu0 0.0
    %5867 = vmatpush1.msra.mxu0 0.0
    %5868 = vmatprep.mubr.f32.mxu0 0.0
    %5869 = vmatmul.mubr.f32.gmra.mrb[0].mxu0 %v5802
    %v5870 = vpop.f32.mrb[0].mxu0
    %v5871 = vadd.f32 0.0, %v5870
    %v5872 = vpop.f32.mrb[0].mxu0
    %5873 = vdwg.mxu0
    %5874 = vrot.lane.b32.xlu0 %v3771, 32
    %v5875 = vpop.permute.xlu0 %5874
    %5876 = vrot.lane.b32.xlu0 %v3644, 32
    %v5877 = vpop.permute.xlu0 %5876
    %5878 = vrot.lane.b32.xlu0 %v3649, 32
    %v5879 = vpop.permute.xlu0 %5878
    %v5880 = vsel %vm507, %v5875, 0
    %v5882 = vsel %vm507, %v5877, 0
    %v5884 = vsel %vm507, %v5879, 0
    %5886 = vmatprep.subr.mxu0 0.0
    %5887 = vmatpush1.xpose.msra.mxu0 %v5882
    %5888 = vmatprep.subr.mxu0 0.0
    %5889 = vmatpush1.xpose.msra.mxu0 %v5884
    %5890 = vmatprep.subr.mxu0 0.0
    %5891 = vmatpush1.xpose.msra.mxu0 0.0
    %5892 = vmatprep.subr.mxu0 0.0
    %5893 = vmatpush1.xpose.msra.mxu0 0.0
    %5894 = vmatprep.subr.mxu0 0.0
    %5895 = vmatpush1.xpose.msra.mxu0 0.0
    %5896 = vmatprep.subr.mxu0 0.0
    %5897 = vmatpush1.xpose.msra.mxu0 0.0
    %5898 = vmatprep.subr.mxu0 0.0
    %5899 = vmatpush1.xpose.msra.mxu0 0.0
    %5900 = vmatprep.subr.mxu0 0.0
    %5901 = vmatpush1.xpose.msra.mxu0 0.0
    %5902 = vmatprep.subr.mxu0 0.0
    %5903 = vmatpush1.xpose.msra.mxu0 0.0
    %5904 = vmatprep.subr.mxu0 0.0
    %5905 = vmatpush1.xpose.msra.mxu0 0.0
    %5906 = vmatprep.subr.mxu0 0.0
    %5907 = vmatpush1.xpose.msra.mxu0 0.0
    %5908 = vmatprep.subr.mxu0 0.0
    %5909 = vmatpush1.xpose.msra.mxu0 0.0
    %5910 = vmatprep.subr.mxu0 0.0
    %5911 = vmatpush1.xpose.msra.mxu0 0.0
    %5912 = vmatprep.subr.mxu0 0.0
    %5913 = vmatpush1.xpose.msra.mxu0 0.0
    %5914 = vmatprep.subr.mxu0 0.0
    %5915 = vmatpush1.xpose.msra.mxu0 0.0
    %5916 = vmatprep.subr.mxu0 0.0
    %5917 = vmatpush1.xpose.msra.mxu0 0.0
    %5918 = vmatprep.subr.mxu0 0.0
    %5919 = vmatpush1.xpose.msra.mxu0 0.0
    %5920 = vmatprep.subr.mxu0 0.0
    %5921 = vmatpush1.xpose.msra.mxu0 0.0
    %5922 = vmatprep.subr.mxu0 0.0
    %5923 = vmatpush1.xpose.msra.mxu0 0.0
    %5924 = vmatprep.subr.mxu0 0.0
    %5925 = vmatpush1.xpose.msra.mxu0 0.0
    %5926 = vmatprep.subr.mxu0 0.0
    %5927 = vmatpush1.xpose.msra.mxu0 0.0
    %5928 = vmatprep.subr.mxu0 0.0
    %5929 = vmatpush1.xpose.msra.mxu0 0.0
    %5930 = vmatprep.subr.mxu0 0.0
    %5931 = vmatpush1.xpose.msra.mxu0 0.0
    %5932 = vmatprep.subr.mxu0 0.0
    %5933 = vmatpush1.xpose.msra.mxu0 0.0
    %5934 = vmatprep.subr.mxu0 0.0
    %5935 = vmatpush1.xpose.msra.mxu0 0.0
    %5936 = vmatprep.subr.mxu0 0.0
    %5937 = vmatpush1.xpose.msra.mxu0 0.0
    %5938 = vmatprep.subr.mxu0 0.0
    %5939 = vmatpush1.xpose.msra.mxu0 0.0
    %5940 = vmatprep.subr.mxu0 0.0
    %5941 = vmatpush1.xpose.msra.mxu0 0.0
    %5942 = vmatprep.subr.mxu0 0.0
    %5943 = vmatpush1.xpose.msra.mxu0 0.0
    %5944 = vmatprep.subr.mxu0 0.0
    %5945 = vmatpush1.xpose.msra.mxu0 0.0
    %5946 = vmatprep.subr.mxu0 0.0
    %5947 = vmatpush1.xpose.msra.mxu0 0.0
    %5948 = vmatprep.subr.mxu0 0.0
    %5949 = vmatpush1.xpose.msra.mxu0 0.0
    %5950 = vmatprep.mubr.f32.mxu0 0.0
    %5951 = vmatmul.mubr.f32.gmra.mrb[0].mxu0 %v5880
    %v5952 = vpop.f32.mrb[0].mxu0
    %v5953 = vadd.f32 0.0, %v5952
    %v5954 = vpop.f32.mrb[0].mxu0
    %5955 = vdwg.mxu0
    %5956 = vrot.lane.b32.xlu0 %v3776, 32
    %v5957 = vpop.permute.xlu0 %5956
    %5958 = vrot.lane.b32.xlu0 %v3654, 32
    %v5959 = vpop.permute.xlu0 %5958
    %5960 = vrot.lane.b32.xlu0 %v3659, 32
    %v5961 = vpop.permute.xlu0 %5960
    %v5962 = vsel %vm507, %v5957, 0
    %v5964 = vsel %vm507, %v5959, 0
    %v5966 = vsel %vm507, %v5961, 0
    %5968 = vmatprep.subr.mxu0 0.0
    %5969 = vmatpush1.xpose.msra.mxu0 %v5964
    %5970 = vmatprep.subr.mxu0 0.0
    %5971 = vmatpush1.xpose.msra.mxu0 %v5966
    %5972 = vmatprep.subr.mxu0 0.0
    %5973 = vmatpush1.xpose.msra.mxu0 0.0
    %5974 = vmatprep.subr.mxu0 0.0
    %5975 = vmatpush1.xpose.msra.mxu0 0.0
    %5976 = vmatprep.subr.mxu0 0.0
    %5977 = vmatpush1.xpose.msra.mxu0 0.0
    %5978 = vmatprep.subr.mxu0 0.0
    %5979 = vmatpush1.xpose.msra.mxu0 0.0
    %5980 = vmatprep.subr.mxu0 0.0
    %5981 = vmatpush1.xpose.msra.mxu0 0.0
    %5982 = vmatprep.subr.mxu0 0.0
    %5983 = vmatpush1.xpose.msra.mxu0 0.0
    %5984 = vmatprep.subr.mxu0 0.0
    %5985 = vmatpush1.xpose.msra.mxu0 0.0
    %5986 = vmatprep.subr.mxu0 0.0
    %5987 = vmatpush1.xpose.msra.mxu0 0.0
    %5988 = vmatprep.subr.mxu0 0.0
    %5989 = vmatpush1.xpose.msra.mxu0 0.0
    %5990 = vmatprep.subr.mxu0 0.0
    %5991 = vmatpush1.xpose.msra.mxu0 0.0
    %5992 = vmatprep.subr.mxu0 0.0
    %5993 = vmatpush1.xpose.msra.mxu0 0.0
    %5994 = vmatprep.subr.mxu0 0.0
    %5995 = vmatpush1.xpose.msra.mxu0 0.0
    %5996 = vmatprep.subr.mxu0 0.0
    %5997 = vmatpush1.xpose.msra.mxu0 0.0
    %5998 = vmatprep.subr.mxu0 0.0
    %5999 = vmatpush1.xpose.msra.mxu0 0.0
    %6000 = vmatprep.subr.mxu0 0.0
    %6001 = vmatpush1.xpose.msra.mxu0 0.0
    %6002 = vmatprep.subr.mxu0 0.0
    %6003 = vmatpush1.xpose.msra.mxu0 0.0
    %6004 = vmatprep.subr.mxu0 0.0
    %6005 = vmatpush1.xpose.msra.mxu0 0.0
    %6006 = vmatprep.subr.mxu0 0.0
    %6007 = vmatpush1.xpose.msra.mxu0 0.0
    %6008 = vmatprep.subr.mxu0 0.0
    %6009 = vmatpush1.xpose.msra.mxu0 0.0
    %6010 = vmatprep.subr.mxu0 0.0
    %6011 = vmatpush1.xpose.msra.mxu0 0.0
    %6012 = vmatprep.subr.mxu0 0.0
    %6013 = vmatpush1.xpose.msra.mxu0 0.0
    %6014 = vmatprep.subr.mxu0 0.0
    %6015 = vmatpush1.xpose.msra.mxu0 0.0
    %6016 = vmatprep.subr.mxu0 0.0
    %6017 = vmatpush1.xpose.msra.mxu0 0.0
    %6018 = vmatprep.subr.mxu0 0.0
    %6019 = vmatpush1.xpose.msra.mxu0 0.0
    %6020 = vmatprep.subr.mxu0 0.0
    %6021 = vmatpush1.xpose.msra.mxu0 0.0
    %6022 = vmatprep.subr.mxu0 0.0
    %6023 = vmatpush1.xpose.msra.mxu0 0.0
    %6024 = vmatprep.subr.mxu0 0.0
    %6025 = vmatpush1.xpose.msra.mxu0 0.0
    %6026 = vmatprep.subr.mxu0 0.0
    %6027 = vmatpush1.xpose.msra.mxu0 0.0
    %6028 = vmatprep.subr.mxu0 0.0
    %6029 = vmatpush1.xpose.msra.mxu0 0.0
    %6030 = vmatprep.subr.mxu0 0.0
    %6031 = vmatpush1.xpose.msra.mxu0 0.0
    %6032 = vmatprep.mubr.f32.mxu0 0.0
    %6033 = vmatmul.mubr.f32.gmra.mrb[0].mxu0 %v5962
    %v6034 = vpop.f32.mrb[0].mxu0
    %v6035 = vadd.f32 0.0, %v6034
    %v6036 = vpop.f32.mrb[0].mxu0
    %6037 = vdwg.mxu0
    %6038 = vrot.lane.b32.xlu0 %v3781, 32
    %v6039 = vpop.permute.xlu0 %6038
    %6040 = vrot.lane.b32.xlu0 %v3664, 32
    %v6041 = vpop.permute.xlu0 %6040
    %6042 = vrot.lane.b32.xlu0 %v3669, 32
    %v6043 = vpop.permute.xlu0 %6042
    %v6044 = vsel %vm507, %v6039, 0
    %v6046 = vsel %vm507, %v6041, 0
    %v6048 = vsel %vm507, %v6043, 0
    %6050 = vmatprep.subr.mxu0 0.0
    %6051 = vmatpush1.xpose.msra.mxu0 %v6046
    %6052 = vmatprep.subr.mxu0 0.0
    %6053 = vmatpush1.xpose.msra.mxu0 %v6048
    %6054 = vmatprep.subr.mxu0 0.0
    %6055 = vmatpush1.xpose.msra.mxu0 0.0
    %6056 = vmatprep.subr.mxu0 0.0
    %6057 = vmatpush1.xpose.msra.mxu0 0.0
    %6058 = vmatprep.subr.mxu0 0.0
    %6059 = vmatpush1.xpose.msra.mxu0 0.0
    %6060 = vmatprep.subr.mxu0 0.0
    %6061 = vmatpush1.xpose.msra.mxu0 0.0
    %6062 = vmatprep.subr.mxu0 0.0
    %6063 = vmatpush1.xpose.msra.mxu0 0.0
    %6064 = vmatprep.subr.mxu0 0.0
    %6065 = vmatpush1.xpose.msra.mxu0 0.0
    %6066 = vmatprep.subr.mxu0 0.0
    %6067 = vmatpush1.xpose.msra.mxu0 0.0
    %6068 = vmatprep.subr.mxu0 0.0
    %6069 = vmatpush1.xpose.msra.mxu0 0.0
    %6070 = vmatprep.subr.mxu0 0.0
    %6071 = vmatpush1.xpose.msra.mxu0 0.0
    %6072 = vmatprep.subr.mxu0 0.0
    %6073 = vmatpush1.xpose.msra.mxu0 0.0
    %6074 = vmatprep.subr.mxu0 0.0
    %6075 = vmatpush1.xpose.msra.mxu0 0.0
    %6076 = vmatprep.subr.mxu0 0.0
    %6077 = vmatpush1.xpose.msra.mxu0 0.0
    %6078 = vmatprep.subr.mxu0 0.0
    %6079 = vmatpush1.xpose.msra.mxu0 0.0
    %6080 = vmatprep.subr.mxu0 0.0
    %6081 = vmatpush1.xpose.msra.mxu0 0.0
    %6082 = vmatprep.subr.mxu0 0.0
    %6083 = vmatpush1.xpose.msra.mxu0 0.0
    %6084 = vmatprep.subr.mxu0 0.0
    %6085 = vmatpush1.xpose.msra.mxu0 0.0
    %6086 = vmatprep.subr.mxu0 0.0
    %6087 = vmatpush1.xpose.msra.mxu0 0.0
    %6088 = vmatprep.subr.mxu0 0.0
    %6089 = vmatpush1.xpose.msra.mxu0 0.0
    %6090 = vmatprep.subr.mxu0 0.0
    %6091 = vmatpush1.xpose.msra.mxu0 0.0
    %6092 = vmatprep.subr.mxu0 0.0
    %6093 = vmatpush1.xpose.msra.mxu0 0.0
    %6094 = vmatprep.subr.mxu0 0.0
    %6095 = vmatpush1.xpose.msra.mxu0 0.0
    %6096 = vmatprep.subr.mxu0 0.0
    %6097 = vmatpush1.xpose.msra.mxu0 0.0
    %6098 = vmatprep.subr.mxu0 0.0
    %6099 = vmatpush1.xpose.msra.mxu0 0.0
    %6100 = vmatprep.subr.mxu0 0.0
    %6101 = vmatpush1.xpose.msra.mxu0 0.0
    %6102 = vmatprep.subr.mxu0 0.0
    %6103 = vmatpush1.xpose.msra.mxu0 0.0
    %6104 = vmatprep.subr.mxu0 0.0
    %6105 = vmatpush1.xpose.msra.mxu0 0.0
    %6106 = vmatprep.subr.mxu0 0.0
    %6107 = vmatpush1.xpose.msra.mxu0 0.0
    %6108 = vmatprep.subr.mxu0 0.0
    %6109 = vmatpush1.xpose.msra.mxu0 0.0
    %6110 = vmatprep.subr.mxu0 0.0
    %6111 = vmatpush1.xpose.msra.mxu0 0.0
    %6112 = vmatprep.subr.mxu0 0.0
    %6113 = vmatpush1.xpose.msra.mxu0 0.0
    %6114 = vmatprep.mubr.f32.mxu0 0.0
    %6115 = vmatmul.mubr.f32.gmra.mrb[0].mxu0 %v6044
    %v6116 = vpop.f32.mrb[0].mxu0
    %v6117 = vadd.f32 0.0, %v6116
    %v6118 = vpop.f32.mrb[0].mxu0
    %6119 = vdwg.mxu0
    %6120 = vrot.lane.b32.xlu0 %v3786, 32
    %v6121 = vpop.permute.xlu0 %6120
    %6122 = vrot.lane.b32.xlu0 %v3674, 32
    %v6123 = vpop.permute.xlu0 %6122
    %6124 = vrot.lane.b32.xlu0 %v3679, 32
    %v6125 = vpop.permute.xlu0 %6124
    %v6126 = vsel %vm507, %v6121, 0
    %v6128 = vsel %vm507, %v6123, 0
    %v6130 = vsel %vm507, %v6125, 0
    %6132 = vmatprep.subr.mxu0 0.0
    %6133 = vmatpush1.xpose.msra.mxu0 %v6128
    %6134 = vmatprep.subr.mxu0 0.0
    %6135 = vmatpush1.xpose.msra.mxu0 %v6130
    %6136 = vmatprep.subr.mxu0 0.0
    %6137 = vmatpush1.xpose.msra.mxu0 0.0
    %6138 = vmatprep.subr.mxu0 0.0
    %6139 = vmatpush1.xpose.msra.mxu0 0.0
    %6140 = vmatprep.subr.mxu0 0.0
    %6141 = vmatpush1.xpose.msra.mxu0 0.0
    %6142 = vmatprep.subr.mxu0 0.0
    %6143 = vmatpush1.xpose.msra.mxu0 0.0
    %6144 = vmatprep.subr.mxu0 0.0
    %6145 = vmatpush1.xpose.msra.mxu0 0.0
    %6146 = vmatprep.subr.mxu0 0.0
    %6147 = vmatpush1.xpose.msra.mxu0 0.0
    %6148 = vmatprep.subr.mxu0 0.0
    %6149 = vmatpush1.xpose.msra.mxu0 0.0
    %6150 = vmatprep.subr.mxu0 0.0
    %6151 = vmatpush1.xpose.msra.mxu0 0.0
    %6152 = vmatprep.subr.mxu0 0.0
    %6153 = vmatpush1.xpose.msra.mxu0 0.0
    %6154 = vmatprep.subr.mxu0 0.0
    %6155 = vmatpush1.xpose.msra.mxu0 0.0
    %6156 = vmatprep.subr.mxu0 0.0
    %6157 = vmatpush1.xpose.msra.mxu0 0.0
    %6158 = vmatprep.subr.mxu0 0.0
    %6159 = vmatpush1.xpose.msra.mxu0 0.0
    %6160 = vmatprep.subr.mxu0 0.0
    %6161 = vmatpush1.xpose.msra.mxu0 0.0
    %6162 = vmatprep.subr.mxu0 0.0
    %6163 = vmatpush1.xpose.msra.mxu0 0.0
    %6164 = vmatprep.subr.mxu0 0.0
    %6165 = vmatpush1.xpose.msra.mxu0 0.0
    %6166 = vmatprep.subr.mxu0 0.0
    %6167 = vmatpush1.xpose.msra.mxu0 0.0
    %6168 = vmatprep.subr.mxu0 0.0
    %6169 = vmatpush1.xpose.msra.mxu0 0.0
    %6170 = vmatprep.subr.mxu0 0.0
    %6171 = vmatpush1.xpose.msra.mxu0 0.0
    %6172 = vmatprep.subr.mxu0 0.0
    %6173 = vmatpush1.xpose.msra.mxu0 0.0
    %6174 = vmatprep.subr.mxu0 0.0
    %6175 = vmatpush1.xpose.msra.mxu0 0.0
    %6176 = vmatprep.subr.mxu0 0.0
    %6177 = vmatpush1.xpose.msra.mxu0 0.0
    %6178 = vmatprep.subr.mxu0 0.0
    %6179 = vmatpush1.xpose.msra.mxu0 0.0
    %6180 = vmatprep.subr.mxu0 0.0
    %6181 = vmatpush1.xpose.msra.mxu0 0.0
    %6182 = vmatprep.subr.mxu0 0.0
    %6183 = vmatpush1.xpose.msra.mxu0 0.0
    %6184 = vmatprep.subr.mxu0 0.0
    %6185 = vmatpush1.xpose.msra.mxu0 0.0
    %6186 = vmatprep.subr.mxu0 0.0
    %6187 = vmatpush1.xpose.msra.mxu0 0.0
    %6188 = vmatprep.subr.mxu0 0.0
    %6189 = vmatpush1.xpose.msra.mxu0 0.0
    %6190 = vmatprep.subr.mxu0 0.0
    %6191 = vmatpush1.xpose.msra.mxu0 0.0
    %6192 = vmatprep.subr.mxu0 0.0
    %6193 = vmatpush1.xpose.msra.mxu0 0.0
    %6194 = vmatprep.subr.mxu0 0.0
    %6195 = vmatpush1.xpose.msra.mxu0 0.0
    %6196 = vmatprep.mubr.f32.mxu0 0.0
    %6197 = vmatmul.mubr.f32.gmra.mrb[0].mxu0 %v6126
    %v6198 = vpop.f32.mrb[0].mxu0
    %v6199 = vadd.f32 0.0, %v6198
    %v6200 = vpop.f32.mrb[0].mxu0
    %6201 = vdwg.mxu0
    %v6202 = vmul.f32 %v5953, 0.17677669
    %v6203 = vmul.f32 %v6035, 0.17677669
    %v6204 = vmul.f32 %v6117, 0.17677669
    %v6205 = vmul.f32 %v6199, 0.17677669
    %v6206 = vadd.f32 %v6202, %v3796
    %v6207 = vadd.f32 %v6203, %v3800
    %v6208 = vadd.f32 %v6204, %v3804
    %v6209 = vadd.f32 %v6205, %v3808
    %v6210 = vsel %vm4137, %v6206, -inf
    %6211 = vmax.xlane.f32.xlu0 %v6210
    %v6212 = vpop.xlane.xlu0 %6211
    %v6213 = vsel %vm4137, %v6207, -inf
    %6214 = vmax.xlane.f32.xlu0 %v6213
    %v6215 = vpop.xlane.xlu0 %6214
    %v6216 = vsel %vm4137, %v6208, -inf
    %6217 = vmax.xlane.f32.xlu0 %v6216
    %v6218 = vpop.xlane.xlu0 %6217
    %v6219 = vsel %vm4137, %v6209, -inf
    %6220 = vmax.xlane.f32.xlu0 %v6219
    %v6221 = vpop.xlane.xlu0 %6220
    %v6222 = vsub.f32 %v6206, %v6212
    %v6223 = vsub.f32 %v6207, %v6215
    %v6224 = vsub.f32 %v6208, %v6218
    %v6225 = vsub.f32 %v6209, %v6221
    %v6226 = vmul.f32 %v6222, 1.442695
    %v6227 = vpow.pop %v6226
    %v6228 = vmul.f32 %v6223, 1.442695
    %v6229 = vpow.pop %v6228
    %v6230 = vmul.f32 %v6224, 1.442695
    %v6231 = vpow.pop %v6230
    %v6232 = vmul.f32 %v6225, 1.442695
    %v6233 = vpow.pop %v6232
    %v6234 = vsel %vm4137, %v6227, 0.0
    %6235 = vadd.xlane.f32.xlu0 %v6234
    %v6236 = vpop.xlane.xlu0 %6235
    %v6237 = vsel %vm4137, %v6229, 0.0
    %6238 = vadd.xlane.f32.xlu0 %v6237
    %v6239 = vpop.xlane.xlu0 %6238
    %v6240 = vsel %vm4137, %v6231, 0.0
    %6241 = vadd.xlane.f32.xlu0 %v6240
    %v6242 = vpop.xlane.xlu0 %6241
    %v6243 = vsel %vm4137, %v6233, 0.0
    %6244 = vadd.xlane.f32.xlu0 %v6243
    %v6245 = vpop.xlane.xlu0 %6244
    %v6246 = vrcp.pop %v6236
    %v6247 = vrcp.pop %v6239
    %v6248 = vrcp.pop %v6242
    %v6249 = vrcp.pop %v6245
    %v6250 = vmul.f32 %v6227, %v6246
    %v6251 = vmul.f32 %v6229, %v6247
    %v6252 = vmul.f32 %v6231, %v6248
    %v6253 = vmul.f32 %v6233, %v6249
    %6254 = vrot.lane.b32.xlu0 %v3517, 32
    %v6255 = vpop.permute.xlu0 %6254
    %6256 = vrot.lane.b32.xlu0 %v3522, 32
    %v6257 = vpop.permute.xlu0 %6256
    %v6261 = vsel %vm4137, %v6250, 0
    %6263 = vmatprep.subr.mxu0 0.0
    %6264 = vmatpush1.msra.mxu0 %v6255
    %6265 = vmatprep.subr.mxu0 0.0
    %6266 = vmatpush1.msra.mxu0 %v6257
    %6267 = vmatprep.subr.mxu0 0.0
    %6268 = vmatpush1.msra.mxu0 0.0
    %6269 = vmatprep.subr.mxu0 0.0
    %6270 = vmatpush1.msra.mxu0 0.0
    %6271 = vmatprep.subr.mxu0 0.0
    %6272 = vmatpush1.msra.mxu0 0.0
    %6273 = vmatprep.subr.mxu0 0.0
    %6274 = vmatpush1.msra.mxu0 0.0
    %6275 = vmatprep.subr.mxu0 0.0
    %6276 = vmatpush1.msra.mxu0 0.0
    %6277 = vmatprep.subr.mxu0 0.0
    %6278 = vmatpush1.msra.mxu0 0.0
    %6279 = vmatprep.subr.mxu0 0.0
    %6280 = vmatpush1.msra.mxu0 0.0
    %6281 = vmatprep.subr.mxu0 0.0
    %6282 = vmatpush1.msra.mxu0 0.0
    %6283 = vmatprep.subr.mxu0 0.0
    %6284 = vmatpush1.msra.mxu0 0.0
    %6285 = vmatprep.subr.mxu0 0.0
    %6286 = vmatpush1.msra.mxu0 0.0
    %6287 = vmatprep.subr.mxu0 0.0
    %6288 = vmatpush1.msra.mxu0 0.0
    %6289 = vmatprep.subr.mxu0 0.0
    %6290 = vmatpush1.msra.mxu0 0.0
    %6291 = vmatprep.subr.mxu0 0.0
    %6292 = vmatpush1.msra.mxu0 0.0
    %6293 = vmatprep.subr.mxu0 0.0
    %6294 = vmatpush1.msra.mxu0 0.0
    %6295 = vmatprep.subr.mxu0 0.0
    %6296 = vmatpush1.msra.mxu0 0.0
    %6297 = vmatprep.subr.mxu0 0.0
    %6298 = vmatpush1.msra.mxu0 0.0
    %6299 = vmatprep.subr.mxu0 0.0
    %6300 = vmatpush1.msra.mxu0 0.0
    %6301 = vmatprep.subr.mxu0 0.0
    %6302 = vmatpush1.msra.mxu0 0.0
    %6303 = vmatprep.subr.mxu0 0.0
    %6304 = vmatpush1.msra.mxu0 0.0
    %6305 = vmatprep.subr.mxu0 0.0
    %6306 = vmatpush1.msra.mxu0 0.0
    %6307 = vmatprep.subr.mxu0 0.0
    %6308 = vmatpush1.msra.mxu0 0.0
    %6309 = vmatprep.subr.mxu0 0.0
    %6310 = vmatpush1.msra.mxu0 0.0
    %6311 = vmatprep.subr.mxu0 0.0
    %6312 = vmatpush1.msra.mxu0 0.0
    %6313 = vmatprep.subr.mxu0 0.0
    %6314 = vmatpush1.msra.mxu0 0.0
    %6315 = vmatprep.subr.mxu0 0.0
    %6316 = vmatpush1.msra.mxu0 0.0
    %6317 = vmatprep.subr.mxu0 0.0
    %6318 = vmatpush1.msra.mxu0 0.0
    %6319 = vmatprep.subr.mxu0 0.0
    %6320 = vmatpush1.msra.mxu0 0.0
    %6321 = vmatprep.subr.mxu0 0.0
    %6322 = vmatpush1.msra.mxu0 0.0
    %6323 = vmatprep.subr.mxu0 0.0
    %6324 = vmatpush1.msra.mxu0 0.0
    %6325 = vmatprep.subr.mxu0 0.0
    %6326 = vmatpush1.msra.mxu0 0.0
    %6327 = vmatprep.mubr.f32.mxu0 0.0
    %6328 = vmatmul.mubr.f32.gmra.mrb[0].mxu0 %v6261
    %v6329 = vpop.f32.mrb[0].mxu0
    %v6330 = vadd.f32 0.0, %v6329
    %v6331 = vpop.f32.mrb[0].mxu0
    %6332 = vdwg.mxu0
    %6333 = vrot.lane.b32.xlu0 %v3527, 32
    %v6334 = vpop.permute.xlu0 %6333
    %6335 = vrot.lane.b32.xlu0 %v3532, 32
    %v6336 = vpop.permute.xlu0 %6335
    %v6340 = vsel %vm4137, %v6251, 0
    %6342 = vmatprep.subr.mxu0 0.0
    %6343 = vmatpush1.msra.mxu0 %v6334
    %6344 = vmatprep.subr.mxu0 0.0
    %6345 = vmatpush1.msra.mxu0 %v6336
    %6346 = vmatprep.subr.mxu0 0.0
    %6347 = vmatpush1.msra.mxu0 0.0
    %6348 = vmatprep.subr.mxu0 0.0
    %6349 = vmatpush1.msra.mxu0 0.0
    %6350 = vmatprep.subr.mxu0 0.0
    %6351 = vmatpush1.msra.mxu0 0.0
    %6352 = vmatprep.subr.mxu0 0.0
    %6353 = vmatpush1.msra.mxu0 0.0
    %6354 = vmatprep.subr.mxu0 0.0
    %6355 = vmatpush1.msra.mxu0 0.0
    %6356 = vmatprep.subr.mxu0 0.0
    %6357 = vmatpush1.msra.mxu0 0.0
    %6358 = vmatprep.subr.mxu0 0.0
    %6359 = vmatpush1.msra.mxu0 0.0
    %6360 = vmatprep.subr.mxu0 0.0
    %6361 = vmatpush1.msra.mxu0 0.0
    %6362 = vmatprep.subr.mxu0 0.0
    %6363 = vmatpush1.msra.mxu0 0.0
    %6364 = vmatprep.subr.mxu0 0.0
    %6365 = vmatpush1.msra.mxu0 0.0
    %6366 = vmatprep.subr.mxu0 0.0
    %6367 = vmatpush1.msra.mxu0 0.0
    %6368 = vmatprep.subr.mxu0 0.0
    %6369 = vmatpush1.msra.mxu0 0.0
    %6370 = vmatprep.subr.mxu0 0.0
    %6371 = vmatpush1.msra.mxu0 0.0
    %6372 = vmatprep.subr.mxu0 0.0
    %6373 = vmatpush1.msra.mxu0 0.0
    %6374 = vmatprep.subr.mxu0 0.0
    %6375 = vmatpush1.msra.mxu0 0.0
    %6376 = vmatprep.subr.mxu0 0.0
    %6377 = vmatpush1.msra.mxu0 0.0
    %6378 = vmatprep.subr.mxu0 0.0
    %6379 = vmatpush1.msra.mxu0 0.0
    %6380 = vmatprep.subr.mxu0 0.0
    %6381 = vmatpush1.msra.mxu0 0.0
    %6382 = vmatprep.subr.mxu0 0.0
    %6383 = vmatpush1.msra.mxu0 0.0
    %6384 = vmatprep.subr.mxu0 0.0
    %6385 = vmatpush1.msra.mxu0 0.0
    %6386 = vmatprep.subr.mxu0 0.0
    %6387 = vmatpush1.msra.mxu0 0.0
    %6388 = vmatprep.subr.mxu0 0.0
    %6389 = vmatpush1.msra.mxu0 0.0
    %6390 = vmatprep.subr.mxu0 0.0
    %6391 = vmatpush1.msra.mxu0 0.0
    %6392 = vmatprep.subr.mxu0 0.0
    %6393 = vmatpush1.msra.mxu0 0.0
    %6394 = vmatprep.subr.mxu0 0.0
    %6395 = vmatpush1.msra.mxu0 0.0
    %6396 = vmatprep.subr.mxu0 0.0
    %6397 = vmatpush1.msra.mxu0 0.0
    %6398 = vmatprep.subr.mxu0 0.0
    %6399 = vmatpush1.msra.mxu0 0.0
    %6400 = vmatprep.subr.mxu0 0.0
    %6401 = vmatpush1.msra.mxu0 0.0
    %6402 = vmatprep.subr.mxu0 0.0
    %6403 = vmatpush1.msra.mxu0 0.0
    %6404 = vmatprep.subr.mxu0 0.0
    %6405 = vmatpush1.msra.mxu0 0.0
    %6406 = vmatprep.mubr.f32.mxu0 0.0
    %6407 = vmatmul.mubr.f32.gmra.mrb[0].mxu0 %v6340
    %v6408 = vpop.f32.mrb[0].mxu0
    %v6409 = vadd.f32 0.0, %v6408
    %v6410 = vpop.f32.mrb[0].mxu0
    %6411 = vdwg.mxu0
    %6412 = vrot.lane.b32.xlu0 %v3537, 32
    %v6413 = vpop.permute.xlu0 %6412
    %6414 = vrot.lane.b32.xlu0 %v3542, 32
    %v6415 = vpop.permute.xlu0 %6414
    %v6419 = vsel %vm4137, %v6252, 0
    %6421 = vmatprep.subr.mxu0 0.0
    %6422 = vmatpush1.msra.mxu0 %v6413
    %6423 = vmatprep.subr.mxu0 0.0
    %6424 = vmatpush1.msra.mxu0 %v6415
    %6425 = vmatprep.subr.mxu0 0.0
    %6426 = vmatpush1.msra.mxu0 0.0
    %6427 = vmatprep.subr.mxu0 0.0
    %6428 = vmatpush1.msra.mxu0 0.0
    %6429 = vmatprep.subr.mxu0 0.0
    %6430 = vmatpush1.msra.mxu0 0.0
    %6431 = vmatprep.subr.mxu0 0.0
    %6432 = vmatpush1.msra.mxu0 0.0
    %6433 = vmatprep.subr.mxu0 0.0
    %6434 = vmatpush1.msra.mxu0 0.0
    %6435 = vmatprep.subr.mxu0 0.0
    %6436 = vmatpush1.msra.mxu0 0.0
    %6437 = vmatprep.subr.mxu0 0.0
    %6438 = vmatpush1.msra.mxu0 0.0
    %6439 = vmatprep.subr.mxu0 0.0
    %6440 = vmatpush1.msra.mxu0 0.0
    %6441 = vmatprep.subr.mxu0 0.0
    %6442 = vmatpush1.msra.mxu0 0.0
    %6443 = vmatprep.subr.mxu0 0.0
    %6444 = vmatpush1.msra.mxu0 0.0
    %6445 = vmatprep.subr.mxu0 0.0
    %6446 = vmatpush1.msra.mxu0 0.0
    %6447 = vmatprep.subr.mxu0 0.0
    %6448 = vmatpush1.msra.mxu0 0.0
    %6449 = vmatprep.subr.mxu0 0.0
    %6450 = vmatpush1.msra.mxu0 0.0
    %6451 = vmatprep.subr.mxu0 0.0
    %6452 = vmatpush1.msra.mxu0 0.0
    %6453 = vmatprep.subr.mxu0 0.0
    %6454 = vmatpush1.msra.mxu0 0.0
    %6455 = vmatprep.subr.mxu0 0.0
    %6456 = vmatpush1.msra.mxu0 0.0
    %6457 = vmatprep.subr.mxu0 0.0
    %6458 = vmatpush1.msra.mxu0 0.0
    %6459 = vmatprep.subr.mxu0 0.0
    %6460 = vmatpush1.msra.mxu0 0.0
    %6461 = vmatprep.subr.mxu0 0.0
    %6462 = vmatpush1.msra.mxu0 0.0
    %6463 = vmatprep.subr.mxu0 0.0
    %6464 = vmatpush1.msra.mxu0 0.0
    %6465 = vmatprep.subr.mxu0 0.0
    %6466 = vmatpush1.msra.mxu0 0.0
    %6467 = vmatprep.subr.mxu0 0.0
    %6468 = vmatpush1.msra.mxu0 0.0
    %6469 = vmatprep.subr.mxu0 0.0
    %6470 = vmatpush1.msra.mxu0 0.0
    %6471 = vmatprep.subr.mxu0 0.0
    %6472 = vmatpush1.msra.mxu0 0.0
    %6473 = vmatprep.subr.mxu0 0.0
    %6474 = vmatpush1.msra.mxu0 0.0
    %6475 = vmatprep.subr.mxu0 0.0
    %6476 = vmatpush1.msra.mxu0 0.0
    %6477 = vmatprep.subr.mxu0 0.0
    %6478 = vmatpush1.msra.mxu0 0.0
    %6479 = vmatprep.subr.mxu0 0.0
    %6480 = vmatpush1.msra.mxu0 0.0
    %6481 = vmatprep.subr.mxu0 0.0
    %6482 = vmatpush1.msra.mxu0 0.0
    %6483 = vmatprep.subr.mxu0 0.0
    %6484 = vmatpush1.msra.mxu0 0.0
    %6485 = vmatprep.mubr.f32.mxu0 0.0
    %6486 = vmatmul.mubr.f32.gmra.mrb[0].mxu0 %v6419
    %v6487 = vpop.f32.mrb[0].mxu0
    %v6488 = vadd.f32 0.0, %v6487
    %v6489 = vpop.f32.mrb[0].mxu0
    %6490 = vdwg.mxu0
    %6491 = vrot.lane.b32.xlu0 %v3547, 32
    %v6492 = vpop.permute.xlu0 %6491
    %6493 = vrot.lane.b32.xlu0 %v3552, 32
    %v6494 = vpop.permute.xlu0 %6493
    %v6498 = vsel %vm4137, %v6253, 0
    %6500 = vmatprep.subr.mxu0 0.0
    %6501 = vmatpush1.msra.mxu0 %v6492
    %6502 = vmatprep.subr.mxu0 0.0
    %6503 = vmatpush1.msra.mxu0 %v6494
    %6504 = vmatprep.subr.mxu0 0.0
    %6505 = vmatpush1.msra.mxu0 0.0
    %6506 = vmatprep.subr.mxu0 0.0
    %6507 = vmatpush1.msra.mxu0 0.0
    %6508 = vmatprep.subr.mxu0 0.0
    %6509 = vmatpush1.msra.mxu0 0.0
    %6510 = vmatprep.subr.mxu0 0.0
    %6511 = vmatpush1.msra.mxu0 0.0
    %6512 = vmatprep.subr.mxu0 0.0
    %6513 = vmatpush1.msra.mxu0 0.0
    %6514 = vmatprep.subr.mxu0 0.0
    %6515 = vmatpush1.msra.mxu0 0.0
    %6516 = vmatprep.subr.mxu0 0.0
    %6517 = vmatpush1.msra.mxu0 0.0
    %6518 = vmatprep.subr.mxu0 0.0
    %6519 = vmatpush1.msra.mxu0 0.0
    %6520 = vmatprep.subr.mxu0 0.0
    %6521 = vmatpush1.msra.mxu0 0.0
    %6522 = vmatprep.subr.mxu0 0.0
    %6523 = vmatpush1.msra.mxu0 0.0
    %6524 = vmatprep.subr.mxu0 0.0
    %6525 = vmatpush1.msra.mxu0 0.0
    %6526 = vmatprep.subr.mxu0 0.0
    %6527 = vmatpush1.msra.mxu0 0.0
    %6528 = vmatprep.subr.mxu0 0.0
    %6529 = vmatpush1.msra.mxu0 0.0
    %6530 = vmatprep.subr.mxu0 0.0
    %6531 = vmatpush1.msra.mxu0 0.0
    %6532 = vmatprep.subr.mxu0 0.0
    %6533 = vmatpush1.msra.mxu0 0.0
    %6534 = vmatprep.subr.mxu0 0.0
    %6535 = vmatpush1.msra.mxu0 0.0
    %6536 = vmatprep.subr.mxu0 0.0
    %6537 = vmatpush1.msra.mxu0 0.0
    %6538 = vmatprep.subr.mxu0 0.0
    %6539 = vmatpush1.msra.mxu0 0.0
    %6540 = vmatprep.subr.mxu0 0.0
    %6541 = vmatpush1.msra.mxu0 0.0
    %6542 = vmatprep.subr.mxu0 0.0
    %6543 = vmatpush1.msra.mxu0 0.0
    %6544 = vmatprep.subr.mxu0 0.0
    %6545 = vmatpush1.msra.mxu0 0.0
    %6546 = vmatprep.subr.mxu0 0.0
    %6547 = vmatpush1.msra.mxu0 0.0
    %6548 = vmatprep.subr.mxu0 0.0
    %6549 = vmatpush1.msra.mxu0 0.0
    %6550 = vmatprep.subr.mxu0 0.0
    %6551 = vmatpush1.msra.mxu0 0.0
    %6552 = vmatprep.subr.mxu0 0.0
    %6553 = vmatpush1.msra.mxu0 0.0
    %6554 = vmatprep.subr.mxu0 0.0
    %6555 = vmatpush1.msra.mxu0 0.0
    %6556 = vmatprep.subr.mxu0 0.0
    %6557 = vmatpush1.msra.mxu0 0.0
    %6558 = vmatprep.subr.mxu0 0.0
    %6559 = vmatpush1.msra.mxu0 0.0
    %6560 = vmatprep.subr.mxu0 0.0
    %6561 = vmatpush1.msra.mxu0 0.0
    %6562 = vmatprep.subr.mxu0 0.0
    %6563 = vmatpush1.msra.mxu0 0.0
    %6564 = vmatprep.mubr.f32.mxu0 0.0
    %6565 = vmatmul.mubr.f32.gmra.mrb[0].mxu0 %v6498
    %v6566 = vpop.f32.mrb[0].mxu0
    %v6567 = vadd.f32 0.0, %v6566
    %v6568 = vpop.f32.mrb[0].mxu0
    %6569 = vdwg.mxu0
    %6574 = vrot.lane.b32.xlu0 %v4932, 32
    %v6575 = vpop.permute.xlu0 %6574
    %6576 = vrot.lane.b32.xlu0 %v5013, 32
    %v6577 = vpop.permute.xlu0 %6576
    %6578 = vrot.lane.b32.xlu0 %v5094, 32
    %v6579 = vpop.permute.xlu0 %6578
    %6580 = vrot.lane.b32.xlu0 %v5175, 32
    %v6581 = vpop.permute.xlu0 %6580
    %6590 = vrot.lane.b32.xlu0 %v5634, 64
    %v6591 = vpop.permute.xlu0 %6590
    %6592 = vrot.lane.b32.xlu0 %v5713, 64
    %v6593 = vpop.permute.xlu0 %6592
    %6594 = vrot.lane.b32.xlu0 %v5792, 64
    %v6595 = vpop.permute.xlu0 %6594
    %6596 = vrot.lane.b32.xlu0 %v5871, 64
    %v6597 = vpop.permute.xlu0 %6596
    %6606 = vrot.lane.b32.xlu0 %v6330, 96
    %v6607 = vpop.permute.xlu0 %6606
    %6608 = vrot.lane.b32.xlu0 %v6409, 96
    %v6609 = vpop.permute.xlu0 %6608
    %6610 = vrot.lane.b32.xlu0 %v6488, 96
    %v6611 = vpop.permute.xlu0 %6610
    %6612 = vrot.lane.b32.xlu0 %v6567, 96
    %v6613 = vpop.permute.xlu0 %6612
    %v6618 = vsel %vm507, %v4252, %v6575
    %v6619 = vsel %vm507, %v4325, %v6577
    %v6620 = vsel %vm507, %v4398, %v6579
    %v6621 = vsel %vm507, %v4471, %v6581
    %v6622 = vsel %vm3217, %v6618, %v6591
    %v6623 = vsel %vm3217, %v6619, %v6593
    %v6624 = vsel %vm3217, %v6620, %v6595
    %v6625 = vsel %vm3217, %v6621, %v6597
    %v6626 = vsel %vm3222, %v6622, %v6607
    %v6627 = vsel %vm3222, %v6623, %v6609
    %v6628 = vsel %vm3222, %v6624, %v6611
    %v6629 = vsel %vm3222, %v6625, %v6613
    %s6630 = scalar_lea.vmem [#allocation10], 384
    %v6631 = vld [vmem:[%s6630] sm:$0xff]
    %v6632 = vld [vmem:[%s6630 + $0x8] sm:$0xff]
    %v6633 = vld [vmem:[%s6630 + $0x10] sm:$0xff]
    %v6634 = vld [vmem:[%s6630 + $0x18] sm:$0xff]
    %v6635 = vld [vmem:[%s6630 + $0x20] sm:$0xff]
    %v6636 = vld [vmem:[%s6630 + $0x28] sm:$0xff]
    %v6637 = vld [vmem:[%s6630 + $0x30] sm:$0xff]
    %v6638 = vld [vmem:[%s6630 + $0x38] sm:$0xff]
    %v6639 = vld [vmem:[%s6630 + $0x40] sm:$0xff]
    %v6640 = vld [vmem:[%s6630 + $0x48] sm:$0xff]
    %v6641 = vld [vmem:[%s6630 + $0x50] sm:$0xff]
    %v6642 = vld [vmem:[%s6630 + $0x58] sm:$0xff]
    %v6643 = vld [vmem:[%s6630 + $0x60] sm:$0xff]
    %v6644 = vld [vmem:[%s6630 + $0x68] sm:$0xff]
    %v6645 = vld [vmem:[%s6630 + $0x70] sm:$0xff]
    %v6646 = vld [vmem:[%s6630 + $0x78] sm:$0xff]
    %v6647 = vld [vmem:[%s7 + $0x3] sm:$0x1]
    %v6648 = vlaneseq
    %v6649 = vshrl.u32 %v6648, 7
    %v6650 = vsub.s32 0, %v6649
    %v6651 = vrot.slane %v6647, %v6650
    %6652 = vmatprep.subr.mxu0 0.0
    %6653 = vmatpush1.msra.mxu0 %v6631
    %6654 = vmatprep.subr.mxu0 0.0
    %6655 = vmatpush1.msra.mxu0 %v6632
    %6656 = vmatprep.subr.mxu0 0.0
    %6657 = vmatpush1.msra.mxu0 %v6633
    %6658 = vmatprep.subr.mxu0 0.0
    %6659 = vmatpush1.msra.mxu0 %v6634
    %6660 = vmatprep.subr.mxu0 0.0
    %6661 = vmatpush1.msra.mxu0 %v6635
    %6662 = vmatprep.subr.mxu0 0.0
    %6663 = vmatpush1.msra.mxu0 %v6636
    %6664 = vmatprep.subr.mxu0 0.0
    %6665 = vmatpush1.msra.mxu0 %v6637
    %6666 = vmatprep.subr.mxu0 0.0
    %6667 = vmatpush1.msra.mxu0 %v6638
    %6668 = vmatprep.subr.mxu0 0.0
    %6669 = vmatpush1.msra.mxu0 %v6639
    %6670 = vmatprep.subr.mxu0 0.0
    %6671 = vmatpush1.msra.mxu0 %v6640
    %6672 = vmatprep.subr.mxu0 0.0
    %6673 = vmatpush1.msra.mxu0 %v6641
    %6674 = vmatprep.subr.mxu0 0.0
    %6675 = vmatpush1.msra.mxu0 %v6642
    %6676 = vmatprep.subr.mxu0 0.0
    %6677 = vmatpush1.msra.mxu0 %v6643
    %6678 = vmatprep.subr.mxu0 0.0
    %6679 = vmatpush1.msra.mxu0 %v6644
    %6680 = vmatprep.subr.mxu0 0.0
    %6681 = vmatpush1.msra.mxu0 %v6645
    %6682 = vmatprep.subr.mxu0 0.0
    %6683 = vmatpush1.msra.mxu0 %v6646
    %6684 = vmatprep.subr.mxu0 0.0
    %6685 = vmatpush1.msra.mxu0 0.0
    %6686 = vmatprep.subr.mxu0 0.0
    %6687 = vmatpush1.msra.mxu0 0.0
    %6688 = vmatprep.subr.mxu0 0.0
    %6689 = vmatpush1.msra.mxu0 0.0
    %6690 = vmatprep.subr.mxu0 0.0
    %6691 = vmatpush1.msra.mxu0 0.0
    %6692 = vmatprep.subr.mxu0 0.0
    %6693 = vmatpush1.msra.mxu0 0.0
    %6694 = vmatprep.subr.mxu0 0.0
    %6695 = vmatpush1.msra.mxu0 0.0
    %6696 = vmatprep.subr.mxu0 0.0
    %6697 = vmatpush1.msra.mxu0 0.0
    %6698 = vmatprep.subr.mxu0 0.0
    %6699 = vmatpush1.msra.mxu0 0.0
    %6700 = vmatprep.subr.mxu0 0.0
    %6701 = vmatpush1.msra.mxu0 0.0
    %6702 = vmatprep.subr.mxu0 0.0
    %6703 = vmatpush1.msra.mxu0 0.0
    %6704 = vmatprep.subr.mxu0 0.0
    %6705 = vmatpush1.msra.mxu0 0.0
    %6706 = vmatprep.subr.mxu0 0.0
    %6707 = vmatpush1.msra.mxu0 0.0
    %6708 = vmatprep.subr.mxu0 0.0
    %6709 = vmatpush1.msra.mxu0 0.0
    %6710 = vmatprep.subr.mxu0 0.0
    %6711 = vmatpush1.msra.mxu0 0.0
    %6712 = vmatprep.subr.mxu0 0.0
    %6713 = vmatpush1.msra.mxu0 0.0
    %6714 = vmatprep.subr.mxu0 0.0
    %6715 = vmatpush1.msra.mxu0 0.0
    %6716 = vmatprep.mubr.f32.mxu0 0.0
    %6717 = vmatmul.mubr.f32.gmra.mrb[0].mxu0 %v6626
    %v6718 = vpop.f32.mrb[0].mxu0
    %v6719 = vadd.f32 %v6651, %v6718
    %v6720 = vpop.f32.mrb[0].mxu0
    %6721 = vmatprep.mubr.f32.mxu0 0.0
    %6722 = vmatmul.mubr.f32.gmra.mrb[0].mxu0 %v6627
    %v6723 = vpop.f32.mrb[0].mxu0
    %v6724 = vadd.f32 %v6651, %v6723
    %v6725 = vpop.f32.mrb[0].mxu0
    %6726 = vmatprep.mubr.f32.mxu0 0.0
    %6727 = vmatmul.mubr.f32.gmra.mrb[0].mxu0 %v6628
    %v6728 = vpop.f32.mrb[0].mxu0
    %v6729 = vadd.f32 %v6651, %v6728
    %v6730 = vpop.f32.mrb[0].mxu0
    %6731 = vmatprep.mubr.f32.mxu0 0.0
    %6732 = vmatmul.mubr.f32.gmra.mrb[0].mxu0 %v6629
    %v6733 = vpop.f32.mrb[0].mxu0
    %v6734 = vadd.f32 %v6651, %v6733
    %v6735 = vpop.f32.mrb[0].mxu0
    %6736 = vdwg.mxu0
    %v6737 = vadd.f32 %v3425, %v6719
    %v6738 = vadd.f32 %v3426, %v6724
    %v6739 = vadd.f32 %v3427, %v6729
    %v6740 = vadd.f32 %v3428, %v6734
    %v6741 = vld [vmem:[%s12 + $0x1] sm:$0x1]
    %v6742 = vld [vmem:[%s13 + $0x1] sm:$0x1]
    %6743 = vadd.xlane.f32.xlu0 %v6737
    %v6744 = vpop.xlane.xlu0 %6743
    %6745 = vadd.xlane.f32.xlu0 %v6738
    %v6746 = vpop.xlane.xlu0 %6745
    %6747 = vadd.xlane.f32.xlu0 %v6739
    %v6748 = vpop.xlane.xlu0 %6747
    %6749 = vadd.xlane.f32.xlu0 %v6740
    %v6750 = vpop.xlane.xlu0 %6749
    %v6751 = vmul.f32 %v6744, %v3348
    %v6752 = vmul.f32 %v6746, %v3348
    %v6753 = vmul.f32 %v6748, %v3348
    %v6754 = vmul.f32 %v6750, %v3348
    %v6755 = vsub.f32 %v6737, %v6751
    %v6756 = vsub.f32 %v6738, %v6752
    %v6757 = vsub.f32 %v6739, %v6753
    %v6758 = vsub.f32 %v6740, %v6754
    %v6759 = vmul.f32 %v6755, %v6755
    %v6760 = vmul.f32 %v6756, %v6756
    %v6761 = vmul.f32 %v6757, %v6757
    %v6762 = vmul.f32 %v6758, %v6758
    %6763 = vadd.xlane.f32.xlu0 %v6759
    %v6764 = vpop.xlane.xlu0 %6763
    %6765 = vadd.xlane.f32.xlu0 %v6760
    %v6766 = vpop.xlane.xlu0 %6765
    %6767 = vadd.xlane.f32.xlu0 %v6761
    %v6768 = vpop.xlane.xlu0 %6767
    %6769 = vadd.xlane.f32.xlu0 %v6762
    %v6770 = vpop.xlane.xlu0 %6769
    %v6771 = vmul.f32 %v6764, 0.007874016
    %v6772 = vmul.f32 %v6766, 0.007874016
    %v6773 = vmul.f32 %v6768, 0.007874016
    %v6774 = vmul.f32 %v6770, 0.007874016
    %v6775 = vrsqrt.pop %v6771
    %v6776 = vmul.f32 %v6771, %v6775
    %vm6777 = vcmp.eq.f32.partialorder %v6771, inf
    %v6778 = vsel %vm6777, %v6771, %v6776
    %vm6779 = vcmp.eq.f32.partialorder %v6771, 0.0
    %v6780 = vand.u32 %v6771, 2147483648
    %v6781 = vsel %vm6779, %v6780, %v6778
    %v6782 = vrsqrt.pop %v6772
    %v6783 = vmul.f32 %v6772, %v6782
    %vm6784 = vcmp.eq.f32.partialorder %v6772, inf
    %v6785 = vsel %vm6784, %v6772, %v6783
    %vm6786 = vcmp.eq.f32.partialorder %v6772, 0.0
    %v6787 = vand.u32 %v6772, 2147483648
    %v6788 = vsel %vm6786, %v6787, %v6785
    %v6789 = vrsqrt.pop %v6773
    %v6790 = vmul.f32 %v6773, %v6789
    %vm6791 = vcmp.eq.f32.partialorder %v6773, inf
    %v6792 = vsel %vm6791, %v6773, %v6790
    %vm6793 = vcmp.eq.f32.partialorder %v6773, 0.0
    %v6794 = vand.u32 %v6773, 2147483648
    %v6795 = vsel %vm6793, %v6794, %v6792
    %v6796 = vrsqrt.pop %v6774
    %v6797 = vmul.f32 %v6774, %v6796
    %vm6798 = vcmp.eq.f32.partialorder %v6774, inf
    %v6799 = vsel %vm6798, %v6774, %v6797
    %vm6800 = vcmp.eq.f32.partialorder %v6774, 0.0
    %v6801 = vand.u32 %v6774, 2147483648
    %v6802 = vsel %vm6800, %v6801, %v6799
    %v6803 = vadd.f32 %v6781, 1e-06
    %v6804 = vadd.f32 %v6788, 1e-06
    %v6805 = vadd.f32 %v6795, 1e-06
    %v6806 = vadd.f32 %v6802, 1e-06
    %v6807 = vrcp.pop %v6803
    %v6808 = vrcp.pop %v6804
    %v6809 = vrcp.pop %v6805
    %v6810 = vrcp.pop %v6806
    %v6811 = vlaneseq
    %v6812 = vshrl.u32 %v6811, 7
    %v6813 = vsub.s32 0, %v6812
    %v6814 = vrot.slane %v6741, %v6813
    %v6815 = vmul.f32 %v6814, %v6755
    %v6816 = vmul.f32 %v6814, %v6756
    %v6817 = vmul.f32 %v6814, %v6757
    %v6818 = vmul.f32 %v6814, %v6758
    %v6819 = vmul.f32 %v6815, %v6807
    %v6820 = vmul.f32 %v6816, %v6808
    %v6821 = vmul.f32 %v6817, %v6809
    %v6822 = vmul.f32 %v6818, %v6810
    %v6823 = vlaneseq
    %v6824 = vshrl.u32 %v6823, 7
    %v6825 = vsub.s32 0, %v6824
    %v6826 = vrot.slane %v6742, %v6825
    %v6827 = vadd.f32 %v6819, %v6826
    %v6828 = vadd.f32 %v6820, %v6826
    %v6829 = vadd.f32 %v6821, %v6826
    %v6830 = vadd.f32 %v6822, %v6826
    %v6831 = vld [vmem:[#allocation11] sm:$0xff]
    %v6832 = vld [vmem:[#allocation11 + $0x8] sm:$0xff]
    %v6833 = vld [vmem:[#allocation11 + $0x10] sm:$0xff]
    %v6834 = vld [vmem:[#allocation11 + $0x18] sm:$0xff]
    %v6835 = vld [vmem:[#allocation11 + $0x20] sm:$0xff]
    %v6836 = vld [vmem:[#allocation11 + $0x28] sm:$0xff]
    %v6837 = vld [vmem:[#allocation11 + $0x30] sm:$0xff]
    %v6838 = vld [vmem:[#allocation11 + $0x38] sm:$0xff]
    %v6839 = vld [vmem:[#allocation11 + $0x40] sm:$0xff]
    %v6840 = vld [vmem:[#allocation11 + $0x48] sm:$0xff]
    %v6841 = vld [vmem:[#allocation11 + $0x50] sm:$0xff]
    %v6842 = vld [vmem:[#allocation11 + $0x58] sm:$0xff]
    %v6843 = vld [vmem:[#allocation11 + $0x60] sm:$0xff]
    %v6844 = vld [vmem:[#allocation11 + $0x68] sm:$0xff]
    %v6845 = vld [vmem:[#allocation11 + $0x70] sm:$0xff]
    %v6846 = vld [vmem:[#allocation11 + $0x78] sm:$0xff]
    %v6847 = vld [vmem:[#allocation11 + $0x80] sm:$0xff]
    %v6848 = vld [vmem:[#allocation11 + $0x88] sm:$0xff]
    %v6849 = vld [vmem:[#allocation11 + $0x90] sm:$0xff]
    %v6850 = vld [vmem:[#allocation11 + $0x98] sm:$0xff]
    %v6851 = vld [vmem:[#allocation11 + $0xa0] sm:$0xff]
    %v6852 = vld [vmem:[#allocation11 + $0xa8] sm:$0xff]
    %v6853 = vld [vmem:[#allocation11 + $0xb0] sm:$0xff]
    %v6854 = vld [vmem:[#allocation11 + $0xb8] sm:$0xff]
    %v6855 = vld [vmem:[#allocation11 + $0xc0] sm:$0xff]
    %v6856 = vld [vmem:[#allocation11 + $0xc8] sm:$0xff]
    %v6857 = vld [vmem:[#allocation11 + $0xd0] sm:$0xff]
    %v6858 = vld [vmem:[#allocation11 + $0xd8] sm:$0xff]
    %v6859 = vld [vmem:[#allocation11 + $0xe0] sm:$0xff]
    %v6860 = vld [vmem:[#allocation11 + $0xe8] sm:$0xff]
    %v6861 = vld [vmem:[#allocation11 + $0xf0] sm:$0xff]
    %v6862 = vld [vmem:[#allocation11 + $0xf8] sm:$0xff]
    %v6863 = vld [vmem:[%s9] sm:$0x3]
    %v6865 = vlaneseq
    %v6866 = vshrl.u32 %v6865, 7
    %v6867 = vsub.s32 0, %v6866
    %v6868 = vrot.slane %v6863, %v6867
    %v6869 = vlaneseq
    %v6870 = vshrl.u32 %v6869, 7
    %v6871 = vsub.s32 1, %v6870
    %v6872 = vrot.slane %v6863, %v6871
    %6875 = vmatprep.subr.mxu0 %v6832
    %6876 = vmatpush1.msra.mxu0 %v6831
    %6877 = vmatprep.subr.mxu0 %v6834
    %6878 = vmatpush1.msra.mxu0 %v6833
    %6879 = vmatprep.subr.mxu0 %v6836
    %6880 = vmatpush1.msra.mxu0 %v6835
    %6881 = vmatprep.subr.mxu0 %v6838
    %6882 = vmatpush1.msra.mxu0 %v6837
    %6883 = vmatprep.subr.mxu0 %v6840
    %6884 = vmatpush1.msra.mxu0 %v6839
    %6885 = vmatprep.subr.mxu0 %v6842
    %6886 = vmatpush1.msra.mxu0 %v6841
    %6887 = vmatprep.subr.mxu0 %v6844
    %6888 = vmatpush1.msra.mxu0 %v6843
    %6889 = vmatprep.subr.mxu0 %v6846
    %6890 = vmatpush1.msra.mxu0 %v6845
    %6891 = vmatprep.subr.mxu0 %v6848
    %6892 = vmatpush1.msra.mxu0 %v6847
    %6893 = vmatprep.subr.mxu0 %v6850
    %6894 = vmatpush1.msra.mxu0 %v6849
    %6895 = vmatprep.subr.mxu0 %v6852
    %6896 = vmatpush1.msra.mxu0 %v6851
    %6897 = vmatprep.subr.mxu0 %v6854
    %6898 = vmatpush1.msra.mxu0 %v6853
    %6899 = vmatprep.subr.mxu0 %v6856
    %6900 = vmatpush1.msra.mxu0 %v6855
    %6901 = vmatprep.subr.mxu0 %v6858
    %6902 = vmatpush1.msra.mxu0 %v6857
    %6903 = vmatprep.subr.mxu0 %v6860
    %6904 = vmatpush1.msra.mxu0 %v6859
    %6905 = vmatprep.subr.mxu0 %v6862
    %6906 = vmatpush1.msra.mxu0 %v6861
    %6907 = vmatprep.subr.mxu0 0.0
    %6908 = vmatpush1.msra.mxu0 0.0
    %6909 = vmatprep.subr.mxu0 0.0
    %6910 = vmatpush1.msra.mxu0 0.0
    %6911 = vmatprep.subr.mxu0 0.0
    %6912 = vmatpush1.msra.mxu0 0.0
    %6913 = vmatprep.subr.mxu0 0.0
    %6914 = vmatpush1.msra.mxu0 0.0
    %6915 = vmatprep.subr.mxu0 0.0
    %6916 = vmatpush1.msra.mxu0 0.0
    %6917 = vmatprep.subr.mxu0 0.0
    %6918 = vmatpush1.msra.mxu0 0.0
    %6919 = vmatprep.subr.mxu0 0.0
    %6920 = vmatpush1.msra.mxu0 0.0
    %6921 = vmatprep.subr.mxu0 0.0
    %6922 = vmatpush1.msra.mxu0 0.0
    %6923 = vmatprep.subr.mxu0 0.0
    %6924 = vmatpush1.msra.mxu0 0.0
    %6925 = vmatprep.subr.mxu0 0.0
    %6926 = vmatpush1.msra.mxu0 0.0
    %6927 = vmatprep.subr.mxu0 0.0
    %6928 = vmatpush1.msra.mxu0 0.0
    %6929 = vmatprep.subr.mxu0 0.0
    %6930 = vmatpush1.msra.mxu0 0.0
    %6931 = vmatprep.subr.mxu0 0.0
    %6932 = vmatpush1.msra.mxu0 0.0
    %6933 = vmatprep.subr.mxu0 0.0
    %6934 = vmatpush1.msra.mxu0 0.0
    %6935 = vmatprep.subr.mxu0 0.0
    %6936 = vmatpush1.msra.mxu0 0.0
    %6937 = vmatprep.subr.mxu0 0.0
    %6938 = vmatpush1.msra.mxu0 0.0
    %6939 = vmatprep.mubr.f32.mxu0 0.0
    %6940 = vmatmul.mubr.f32.gmra.mrb[0].mxu0 %v6827
    %v6941 = vpop.f32.mrb[0].mxu0
    %v6942 = vadd.f32 %v6868, %v6941
    %v6943 = vpop.f32.mrb[0].mxu0
    %v6944 = vadd.f32 %v6872, %v6943
    %6945 = vmatprep.mubr.f32.mxu0 0.0
    %6946 = vmatmul.mubr.f32.gmra.mrb[0].mxu0 %v6828
    %v6947 = vpop.f32.mrb[0].mxu0
    %v6948 = vadd.f32 %v6868, %v6947
    %v6949 = vpop.f32.mrb[0].mxu0
    %v6950 = vadd.f32 %v6872, %v6949
    %6951 = vmatprep.mubr.f32.mxu0 0.0
    %6952 = vmatmul.mubr.f32.gmra.mrb[0].mxu0 %v6829
    %v6953 = vpop.f32.mrb[0].mxu0
    %v6954 = vadd.f32 %v6868, %v6953
    %v6955 = vpop.f32.mrb[0].mxu0
    %v6956 = vadd.f32 %v6872, %v6955
    %6957 = vmatprep.mubr.f32.mxu0 0.0
    %6958 = vmatmul.mubr.f32.gmra.mrb[0].mxu0 %v6830
    %v6959 = vpop.f32.mrb[0].mxu0
    %v6960 = vadd.f32 %v6868, %v6959
    %v6961 = vpop.f32.mrb[0].mxu0
    %v6962 = vadd.f32 %v6872, %v6961
    %6963 = vdwg.mxu0
    %v6964 = vmax.f32 %v6942, 0.0
    %v6965 = vmax.f32 %v6944, 0.0
    %v6966 = vmax.f32 %v6948, 0.0
    %v6967 = vmax.f32 %v6950, 0.0
    %v6968 = vmax.f32 %v6954, 0.0
    %v6969 = vmax.f32 %v6956, 0.0
    %v6970 = vmax.f32 %v6960, 0.0
    %v6971 = vmax.f32 %v6962, 0.0
    %v6972 = vld [vmem:[#allocation13] sm:$0xff]
    %v6973 = vld [vmem:[#allocation13 + $0x8] sm:$0xff]
    %v6974 = vld [vmem:[#allocation13 + $0x10] sm:$0xff]
    %v6975 = vld [vmem:[#allocation13 + $0x18] sm:$0xff]
    %v6976 = vld [vmem:[#allocation13 + $0x20] sm:$0xff]
    %v6977 = vld [vmem:[#allocation13 + $0x28] sm:$0xff]
    %v6978 = vld [vmem:[#allocation13 + $0x30] sm:$0xff]
    %v6979 = vld [vmem:[#allocation13 + $0x38] sm:$0xff]
    %v6980 = vld [vmem:[#allocation13 + $0x40] sm:$0xff]
    %v6981 = vld [vmem:[#allocation13 + $0x48] sm:$0xff]
    %v6982 = vld [vmem:[#allocation13 + $0x50] sm:$0xff]
    %v6983 = vld [vmem:[#allocation13 + $0x58] sm:$0xff]
    %v6984 = vld [vmem:[#allocation13 + $0x60] sm:$0xff]
    %v6985 = vld [vmem:[#allocation13 + $0x68] sm:$0xff]
    %v6986 = vld [vmem:[#allocation13 + $0x70] sm:$0xff]
    %v6987 = vld [vmem:[#allocation13 + $0x78] sm:$0xff]
    %v6988 = vld [vmem:[#allocation13 + $0x80] sm:$0xff]
    %v6989 = vld [vmem:[#allocation13 + $0x88] sm:$0xff]
    %v6990 = vld [vmem:[#allocation13 + $0x90] sm:$0xff]
    %v6991 = vld [vmem:[#allocation13 + $0x98] sm:$0xff]
    %v6992 = vld [vmem:[#allocation13 + $0xa0] sm:$0xff]
    %v6993 = vld [vmem:[#allocation13 + $0xa8] sm:$0xff]
    %v6994 = vld [vmem:[#allocation13 + $0xb0] sm:$0xff]
    %v6995 = vld [vmem:[#allocation13 + $0xb8] sm:$0xff]
    %v6996 = vld [vmem:[#allocation13 + $0xc0] sm:$0xff]
    %v6997 = vld [vmem:[#allocation13 + $0xc8] sm:$0xff]
    %v6998 = vld [vmem:[#allocation13 + $0xd0] sm:$0xff]
    %v6999 = vld [vmem:[#allocation13 + $0xd8] sm:$0xff]
    %v7000 = vld [vmem:[#allocation13 + $0xe0] sm:$0xff]
    %v7001 = vld [vmem:[#allocation13 + $0xe8] sm:$0xff]
    %v7002 = vld [vmem:[#allocation13 + $0xf0] sm:$0xff]
    %v7003 = vld [vmem:[#allocation13 + $0xf8] sm:$0xff]
    %v7004 = vld [vmem:[%s11] sm:$0x1]
    %v7006 = vlaneseq
    %v7007 = vshrl.u32 %v7006, 7
    %v7008 = vsub.s32 0, %v7007
    %v7009 = vrot.slane %v7004, %v7008
    %7011 = vmatprep.subr.mxu0 0.0
    %7012 = vmatpush1.msra.mxu0 %v6972
    %7013 = vmatprep.subr.mxu0 0.0
    %7014 = vmatpush1.msra.mxu0 %v6973
    %7015 = vmatprep.subr.mxu0 0.0
    %7016 = vmatpush1.msra.mxu0 %v6974
    %7017 = vmatprep.subr.mxu0 0.0
    %7018 = vmatpush1.msra.mxu0 %v6975
    %7019 = vmatprep.subr.mxu0 0.0
    %7020 = vmatpush1.msra.mxu0 %v6976
    %7021 = vmatprep.subr.mxu0 0.0
    %7022 = vmatpush1.msra.mxu0 %v6977
    %7023 = vmatprep.subr.mxu0 0.0
    %7024 = vmatpush1.msra.mxu0 %v6978
    %7025 = vmatprep.subr.mxu0 0.0
    %7026 = vmatpush1.msra.mxu0 %v6979
    %7027 = vmatprep.subr.mxu0 0.0
    %7028 = vmatpush1.msra.mxu0 %v6980
    %7029 = vmatprep.subr.mxu0 0.0
    %7030 = vmatpush1.msra.mxu0 %v6981
    %7031 = vmatprep.subr.mxu0 0.0
    %7032 = vmatpush1.msra.mxu0 %v6982
    %7033 = vmatprep.subr.mxu0 0.0
    %7034 = vmatpush1.msra.mxu0 %v6983
    %7035 = vmatprep.subr.mxu0 0.0
    %7036 = vmatpush1.msra.mxu0 %v6984
    %7037 = vmatprep.subr.mxu0 0.0
    %7038 = vmatpush1.msra.mxu0 %v6985
    %7039 = vmatprep.subr.mxu0 0.0
    %7040 = vmatpush1.msra.mxu0 %v6986
    %7041 = vmatprep.subr.mxu0 0.0
    %7042 = vmatpush1.msra.mxu0 %v6987
    %7043 = vmatprep.subr.mxu0 0.0
    %7044 = vmatpush1.msra.mxu0 %v6988
    %7045 = vmatprep.subr.mxu0 0.0
    %7046 = vmatpush1.msra.mxu0 %v6989
    %7047 = vmatprep.subr.mxu0 0.0
    %7048 = vmatpush1.msra.mxu0 %v6990
    %7049 = vmatprep.subr.mxu0 0.0
    %7050 = vmatpush1.msra.mxu0 %v6991
    %7051 = vmatprep.subr.mxu0 0.0
    %7052 = vmatpush1.msra.mxu0 %v6992
    %7053 = vmatprep.subr.mxu0 0.0
    %7054 = vmatpush1.msra.mxu0 %v6993
    %7055 = vmatprep.subr.mxu0 0.0
    %7056 = vmatpush1.msra.mxu0 %v6994
    %7057 = vmatprep.subr.mxu0 0.0
    %7058 = vmatpush1.msra.mxu0 %v6995
    %7059 = vmatprep.subr.mxu0 0.0
    %7060 = vmatpush1.msra.mxu0 %v6996
    %7061 = vmatprep.subr.mxu0 0.0
    %7062 = vmatpush1.msra.mxu0 %v6997
    %7063 = vmatprep.subr.mxu0 0.0
    %7064 = vmatpush1.msra.mxu0 %v6998
    %7065 = vmatprep.subr.mxu0 0.0
    %7066 = vmatpush1.msra.mxu0 %v6999
    %7067 = vmatprep.subr.mxu0 0.0
    %7068 = vmatpush1.msra.mxu0 %v7000
    %7069 = vmatprep.subr.mxu0 0.0
    %7070 = vmatpush1.msra.mxu0 %v7001
    %7071 = vmatprep.subr.mxu0 0.0
    %7072 = vmatpush1.msra.mxu0 %v7002
    %7073 = vmatprep.subr.mxu0 0.0
    %7074 = vmatpush1.msra.mxu0 %v7003
    %7075 = vmatprep.mubr.f32.mxu0 %v6965
    %7076 = vmatmul.mubr.f32.gmra.mrb[0].mxu0 %v6964
    %v7077 = vpop.f32.mrb[0].mxu0
    %v7078 = vadd.f32 %v7009, %v7077
    %v7079 = vpop.f32.mrb[0].mxu0
    %7080 = vmatprep.mubr.f32.mxu0 %v6967
    %7081 = vmatmul.mubr.f32.gmra.mrb[0].mxu0 %v6966
    %v7082 = vpop.f32.mrb[0].mxu0
    %v7083 = vadd.f32 %v7009, %v7082
    %v7084 = vpop.f32.mrb[0].mxu0
    %7085 = vmatprep.mubr.f32.mxu0 %v6969
    %7086 = vmatmul.mubr.f32.gmra.mrb[0].mxu0 %v6968
    %v7087 = vpop.f32.mrb[0].mxu0
    %v7088 = vadd.f32 %v7009, %v7087
    %v7089 = vpop.f32.mrb[0].mxu0
    %7090 = vmatprep.mubr.f32.mxu0 %v6971
    %7091 = vmatmul.mubr.f32.gmra.mrb[0].mxu0 %v6970
    %v7092 = vpop.f32.mrb[0].mxu0
    %v7093 = vadd.f32 %v7009, %v7092
    %v7094 = vpop.f32.mrb[0].mxu0
    %7095 = vdwg.mxu0
    %v7096 = vadd.f32 %v6827, %v7078
    %v7097 = vadd.f32 %v6828, %v7083
    %v7098 = vadd.f32 %v6829, %v7088
    %v7099 = vadd.f32 %v6830, %v7093
    %v7100 = vld [vmem:[%s12 + $0x2] sm:$0x1]
    %v7101 = vld [vmem:[%s13 + $0x2] sm:$0x1]
    %7102 = vadd.xlane.f32.xlu0 %v7096
    %v7103 = vpop.xlane.xlu0 %7102
    %7104 = vadd.xlane.f32.xlu0 %v7097
    %v7105 = vpop.xlane.xlu0 %7104
    %7106 = vadd.xlane.f32.xlu0 %v7098
    %v7107 = vpop.xlane.xlu0 %7106
    %7108 = vadd.xlane.f32.xlu0 %v7099
    %v7109 = vpop.xlane.xlu0 %7108
    %v7110 = vmul.f32 %v7103, %v3348
    %v7111 = vmul.f32 %v7105, %v3348
    %v7112 = vmul.f32 %v7107, %v3348
    %v7113 = vmul.f32 %v7109, %v3348
    %v7114 = vsub.f32 %v7096, %v7110
    %v7115 = vsub.f32 %v7097, %v7111
    %v7116 = vsub.f32 %v7098, %v7112
    %v7117 = vsub.f32 %v7099, %v7113
    %v7118 = vmul.f32 %v7114, %v7114
    %v7119 = vmul.f32 %v7115, %v7115
    %v7120 = vmul.f32 %v7116, %v7116
    %v7121 = vmul.f32 %v7117, %v7117
    %7122 = vadd.xlane.f32.xlu0 %v7118
    %v7123 = vpop.xlane.xlu0 %7122
    %7124 = vadd.xlane.f32.xlu0 %v7119
    %v7125 = vpop.xlane.xlu0 %7124
    %7126 = vadd.xlane.f32.xlu0 %v7120
    %v7127 = vpop.xlane.xlu0 %7126
    %7128 = vadd.xlane.f32.xlu0 %v7121
    %v7129 = vpop.xlane.xlu0 %7128
    %v7130 = vmul.f32 %v7123, 0.007874016
    %v7131 = vmul.f32 %v7125, 0.007874016
    %v7132 = vmul.f32 %v7127, 0.007874016
    %v7133 = vmul.f32 %v7129, 0.007874016
    %v7134 = vrsqrt.pop %v7130
    %v7135 = vmul.f32 %v7130, %v7134
    %vm7136 = vcmp.eq.f32.partialorder %v7130, inf
    %v7137 = vsel %vm7136, %v7130, %v7135
    %vm7138 = vcmp.eq.f32.partialorder %v7130, 0.0
    %v7139 = vand.u32 %v7130, 2147483648
    %v7140 = vsel %vm7138, %v7139, %v7137
    %v7141 = vrsqrt.pop %v7131
    %v7142 = vmul.f32 %v7131, %v7141
    %vm7143 = vcmp.eq.f32.partialorder %v7131, inf
    %v7144 = vsel %vm7143, %v7131, %v7142
    %vm7145 = vcmp.eq.f32.partialorder %v7131, 0.0
    %v7146 = vand.u32 %v7131, 2147483648
    %v7147 = vsel %vm7145, %v7146, %v7144
    %v7148 = vrsqrt.pop %v7132
    %v7149 = vmul.f32 %v7132, %v7148
    %vm7150 = vcmp.eq.f32.partialorder %v7132, inf
    %v7151 = vsel %vm7150, %v7132, %v7149
    %vm7152 = vcmp.eq.f32.partialorder %v7132, 0.0
    %v7153 = vand.u32 %v7132, 2147483648
    %v7154 = vsel %vm7152, %v7153, %v7151
    %v7155 = vrsqrt.pop %v7133
    %v7156 = vmul.f32 %v7133, %v7155
    %vm7157 = vcmp.eq.f32.partialorder %v7133, inf
    %v7158 = vsel %vm7157, %v7133, %v7156
    %vm7159 = vcmp.eq.f32.partialorder %v7133, 0.0
    %v7160 = vand.u32 %v7133, 2147483648
    %v7161 = vsel %vm7159, %v7160, %v7158
    %v7162 = vadd.f32 %v7140, 1e-06
    %v7163 = vadd.f32 %v7147, 1e-06
    %v7164 = vadd.f32 %v7154, 1e-06
    %v7165 = vadd.f32 %v7161, 1e-06
    %v7166 = vrcp.pop %v7162
    %v7167 = vrcp.pop %v7163
    %v7168 = vrcp.pop %v7164
    %v7169 = vrcp.pop %v7165
    %v7170 = vlaneseq
    %v7171 = vshrl.u32 %v7170, 7
    %v7172 = vsub.s32 0, %v7171
    %v7173 = vrot.slane %v7100, %v7172
    %v7174 = vmul.f32 %v7173, %v7114
    %v7175 = vmul.f32 %v7173, %v7115
    %v7176 = vmul.f32 %v7173, %v7116
    %v7177 = vmul.f32 %v7173, %v7117
    %v7178 = vmul.f32 %v7174, %v7166
    %v7179 = vmul.f32 %v7175, %v7167
    %v7180 = vmul.f32 %v7176, %v7168
    %v7181 = vmul.f32 %v7177, %v7169
    %v7182 = vlaneseq
    %v7183 = vshrl.u32 %v7182, 7
    %v7184 = vsub.s32 0, %v7183
    %v7185 = vrot.slane %v7101, %v7184
    %v7186 = vadd.f32 %v7178, %v7185
    %v7187 = vadd.f32 %v7179, %v7185
    %v7188 = vadd.f32 %v7180, %v7185
    %v7189 = vadd.f32 %v7181, %v7185
    %7190 = vst [vmem:[#allocation14] sm:$0xff] %v7186
    %7191 = vst [vmem:[#allocation14 + $0x8] sm:$0xff] %v7187
    %7192 = vst [vmem:[#allocation14 + $0x10] sm:$0xff] %v7188
    %7193 = vst [vmem:[#allocation14 + $0x18] sm:$0xff] %v7189
    // Predicated region
    $region86: #{tpu_custom_call.1} parent=1 // pred_check
      _
    $region87: #{tpu_custom_call.1} parent=1 // pred_check_branch
      %7195 = sbr.rel (0) target = $region89
    $region88: #{tpu_custom_call.1} parent=1 // pred_region
      %s7197 = ssub.s32 512, 512
      %7198 = vsyncadd [#allocation4], %s7197
      %s7199 = sshll.u32 [#allocation14], 4
      %s7200 = int_to_ptr.vmem [resolvable:$true] %s7199
      %7205 = dma.vmem_to_hbm [thread:$0]  %s7200, 512, %s14, [#allocation4], 128, 128, 8
    $region89: #{tpu_custom_call.1} parent=1 // pred_fallthru
      _
    // Predicated region
    $region90: #{tpu_custom_call.1} parent=1 // pred_check
      _
    $region91: #{tpu_custom_call.1} parent=1 // pred_check_branch
      %7207 = sbr.rel (0) target = $region93
    $region92: #{tpu_custom_call.1} parent=1 // pred_region
      %7208 = dma.done [#allocation4], 512
    $region93: #{tpu_custom_call.1} parent=1 // pred_fallthru
      _
    %7209 = vsyncpa [#allocation3], 1
    %7210 = vsyncpa [#allocation6], 1
    %7211 = vsyncpa [#allocation9], 1
    %7212 = vsyncpa [#allocation12], 1
    %7213 = vsyncpa [#allocation4], 1

</llo_original>
